<compile_context>
chip_gen: v5e
topology: v5e:2x2
jax: 0.10.0
libtpu: 0.0.40
codegen_flags: <defaults>
</compile_context>

<pallas_src>
import functools

import jax
import jax.numpy as jnp
from jax.experimental import pallas as pl
from jax.experimental.pallas import tpu as pltpu


def _round_up(x: int, m: int) -> int:
    return (x + m - 1) // m * m


# ----------------------------------------------------------------------------
# Pallas kernels
# ----------------------------------------------------------------------------
def _matmul_affine_kernel(x_ref, w_ref, scale_ref, shift_ref, o_ref, acc_ref,
                          *, n_pairs, clamp):
    # o = (sum_p x[p] @ w[p]) * scale + shift, optionally clamped (Hardtanh).
    # grid = (M_blocks, N_blocks, K_blocks); K is the sequential reduction axis.
    # MXU operands are cast to bf16; accumulation stays in an f32 VMEM scratch.
    k = pl.program_id(2)

    @pl.when(k == 0)
    def _():
        acc_ref[...] = jnp.zeros_like(acc_ref)

    for p in range(n_pairs):
        acc_ref[...] += jnp.dot(
            x_ref[p].astype(jnp.bfloat16), w_ref[p].astype(jnp.bfloat16),
            preferred_element_type=jnp.float32)

    @pl.when(k == pl.num_programs(2) - 1)
    def _():
        y = acc_ref[...] * scale_ref[...] + shift_ref[...]
        if clamp is not None:
            y = jnp.clip(y, clamp[0], clamp[1])
        o_ref[...] = y.astype(o_ref.dtype)


def _lstm_dir_kernel(gx_ref, whh_hbm, h_out_ref, whh_vmem, h_scr, c_scr, sem,
                     *, Hp, Tc, unroll):
    # One LSTM direction, one chunk of Tc time steps per grid step.
    #   grid = (direction, chunk), direction marked "parallel" so v7x runs the
    #   two directions on its two TensorCores.
    #   gx_ref   : (Tc, B, 4*Hp) bf16 gate pre-activations of this direction;
    #              for the backward direction the chunk index_map is reversed
    #              and the in-chunk order is reversed below.
    #   whh_hbm  : (2, Hp, 4*Hp) bf16 recurrent weights, left in HBM and copied
    #              ONCE per direction into whh_vmem (single-buffered).
    #   h_out_ref: (Tc, B, Hp) bf16 hidden states (time ascending).
    d = pl.program_id(0)
    s = pl.program_id(1)

    @pl.when(s == 0)
    def _():
        cp = pltpu.make_async_copy(whh_hbm.at[d], whh_vmem, sem)
        cp.start()
        cp.wait()
        h_scr[...] = jnp.zeros_like(h_scr)
        c_scr[...] = jnp.zeros_like(c_scr)

    def step(i, carry):
        # fwd (d==0) walks the chunk ascending; bwd (d==1) descending.
        t = i + d * (Tc - 1 - 2 * i)
        g = gx_ref[t].astype(jnp.float32) + jnp.dot(
            h_scr[...].astype(jnp.bfloat16), whh_vmem[...],
            preferred_element_type=jnp.float32)
        # PyTorch gate order i, f, g, o; each gate has its own Hp-lane block.
        i_g = jax.nn.sigmoid(g[:, 0 * Hp:1 * Hp])
        f_g = jax.nn.sigmoid(g[:, 1 * Hp:2 * Hp])
        g_g = jnp.tanh(g[:, 2 * Hp:3 * Hp])
        o_g = jax.nn.sigmoid(g[:, 3 * Hp:4 * Hp])
        c_new = f_g * c_scr[...] + i_g * g_g
        h_new = o_g * jnp.tanh(c_new)
        c_scr[...] = c_new
        h_scr[...] = h_new
        h_out_ref[t] = h_new.astype(h_out_ref.dtype)
        return carry

    # Partial unroll: enough ILP for the LLO scheduler without icache blowup.
    jax.lax.fori_loop(0, Tc, step, 0, unroll=unroll)


# ----------------------------------------------------------------------------
# Pallas-call wrappers
# ----------------------------------------------------------------------------
def pallas_matmul_fused(xs, ws, scale, shift, *, clamp=None,
                        out_dtype=jnp.bfloat16, keep_lane_pad=False,
                        tm=256, tn=512, tk=512):
    """y = (sum_p xs[p] @ ws[p]) * scale + shift, optional Hardtanh clamp.

    xs: (M, K) or (P, M, K); ws: (K, N) or (P, K, N).  The pair axis lets the
    caller feed the fwd/bwd hidden states as two K-split operands (no concat).
    Tiled over (M, N, K); bf16 MXU operands, f32 accumulator scratch,
    lane-dense (128-multiple) padded output, sliced back unless keep_lane_pad.
    """
    if xs.ndim == 2:
        xs = xs[None]
    if ws.ndim == 2:
        ws = ws[None]
    P, M, K = xs.shape
    Pw, Kw, Nout = ws.shape
    assert P == Pw and K == Kw

    tm_ = min(tm, _round_up(M, 8))
    tk_ = min(tk, _round_up(K, 128))
    tn_ = min(tn, _round_up(Nout, 128))
    Mp, Kp, Np = _round_up(M, tm_), _round_up(K, tk_), _round_up(Nout, tn_)

    xs = jnp.pad(xs.astype(jnp.bfloat16), ((0, 0), (0, Mp - M), (0, Kp - K)))
    ws = jnp.pad(ws.astype(jnp.bfloat16), ((0, 0), (0, Kp - K), (0, Np - Nout)))
    scale_p = jnp.pad(scale.reshape(1, Nout).astype(jnp.float32),
                      ((0, 0), (0, Np - Nout)))
    shift_p = jnp.pad(shift.reshape(1, Nout).astype(jnp.float32),
                      ((0, 0), (0, Np - Nout)))

    out = pl.pallas_call(
        functools.partial(_matmul_affine_kernel, n_pairs=P, clamp=clamp),
        out_shape=jax.ShapeDtypeStruct((Mp, Np), out_dtype),
        grid=(Mp // tm_, Np // tn_, Kp // tk_),
        in_specs=[
            pl.BlockSpec((P, tm_, tk_), lambda i, j, k: (0, i, k)),
            pl.BlockSpec((P, tk_, tn_), lambda i, j, k: (0, k, j)),
            pl.BlockSpec((1, tn_), lambda i, j, k: (0, j)),
            pl.BlockSpec((1, tn_), lambda i, j, k: (0, j)),
        ],
        out_specs=pl.BlockSpec((tm_, tn_), lambda i, j, k: (i, j)),
        scratch_shapes=[pltpu.VMEM((tm_, tn_), jnp.float32)],
        compiler_params=pltpu.CompilerParams(
            dimension_semantics=("parallel", "parallel", "arbitrary"),
            vmem_limit_bytes=48 * 1024 * 1024),
    )(xs, ws, scale_p, shift_p)

    out = out[:M]
    if not keep_lane_pad:
        out = out[:, :Nout]
    return out


def pallas_bilstm_scan(gx, whh_pair, *, Hp, Tc, unroll):
    """Both LSTM directions over all time chunks in one pallas_call.

    gx:       (Tp, B, 8*Hp) bf16, [fwd i|f|g|o | bwd i|f|g|o] gate blocks.
    whh_pair: (2, Hp, 4*Hp) bf16 stacked [fwd, bwd] recurrent weights.
    Returns   (2, Tp, B, Hp) bf16 hidden states, direction-major.
    """
    Tp, B, G = gx.shape
    assert G == 8 * Hp and Tp % Tc == 0
    nchunks = Tp // Tc

    def gx_map(d, s):
        # fwd: chunk s, fwd gate lanes; bwd: reversed chunk, bwd gate lanes.
        return (s + d * (nchunks - 1 - 2 * s), 0, d)

    def out_map(d, s):
        return (d, s + d * (nchunks - 1 - 2 * s), 0, 0)

    return pl.pallas_call(
        functools.partial(_lstm_dir_kernel, Hp=Hp, Tc=Tc, unroll=unroll),
        out_shape=jax.ShapeDtypeStruct((2, Tp, B, Hp), jnp.bfloat16),
        grid=(2, nchunks),
        in_specs=[
            pl.BlockSpec((Tc, B, 4 * Hp), gx_map),
            # Time-invariant recurrent weights stay in HBM and are copied once
            # per direction into VMEM scratch (single-buffered).
            pl.BlockSpec(memory_space=pl.ANY),
        ],
        out_specs=pl.BlockSpec((None, Tc, B, Hp), out_map),
        scratch_shapes=[
            pltpu.VMEM((Hp, 4 * Hp), jnp.bfloat16),   # single-buffered W_hh
            pltpu.VMEM((B, Hp), jnp.float32),          # h state
            pltpu.VMEM((B, Hp), jnp.float32),          # c state
            pltpu.SemaphoreType.DMA,
        ],
        compiler_params=pltpu.CompilerParams(
            dimension_semantics=("parallel", "arbitrary"),
            vmem_limit_bytes=48 * 1024 * 1024),
    )(gx, whh_pair)
    # TODO(synk): on single-core chips (v5e/v6e) a block-diagonal fwd+bwd
    # recurrent matmul (K=2*Hp per step) would halve MXU pushes; mutually
    # exclusive with the 2-TC direction split chosen here.


# ----------------------------------------------------------------------------
# Model glue (NHWC im2col / reshapes) in plain JAX
# ----------------------------------------------------------------------------
def _im2col_nhwc(x, kh, kw, sh, sw, time_major=False):
    # x: (N, H, W, C) NHWC; patch feature order (kh, kw, C).
    # Row order: (N, Ho, Wo) by default, (Wo, N, Ho) when time_major (W=time),
    # so the conv2 output is already time-major for the LSTM (no transpose).
    # TODO(synk): fold patch extraction into the matmul kernel via manual DMA
    # of overlapping row windows so the kh*kw-expanded patches never hit HBM.
    N, H, W, C = x.shape
    Ho = (H - kh) // sh + 1
    Wo = (W - kw) // sw + 1
    ridx = jnp.arange(Ho)[:, None] * sh + jnp.arange(kh)[None, :]   # (Ho, kh)
    cidx = jnp.arange(Wo)[:, None] * sw + jnp.arange(kw)[None, :]   # (Wo, kw)
    p = x[:, ridx]            # (N, Ho, kh, W, C)
    p = p[:, :, :, cidx]      # (N, Ho, kh, Wo, kw, C)
    if time_major:
        p = p.transpose(3, 0, 1, 2, 4, 5)   # (Wo, N, Ho, kh, kw, C)
        rows = Wo * N * Ho
    else:
        p = p.transpose(0, 1, 3, 2, 4, 5)   # (N, Ho, Wo, kh, kw, C)
        rows = N * Ho * Wo
    return p.reshape(rows, kh * kw * C), Ho, Wo


def conv_bn_hardtanh(x_nhwc, wmat, scale, shift, kh, kw, stride, *,
                     time_major=False, keep_lane_pad=False):
    sh, sw = stride
    patches, Ho, Wo = _im2col_nhwc(x_nhwc, kh, kw, sh, sw, time_major=time_major)
    out = pallas_matmul_fused(patches, wmat, scale, shift, clamp=(0.0, 20.0),
                              out_dtype=jnp.bfloat16, keep_lane_pad=keep_lane_pad)
    return out, Ho, Wo


def deepspeech2_forward(x, packed, *, rnn_layers, num_classes, Hp, Tc=64):
    B = x.shape[0]
    # NCHW (B, 1, F, T) -> NHWC (B, F, T, 1): pure reshape since C == 1.
    x = x.reshape(B, x.shape[2], x.shape[3], 1).astype(jnp.bfloat16)

    # ---- Conv stack (NHWC throughout; BN + Hardtanh fused into the matmul).
    h, F1, T1 = conv_bn_hardtanh(x, packed["conv1_w"], packed["conv1_s"],
                                 packed["conv1_t"], 41, 11, (2, 2))
    h = h.reshape(B, F1, T1, 32)
    # conv2 emits rows time-major (T2, B, F2) and keeps the channel lanes
    # padded to 128 so they feed the layer-0 gate matmul with no re-layout.
    h, F2, T2 = conv_bn_hardtanh(h, packed["conv2_w"], packed["conv2_s"],
                                 packed["conv2_t"], 21, 11, (2, 1),
                                 time_major=True, keep_lane_pad=True)
    assert F2 == 1, "in_features must collapse to 1 after the conv stack"
    T = T2                      # h: (T*B, 128) bf16, rows already time-major

    Tc_eff = min(Tc, _round_up(T, 8))
    Tp = _round_up(T, Tc_eff)
    unroll = min(8, Tc_eff)

    # ---- Bidirectional LSTM stack.
    # TODO(synk): for hidden << 128 the per-gate Hp=128 padding over-computes;
    # a packed 4*hidden-lane gate layout would remove that waste.
    # TODO(synk): pad/pack batch toward 8 sublanes when deployment batch stays
    # tiny so recurrence stores are unmasked full-sublane vst.
    x_pairs = h                                  # layer-0 input: (T*B, 128)
    for l in range(rnn_layers):
        lp = packed["lstm"][l]
        # Gate pre-activations for BOTH directions in one matmul
        # (fwd gates in lanes [0, 4Hp), bwd gates in [4Hp, 8Hp)).
        gx = pallas_matmul_fused(
            x_pairs, lp["w_ih"],
            jnp.ones((8 * Hp,), jnp.float32), lp["b"],
            out_dtype=jnp.bfloat16)
        gx = gx.reshape(T, B, 8 * Hp)
        if Tp != T:
            # Zero gate pre-activations keep padded steps' h/c exactly zero, so
            # the bwd direction enters the real sequence with zero state.
            gx = jnp.pad(gx, ((0, Tp - T), (0, 0), (0, 0)))
        h_out = pallas_bilstm_scan(gx, lp["w_hh"], Hp=Hp, Tc=Tc_eff,
                                   unroll=unroll)          # (2, Tp, B, Hp)
        if Tp != T:
            h_out = h_out[:, :T]
        # Next consumer takes the fwd/bwd halves as two K-split operands.
        x_pairs = h_out.reshape(2, T * B, Hp)

    # ---- Output projection: direction sum folded in (h_f@W + h_b@W).
    logits = pallas_matmul_fused(
        x_pairs, packed["out_w"],
        jnp.ones((num_classes,), jnp.float32), packed["out_b"],
        out_dtype=jnp.float32)
    return logits.reshape(T, B, num_classes)


# ----------------------------------------------------------------------------
# Parameter init (PyTorch shapes) and packing into kernel-friendly layouts
# ----------------------------------------------------------------------------
def init_params(key, hidden, rnn_layers, num_classes):
    keys = iter(jax.random.split(key, 16 + 6 * rnn_layers))

    def nrm(shape, s=0.05):
        return (jax.random.normal(next(keys), shape, jnp.float32) * s).astype(jnp.float32)

    p = {}
    p["conv1_w"] = nrm((32, 1, 41, 11))
    p["conv1_b"] = nrm((32,))
    p["bn1_g"] = 1.0 + nrm((32,))
    p["bn1_b"] = nrm((32,))
    p["bn1_m"] = nrm((32,))
    p["bn1_v"] = 1.0 + jnp.abs(nrm((32,)))
    p["conv2_w"] = nrm((32, 32, 21, 11))
    p["conv2_b"] = nrm((32,))
    p["bn2_g"] = 1.0 + nrm((32,))
    p["bn2_b"] = nrm((32,))
    p["bn2_m"] = nrm((32,))
    p["bn2_v"] = 1.0 + jnp.abs(nrm((32,)))

    lstm = []
    for l in range(rnn_layers):
        in_l = 32 if l == 0 else 2 * hidden
        layer = {}
        for d in ("fwd", "bwd"):
            layer[d] = {
                "w_ih_t": nrm((in_l, 4 * hidden)),    # W_ih^T (gates i,f,g,o)
                "w_hh_t": nrm((hidden, 4 * hidden)),  # W_hh^T
                "b": nrm((4 * hidden,)),              # b_ih + b_hh combined
            }
        lstm.append(layer)
    p["lstm"] = lstm

    p["out_w_t"] = nrm((hidden, num_classes))
    p["out_b"] = nrm((num_classes,))
    return p


def pack_params(p, hidden, rnn_layers, Hp, eps=1e-5):
    packed = {}

    def conv_pack(w, b, g, beta, m, v):
        # NHWC im2col feature order (kh, kw, Cin); fold BN + conv bias.
        Cout, Cin, kh, kw = w.shape
        wmat = w.transpose(2, 3, 1, 0).reshape(kh * kw * Cin, Cout)
        scale = g / jnp.sqrt(v + eps)
        shift = scale * (b - m) + beta
        return (wmat.astype(jnp.bfloat16), scale.astype(jnp.float32),
                shift.astype(jnp.float32))

    packed["conv1_w"], packed["conv1_s"], packed["conv1_t"] = conv_pack(
        p["conv1_w"], p["conv1_b"], p["bn1_g"], p["bn1_b"], p["bn1_m"], p["bn1_v"])
    packed["conv2_w"], packed["conv2_s"], packed["conv2_t"] = conv_pack(
        p["conv2_w"], p["conv2_b"], p["bn2_g"], p["bn2_b"], p["bn2_m"], p["bn2_v"])

    def pad_gates(w):
        # (..., 4*hidden) -> (..., 4*Hp): each gate gets its own Hp-lane block.
        lead = w.shape[:-1]
        w4 = w.reshape(*lead, 4, hidden)
        w4 = jnp.pad(w4, [(0, 0)] * len(lead) + [(0, 0), (0, Hp - hidden)])
        return w4.reshape(*lead, 4 * Hp)

    lstm_packed = []
    for l in range(rnn_layers):
        lp = p["lstm"][l]
        w_ih_f = pad_gates(lp["fwd"]["w_ih_t"])          # (In, 4*Hp)
        w_ih_b = pad_gates(lp["bwd"]["w_ih_t"])

        if l == 0:
            # Layer 0 consumes the conv output with channels lane-padded to
            # 128: real rows 0..31, zero rows 32..127.
            in_l = w_ih_f.shape[0]
            w_ih = jnp.concatenate([w_ih_f, w_ih_b], axis=1)        # (in_l, 8Hp)
            w_ih = jnp.pad(w_ih, ((0, 128 - in_l), (0, 0)))          # (128, 8Hp)
        else:
            # Layers >0 consume the pair (h_fwd, h_bwd) as K-split operands:
            # rows [0:hidden] multiply h_fwd, rows [hidden:2h] multiply h_bwd.
            def split_rows(w):                                       # -> (2, Hp, 4Hp)
                wf = jnp.pad(w[:hidden], ((0, Hp - hidden), (0, 0)))
                wb = jnp.pad(w[hidden:], ((0, Hp - hidden), (0, 0)))
                return jnp.stack([wf, wb], axis=0)
            w_ih = jnp.concatenate([split_rows(w_ih_f),
                                    split_rows(w_ih_b)], axis=2)     # (2, Hp, 8Hp)

        b_cat = jnp.concatenate([pad_gates(lp["fwd"]["b"]),
                                 pad_gates(lp["bwd"]["b"])], axis=0)  # (8*Hp,)

        def prep_hh(w):                                              # (Hp, 4Hp)
            return jnp.pad(pad_gates(w), ((0, Hp - hidden), (0, 0)))
        w_hh = jnp.stack([prep_hh(lp["fwd"]["w_hh_t"]),
                          prep_hh(lp["bwd"]["w_hh_t"])], axis=0)     # (2, Hp, 4Hp)

        lstm_packed.append({
            "w_ih": w_ih.astype(jnp.bfloat16),
            "b": b_cat.astype(jnp.float32),
            "w_hh": w_hh.astype(jnp.bfloat16),
        })
    packed["lstm"] = lstm_packed

    # Direction sum folded into the projection: same W for both pair operands.
    w_out = jnp.pad(p["out_w_t"], ((0, Hp - hidden), (0, 0)))        # (Hp, C)
    packed["out_w"] = jnp.stack([w_out, w_out], axis=0).astype(jnp.bfloat16)
    packed["out_b"] = p["out_b"].astype(jnp.float32)
    return packed


# ----------------------------------------------------------------------------
if __name__ == "__main__":
    # Small config: in_features=81 -> freq collapses to 1 after the two convs,
    # time=45 -> sequence length 8 after the convs.
    IN_FEATURES = 81
    HIDDEN = 32
    RNN_LAYERS = 2
    NUM_CLASSES = 16
    BATCH = 2
    TIME = 45
    HP = _round_up(HIDDEN, 128)   # gate-major padded hidden (128 lanes per gate)

    key = jax.random.PRNGKey(0)
    k_x, k_p = jax.random.split(key)
    x = jax.random.normal(k_x, (BATCH, 1, IN_FEATURES, TIME), jnp.float32)
    params = init_params(k_p, HIDDEN, RNN_LAYERS, NUM_CLASSES)
    packed = pack_params(params, HIDDEN, RNN_LAYERS, HP)

    fwd = jax.jit(functools.partial(
        deepspeech2_forward, rnn_layers=RNN_LAYERS, num_classes=NUM_CLASSES,
        Hp=HP, Tc=64))
    out = jax.block_until_ready(fwd(x, packed))
    assert out.shape == (8, BATCH, NUM_CLASSES), out.shape
    assert bool(jnp.all(jnp.isfinite(out)))
    print("KERNEL_OK")
</pallas_src>

<mosaic_0001>
module attributes {stable_mosaic.version = 11 : i64} {
  func.func @_matmul_affine_kernel(%arg0: i32, %arg1: i32, %arg2: i32, %arg3: memref<1x256x512xbf16, #tpu.memory_space<vmem>>, %arg4: memref<1x512x128xbf16, #tpu.memory_space<vmem>>, %arg5: memref<1x128xf32, #tpu.memory_space<vmem>>, %arg6: memref<1x128xf32, #tpu.memory_space<vmem>>, %arg7: memref<256x128xbf16, #tpu.memory_space<vmem>>, %arg8: memref<256x128xf32, #tpu.memory_space<vmem>>) attributes {dimension_semantics = [#tpu.dimension_semantics<parallel>, #tpu.dimension_semantics<parallel>, #tpu.dimension_semantics<arbitrary>], iteration_bounds = array<i64: 3, 1, 1>, scalar_prefetch = 0 : i64, scratch_operands = 1 : i64, tpu.core_type = #tpu.core_type<tc>, window_params = [{transform_indices = @transform_0, window_bounds = array<i64: 1, 256, 512>}, {transform_indices = @transform_1, window_bounds = array<i64: 1, 512, 128>}, {transform_indices = @transform_2, window_bounds = array<i64: 1, 128>}, {transform_indices = @transform_3, window_bounds = array<i64: 1, 128>}, {transform_indices = @transform_4, window_bounds = array<i64: 256, 128>}]} {
    %c0_i32 = arith.constant 0 : i32
    %0 = arith.cmpi eq, %arg2, %c0_i32 : i32
    %1 = arith.extui %0 : i1 to i32
    %c0_i32_0 = arith.constant 0 : i32
    %2 = arith.cmpi ne, %1, %c0_i32_0 : i32
    scf.if %2 {
      %cst_12 = arith.constant 0.000000e+00 : f32
      %14 = vector.broadcast %cst_12 : f32 to vector<256x128xf32>
      %c0_13 = arith.constant 0 : index
      %c0_14 = arith.constant 0 : index
      %15 = vector.load %arg8[%c0_13, %c0_14] : memref<256x128xf32, #tpu.memory_space<vmem>>, vector<256x128xf32>
      tpu.vector_store %arg8[%c0_13, %c0_14], %14 {strides = array<i32>} : memref<256x128xf32, #tpu.memory_space<vmem>>, vector<256x128xf32>,
    } else {
    }
    %c0 = arith.constant 0 : index
    %c0_1 = arith.constant 0 : index
    %3 = vector.load %arg8[%c0, %c0_1] : memref<256x128xf32, #tpu.memory_space<vmem>>, vector<256x128xf32>
    %c0_2 = arith.constant 0 : index
    %c0_3 = arith.constant 0 : index
    %c0_4 = arith.constant 0 : index
    %4 = vector.load %arg3[%c0_2, %c0_3, %c0_4] : memref<1x256x512xbf16, #tpu.memory_space<vmem>>, vector<1x256x512xbf16>
    %5 = vector.shape_cast %4 : vector<1x256x512xbf16> to vector<256x512xbf16>
    %c0_5 = arith.constant 0 : index
    %c0_6 = arith.constant 0 : index
    %c0_7 = arith.constant 0 : index
    %6 = vector.load %arg4[%c0_5, %c0_6, %c0_7] : memref<1x512x128xbf16, #tpu.memory_space<vmem>>, vector<1x512x128xbf16>
    %7 = vector.shape_cast %6 : vector<1x512x128xbf16> to vector<512x128xbf16>
    %cst = arith.constant dense<0.000000e+00> : vector<256x128xf32>
    %8 = tpu.matmul %5, %7, %cst {dimension_numbers = #tpu.dot_dimension_numbers<[1], [0], [0], [1], [0, 0, 1, 1], [], []>} : vector<256x512xbf16>, vector<512x128xbf16>, vector<256x128xf32> -> vector<256x128xf32>
    %9 = arith.addf %3, %8 : vector<256x128xf32>
    %c0_8 = arith.constant 0 : index
    %c0_9 = arith.constant 0 : index
    %10 = vector.load %arg8[%c0_8, %c0_9] : memref<256x128xf32, #tpu.memory_space<vmem>>, vector<256x128xf32>
    tpu.vector_store %arg8[%c0_8, %c0_9], %9 {strides = array<i32>} : memref<256x128xf32, #tpu.memory_space<vmem>>, vector<256x128xf32>,
    %c0_i32_10 = arith.constant 0 : i32
    %11 = arith.cmpi eq, %arg2, %c0_i32_10 : i32
    %12 = arith.extui %11 : i1 to i32
    %c0_i32_11 = arith.constant 0 : i32
    %13 = arith.cmpi ne, %12, %c0_i32_11 : i32
    scf.if %13 {
      %c0_12 = arith.constant 0 : index
      %c0_13 = arith.constant 0 : index
      %14 = vector.load %arg8[%c0_12, %c0_13] : memref<256x128xf32, #tpu.memory_space<vmem>>, vector<256x128xf32>
      %c0_14 = arith.constant 0 : index
      %c0_15 = arith.constant 0 : index
      %15 = vector.load %arg5[%c0_14, %c0_15] : memref<1x128xf32, #tpu.memory_space<vmem>>, vector<1x128xf32>
      %16 = vector.broadcast %15 : vector<1x128xf32> to vector<256x128xf32>
      %17 = arith.mulf %14, %16 : vector<256x128xf32>
      %c0_16 = arith.constant 0 : index
      %c0_17 = arith.constant 0 : index
      %18 = vector.load %arg6[%c0_16, %c0_17] : memref<1x128xf32, #tpu.memory_space<vmem>>, vector<1x128xf32>
      %19 = vector.broadcast %18 : vector<1x128xf32> to vector<256x128xf32>
      %20 = arith.addf %17, %19 : vector<256x128xf32>
      %cst_18 = arith.constant 0.000000e+00 : f32
      %cst_19 = arith.constant 2.000000e+01 : f32
      %21 = vector.broadcast %cst_18 : f32 to vector<256x128xf32>
      %22 = arith.maximumf %21, %20 : vector<256x128xf32>
      %23 = vector.broadcast %cst_19 : f32 to vector<256x128xf32>
      %24 = arith.minimumf %23, %22 : vector<256x128xf32>
      %25 = arith.truncf %24 : vector<256x128xf32> to vector<256x128xbf16>
      %c0_20 = arith.constant 0 : index
      %c0_21 = arith.constant 0 : index
      %26 = vector.load %arg7[%c0_20, %c0_21] : memref<256x128xbf16, #tpu.memory_space<vmem>>, vector<256x128xbf16>
      tpu.vector_store %arg7[%c0_20, %c0_21], %25 {strides = array<i32>} : memref<256x128xbf16, #tpu.memory_space<vmem>>, vector<256x128xbf16>,
    } else {
    }
    return
  }
  func.func @transform_0(%arg0: i32, %arg1: i32, %arg2: i32) -> (i32, i32, i32) {
    %c0_i32 = arith.constant 0 : i32
    %c0_i32_0 = arith.constant 0 : i32
    return %c0_i32, %arg0, %arg2 : i32, i32, i32
  }
  func.func @transform_1(%arg0: i32, %arg1: i32, %arg2: i32) -> (i32, i32, i32) {
    %c0_i32 = arith.constant 0 : i32
    %c0_i32_0 = arith.constant 0 : i32
    return %c0_i32, %arg2, %arg1 : i32, i32, i32
  }
  func.func @transform_2(%arg0: i32, %arg1: i32, %arg2: i32) -> (i32, i32) {
    %c0_i32 = arith.constant 0 : i32
    %c0_i32_0 = arith.constant 0 : i32
    return %c0_i32, %arg1 : i32, i32
  }
  func.func @transform_3(%arg0: i32, %arg1: i32, %arg2: i32) -> (i32, i32) {
    %c0_i32 = arith.constant 0 : i32
    %c0_i32_0 = arith.constant 0 : i32
    return %c0_i32, %arg1 : i32, i32
  }
  func.func @transform_4(%arg0: i32, %arg1: i32, %arg2: i32) -> (i32, i32) {
    %c0_i32 = arith.constant 0 : i32
    return %arg0, %arg1 : i32, i32
  }
}

module attributes {stable_mosaic.version = 11 : i64} {
  func.func @_matmul_affine_kernel(%arg0: i32, %arg1: i32, %arg2: i32, %arg3: memref<1x16x512xbf16, #tpu.memory_space<vmem>>, %arg4: memref<1x512x128xbf16, #tpu.memory_space<vmem>>, %arg5: memref<1x128xf32, #tpu.memory_space<vmem>>, %arg6: memref<1x128xf32, #tpu.memory_space<vmem>>, %arg7: memref<16x128xbf16, #tpu.memory_space<vmem>>, %arg8: memref<16x128xf32, #tpu.memory_space<vmem>>) attributes {dimension_semantics = [#tpu.dimension_semantics<parallel>, #tpu.dimension_semantics<parallel>, #tpu.dimension_semantics<arbitrary>], iteration_bounds = array<i64: 1, 1, 15>, scalar_prefetch = 0 : i64, scratch_operands = 1 : i64, tpu.core_type = #tpu.core_type<tc>, window_params = [{transform_indices = @transform_0, window_bounds = array<i64: 1, 16, 512>}, {transform_indices = @transform_1, window_bounds = array<i64: 1, 512, 128>}, {transform_indices = @transform_2, window_bounds = array<i64: 1, 128>}, {transform_indices = @transform_3, window_bounds = array<i64: 1, 128>}, {transform_indices = @transform_4, window_bounds = array<i64: 16, 128>}]} {
    %c0_i32 = arith.constant 0 : i32
    %0 = arith.cmpi eq, %arg2, %c0_i32 : i32
    %1 = arith.extui %0 : i1 to i32
    %c0_i32_0 = arith.constant 0 : i32
    %2 = arith.cmpi ne, %1, %c0_i32_0 : i32
    scf.if %2 {
      %cst_11 = arith.constant 0.000000e+00 : f32
      %14 = vector.broadcast %cst_11 : f32 to vector<16x128xf32>
      %c0_12 = arith.constant 0 : index
      %c0_13 = arith.constant 0 : index
      %15 = vector.load %arg8[%c0_12, %c0_13] : memref<16x128xf32, #tpu.memory_space<vmem>>, vector<16x128xf32>
      tpu.vector_store %arg8[%c0_12, %c0_13], %14 {strides = array<i32>} : memref<16x128xf32, #tpu.memory_space<vmem>>, vector<16x128xf32>,
    } else {
    }
    %c0 = arith.constant 0 : index
    %c0_1 = arith.constant 0 : index
    %3 = vector.load %arg8[%c0, %c0_1] : memref<16x128xf32, #tpu.memory_space<vmem>>, vector<16x128xf32>
    %c0_2 = arith.constant 0 : index
    %c0_3 = arith.constant 0 : index
    %c0_4 = arith.constant 0 : index
    %4 = vector.load %arg3[%c0_2, %c0_3, %c0_4] : memref<1x16x512xbf16, #tpu.memory_space<vmem>>, vector<1x16x512xbf16>
    %5 = vector.shape_cast %4 : vector<1x16x512xbf16> to vector<16x512xbf16>
    %c0_5 = arith.constant 0 : index
    %c0_6 = arith.constant 0 : index
    %c0_7 = arith.constant 0 : index
    %6 = vector.load %arg4[%c0_5, %c0_6, %c0_7] : memref<1x512x128xbf16, #tpu.memory_space<vmem>>, vector<1x512x128xbf16>
    %7 = vector.shape_cast %6 : vector<1x512x128xbf16> to vector<512x128xbf16>
    %cst = arith.constant dense<0.000000e+00> : vector<16x128xf32>
    %8 = tpu.matmul %5, %7, %cst {dimension_numbers = #tpu.dot_dimension_numbers<[1], [0], [0], [1], [0, 0, 1, 1], [], []>} : vector<16x512xbf16>, vector<512x128xbf16>, vector<16x128xf32> -> vector<16x128xf32>
    %9 = arith.addf %3, %8 : vector<16x128xf32>
    %c0_8 = arith.constant 0 : index
    %c0_9 = arith.constant 0 : index
    %10 = vector.load %arg8[%c0_8, %c0_9] : memref<16x128xf32, #tpu.memory_space<vmem>>, vector<16x128xf32>
    tpu.vector_store %arg8[%c0_8, %c0_9], %9 {strides = array<i32>} : memref<16x128xf32, #tpu.memory_space<vmem>>, vector<16x128xf32>,
    %c14_i32 = arith.constant 14 : i32
    %11 = arith.cmpi eq, %arg2, %c14_i32 : i32
    %12 = arith.extui %11 : i1 to i32
    %c0_i32_10 = arith.constant 0 : i32
    %13 = arith.cmpi ne, %12, %c0_i32_10 : i32
    scf.if %13 {
      %c0_11 = arith.constant 0 : index
      %c0_12 = arith.constant 0 : index
      %14 = vector.load %arg8[%c0_11, %c0_12] : memref<16x128xf32, #tpu.memory_space<vmem>>, vector<16x128xf32>
      %c0_13 = arith.constant 0 : index
      %c0_14 = arith.constant 0 : index
      %15 = vector.load %arg5[%c0_13, %c0_14] : memref<1x128xf32, #tpu.memory_space<vmem>>, vector<1x128xf32>
      %16 = vector.broadcast %15 : vector<1x128xf32> to vector<16x128xf32>
      %17 = arith.mulf %14, %16 : vector<16x128xf32>
      %c0_15 = arith.constant 0 : index
      %c0_16 = arith.constant 0 : index
      %18 = vector.load %arg6[%c0_15, %c0_16] : memref<1x128xf32, #tpu.memory_space<vmem>>, vector<1x128xf32>
      %19 = vector.broadcast %18 : vector<1x128xf32> to vector<16x128xf32>
      %20 = arith.addf %17, %19 : vector<16x128xf32>
      %cst_17 = arith.constant 0.000000e+00 : f32
      %cst_18 = arith.constant 2.000000e+01 : f32
      %21 = vector.broadcast %cst_17 : f32 to vector<16x128xf32>
      %22 = arith.maximumf %21, %20 : vector<16x128xf32>
      %23 = vector.broadcast %cst_18 : f32 to vector<16x128xf32>
      %24 = arith.minimumf %23, %22 : vector<16x128xf32>
      %25 = arith.truncf %24 : vector<16x128xf32> to vector<16x128xbf16>
      %c0_19 = arith.constant 0 : index
      %c0_20 = arith.constant 0 : index
      %26 = vector.load %arg7[%c0_19, %c0_20] : memref<16x128xbf16, #tpu.memory_space<vmem>>, vector<16x128xbf16>
      tpu.vector_store %arg7[%c0_19, %c0_20], %25 {strides = array<i32>} : memref<16x128xbf16, #tpu.memory_space<vmem>>, vector<16x128xbf16>,
    } else {
    }
    return
  }
  func.func @transform_0(%arg0: i32, %arg1: i32, %arg2: i32) -> (i32, i32, i32) {
    %c0_i32 = arith.constant 0 : i32
    %c0_i32_0 = arith.constant 0 : i32
    return %c0_i32, %arg0, %arg2 : i32, i32, i32
  }
  func.func @transform_1(%arg0: i32, %arg1: i32, %arg2: i32) -> (i32, i32, i32) {
    %c0_i32 = arith.constant 0 : i32
    %c0_i32_0 = arith.constant 0 : i32
    return %c0_i32, %arg2, %arg1 : i32, i32, i32
  }
  func.func @transform_2(%arg0: i32, %arg1: i32, %arg2: i32) -> (i32, i32) {
    %c0_i32 = arith.constant 0 : i32
    %c0_i32_0 = arith.constant 0 : i32
    return %c0_i32, %arg1 : i32, i32
  }
  func.func @transform_3(%arg0: i32, %arg1: i32, %arg2: i32) -> (i32, i32) {
    %c0_i32 = arith.constant 0 : i32
    %c0_i32_0 = arith.constant 0 : i32
    return %c0_i32, %arg1 : i32, i32
  }
  func.func @transform_4(%arg0: i32, %arg1: i32, %arg2: i32) -> (i32, i32) {
    %c0_i32 = arith.constant 0 : i32
    return %arg0, %arg1 : i32, i32
  }
}

module attributes {stable_mosaic.version = 11 : i64} {
  func.func @_matmul_affine_kernel(%arg0: i32, %arg1: i32, %arg2: i32, %arg3: memref<1x16x128xbf16, #tpu.memory_space<vmem>>, %arg4: memref<1x128x512xbf16, #tpu.memory_space<vmem>>, %arg5: memref<1x512xf32, #tpu.memory_space<vmem>>, %arg6: memref<1x512xf32, #tpu.memory_space<vmem>>, %arg7: memref<16x512xbf16, #tpu.memory_space<vmem>>, %arg8: memref<16x512xf32, #tpu.memory_space<vmem>>) attributes {dimension_semantics = [#tpu.dimension_semantics<parallel>, #tpu.dimension_semantics<parallel>, #tpu.dimension_semantics<arbitrary>], iteration_bounds = array<i64: 1, 2, 1>, scalar_prefetch = 0 : i64, scratch_operands = 1 : i64, tpu.core_type = #tpu.core_type<tc>, window_params = [{transform_indices = @transform_0, window_bounds = array<i64: 1, 16, 128>}, {transform_indices = @transform_1, window_bounds = array<i64: 1, 128, 512>}, {transform_indices = @transform_2, window_bounds = array<i64: 1, 512>}, {transform_indices = @transform_3, window_bounds = array<i64: 1, 512>}, {transform_indices = @transform_4, window_bounds = array<i64: 16, 512>}]} {
    %c0_i32 = arith.constant 0 : i32
    %0 = arith.cmpi eq, %arg2, %c0_i32 : i32
    %1 = arith.extui %0 : i1 to i32
    %c0_i32_0 = arith.constant 0 : i32
    %2 = arith.cmpi ne, %1, %c0_i32_0 : i32
    scf.if %2 {
      %cst_12 = arith.constant 0.000000e+00 : f32
      %14 = vector.broadcast %cst_12 : f32 to vector<16x512xf32>
      %c0_13 = arith.constant 0 : index
      %c0_14 = arith.constant 0 : index
      %15 = vector.load %arg8[%c0_13, %c0_14] : memref<16x512xf32, #tpu.memory_space<vmem>>, vector<16x512xf32>
      tpu.vector_store %arg8[%c0_13, %c0_14], %14 {strides = array<i32>} : memref<16x512xf32, #tpu.memory_space<vmem>>, vector<16x512xf32>,
    } else {
    }
    %c0 = arith.constant 0 : index
    %c0_1 = arith.constant 0 : index
    %3 = vector.load %arg8[%c0, %c0_1] : memref<16x512xf32, #tpu.memory_space<vmem>>, vector<16x512xf32>
    %c0_2 = arith.constant 0 : index
    %c0_3 = arith.constant 0 : index
    %c0_4 = arith.constant 0 : index
    %4 = vector.load %arg3[%c0_2, %c0_3, %c0_4] : memref<1x16x128xbf16, #tpu.memory_space<vmem>>, vector<1x16x128xbf16>
    %5 = vector.shape_cast %4 : vector<1x16x128xbf16> to vector<16x128xbf16>
    %c0_5 = arith.constant 0 : index
    %c0_6 = arith.constant 0 : index
    %c0_7 = arith.constant 0 : index
    %6 = vector.load %arg4[%c0_5, %c0_6, %c0_7] : memref<1x128x512xbf16, #tpu.memory_space<vmem>>, vector<1x128x512xbf16>
    %7 = vector.shape_cast %6 : vector<1x128x512xbf16> to vector<128x512xbf16>
    %cst = arith.constant dense<0.000000e+00> : vector<16x512xf32>
    %8 = tpu.matmul %5, %7, %cst {dimension_numbers = #tpu.dot_dimension_numbers<[1], [0], [0], [1], [0, 0, 1, 1], [], []>} : vector<16x128xbf16>, vector<128x512xbf16>, vector<16x512xf32> -> vector<16x512xf32>
    %9 = arith.addf %3, %8 : vector<16x512xf32>
    %c0_8 = arith.constant 0 : index
    %c0_9 = arith.constant 0 : index
    %10 = vector.load %arg8[%c0_8, %c0_9] : memref<16x512xf32, #tpu.memory_space<vmem>>, vector<16x512xf32>
    tpu.vector_store %arg8[%c0_8, %c0_9], %9 {strides = array<i32>} : memref<16x512xf32, #tpu.memory_space<vmem>>, vector<16x512xf32>,
    %c0_i32_10 = arith.constant 0 : i32
    %11 = arith.cmpi eq, %arg2, %c0_i32_10 : i32
    %12 = arith.extui %11 : i1 to i32
    %c0_i32_11 = arith.constant 0 : i32
    %13 = arith.cmpi ne, %12, %c0_i32_11 : i32
    scf.if %13 {
      %c0_12 = arith.constant 0 : index
      %c0_13 = arith.constant 0 : index
      %14 = vector.load %arg8[%c0_12, %c0_13] : memref<16x512xf32, #tpu.memory_space<vmem>>, vector<16x512xf32>
      %c0_14 = arith.constant 0 : index
      %c0_15 = arith.constant 0 : index
      %15 = vector.load %arg5[%c0_14, %c0_15] : memref<1x512xf32, #tpu.memory_space<vmem>>, vector<1x512xf32>
      %16 = vector.broadcast %15 : vector<1x512xf32> to vector<16x512xf32>
      %17 = arith.mulf %14, %16 : vector<16x512xf32>
      %c0_16 = arith.constant 0 : index
      %c0_17 = arith.constant 0 : index
      %18 = vector.load %arg6[%c0_16, %c0_17] : memref<1x512xf32, #tpu.memory_space<vmem>>, vector<1x512xf32>
      %19 = vector.broadcast %18 : vector<1x512xf32> to vector<16x512xf32>
      %20 = arith.addf %17, %19 : vector<16x512xf32>
      %21 = arith.truncf %20 : vector<16x512xf32> to vector<16x512xbf16>
      %c0_18 = arith.constant 0 : index
      %c0_19 = arith.constant 0 : index
      %22 = vector.load %arg7[%c0_18, %c0_19] : memref<16x512xbf16, #tpu.memory_space<vmem>>, vector<16x512xbf16>
      tpu.vector_store %arg7[%c0_18, %c0_19], %21 {strides = array<i32>} : memref<16x512xbf16, #tpu.memory_space<vmem>>, vector<16x512xbf16>,
    } else {
    }
    return
  }
  func.func @transform_0(%arg0: i32, %arg1: i32, %arg2: i32) -> (i32, i32, i32) {
    %c0_i32 = arith.constant 0 : i32
    %c0_i32_0 = arith.constant 0 : i32
    return %c0_i32, %arg0, %arg2 : i32, i32, i32
  }
  func.func @transform_1(%arg0: i32, %arg1: i32, %arg2: i32) -> (i32, i32, i32) {
    %c0_i32 = arith.constant 0 : i32
    %c0_i32_0 = arith.constant 0 : i32
    return %c0_i32, %arg2, %arg1 : i32, i32, i32
  }
  func.func @transform_2(%arg0: i32, %arg1: i32, %arg2: i32) -> (i32, i32) {
    %c0_i32 = arith.constant 0 : i32
    %c0_i32_0 = arith.constant 0 : i32
    return %c0_i32, %arg1 : i32, i32
  }
  func.func @transform_3(%arg0: i32, %arg1: i32, %arg2: i32) -> (i32, i32) {
    %c0_i32 = arith.constant 0 : i32
    %c0_i32_0 = arith.constant 0 : i32
    return %c0_i32, %arg1 : i32, i32
  }
  func.func @transform_4(%arg0: i32, %arg1: i32, %arg2: i32) -> (i32, i32) {
    %c0_i32 = arith.constant 0 : i32
    return %arg0, %arg1 : i32, i32
  }
}

module attributes {stable_mosaic.version = 11 : i64} {
  func.func @_lstm_dir_kernel(%arg0: i32, %arg1: i32, %arg2: memref<8x2x512xbf16, #tpu.memory_space<vmem>>, %arg3: memref<2x128x512xbf16, #tpu.memory_space<any>>, %arg4: memref<1x8x2x128xbf16, #tpu.memory_space<vmem>>, %arg5: memref<128x512xbf16, #tpu.memory_space<vmem>>, %arg6: memref<2x128xf32, #tpu.memory_space<vmem>>, %arg7: memref<2x128xf32, #tpu.memory_space<vmem>>, %arg8: memref<!tpu.dma_semaphore, #tpu.memory_space<semaphore_mem>>) attributes {dimension_semantics = [#tpu.dimension_semantics<parallel>, #tpu.dimension_semantics<arbitrary>], iteration_bounds = array<i64: 2, 1>, scalar_prefetch = 0 : i64, scratch_operands = 4 : i64, tpu.core_type = #tpu.core_type<tc>, window_params = [{transform_indices = @transform_0, window_bounds = array<i64: 8, 2, 512>}, {}, {transform_indices = @transform_2, window_bounds = array<i64: 1, 8, 2, 128>}]} {
    %c0_i32 = arith.constant 0 : i32
    %0 = arith.cmpi eq, %arg1, %c0_i32 : i32
    %1 = arith.extui %0 : i1 to i32
    %c0_i32_0 = arith.constant 0 : i32
    %2 = arith.cmpi ne, %1, %c0_i32_0 : i32
    scf.if %2 {
      %c0_i32_168 = arith.constant 0 : i32
      %c0_i32_169 = arith.constant 0 : i32
      %371 = tpu.memref_slice %arg3[%arg0, %c0_i32_168, %c0_i32_169] : memref<2x128x512xbf16, #tpu.memory_space<any>> -> memref<1x128x512xbf16, #tpu.memory_space<any>>
      %372 = tpu.memref_squeeze %371 : memref<1x128x512xbf16, #tpu.memory_space<any>> -> memref<128x512xbf16, #tpu.memory_space<any>>
      tpu.enqueue_dma source(%372 : memref<128x512xbf16, #tpu.memory_space<any>>) target(%arg5 : memref<128x512xbf16, #tpu.memory_space<vmem>>) target_semaphore(%arg8 : memref<!tpu.dma_semaphore, #tpu.memory_space<semaphore_mem>>)
      %c0_i32_170 = arith.constant 0 : i32
      %c0_i32_171 = arith.constant 0 : i32
      %373 = tpu.memref_slice %arg3[%arg0, %c0_i32_170, %c0_i32_171] : memref<2x128x512xbf16, #tpu.memory_space<any>> -> memref<1x128x512xbf16, #tpu.memory_space<any>>
      %374 = tpu.memref_squeeze %373 : memref<1x128x512xbf16, #tpu.memory_space<any>> -> memref<128x512xbf16, #tpu.memory_space<any>>
      tpu.wait_dma2 semaphore(%arg8 : memref<!tpu.dma_semaphore, #tpu.memory_space<semaphore_mem>>) src(%374 : memref<128x512xbf16, #tpu.memory_space<any>>) dst(%arg5 : memref<128x512xbf16, #tpu.memory_space<vmem>>)
      %cst_172 = arith.constant 0.000000e+00 : f32
      %375 = vector.broadcast %cst_172 : f32 to vector<2x128xf32>
      %c0_173 = arith.constant 0 : index
      %c0_174 = arith.constant 0 : index
      %376 = vector.load %arg6[%c0_173, %c0_174] : memref<2x128xf32, #tpu.memory_space<vmem>>, vector<2x128xf32>
      tpu.vector_store %arg6[%c0_173, %c0_174], %375 {strides = array<i32>} : memref<2x128xf32, #tpu.memory_space<vmem>>, vector<2x128xf32>,
      %cst_175 = arith.constant 0.000000e+00 : f32
      %377 = vector.broadcast %cst_175 : f32 to vector<2x128xf32>
      %c0_176 = arith.constant 0 : index
      %c0_177 = arith.constant 0 : index
      %378 = vector.load %arg7[%c0_176, %c0_177] : memref<2x128xf32, #tpu.memory_space<vmem>>, vector<2x128xf32>
      tpu.vector_store %arg7[%c0_176, %c0_177], %377 {strides = array<i32>} : memref<2x128xf32, #tpu.memory_space<vmem>>, vector<2x128xf32>,
    } else {
    }
    %c0_i32_1 = arith.constant 0 : i32
    %c2_i32 = arith.constant 2 : i32
    %3 = arith.muli %c2_i32, %c0_i32_1 : i32
    %c7_i32 = arith.constant 7 : i32
    %4 = arith.subi %c7_i32, %3 : i32
    %5 = arith.muli %arg0, %4 : i32
    %6 = arith.addi %c0_i32_1, %5 : i32
    %7 = arith.index_cast %6 : i32 to index
    %c0 = arith.constant 0 : index
    %c0_2 = arith.constant 0 : index
    %8 = vector.load %arg2[%7, %c0, %c0_2] : memref<8x2x512xbf16, #tpu.memory_space<vmem>>, vector<1x2x512xbf16>
    %9 = vector.shape_cast %8 : vector<1x2x512xbf16> to vector<2x512xbf16>
    %10 = arith.extf %9 : vector<2x512xbf16> to vector<2x512xf32>
    %c0_3 = arith.constant 0 : index
    %c0_4 = arith.constant 0 : index
    %11 = vector.load %arg6[%c0_3, %c0_4] : memref<2x128xf32, #tpu.memory_space<vmem>>, vector<2x128xf32>
    %12 = arith.truncf %11 : vector<2x128xf32> to vector<2x128xbf16>
    %c0_5 = arith.constant 0 : index
    %c0_6 = arith.constant 0 : index
    %13 = vector.load %arg5[%c0_5, %c0_6] : memref<128x512xbf16, #tpu.memory_space<vmem>>, vector<128x512xbf16>
    %cst = arith.constant dense<0.000000e+00> : vector<2x512xf32>
    %14 = tpu.matmul %12, %13, %cst {dimension_numbers = #tpu.dot_dimension_numbers<[1], [0], [0], [1], [0, 0, 1, 1], [], []>} : vector<2x128xbf16>, vector<128x512xbf16>, vector<2x512xf32> -> vector<2x512xf32>
    %15 = arith.addf %10, %14 : vector<2x512xf32>
    %16 = vector.extract_strided_slice %15 {offsets = [0, 0], sizes = [2, 128], strides = [1, 1]} : vector<2x512xf32> to vector<2x128xf32>
    %17 = arith.negf %16 : vector<2x128xf32>
    %18 = math.exp %17 : vector<2x128xf32>
    %cst_7 = arith.constant 1.000000e+00 : f32
    %19 = vector.broadcast %cst_7 : f32 to vector<2x128xf32>
    %20 = arith.addf %19, %18 : vector<2x128xf32>
    %21 = arith.divf %19, %20 : vector<2x128xf32>
    %22 = vector.extract_strided_slice %15 {offsets = [0, 128], sizes = [2, 128], strides = [1, 1]} : vector<2x512xf32> to vector<2x128xf32>
    %23 = arith.negf %22 : vector<2x128xf32>
    %24 = math.exp %23 : vector<2x128xf32>
    %cst_8 = arith.constant 1.000000e+00 : f32
    %25 = vector.broadcast %cst_8 : f32 to vector<2x128xf32>
    %26 = arith.addf %25, %24 : vector<2x128xf32>
    %27 = arith.divf %25, %26 : vector<2x128xf32>
    %28 = vector.extract_strided_slice %15 {offsets = [0, 256], sizes = [2, 128], strides = [1, 1]} : vector<2x512xf32> to vector<2x128xf32>
    %29 = math.tanh %28 : vector<2x128xf32>
    %30 = vector.extract_strided_slice %15 {offsets = [0, 384], sizes = [2, 128], strides = [1, 1]} : vector<2x512xf32> to vector<2x128xf32>
    %31 = arith.negf %30 : vector<2x128xf32>
    %32 = math.exp %31 : vector<2x128xf32>
    %cst_9 = arith.constant 1.000000e+00 : f32
    %33 = vector.broadcast %cst_9 : f32 to vector<2x128xf32>
    %34 = arith.addf %33, %32 : vector<2x128xf32>
    %35 = arith.divf %33, %34 : vector<2x128xf32>
    %c0_10 = arith.constant 0 : index
    %c0_11 = arith.constant 0 : index
    %36 = vector.load %arg7[%c0_10, %c0_11] : memref<2x128xf32, #tpu.memory_space<vmem>>, vector<2x128xf32>
    %37 = arith.mulf %27, %36 : vector<2x128xf32>
    %38 = arith.mulf %21, %29 : vector<2x128xf32>
    %39 = arith.addf %37, %38 : vector<2x128xf32>
    %40 = math.tanh %39 : vector<2x128xf32>
    %41 = arith.mulf %35, %40 : vector<2x128xf32>
    %c0_12 = arith.constant 0 : index
    %c0_13 = arith.constant 0 : index
    %42 = vector.load %arg7[%c0_12, %c0_13] : memref<2x128xf32, #tpu.memory_space<vmem>>, vector<2x128xf32>
    tpu.vector_store %arg7[%c0_12, %c0_13], %39 {strides = array<i32>} : memref<2x128xf32, #tpu.memory_space<vmem>>, vector<2x128xf32>,
    %c0_14 = arith.constant 0 : index
    %c0_15 = arith.constant 0 : index
    %43 = vector.load %arg6[%c0_14, %c0_15] : memref<2x128xf32, #tpu.memory_space<vmem>>, vector<2x128xf32>
    tpu.vector_store %arg6[%c0_14, %c0_15], %41 {strides = array<i32>} : memref<2x128xf32, #tpu.memory_space<vmem>>, vector<2x128xf32>,
    %44 = arith.truncf %41 : vector<2x128xf32> to vector<2x128xbf16>
    %c0_16 = arith.constant 0 : index
    %45 = arith.index_cast %6 : i32 to index
    %c0_17 = arith.constant 0 : index
    %c0_18 = arith.constant 0 : index
    %46 = vector.load %arg4[%c0_16, %45, %c0_17, %c0_18] : memref<1x8x2x128xbf16, #tpu.memory_space<vmem>>, vector<1x1x2x128xbf16>
    %47 = vector.shape_cast %46 : vector<1x1x2x128xbf16> to vector<2x128xbf16>
    %48 = vector.shape_cast %44 : vector<2x128xbf16> to vector<1x1x2x128xbf16>
    tpu.vector_store %arg4[%c0_16, %45, %c0_17, %c0_18], %48 {strides = array<i32>} : memref<1x8x2x128xbf16, #tpu.memory_space<vmem>>, vector<1x1x2x128xbf16>,
    %c1_i32 = arith.constant 1 : i32
    %c2_i32_19 = arith.constant 2 : i32
    %49 = arith.muli %c2_i32_19, %c1_i32 : i32
    %c7_i32_20 = arith.constant 7 : i32
    %50 = arith.subi %c7_i32_20, %49 : i32
    %51 = arith.muli %arg0, %50 : i32
    %52 = arith.addi %c1_i32, %51 : i32
    %53 = arith.index_cast %52 : i32 to index
    %c0_21 = arith.constant 0 : index
    %c0_22 = arith.constant 0 : index
    %54 = vector.load %arg2[%53, %c0_21, %c0_22] : memref<8x2x512xbf16, #tpu.memory_space<vmem>>, vector<1x2x512xbf16>
    %55 = vector.shape_cast %54 : vector<1x2x512xbf16> to vector<2x512xbf16>
    %56 = arith.extf %55 : vector<2x512xbf16> to vector<2x512xf32>
    %c0_23 = arith.constant 0 : index
    %c0_24 = arith.constant 0 : index
    %57 = vector.load %arg6[%c0_23, %c0_24] : memref<2x128xf32, #tpu.memory_space<vmem>>, vector<2x128xf32>
    %58 = arith.truncf %57 : vector<2x128xf32> to vector<2x128xbf16>
    %c0_25 = arith.constant 0 : index
    %c0_26 = arith.constant 0 : index
    %59 = vector.load %arg5[%c0_25, %c0_26] : memref<128x512xbf16, #tpu.memory_space<vmem>>, vector<128x512xbf16>
    %cst_27 = arith.constant dense<0.000000e+00> : vector<2x512xf32>
    %60 = tpu.matmul %58, %59, %cst_27 {dimension_numbers = #tpu.dot_dimension_numbers<[1], [0], [0], [1], [0, 0, 1, 1], [], []>} : vector<2x128xbf16>, vector<128x512xbf16>, vector<2x512xf32> -> vector<2x512xf32>
    %61 = arith.addf %56, %60 : vector<2x512xf32>
    %62 = vector.extract_strided_slice %61 {offsets = [0, 0], sizes = [2, 128], strides = [1, 1]} : vector<2x512xf32> to vector<2x128xf32>
    %63 = arith.negf %62 : vector<2x128xf32>
    %64 = math.exp %63 : vector<2x128xf32>
    %cst_28 = arith.constant 1.000000e+00 : f32
    %65 = vector.broadcast %cst_28 : f32 to vector<2x128xf32>
    %66 = arith.addf %65, %64 : vector<2x128xf32>
    %67 = arith.divf %65, %66 : vector<2x128xf32>
    %68 = vector.extract_strided_slice %61 {offsets = [0, 128], sizes = [2, 128], strides = [1, 1]} : vector<2x512xf32> to vector<2x128xf32>
    %69 = arith.negf %68 : vector<2x128xf32>
    %70 = math.exp %69 : vector<2x128xf32>
    %cst_29 = arith.constant 1.000000e+00 : f32
    %71 = vector.broadcast %cst_29 : f32 to vector<2x128xf32>
    %72 = arith.addf %71, %70 : vector<2x128xf32>
    %73 = arith.divf %71, %72 : vector<2x128xf32>
    %74 = vector.extract_strided_slice %61 {offsets = [0, 256], sizes = [2, 128], strides = [1, 1]} : vector<2x512xf32> to vector<2x128xf32>
    %75 = math.tanh %74 : vector<2x128xf32>
    %76 = vector.extract_strided_slice %61 {offsets = [0, 384], sizes = [2, 128], strides = [1, 1]} : vector<2x512xf32> to vector<2x128xf32>
    %77 = arith.negf %76 : vector<2x128xf32>
    %78 = math.exp %77 : vector<2x128xf32>
    %cst_30 = arith.constant 1.000000e+00 : f32
    %79 = vector.broadcast %cst_30 : f32 to vector<2x128xf32>
    %80 = arith.addf %79, %78 : vector<2x128xf32>
    %81 = arith.divf %79, %80 : vector<2x128xf32>
    %c0_31 = arith.constant 0 : index
    %c0_32 = arith.constant 0 : index
    %82 = vector.load %arg7[%c0_31, %c0_32] : memref<2x128xf32, #tpu.memory_space<vmem>>, vector<2x128xf32>
    %83 = arith.mulf %73, %82 : vector<2x128xf32>
    %84 = arith.mulf %67, %75 : vector<2x128xf32>
    %85 = arith.addf %83, %84 : vector<2x128xf32>
    %86 = math.tanh %85 : vector<2x128xf32>
    %87 = arith.mulf %81, %86 : vector<2x128xf32>
    %c0_33 = arith.constant 0 : index
    %c0_34 = arith.constant 0 : index
    %88 = vector.load %arg7[%c0_33, %c0_34] : memref<2x128xf32, #tpu.memory_space<vmem>>, vector<2x128xf32>
    tpu.vector_store %arg7[%c0_33, %c0_34], %85 {strides = array<i32>} : memref<2x128xf32, #tpu.memory_space<vmem>>, vector<2x128xf32>,
    %c0_35 = arith.constant 0 : index
    %c0_36 = arith.constant 0 : index
    %89 = vector.load %arg6[%c0_35, %c0_36] : memref<2x128xf32, #tpu.memory_space<vmem>>, vector<2x128xf32>
    tpu.vector_store %arg6[%c0_35, %c0_36], %87 {strides = array<i32>} : memref<2x128xf32, #tpu.memory_space<vmem>>, vector<2x128xf32>,
    %90 = arith.truncf %87 : vector<2x128xf32> to vector<2x128xbf16>
    %c0_37 = arith.constant 0 : index
    %91 = arith.index_cast %52 : i32 to index
    %c0_38 = arith.constant 0 : index
    %c0_39 = arith.constant 0 : index
    %92 = vector.load %arg4[%c0_37, %91, %c0_38, %c0_39] : memref<1x8x2x128xbf16, #tpu.memory_space<vmem>>, vector<1x1x2x128xbf16>
    %93 = vector.shape_cast %92 : vector<1x1x2x128xbf16> to vector<2x128xbf16>
    %94 = vector.shape_cast %90 : vector<2x128xbf16> to vector<1x1x2x128xbf16>
    tpu.vector_store %arg4[%c0_37, %91, %c0_38, %c0_39], %94 {strides = array<i32>} : memref<1x8x2x128xbf16, #tpu.memory_space<vmem>>, vector<1x1x2x128xbf16>,
    %c2_i32_40 = arith.constant 2 : i32
    %c2_i32_41 = arith.constant 2 : i32
    %95 = arith.muli %c2_i32_41, %c2_i32_40 : i32
    %c7_i32_42 = arith.constant 7 : i32
    %96 = arith.subi %c7_i32_42, %95 : i32
    %97 = arith.muli %arg0, %96 : i32
    %98 = arith.addi %c2_i32_40, %97 : i32
    %99 = arith.index_cast %98 : i32 to index
    %c0_43 = arith.constant 0 : index
    %c0_44 = arith.constant 0 : index
    %100 = vector.load %arg2[%99, %c0_43, %c0_44] : memref<8x2x512xbf16, #tpu.memory_space<vmem>>, vector<1x2x512xbf16>
    %101 = vector.shape_cast %100 : vector<1x2x512xbf16> to vector<2x512xbf16>
    %102 = arith.extf %101 : vector<2x512xbf16> to vector<2x512xf32>
    %c0_45 = arith.constant 0 : index
    %c0_46 = arith.constant 0 : index
    %103 = vector.load %arg6[%c0_45, %c0_46] : memref<2x128xf32, #tpu.memory_space<vmem>>, vector<2x128xf32>
    %104 = arith.truncf %103 : vector<2x128xf32> to vector<2x128xbf16>
    %c0_47 = arith.constant 0 : index
    %c0_48 = arith.constant 0 : index
    %105 = vector.load %arg5[%c0_47, %c0_48] : memref<128x512xbf16, #tpu.memory_space<vmem>>, vector<128x512xbf16>
    %cst_49 = arith.constant dense<0.000000e+00> : vector<2x512xf32>
    %106 = tpu.matmul %104, %105, %cst_49 {dimension_numbers = #tpu.dot_dimension_numbers<[1], [0], [0], [1], [0, 0, 1, 1], [], []>} : vector<2x128xbf16>, vector<128x512xbf16>, vector<2x512xf32> -> vector<2x512xf32>
    %107 = arith.addf %102, %106 : vector<2x512xf32>
    %108 = vector.extract_strided_slice %107 {offsets = [0, 0], sizes = [2, 128], strides = [1, 1]} : vector<2x512xf32> to vector<2x128xf32>
    %109 = arith.negf %108 : vector<2x128xf32>
    %110 = math.exp %109 : vector<2x128xf32>
    %cst_50 = arith.constant 1.000000e+00 : f32
    %111 = vector.broadcast %cst_50 : f32 to vector<2x128xf32>
    %112 = arith.addf %111, %110 : vector<2x128xf32>
    %113 = arith.divf %111, %112 : vector<2x128xf32>
    %114 = vector.extract_strided_slice %107 {offsets = [0, 128], sizes = [2, 128], strides = [1, 1]} : vector<2x512xf32> to vector<2x128xf32>
    %115 = arith.negf %114 : vector<2x128xf32>
    %116 = math.exp %115 : vector<2x128xf32>
    %cst_51 = arith.constant 1.000000e+00 : f32
    %117 = vector.broadcast %cst_51 : f32 to vector<2x128xf32>
    %118 = arith.addf %117, %116 : vector<2x128xf32>
    %119 = arith.divf %117, %118 : vector<2x128xf32>
    %120 = vector.extract_strided_slice %107 {offsets = [0, 256], sizes = [2, 128], strides = [1, 1]} : vector<2x512xf32> to vector<2x128xf32>
    %121 = math.tanh %120 : vector<2x128xf32>
    %122 = vector.extract_strided_slice %107 {offsets = [0, 384], sizes = [2, 128], strides = [1, 1]} : vector<2x512xf32> to vector<2x128xf32>
    %123 = arith.negf %122 : vector<2x128xf32>
    %124 = math.exp %123 : vector<2x128xf32>
    %cst_52 = arith.constant 1.000000e+00 : f32
    %125 = vector.broadcast %cst_52 : f32 to vector<2x128xf32>
    %126 = arith.addf %125, %124 : vector<2x128xf32>
    %127 = arith.divf %125, %126 : vector<2x128xf32>
    %c0_53 = arith.constant 0 : index
    %c0_54 = arith.constant 0 : index
    %128 = vector.load %arg7[%c0_53, %c0_54] : memref<2x128xf32, #tpu.memory_space<vmem>>, vector<2x128xf32>
    %129 = arith.mulf %119, %128 : vector<2x128xf32>
    %130 = arith.mulf %113, %121 : vector<2x128xf32>
    %131 = arith.addf %129, %130 : vector<2x128xf32>
    %132 = math.tanh %131 : vector<2x128xf32>
    %133 = arith.mulf %127, %132 : vector<2x128xf32>
    %c0_55 = arith.constant 0 : index
    %c0_56 = arith.constant 0 : index
    %134 = vector.load %arg7[%c0_55, %c0_56] : memref<2x128xf32, #tpu.memory_space<vmem>>, vector<2x128xf32>
    tpu.vector_store %arg7[%c0_55, %c0_56], %131 {strides = array<i32>} : memref<2x128xf32, #tpu.memory_space<vmem>>, vector<2x128xf32>,
    %c0_57 = arith.constant 0 : index
    %c0_58 = arith.constant 0 : index
    %135 = vector.load %arg6[%c0_57, %c0_58] : memref<2x128xf32, #tpu.memory_space<vmem>>, vector<2x128xf32>
    tpu.vector_store %arg6[%c0_57, %c0_58], %133 {strides = array<i32>} : memref<2x128xf32, #tpu.memory_space<vmem>>, vector<2x128xf32>,
    %136 = arith.truncf %133 : vector<2x128xf32> to vector<2x128xbf16>
    %c0_59 = arith.constant 0 : index
    %137 = arith.index_cast %98 : i32 to index
    %c0_60 = arith.constant 0 : index
    %c0_61 = arith.constant 0 : index
    %138 = vector.load %arg4[%c0_59, %137, %c0_60, %c0_61] : memref<1x8x2x128xbf16, #tpu.memory_space<vmem>>, vector<1x1x2x128xbf16>
    %139 = vector.shape_cast %138 : vector<1x1x2x128xbf16> to vector<2x128xbf16>
    %140 = vector.shape_cast %136 : vector<2x128xbf16> to vector<1x1x2x128xbf16>
    tpu.vector_store %arg4[%c0_59, %137, %c0_60, %c0_61], %140 {strides = array<i32>} : memref<1x8x2x128xbf16, #tpu.memory_space<vmem>>, vector<1x1x2x128xbf16>,
    %c3_i32 = arith.constant 3 : i32
    %c2_i32_62 = arith.constant 2 : i32
    %141 = arith.muli %c2_i32_62, %c3_i32 : i32
    %c7_i32_63 = arith.constant 7 : i32
    %142 = arith.subi %c7_i32_63, %141 : i32
    %143 = arith.muli %arg0, %142 : i32
    %144 = arith.addi %c3_i32, %143 : i32
    %145 = arith.index_cast %144 : i32 to index
    %c0_64 = arith.constant 0 : index
    %c0_65 = arith.constant 0 : index
    %146 = vector.load %arg2[%145, %c0_64, %c0_65] : memref<8x2x512xbf16, #tpu.memory_space<vmem>>, vector<1x2x512xbf16>
    %147 = vector.shape_cast %146 : vector<1x2x512xbf16> to vector<2x512xbf16>
    %148 = arith.extf %147 : vector<2x512xbf16> to vector<2x512xf32>
    %c0_66 = arith.constant 0 : index
    %c0_67 = arith.constant 0 : index
    %149 = vector.load %arg6[%c0_66, %c0_67] : memref<2x128xf32, #tpu.memory_space<vmem>>, vector<2x128xf32>
    %150 = arith.truncf %149 : vector<2x128xf32> to vector<2x128xbf16>
    %c0_68 = arith.constant 0 : index
    %c0_69 = arith.constant 0 : index
    %151 = vector.load %arg5[%c0_68, %c0_69] : memref<128x512xbf16, #tpu.memory_space<vmem>>, vector<128x512xbf16>
    %cst_70 = arith.constant dense<0.000000e+00> : vector<2x512xf32>
    %152 = tpu.matmul %150, %151, %cst_70 {dimension_numbers = #tpu.dot_dimension_numbers<[1], [0], [0], [1], [0, 0, 1, 1], [], []>} : vector<2x128xbf16>, vector<128x512xbf16>, vector<2x512xf32> -> vector<2x512xf32>
    %153 = arith.addf %148, %152 : vector<2x512xf32>
    %154 = vector.extract_strided_slice %153 {offsets = [0, 0], sizes = [2, 128], strides = [1, 1]} : vector<2x512xf32> to vector<2x128xf32>
    %155 = arith.negf %154 : vector<2x128xf32>
    %156 = math.exp %155 : vector<2x128xf32>
    %cst_71 = arith.constant 1.000000e+00 : f32
    %157 = vector.broadcast %cst_71 : f32 to vector<2x128xf32>
    %158 = arith.addf %157, %156 : vector<2x128xf32>
    %159 = arith.divf %157, %158 : vector<2x128xf32>
    %160 = vector.extract_strided_slice %153 {offsets = [0, 128], sizes = [2, 128], strides = [1, 1]} : vector<2x512xf32> to vector<2x128xf32>
    %161 = arith.negf %160 : vector<2x128xf32>
    %162 = math.exp %161 : vector<2x128xf32>
    %cst_72 = arith.constant 1.000000e+00 : f32
    %163 = vector.broadcast %cst_72 : f32 to vector<2x128xf32>
    %164 = arith.addf %163, %162 : vector<2x128xf32>
    %165 = arith.divf %163, %164 : vector<2x128xf32>
    %166 = vector.extract_strided_slice %153 {offsets = [0, 256], sizes = [2, 128], strides = [1, 1]} : vector<2x512xf32> to vector<2x128xf32>
    %167 = math.tanh %166 : vector<2x128xf32>
    %168 = vector.extract_strided_slice %153 {offsets = [0, 384], sizes = [2, 128], strides = [1, 1]} : vector<2x512xf32> to vector<2x128xf32>
    %169 = arith.negf %168 : vector<2x128xf32>
    %170 = math.exp %169 : vector<2x128xf32>
    %cst_73 = arith.constant 1.000000e+00 : f32
    %171 = vector.broadcast %cst_73 : f32 to vector<2x128xf32>
    %172 = arith.addf %171, %170 : vector<2x128xf32>
    %173 = arith.divf %171, %172 : vector<2x128xf32>
    %c0_74 = arith.constant 0 : index
    %c0_75 = arith.constant 0 : index
    %174 = vector.load %arg7[%c0_74, %c0_75] : memref<2x128xf32, #tpu.memory_space<vmem>>, vector<2x128xf32>
    %175 = arith.mulf %165, %174 : vector<2x128xf32>
    %176 = arith.mulf %159, %167 : vector<2x128xf32>
    %177 = arith.addf %175, %176 : vector<2x128xf32>
    %178 = math.tanh %177 : vector<2x128xf32>
    %179 = arith.mulf %173, %178 : vector<2x128xf32>
    %c0_76 = arith.constant 0 : index
    %c0_77 = arith.constant 0 : index
    %180 = vector.load %arg7[%c0_76, %c0_77] : memref<2x128xf32, #tpu.memory_space<vmem>>, vector<2x128xf32>
    tpu.vector_store %arg7[%c0_76, %c0_77], %177 {strides = array<i32>} : memref<2x128xf32, #tpu.memory_space<vmem>>, vector<2x128xf32>,
    %c0_78 = arith.constant 0 : index
    %c0_79 = arith.constant 0 : index
    %181 = vector.load %arg6[%c0_78, %c0_79] : memref<2x128xf32, #tpu.memory_space<vmem>>, vector<2x128xf32>
    tpu.vector_store %arg6[%c0_78, %c0_79], %179 {strides = array<i32>} : memref<2x128xf32, #tpu.memory_space<vmem>>, vector<2x128xf32>,
    %182 = arith.truncf %179 : vector<2x128xf32> to vector<2x128xbf16>
    %c0_80 = arith.constant 0 : index
    %183 = arith.index_cast %144 : i32 to index
    %c0_81 = arith.constant 0 : index
    %c0_82 = arith.constant 0 : index
    %184 = vector.load %arg4[%c0_80, %183, %c0_81, %c0_82] : memref<1x8x2x128xbf16, #tpu.memory_space<vmem>>, vector<1x1x2x128xbf16>
    %185 = vector.shape_cast %184 : vector<1x1x2x128xbf16> to vector<2x128xbf16>
    %186 = vector.shape_cast %182 : vector<2x128xbf16> to vector<1x1x2x128xbf16>
    tpu.vector_store %arg4[%c0_80, %183, %c0_81, %c0_82], %186 {strides = array<i32>} : memref<1x8x2x128xbf16, #tpu.memory_space<vmem>>, vector<1x1x2x128xbf16>,
    %c4_i32 = arith.constant 4 : i32
    %c2_i32_83 = arith.constant 2 : i32
    %187 = arith.muli %c2_i32_83, %c4_i32 : i32
    %c7_i32_84 = arith.constant 7 : i32
    %188 = arith.subi %c7_i32_84, %187 : i32
    %189 = arith.muli %arg0, %188 : i32
    %190 = arith.addi %c4_i32, %189 : i32
    %191 = arith.index_cast %190 : i32 to index
    %c0_85 = arith.constant 0 : index
    %c0_86 = arith.constant 0 : index
    %192 = vector.load %arg2[%191, %c0_85, %c0_86] : memref<8x2x512xbf16, #tpu.memory_space<vmem>>, vector<1x2x512xbf16>
    %193 = vector.shape_cast %192 : vector<1x2x512xbf16> to vector<2x512xbf16>
    %194 = arith.extf %193 : vector<2x512xbf16> to vector<2x512xf32>
    %c0_87 = arith.constant 0 : index
    %c0_88 = arith.constant 0 : index
    %195 = vector.load %arg6[%c0_87, %c0_88] : memref<2x128xf32, #tpu.memory_space<vmem>>, vector<2x128xf32>
    %196 = arith.truncf %195 : vector<2x128xf32> to vector<2x128xbf16>
    %c0_89 = arith.constant 0 : index
    %c0_90 = arith.constant 0 : index
    %197 = vector.load %arg5[%c0_89, %c0_90] : memref<128x512xbf16, #tpu.memory_space<vmem>>, vector<128x512xbf16>
    %cst_91 = arith.constant dense<0.000000e+00> : vector<2x512xf32>
    %198 = tpu.matmul %196, %197, %cst_91 {dimension_numbers = #tpu.dot_dimension_numbers<[1], [0], [0], [1], [0, 0, 1, 1], [], []>} : vector<2x128xbf16>, vector<128x512xbf16>, vector<2x512xf32> -> vector<2x512xf32>
    %199 = arith.addf %194, %198 : vector<2x512xf32>
    %200 = vector.extract_strided_slice %199 {offsets = [0, 0], sizes = [2, 128], strides = [1, 1]} : vector<2x512xf32> to vector<2x128xf32>
    %201 = arith.negf %200 : vector<2x128xf32>
    %202 = math.exp %201 : vector<2x128xf32>
    %cst_92 = arith.constant 1.000000e+00 : f32
    %203 = vector.broadcast %cst_92 : f32 to vector<2x128xf32>
    %204 = arith.addf %203, %202 : vector<2x128xf32>
    %205 = arith.divf %203, %204 : vector<2x128xf32>
    %206 = vector.extract_strided_slice %199 {offsets = [0, 128], sizes = [2, 128], strides = [1, 1]} : vector<2x512xf32> to vector<2x128xf32>
    %207 = arith.negf %206 : vector<2x128xf32>
    %208 = math.exp %207 : vector<2x128xf32>
    %cst_93 = arith.constant 1.000000e+00 : f32
    %209 = vector.broadcast %cst_93 : f32 to vector<2x128xf32>
    %210 = arith.addf %209, %208 : vector<2x128xf32>
    %211 = arith.divf %209, %210 : vector<2x128xf32>
    %212 = vector.extract_strided_slice %199 {offsets = [0, 256], sizes = [2, 128], strides = [1, 1]} : vector<2x512xf32> to vector<2x128xf32>
    %213 = math.tanh %212 : vector<2x128xf32>
    %214 = vector.extract_strided_slice %199 {offsets = [0, 384], sizes = [2, 128], strides = [1, 1]} : vector<2x512xf32> to vector<2x128xf32>
    %215 = arith.negf %214 : vector<2x128xf32>
    %216 = math.exp %215 : vector<2x128xf32>
    %cst_94 = arith.constant 1.000000e+00 : f32
    %217 = vector.broadcast %cst_94 : f32 to vector<2x128xf32>
    %218 = arith.addf %217, %216 : vector<2x128xf32>
    %219 = arith.divf %217, %218 : vector<2x128xf32>
    %c0_95 = arith.constant 0 : index
    %c0_96 = arith.constant 0 : index
    %220 = vector.load %arg7[%c0_95, %c0_96] : memref<2x128xf32, #tpu.memory_space<vmem>>, vector<2x128xf32>
    %221 = arith.mulf %211, %220 : vector<2x128xf32>
    %222 = arith.mulf %205, %213 : vector<2x128xf32>
    %223 = arith.addf %221, %222 : vector<2x128xf32>
    %224 = math.tanh %223 : vector<2x128xf32>
    %225 = arith.mulf %219, %224 : vector<2x128xf32>
    %c0_97 = arith.constant 0 : index
    %c0_98 = arith.constant 0 : index
    %226 = vector.load %arg7[%c0_97, %c0_98] : memref<2x128xf32, #tpu.memory_space<vmem>>, vector<2x128xf32>
    tpu.vector_store %arg7[%c0_97, %c0_98], %223 {strides = array<i32>} : memref<2x128xf32, #tpu.memory_space<vmem>>, vector<2x128xf32>,
    %c0_99 = arith.constant 0 : index
    %c0_100 = arith.constant 0 : index
    %227 = vector.load %arg6[%c0_99, %c0_100] : memref<2x128xf32, #tpu.memory_space<vmem>>, vector<2x128xf32>
    tpu.vector_store %arg6[%c0_99, %c0_100], %225 {strides = array<i32>} : memref<2x128xf32, #tpu.memory_space<vmem>>, vector<2x128xf32>,
    %228 = arith.truncf %225 : vector<2x128xf32> to vector<2x128xbf16>
    %c0_101 = arith.constant 0 : index
    %229 = arith.index_cast %190 : i32 to index
    %c0_102 = arith.constant 0 : index
    %c0_103 = arith.constant 0 : index
    %230 = vector.load %arg4[%c0_101, %229, %c0_102, %c0_103] : memref<1x8x2x128xbf16, #tpu.memory_space<vmem>>, vector<1x1x2x128xbf16>
    %231 = vector.shape_cast %230 : vector<1x1x2x128xbf16> to vector<2x128xbf16>
    %232 = vector.shape_cast %228 : vector<2x128xbf16> to vector<1x1x2x128xbf16>
    tpu.vector_store %arg4[%c0_101, %229, %c0_102, %c0_103], %232 {strides = array<i32>} : memref<1x8x2x128xbf16, #tpu.memory_space<vmem>>, vector<1x1x2x128xbf16>,
    %c5_i32 = arith.constant 5 : i32
    %c2_i32_104 = arith.constant 2 : i32
    %233 = arith.muli %c2_i32_104, %c5_i32 : i32
    %c7_i32_105 = arith.constant 7 : i32
    %234 = arith.subi %c7_i32_105, %233 : i32
    %235 = arith.muli %arg0, %234 : i32
    %236 = arith.addi %c5_i32, %235 : i32
    %237 = arith.index_cast %236 : i32 to index
    %c0_106 = arith.constant 0 : index
    %c0_107 = arith.constant 0 : index
    %238 = vector.load %arg2[%237, %c0_106, %c0_107] : memref<8x2x512xbf16, #tpu.memory_space<vmem>>, vector<1x2x512xbf16>
    %239 = vector.shape_cast %238 : vector<1x2x512xbf16> to vector<2x512xbf16>
    %240 = arith.extf %239 : vector<2x512xbf16> to vector<2x512xf32>
    %c0_108 = arith.constant 0 : index
    %c0_109 = arith.constant 0 : index
    %241 = vector.load %arg6[%c0_108, %c0_109] : memref<2x128xf32, #tpu.memory_space<vmem>>, vector<2x128xf32>
    %242 = arith.truncf %241 : vector<2x128xf32> to vector<2x128xbf16>
    %c0_110 = arith.constant 0 : index
    %c0_111 = arith.constant 0 : index
    %243 = vector.load %arg5[%c0_110, %c0_111] : memref<128x512xbf16, #tpu.memory_space<vmem>>, vector<128x512xbf16>
    %cst_112 = arith.constant dense<0.000000e+00> : vector<2x512xf32>
    %244 = tpu.matmul %242, %243, %cst_112 {dimension_numbers = #tpu.dot_dimension_numbers<[1], [0], [0], [1], [0, 0, 1, 1], [], []>} : vector<2x128xbf16>, vector<128x512xbf16>, vector<2x512xf32> -> vector<2x512xf32>
    %245 = arith.addf %240, %244 : vector<2x512xf32>
    %246 = vector.extract_strided_slice %245 {offsets = [0, 0], sizes = [2, 128], strides = [1, 1]} : vector<2x512xf32> to vector<2x128xf32>
    %247 = arith.negf %246 : vector<2x128xf32>
    %248 = math.exp %247 : vector<2x128xf32>
    %cst_113 = arith.constant 1.000000e+00 : f32
    %249 = vector.broadcast %cst_113 : f32 to vector<2x128xf32>
    %250 = arith.addf %249, %248 : vector<2x128xf32>
    %251 = arith.divf %249, %250 : vector<2x128xf32>
    %252 = vector.extract_strided_slice %245 {offsets = [0, 128], sizes = [2, 128], strides = [1, 1]} : vector<2x512xf32> to vector<2x128xf32>
    %253 = arith.negf %252 : vector<2x128xf32>
    %254 = math.exp %253 : vector<2x128xf32>
    %cst_114 = arith.constant 1.000000e+00 : f32
    %255 = vector.broadcast %cst_114 : f32 to vector<2x128xf32>
    %256 = arith.addf %255, %254 : vector<2x128xf32>
    %257 = arith.divf %255, %256 : vector<2x128xf32>
    %258 = vector.extract_strided_slice %245 {offsets = [0, 256], sizes = [2, 128], strides = [1, 1]} : vector<2x512xf32> to vector<2x128xf32>
    %259 = math.tanh %258 : vector<2x128xf32>
    %260 = vector.extract_strided_slice %245 {offsets = [0, 384], sizes = [2, 128], strides = [1, 1]} : vector<2x512xf32> to vector<2x128xf32>
    %261 = arith.negf %260 : vector<2x128xf32>
    %262 = math.exp %261 : vector<2x128xf32>
    %cst_115 = arith.constant 1.000000e+00 : f32
    %263 = vector.broadcast %cst_115 : f32 to vector<2x128xf32>
    %264 = arith.addf %263, %262 : vector<2x128xf32>
    %265 = arith.divf %263, %264 : vector<2x128xf32>
    %c0_116 = arith.constant 0 : index
    %c0_117 = arith.constant 0 : index
    %266 = vector.load %arg7[%c0_116, %c0_117] : memref<2x128xf32, #tpu.memory_space<vmem>>, vector<2x128xf32>
    %267 = arith.mulf %257, %266 : vector<2x128xf32>
    %268 = arith.mulf %251, %259 : vector<2x128xf32>
    %269 = arith.addf %267, %268 : vector<2x128xf32>
    %270 = math.tanh %269 : vector<2x128xf32>
    %271 = arith.mulf %265, %270 : vector<2x128xf32>
    %c0_118 = arith.constant 0 : index
    %c0_119 = arith.constant 0 : index
    %272 = vector.load %arg7[%c0_118, %c0_119] : memref<2x128xf32, #tpu.memory_space<vmem>>, vector<2x128xf32>
    tpu.vector_store %arg7[%c0_118, %c0_119], %269 {strides = array<i32>} : memref<2x128xf32, #tpu.memory_space<vmem>>, vector<2x128xf32>,
    %c0_120 = arith.constant 0 : index
    %c0_121 = arith.constant 0 : index
    %273 = vector.load %arg6[%c0_120, %c0_121] : memref<2x128xf32, #tpu.memory_space<vmem>>, vector<2x128xf32>
    tpu.vector_store %arg6[%c0_120, %c0_121], %271 {strides = array<i32>} : memref<2x128xf32, #tpu.memory_space<vmem>>, vector<2x128xf32>,
    %274 = arith.truncf %271 : vector<2x128xf32> to vector<2x128xbf16>
    %c0_122 = arith.constant 0 : index
    %275 = arith.index_cast %236 : i32 to index
    %c0_123 = arith.constant 0 : index
    %c0_124 = arith.constant 0 : index
    %276 = vector.load %arg4[%c0_122, %275, %c0_123, %c0_124] : memref<1x8x2x128xbf16, #tpu.memory_space<vmem>>, vector<1x1x2x128xbf16>
    %277 = vector.shape_cast %276 : vector<1x1x2x128xbf16> to vector<2x128xbf16>
    %278 = vector.shape_cast %274 : vector<2x128xbf16> to vector<1x1x2x128xbf16>
    tpu.vector_store %arg4[%c0_122, %275, %c0_123, %c0_124], %278 {strides = array<i32>} : memref<1x8x2x128xbf16, #tpu.memory_space<vmem>>, vector<1x1x2x128xbf16>,
    %c6_i32 = arith.constant 6 : i32
    %c2_i32_125 = arith.constant 2 : i32
    %279 = arith.muli %c2_i32_125, %c6_i32 : i32
    %c7_i32_126 = arith.constant 7 : i32
    %280 = arith.subi %c7_i32_126, %279 : i32
    %281 = arith.muli %arg0, %280 : i32
    %282 = arith.addi %c6_i32, %281 : i32
    %283 = arith.index_cast %282 : i32 to index
    %c0_127 = arith.constant 0 : index
    %c0_128 = arith.constant 0 : index
    %284 = vector.load %arg2[%283, %c0_127, %c0_128] : memref<8x2x512xbf16, #tpu.memory_space<vmem>>, vector<1x2x512xbf16>
    %285 = vector.shape_cast %284 : vector<1x2x512xbf16> to vector<2x512xbf16>
    %286 = arith.extf %285 : vector<2x512xbf16> to vector<2x512xf32>
    %c0_129 = arith.constant 0 : index
    %c0_130 = arith.constant 0 : index
    %287 = vector.load %arg6[%c0_129, %c0_130] : memref<2x128xf32, #tpu.memory_space<vmem>>, vector<2x128xf32>
    %288 = arith.truncf %287 : vector<2x128xf32> to vector<2x128xbf16>
    %c0_131 = arith.constant 0 : index
    %c0_132 = arith.constant 0 : index
    %289 = vector.load %arg5[%c0_131, %c0_132] : memref<128x512xbf16, #tpu.memory_space<vmem>>, vector<128x512xbf16>
    %cst_133 = arith.constant dense<0.000000e+00> : vector<2x512xf32>
    %290 = tpu.matmul %288, %289, %cst_133 {dimension_numbers = #tpu.dot_dimension_numbers<[1], [0], [0], [1], [0, 0, 1, 1], [], []>} : vector<2x128xbf16>, vector<128x512xbf16>, vector<2x512xf32> -> vector<2x512xf32>
    %291 = arith.addf %286, %290 : vector<2x512xf32>
    %292 = vector.extract_strided_slice %291 {offsets = [0, 0], sizes = [2, 128], strides = [1, 1]} : vector<2x512xf32> to vector<2x128xf32>
    %293 = arith.negf %292 : vector<2x128xf32>
    %294 = math.exp %293 : vector<2x128xf32>
    %cst_134 = arith.constant 1.000000e+00 : f32
    %295 = vector.broadcast %cst_134 : f32 to vector<2x128xf32>
    %296 = arith.addf %295, %294 : vector<2x128xf32>
    %297 = arith.divf %295, %296 : vector<2x128xf32>
    %298 = vector.extract_strided_slice %291 {offsets = [0, 128], sizes = [2, 128], strides = [1, 1]} : vector<2x512xf32> to vector<2x128xf32>
    %299 = arith.negf %298 : vector<2x128xf32>
    %300 = math.exp %299 : vector<2x128xf32>
    %cst_135 = arith.constant 1.000000e+00 : f32
    %301 = vector.broadcast %cst_135 : f32 to vector<2x128xf32>
    %302 = arith.addf %301, %300 : vector<2x128xf32>
    %303 = arith.divf %301, %302 : vector<2x128xf32>
    %304 = vector.extract_strided_slice %291 {offsets = [0, 256], sizes = [2, 128], strides = [1, 1]} : vector<2x512xf32> to vector<2x128xf32>
    %305 = math.tanh %304 : vector<2x128xf32>
    %306 = vector.extract_strided_slice %291 {offsets = [0, 384], sizes = [2, 128], strides = [1, 1]} : vector<2x512xf32> to vector<2x128xf32>
    %307 = arith.negf %306 : vector<2x128xf32>
    %308 = math.exp %307 : vector<2x128xf32>
    %cst_136 = arith.constant 1.000000e+00 : f32
    %309 = vector.broadcast %cst_136 : f32 to vector<2x128xf32>
    %310 = arith.addf %309, %308 : vector<2x128xf32>
    %311 = arith.divf %309, %310 : vector<2x128xf32>
    %c0_137 = arith.constant 0 : index
    %c0_138 = arith.constant 0 : index
    %312 = vector.load %arg7[%c0_137, %c0_138] : memref<2x128xf32, #tpu.memory_space<vmem>>, vector<2x128xf32>
    %313 = arith.mulf %303, %312 : vector<2x128xf32>
    %314 = arith.mulf %297, %305 : vector<2x128xf32>
    %315 = arith.addf %313, %314 : vector<2x128xf32>
    %316 = math.tanh %315 : vector<2x128xf32>
    %317 = arith.mulf %311, %316 : vector<2x128xf32>
    %c0_139 = arith.constant 0 : index
    %c0_140 = arith.constant 0 : index
    %318 = vector.load %arg7[%c0_139, %c0_140] : memref<2x128xf32, #tpu.memory_space<vmem>>, vector<2x128xf32>
    tpu.vector_store %arg7[%c0_139, %c0_140], %315 {strides = array<i32>} : memref<2x128xf32, #tpu.memory_space<vmem>>, vector<2x128xf32>,
    %c0_141 = arith.constant 0 : index
    %c0_142 = arith.constant 0 : index
    %319 = vector.load %arg6[%c0_141, %c0_142] : memref<2x128xf32, #tpu.memory_space<vmem>>, vector<2x128xf32>
    tpu.vector_store %arg6[%c0_141, %c0_142], %317 {strides = array<i32>} : memref<2x128xf32, #tpu.memory_space<vmem>>, vector<2x128xf32>,
    %320 = arith.truncf %317 : vector<2x128xf32> to vector<2x128xbf16>
    %c0_143 = arith.constant 0 : index
    %321 = arith.index_cast %282 : i32 to index
    %c0_144 = arith.constant 0 : index
    %c0_145 = arith.constant 0 : index
    %322 = vector.load %arg4[%c0_143, %321, %c0_144, %c0_145] : memref<1x8x2x128xbf16, #tpu.memory_space<vmem>>, vector<1x1x2x128xbf16>
    %323 = vector.shape_cast %322 : vector<1x1x2x128xbf16> to vector<2x128xbf16>
    %324 = vector.shape_cast %320 : vector<2x128xbf16> to vector<1x1x2x128xbf16>
    tpu.vector_store %arg4[%c0_143, %321, %c0_144, %c0_145], %324 {strides = array<i32>} : memref<1x8x2x128xbf16, #tpu.memory_space<vmem>>, vector<1x1x2x128xbf16>,
    %c7_i32_146 = arith.constant 7 : i32
    %c2_i32_147 = arith.constant 2 : i32
    %325 = arith.muli %c2_i32_147, %c7_i32_146 : i32
    %c7_i32_148 = arith.constant 7 : i32
    %326 = arith.subi %c7_i32_148, %325 : i32
    %327 = arith.muli %arg0, %326 : i32
    %328 = arith.addi %c7_i32_146, %327 : i32
    %329 = arith.index_cast %328 : i32 to index
    %c0_149 = arith.constant 0 : index
    %c0_150 = arith.constant 0 : index
    %330 = vector.load %arg2[%329, %c0_149, %c0_150] : memref<8x2x512xbf16, #tpu.memory_space<vmem>>, vector<1x2x512xbf16>
    %331 = vector.shape_cast %330 : vector<1x2x512xbf16> to vector<2x512xbf16>
    %332 = arith.extf %331 : vector<2x512xbf16> to vector<2x512xf32>
    %c0_151 = arith.constant 0 : index
    %c0_152 = arith.constant 0 : index
    %333 = vector.load %arg6[%c0_151, %c0_152] : memref<2x128xf32, #tpu.memory_space<vmem>>, vector<2x128xf32>
    %334 = arith.truncf %333 : vector<2x128xf32> to vector<2x128xbf16>
    %c0_153 = arith.constant 0 : index
    %c0_154 = arith.constant 0 : index
    %335 = vector.load %arg5[%c0_153, %c0_154] : memref<128x512xbf16, #tpu.memory_space<vmem>>, vector<128x512xbf16>
    %cst_155 = arith.constant dense<0.000000e+00> : vector<2x512xf32>
    %336 = tpu.matmul %334, %335, %cst_155 {dimension_numbers = #tpu.dot_dimension_numbers<[1], [0], [0], [1], [0, 0, 1, 1], [], []>} : vector<2x128xbf16>, vector<128x512xbf16>, vector<2x512xf32> -> vector<2x512xf32>
    %337 = arith.addf %332, %336 : vector<2x512xf32>
    %338 = vector.extract_strided_slice %337 {offsets = [0, 0], sizes = [2, 128], strides = [1, 1]} : vector<2x512xf32> to vector<2x128xf32>
    %339 = arith.negf %338 : vector<2x128xf32>
    %340 = math.exp %339 : vector<2x128xf32>
    %cst_156 = arith.constant 1.000000e+00 : f32
    %341 = vector.broadcast %cst_156 : f32 to vector<2x128xf32>
    %342 = arith.addf %341, %340 : vector<2x128xf32>
    %343 = arith.divf %341, %342 : vector<2x128xf32>
    %344 = vector.extract_strided_slice %337 {offsets = [0, 128], sizes = [2, 128], strides = [1, 1]} : vector<2x512xf32> to vector<2x128xf32>
    %345 = arith.negf %344 : vector<2x128xf32>
    %346 = math.exp %345 : vector<2x128xf32>
    %cst_157 = arith.constant 1.000000e+00 : f32
    %347 = vector.broadcast %cst_157 : f32 to vector<2x128xf32>
    %348 = arith.addf %347, %346 : vector<2x128xf32>
    %349 = arith.divf %347, %348 : vector<2x128xf32>
    %350 = vector.extract_strided_slice %337 {offsets = [0, 256], sizes = [2, 128], strides = [1, 1]} : vector<2x512xf32> to vector<2x128xf32>
    %351 = math.tanh %350 : vector<2x128xf32>
    %352 = vector.extract_strided_slice %337 {offsets = [0, 384], sizes = [2, 128], strides = [1, 1]} : vector<2x512xf32> to vector<2x128xf32>
    %353 = arith.negf %352 : vector<2x128xf32>
    %354 = math.exp %353 : vector<2x128xf32>
    %cst_158 = arith.constant 1.000000e+00 : f32
    %355 = vector.broadcast %cst_158 : f32 to vector<2x128xf32>
    %356 = arith.addf %355, %354 : vector<2x128xf32>
    %357 = arith.divf %355, %356 : vector<2x128xf32>
    %c0_159 = arith.constant 0 : index
    %c0_160 = arith.constant 0 : index
    %358 = vector.load %arg7[%c0_159, %c0_160] : memref<2x128xf32, #tpu.memory_space<vmem>>, vector<2x128xf32>
    %359 = arith.mulf %349, %358 : vector<2x128xf32>
    %360 = arith.mulf %343, %351 : vector<2x128xf32>
    %361 = arith.addf %359, %360 : vector<2x128xf32>
    %362 = math.tanh %361 : vector<2x128xf32>
    %363 = arith.mulf %357, %362 : vector<2x128xf32>
    %c0_161 = arith.constant 0 : index
    %c0_162 = arith.constant 0 : index
    %364 = vector.load %arg7[%c0_161, %c0_162] : memref<2x128xf32, #tpu.memory_space<vmem>>, vector<2x128xf32>
    tpu.vector_store %arg7[%c0_161, %c0_162], %361 {strides = array<i32>} : memref<2x128xf32, #tpu.memory_space<vmem>>, vector<2x128xf32>,
    %c0_163 = arith.constant 0 : index
    %c0_164 = arith.constant 0 : index
    %365 = vector.load %arg6[%c0_163, %c0_164] : memref<2x128xf32, #tpu.memory_space<vmem>>, vector<2x128xf32>
    tpu.vector_store %arg6[%c0_163, %c0_164], %363 {strides = array<i32>} : memref<2x128xf32, #tpu.memory_space<vmem>>, vector<2x128xf32>,
    %366 = arith.truncf %363 : vector<2x128xf32> to vector<2x128xbf16>
    %c0_165 = arith.constant 0 : index
    %367 = arith.index_cast %328 : i32 to index
    %c0_166 = arith.constant 0 : index
    %c0_167 = arith.constant 0 : index
    %368 = vector.load %arg4[%c0_165, %367, %c0_166, %c0_167] : memref<1x8x2x128xbf16, #tpu.memory_space<vmem>>, vector<1x1x2x128xbf16>
    %369 = vector.shape_cast %368 : vector<1x1x2x128xbf16> to vector<2x128xbf16>
    %370 = vector.shape_cast %366 : vector<2x128xbf16> to vector<1x1x2x128xbf16>
    tpu.vector_store %arg4[%c0_165, %367, %c0_166, %c0_167], %370 {strides = array<i32>} : memref<1x8x2x128xbf16, #tpu.memory_space<vmem>>, vector<1x1x2x128xbf16>,
    %c8_i32 = arith.constant 8 : i32
    return
  }
  func.func @transform_0(%arg0: i32, %arg1: i32) -> (i32, i32, i32) {
    %c2_i32 = arith.constant 2 : i32
    %0 = arith.muli %c2_i32, %arg1 : i32
    %c0_i32 = arith.constant 0 : i32
    %1 = arith.subi %c0_i32, %0 : i32
    %2 = arith.muli %arg0, %1 : i32
    %3 = arith.addi %arg1, %2 : i32
    %c0_i32_0 = arith.constant 0 : i32
    %c0_i32_1 = arith.constant 0 : i32
    return %3, %c0_i32_0, %arg0 : i32, i32, i32
  }
  func.func @transform_2(%arg0: i32, %arg1: i32) -> (i32, i32, i32, i32) {
    %c2_i32 = arith.constant 2 : i32
    %0 = arith.muli %c2_i32, %arg1 : i32
    %c0_i32 = arith.constant 0 : i32
    %1 = arith.subi %c0_i32, %0 : i32
    %2 = arith.muli %arg0, %1 : i32
    %3 = arith.addi %arg1, %2 : i32
    %c0_i32_0 = arith.constant 0 : i32
    %c0_i32_1 = arith.constant 0 : i32
    %c0_i32_2 = arith.constant 0 : i32
    return %arg0, %3, %c0_i32_0, %c0_i32_1 : i32, i32, i32, i32
  }
}

module attributes {stable_mosaic.version = 11 : i64} {
  func.func @_matmul_affine_kernel(%arg0: i32, %arg1: i32, %arg2: i32, %arg3: memref<2x16x128xbf16, #tpu.memory_space<vmem>>, %arg4: memref<2x128x512xbf16, #tpu.memory_space<vmem>>, %arg5: memref<1x512xf32, #tpu.memory_space<vmem>>, %arg6: memref<1x512xf32, #tpu.memory_space<vmem>>, %arg7: memref<16x512xbf16, #tpu.memory_space<vmem>>, %arg8: memref<16x512xf32, #tpu.memory_space<vmem>>) attributes {dimension_semantics = [#tpu.dimension_semantics<parallel>, #tpu.dimension_semantics<parallel>, #tpu.dimension_semantics<arbitrary>], iteration_bounds = array<i64: 1, 2, 1>, scalar_prefetch = 0 : i64, scratch_operands = 1 : i64, tpu.core_type = #tpu.core_type<tc>, window_params = [{transform_indices = @transform_0, window_bounds = array<i64: 2, 16, 128>}, {transform_indices = @transform_1, window_bounds = array<i64: 2, 128, 512>}, {transform_indices = @transform_2, window_bounds = array<i64: 1, 512>}, {transform_indices = @transform_3, window_bounds = array<i64: 1, 512>}, {transform_indices = @transform_4, window_bounds = array<i64: 16, 512>}]} {
    %c0_i32 = arith.constant 0 : i32
    %0 = arith.cmpi eq, %arg2, %c0_i32 : i32
    %1 = arith.extui %0 : i1 to i32
    %c0_i32_0 = arith.constant 0 : i32
    %2 = arith.cmpi ne, %1, %c0_i32_0 : i32
    scf.if %2 {
      %cst_22 = arith.constant 0.000000e+00 : f32
      %22 = vector.broadcast %cst_22 : f32 to vector<16x512xf32>
      %c0_23 = arith.constant 0 : index
      %c0_24 = arith.constant 0 : index
      %23 = vector.load %arg8[%c0_23, %c0_24] : memref<16x512xf32, #tpu.memory_space<vmem>>, vector<16x512xf32>
      tpu.vector_store %arg8[%c0_23, %c0_24], %22 {strides = array<i32>} : memref<16x512xf32, #tpu.memory_space<vmem>>, vector<16x512xf32>,
    } else {
    }
    %c0 = arith.constant 0 : index
    %c0_1 = arith.constant 0 : index
    %3 = vector.load %arg8[%c0, %c0_1] : memref<16x512xf32, #tpu.memory_space<vmem>>, vector<16x512xf32>
    %c0_2 = arith.constant 0 : index
    %c0_3 = arith.constant 0 : index
    %c0_4 = arith.constant 0 : index
    %4 = vector.load %arg3[%c0_2, %c0_3, %c0_4] : memref<2x16x128xbf16, #tpu.memory_space<vmem>>, vector<1x16x128xbf16>
    %5 = vector.shape_cast %4 : vector<1x16x128xbf16> to vector<16x128xbf16>
    %c0_5 = arith.constant 0 : index
    %c0_6 = arith.constant 0 : index
    %c0_7 = arith.constant 0 : index
    %6 = vector.load %arg4[%c0_5, %c0_6, %c0_7] : memref<2x128x512xbf16, #tpu.memory_space<vmem>>, vector<1x128x512xbf16>
    %7 = vector.shape_cast %6 : vector<1x128x512xbf16> to vector<128x512xbf16>
    %cst = arith.constant dense<0.000000e+00> : vector<16x512xf32>
    %8 = tpu.matmul %5, %7, %cst {dimension_numbers = #tpu.dot_dimension_numbers<[1], [0], [0], [1], [0, 0, 1, 1], [], []>} : vector<16x128xbf16>, vector<128x512xbf16>, vector<16x512xf32> -> vector<16x512xf32>
    %9 = arith.addf %3, %8 : vector<16x512xf32>
    %c0_8 = arith.constant 0 : index
    %c0_9 = arith.constant 0 : index
    %10 = vector.load %arg8[%c0_8, %c0_9] : memref<16x512xf32, #tpu.memory_space<vmem>>, vector<16x512xf32>
    tpu.vector_store %arg8[%c0_8, %c0_9], %9 {strides = array<i32>} : memref<16x512xf32, #tpu.memory_space<vmem>>, vector<16x512xf32>,
    %c0_10 = arith.constant 0 : index
    %c0_11 = arith.constant 0 : index
    %11 = vector.load %arg8[%c0_10, %c0_11] : memref<16x512xf32, #tpu.memory_space<vmem>>, vector<16x512xf32>
    %c1 = arith.constant 1 : index
    %c0_12 = arith.constant 0 : index
    %c0_13 = arith.constant 0 : index
    %12 = vector.load %arg3[%c1, %c0_12, %c0_13] : memref<2x16x128xbf16, #tpu.memory_space<vmem>>, vector<1x16x128xbf16>
    %13 = vector.shape_cast %12 : vector<1x16x128xbf16> to vector<16x128xbf16>
    %c1_14 = arith.constant 1 : index
    %c0_15 = arith.constant 0 : index
    %c0_16 = arith.constant 0 : index
    %14 = vector.load %arg4[%c1_14, %c0_15, %c0_16] : memref<2x128x512xbf16, #tpu.memory_space<vmem>>, vector<1x128x512xbf16>
    %15 = vector.shape_cast %14 : vector<1x128x512xbf16> to vector<128x512xbf16>
    %cst_17 = arith.constant dense<0.000000e+00> : vector<16x512xf32>
    %16 = tpu.matmul %13, %15, %cst_17 {dimension_numbers = #tpu.dot_dimension_numbers<[1], [0], [0], [1], [0, 0, 1, 1], [], []>} : vector<16x128xbf16>, vector<128x512xbf16>, vector<16x512xf32> -> vector<16x512xf32>
    %17 = arith.addf %11, %16 : vector<16x512xf32>
    %c0_18 = arith.constant 0 : index
    %c0_19 = arith.constant 0 : index
    %18 = vector.load %arg8[%c0_18, %c0_19] : memref<16x512xf32, #tpu.memory_space<vmem>>, vector<16x512xf32>
    tpu.vector_store %arg8[%c0_18, %c0_19], %17 {strides = array<i32>} : memref<16x512xf32, #tpu.memory_space<vmem>>, vector<16x512xf32>,
    %c0_i32_20 = arith.constant 0 : i32
    %19 = arith.cmpi eq, %arg2, %c0_i32_20 : i32
    %20 = arith.extui %19 : i1 to i32
    %c0_i32_21 = arith.constant 0 : i32
    %21 = arith.cmpi ne, %20, %c0_i32_21 : i32
    scf.if %21 {
      %c0_22 = arith.constant 0 : index
      %c0_23 = arith.constant 0 : index
      %22 = vector.load %arg8[%c0_22, %c0_23] : memref<16x512xf32, #tpu.memory_space<vmem>>, vector<16x512xf32>
      %c0_24 = arith.constant 0 : index
      %c0_25 = arith.constant 0 : index
      %23 = vector.load %arg5[%c0_24, %c0_25] : memref<1x512xf32, #tpu.memory_space<vmem>>, vector<1x512xf32>
      %24 = vector.broadcast %23 : vector<1x512xf32> to vector<16x512xf32>
      %25 = arith.mulf %22, %24 : vector<16x512xf32>
      %c0_26 = arith.constant 0 : index
      %c0_27 = arith.constant 0 : index
      %26 = vector.load %arg6[%c0_26, %c0_27] : memref<1x512xf32, #tpu.memory_space<vmem>>, vector<1x512xf32>
      %27 = vector.broadcast %26 : vector<1x512xf32> to vector<16x512xf32>
      %28 = arith.addf %25, %27 : vector<16x512xf32>
      %29 = arith.truncf %28 : vector<16x512xf32> to vector<16x512xbf16>
      %c0_28 = arith.constant 0 : index
      %c0_29 = arith.constant 0 : index
      %30 = vector.load %arg7[%c0_28, %c0_29] : memref<16x512xbf16, #tpu.memory_space<vmem>>, vector<16x512xbf16>
      tpu.vector_store %arg7[%c0_28, %c0_29], %29 {strides = array<i32>} : memref<16x512xbf16, #tpu.memory_space<vmem>>, vector<16x512xbf16>,
    } else {
    }
    return
  }
  func.func @transform_0(%arg0: i32, %arg1: i32, %arg2: i32) -> (i32, i32, i32) {
    %c0_i32 = arith.constant 0 : i32
    %c0_i32_0 = arith.constant 0 : i32
    return %c0_i32, %arg0, %arg2 : i32, i32, i32
  }
  func.func @transform_1(%arg0: i32, %arg1: i32, %arg2: i32) -> (i32, i32, i32) {
    %c0_i32 = arith.constant 0 : i32
    %c0_i32_0 = arith.constant 0 : i32
    return %c0_i32, %arg2, %arg1 : i32, i32, i32
  }
  func.func @transform_2(%arg0: i32, %arg1: i32, %arg2: i32) -> (i32, i32) {
    %c0_i32 = arith.constant 0 : i32
    %c0_i32_0 = arith.constant 0 : i32
    return %c0_i32, %arg1 : i32, i32
  }
  func.func @transform_3(%arg0: i32, %arg1: i32, %arg2: i32) -> (i32, i32) {
    %c0_i32 = arith.constant 0 : i32
    %c0_i32_0 = arith.constant 0 : i32
    return %c0_i32, %arg1 : i32, i32
  }
  func.func @transform_4(%arg0: i32, %arg1: i32, %arg2: i32) -> (i32, i32) {
    %c0_i32 = arith.constant 0 : i32
    return %arg0, %arg1 : i32, i32
  }
}

module attributes {stable_mosaic.version = 11 : i64} {
  func.func @_matmul_affine_kernel(%arg0: i32, %arg1: i32, %arg2: i32, %arg3: memref<2x16x128xbf16, #tpu.memory_space<vmem>>, %arg4: memref<2x128x128xbf16, #tpu.memory_space<vmem>>, %arg5: memref<1x128xf32, #tpu.memory_space<vmem>>, %arg6: memref<1x128xf32, #tpu.memory_space<vmem>>, %arg7: memref<16x128xf32, #tpu.memory_space<vmem>>, %arg8: memref<16x128xf32, #tpu.memory_space<vmem>>) attributes {dimension_semantics = [#tpu.dimension_semantics<parallel>, #tpu.dimension_semantics<parallel>, #tpu.dimension_semantics<arbitrary>], iteration_bounds = array<i64: 1, 1, 1>, scalar_prefetch = 0 : i64, scratch_operands = 1 : i64, tpu.core_type = #tpu.core_type<tc>, window_params = [{transform_indices = @transform_0, window_bounds = array<i64: 2, 16, 128>}, {transform_indices = @transform_1, window_bounds = array<i64: 2, 128, 128>}, {transform_indices = @transform_2, window_bounds = array<i64: 1, 128>}, {transform_indices = @transform_3, window_bounds = array<i64: 1, 128>}, {transform_indices = @transform_4, window_bounds = array<i64: 16, 128>}]} {
    %c0_i32 = arith.constant 0 : i32
    %0 = arith.cmpi eq, %arg2, %c0_i32 : i32
    %1 = arith.extui %0 : i1 to i32
    %c0_i32_0 = arith.constant 0 : i32
    %2 = arith.cmpi ne, %1, %c0_i32_0 : i32
    scf.if %2 {
      %cst_22 = arith.constant 0.000000e+00 : f32
      %22 = vector.broadcast %cst_22 : f32 to vector<16x128xf32>
      %c0_23 = arith.constant 0 : index
      %c0_24 = arith.constant 0 : index
      %23 = vector.load %arg8[%c0_23, %c0_24] : memref<16x128xf32, #tpu.memory_space<vmem>>, vector<16x128xf32>
      tpu.vector_store %arg8[%c0_23, %c0_24], %22 {strides = array<i32>} : memref<16x128xf32, #tpu.memory_space<vmem>>, vector<16x128xf32>,
    } else {
    }
    %c0 = arith.constant 0 : index
    %c0_1 = arith.constant 0 : index
    %3 = vector.load %arg8[%c0, %c0_1] : memref<16x128xf32, #tpu.memory_space<vmem>>, vector<16x128xf32>
    %c0_2 = arith.constant 0 : index
    %c0_3 = arith.constant 0 : index
    %c0_4 = arith.constant 0 : index
    %4 = vector.load %arg3[%c0_2, %c0_3, %c0_4] : memref<2x16x128xbf16, #tpu.memory_space<vmem>>, vector<1x16x128xbf16>
    %5 = vector.shape_cast %4 : vector<1x16x128xbf16> to vector<16x128xbf16>
    %c0_5 = arith.constant 0 : index
    %c0_6 = arith.constant 0 : index
    %c0_7 = arith.constant 0 : index
    %6 = vector.load %arg4[%c0_5, %c0_6, %c0_7] : memref<2x128x128xbf16, #tpu.memory_space<vmem>>, vector<1x128x128xbf16>
    %7 = vector.shape_cast %6 : vector<1x128x128xbf16> to vector<128x128xbf16>
    %cst = arith.constant dense<0.000000e+00> : vector<16x128xf32>
    %8 = tpu.matmul %5, %7, %cst {dimension_numbers = #tpu.dot_dimension_numbers<[1], [0], [0], [1], [0, 0, 1, 1], [], []>} : vector<16x128xbf16>, vector<128x128xbf16>, vector<16x128xf32> -> vector<16x128xf32>
    %9 = arith.addf %3, %8 : vector<16x128xf32>
    %c0_8 = arith.constant 0 : index
    %c0_9 = arith.constant 0 : index
    %10 = vector.load %arg8[%c0_8, %c0_9] : memref<16x128xf32, #tpu.memory_space<vmem>>, vector<16x128xf32>
    tpu.vector_store %arg8[%c0_8, %c0_9], %9 {strides = array<i32>} : memref<16x128xf32, #tpu.memory_space<vmem>>, vector<16x128xf32>,
    %c0_10 = arith.constant 0 : index
    %c0_11 = arith.constant 0 : index
    %11 = vector.load %arg8[%c0_10, %c0_11] : memref<16x128xf32, #tpu.memory_space<vmem>>, vector<16x128xf32>
    %c1 = arith.constant 1 : index
    %c0_12 = arith.constant 0 : index
    %c0_13 = arith.constant 0 : index
    %12 = vector.load %arg3[%c1, %c0_12, %c0_13] : memref<2x16x128xbf16, #tpu.memory_space<vmem>>, vector<1x16x128xbf16>
    %13 = vector.shape_cast %12 : vector<1x16x128xbf16> to vector<16x128xbf16>
    %c1_14 = arith.constant 1 : index
    %c0_15 = arith.constant 0 : index
    %c0_16 = arith.constant 0 : index
    %14 = vector.load %arg4[%c1_14, %c0_15, %c0_16] : memref<2x128x128xbf16, #tpu.memory_space<vmem>>, vector<1x128x128xbf16>
    %15 = vector.shape_cast %14 : vector<1x128x128xbf16> to vector<128x128xbf16>
    %cst_17 = arith.constant dense<0.000000e+00> : vector<16x128xf32>
    %16 = tpu.matmul %13, %15, %cst_17 {dimension_numbers = #tpu.dot_dimension_numbers<[1], [0], [0], [1], [0, 0, 1, 1], [], []>} : vector<16x128xbf16>, vector<128x128xbf16>, vector<16x128xf32> -> vector<16x128xf32>
    %17 = arith.addf %11, %16 : vector<16x128xf32>
    %c0_18 = arith.constant 0 : index
    %c0_19 = arith.constant 0 : index
    %18 = vector.load %arg8[%c0_18, %c0_19] : memref<16x128xf32, #tpu.memory_space<vmem>>, vector<16x128xf32>
    tpu.vector_store %arg8[%c0_18, %c0_19], %17 {strides = array<i32>} : memref<16x128xf32, #tpu.memory_space<vmem>>, vector<16x128xf32>,
    %c0_i32_20 = arith.constant 0 : i32
    %19 = arith.cmpi eq, %arg2, %c0_i32_20 : i32
    %20 = arith.extui %19 : i1 to i32
    %c0_i32_21 = arith.constant 0 : i32
    %21 = arith.cmpi ne, %20, %c0_i32_21 : i32
    scf.if %21 {
      %c0_22 = arith.constant 0 : index
      %c0_23 = arith.constant 0 : index
      %22 = vector.load %arg8[%c0_22, %c0_23] : memref<16x128xf32, #tpu.memory_space<vmem>>, vector<16x128xf32>
      %c0_24 = arith.constant 0 : index
      %c0_25 = arith.constant 0 : index
      %23 = vector.load %arg5[%c0_24, %c0_25] : memref<1x128xf32, #tpu.memory_space<vmem>>, vector<1x128xf32>
      %24 = vector.broadcast %23 : vector<1x128xf32> to vector<16x128xf32>
      %25 = arith.mulf %22, %24 : vector<16x128xf32>
      %c0_26 = arith.constant 0 : index
      %c0_27 = arith.constant 0 : index
      %26 = vector.load %arg6[%c0_26, %c0_27] : memref<1x128xf32, #tpu.memory_space<vmem>>, vector<1x128xf32>
      %27 = vector.broadcast %26 : vector<1x128xf32> to vector<16x128xf32>
      %28 = arith.addf %25, %27 : vector<16x128xf32>
      %c0_28 = arith.constant 0 : index
      %c0_29 = arith.constant 0 : index
      %29 = vector.load %arg7[%c0_28, %c0_29] : memref<16x128xf32, #tpu.memory_space<vmem>>, vector<16x128xf32>
      tpu.vector_store %arg7[%c0_28, %c0_29], %28 {strides = array<i32>} : memref<16x128xf32, #tpu.memory_space<vmem>>, vector<16x128xf32>,
    } else {
    }
    return
  }
  func.func @transform_0(%arg0: i32, %arg1: i32, %arg2: i32) -> (i32, i32, i32) {
    %c0_i32 = arith.constant 0 : i32
    %c0_i32_0 = arith.constant 0 : i32
    return %c0_i32, %arg0, %arg2 : i32, i32, i32
  }
  func.func @transform_1(%arg0: i32, %arg1: i32, %arg2: i32) -> (i32, i32, i32) {
    %c0_i32 = arith.constant 0 : i32
    %c0_i32_0 = arith.constant 0 : i32
    return %c0_i32, %arg2, %arg1 : i32, i32, i32
  }
  func.func @transform_2(%arg0: i32, %arg1: i32, %arg2: i32) -> (i32, i32) {
    %c0_i32 = arith.constant 0 : i32
    %c0_i32_0 = arith.constant 0 : i32
    return %c0_i32, %arg1 : i32, i32
  }
  func.func @transform_3(%arg0: i32, %arg1: i32, %arg2: i32) -> (i32, i32) {
    %c0_i32 = arith.constant 0 : i32
    %c0_i32_0 = arith.constant 0 : i32
    return %c0_i32, %arg1 : i32, i32
  }
  func.func @transform_4(%arg0: i32, %arg1: i32, %arg2: i32) -> (i32, i32) {
    %c0_i32 = arith.constant 0 : i32
    return %arg0, %arg1 : i32, i32
  }
}

</mosaic_0001>

<llo_original>
// kernel: deepspeech2_forward.7
$region0: #{deepspeech2_forward.7}
  #allocation0 [shape = 'u32[]', space=smem, size = 0x4, offset = 0x4, fixed_abs, tag = 'smem constant byte address 0x4 - core index']
  #allocation1 [shape = 'u32[72,128]{1,0:T(1,128)}', space=vmem, size = 0x9000, scoped, tag = 'internal scratch']
  #allocation2 [shape = 'f32[256,128]{1,0:T(8,128)}', space=vmem, size = 0x20000, scoped, tag = 'scratch operand']
  %s0 = inlined_call_operand.vmem [shape: bf16[1,768,512], index: 0, kind: input, shape index: {}]
  %s1 = inlined_call_operand.vmem [shape: bf16[1,512,128], index: 1, kind: input, shape index: {}]
  %s2 = inlined_call_operand.vmem [shape: f32[1,128], index: 2, kind: input, shape index: {}]
  %s3 = inlined_call_operand.vmem [shape: f32[1,128], index: 3, kind: input, shape index: {}]
  %s4 = inlined_call_operand.vmem [shape: bf16[768,128], index: 4, kind: output, shape index: {}]
  %s5 = sld [smem:[#allocation0]]
  $region57: #{deepspeech2_forward.7} parent=0
    _
  %s7 = ssub.s32 1, %s5
  %s8 = scalar_select 0, %s7, %s5
  loop: start=0, step=1, limit=5
  $region2: #{deepspeech2_forward.7} parent=0 // loop_pre_header
    _
  $region3: #{deepspeech2_forward.7} parent=0 // loop_header
    %s10 = sphi 0, %s14
    %p11 = scmp.ge.s32.totalorder %s10, 5
    %s17 = sphi 0, %s36
    %s18 = sphi 0, %s32
    %s19 = sphi 0, %s28
    %s20 = sphi 0, %s17
    %s21 = sphi 0, %s18
    %s22 = sphi 0, %s19
    %s23 = sphi 0, %s20
    %s24 = sphi 0, %s21
    %s25 = sphi 0, %s22
    %s41 = sphi 0, %s43
    %s44 = sphi 0, %s41
    %s45 = sphi 0, %s44
    %s61 = sphi 0, %s45
    %s69 = sphi 0, %s71
    %s72 = sphi 0, %s69
    %s73 = sphi 0, %s72
    %s89 = sphi 0, %s73
    %s95 = sphi 0, %s97
    %s98 = sphi 0, %s95
    %s99 = sphi 0, %s98
    %s115 = sphi 0, %s99
    %s121 = sphi 0, %s123
    %s124 = sphi 0, %s121
    %s125 = sphi 0, %s124
    %s141 = sphi 0, %s125
    %s149 = sphi 0, %s151
    %s152 = sphi 0, %s149
    %s153 = sphi 0, %s152
    %s169 = sphi 0, %s153
  $region4: #{deepspeech2_forward.7} parent=0 // loop_header_branch
    %13 = sbr.rel (%p11) target = $region8
  $region5: #{deepspeech2_forward.7} parent=0 // loop_body
    %s15 = ssub.s32 %s10, 1
    %s16 = ssub.s32 %s10, 2
    %s26 = sadd.s32 1, %s19
    %p27 = scmp.ge.s32.totalorder %s26, 1
    %s28 = scalar_select %p27, 0, %s26
    %s29 = sadd.s32 1, %s18
    %s30 = scalar_select %p27, %s29, %s18
    %p31 = scmp.ge.s32.totalorder %s30, 1
    %s32 = scalar_select %p31, 0, %s30
    %s33 = sadd.s32 1, %s17
    %s34 = scalar_select %p31, %s33, %s17
    %p35 = scmp.ge.s32.totalorder %s34, 3
    %s36 = scalar_select %p35, 0, %s34
    %s37 = ssub.s32 %s17, %s36
    %s38 = ssub.s32 %s19, %s28
    %s39 = sor.u32 %s37, %s38
    %p40 = scmp.eq.s32.totalorder %s39, 0
    %s42 = sadd.s32 %s41, 1
    %s43 = scalar_select %p40, %s41, %s42
    %p46 = pneg %p40
    %p47 = scmp.eq.s32.totalorder %s10, 2
    %p48 = por %p46, %p47
    %p49 = scmp.ne.s32.totalorder %s41, %s44
    %p50 = scmp.eq.s32.totalorder %s10, 0
    %p51 = por %p49, %p50
    %p52 = scmp.ne.s32.totalorder %s41, %s44
    %p53 = scmp.eq.s32.totalorder %s15, 2
    %p54 = por %p52, %p53
    %p55 = scmp.ne.s32.totalorder %s44, %s45
    %p56 = scmp.eq.s32.totalorder %s15, 0
    %p57 = por %p55, %p56
    %p58 = scmp.ne.s32.totalorder %s44, %s45
    %p59 = scmp.eq.s32.totalorder %s16, 2
    %p60 = por %p58, %p59
    %p62 = scmp.ne.s32.totalorder %s45, %s61
    %p63 = scmp.eq.s32.totalorder %s16, 0
    %p64 = por %p62, %p63
    %s65 = ssub.s32 %s19, %s28
    %s66 = ssub.s32 %s18, %s32
    %s67 = sor.u32 %s65, %s66
    %p68 = scmp.eq.s32.totalorder %s67, 0
    %s70 = sadd.s32 %s69, 1
    %s71 = scalar_select %p68, %s69, %s70
    %p74 = pneg %p68
    %p75 = scmp.eq.s32.totalorder %s10, 2
    %p76 = por %p74, %p75
    %p77 = scmp.ne.s32.totalorder %s69, %s72
    %p78 = scmp.eq.s32.totalorder %s10, 0
    %p79 = por %p77, %p78
    %p80 = scmp.ne.s32.totalorder %s69, %s72
    %p81 = scmp.eq.s32.totalorder %s15, 2
    %p82 = por %p80, %p81
    %p83 = scmp.ne.s32.totalorder %s72, %s73
    %p84 = scmp.eq.s32.totalorder %s15, 0
    %p85 = por %p83, %p84
    %p86 = scmp.ne.s32.totalorder %s72, %s73
    %p87 = scmp.eq.s32.totalorder %s16, 2
    %p88 = por %p86, %p87
    %p90 = scmp.ne.s32.totalorder %s73, %s89
    %p91 = scmp.eq.s32.totalorder %s16, 0
    %p92 = por %p90, %p91
    %s93 = ssub.s32 %s18, %s32
    %p94 = scmp.eq.s32.totalorder %s93, 0
    %s96 = sadd.s32 %s95, 1
    %s97 = scalar_select %p94, %s95, %s96
    %p100 = pneg %p94
    %p101 = scmp.eq.s32.totalorder %s10, 2
    %p102 = por %p100, %p101
    %p103 = scmp.ne.s32.totalorder %s95, %s98
    %p104 = scmp.eq.s32.totalorder %s10, 0
    %p105 = por %p103, %p104
    %p106 = scmp.ne.s32.totalorder %s95, %s98
    %p107 = scmp.eq.s32.totalorder %s15, 2
    %p108 = por %p106, %p107
    %p109 = scmp.ne.s32.totalorder %s98, %s99
    %p110 = scmp.eq.s32.totalorder %s15, 0
    %p111 = por %p109, %p110
    %p112 = scmp.ne.s32.totalorder %s98, %s99
    %p113 = scmp.eq.s32.totalorder %s16, 2
    %p114 = por %p112, %p113
    %p116 = scmp.ne.s32.totalorder %s99, %s115
    %p117 = scmp.eq.s32.totalorder %s16, 0
    %p118 = por %p116, %p117
    %s119 = ssub.s32 %s18, %s32
    %p120 = scmp.eq.s32.totalorder %s119, 0
    %s122 = sadd.s32 %s121, 1
    %s123 = scalar_select %p120, %s121, %s122
    %p126 = pneg %p120
    %p127 = scmp.eq.s32.totalorder %s10, 2
    %p128 = por %p126, %p127
    %p129 = scmp.ne.s32.totalorder %s121, %s124
    %p130 = scmp.eq.s32.totalorder %s10, 0
    %p131 = por %p129, %p130
    %p132 = scmp.ne.s32.totalorder %s121, %s124
    %p133 = scmp.eq.s32.totalorder %s15, 2
    %p134 = por %p132, %p133
    %p135 = scmp.ne.s32.totalorder %s124, %s125
    %p136 = scmp.eq.s32.totalorder %s15, 0
    %p137 = por %p135, %p136
    %p138 = scmp.ne.s32.totalorder %s124, %s125
    %p139 = scmp.eq.s32.totalorder %s16, 2
    %p140 = por %p138, %p139
    %p142 = scmp.ne.s32.totalorder %s125, %s141
    %p143 = scmp.eq.s32.totalorder %s16, 0
    %p144 = por %p142, %p143
    %s145 = ssub.s32 %s17, %s36
    %s146 = ssub.s32 %s18, %s32
    %s147 = sor.u32 %s145, %s146
    %p148 = scmp.eq.s32.totalorder %s147, 0
    %s150 = sadd.s32 %s149, 1
    %s151 = scalar_select %p148, %s149, %s150
    %p154 = pneg %p148
    %p155 = scmp.eq.s32.totalorder %s10, 2
    %p156 = por %p154, %p155
    %p157 = scmp.ne.s32.totalorder %s149, %s152
    %p158 = scmp.eq.s32.totalorder %s10, 0
    %p159 = por %p157, %p158
    %p160 = scmp.ne.s32.totalorder %s149, %s152
    %p161 = scmp.eq.s32.totalorder %s15, 2
    %p162 = por %p160, %p161
    %p163 = scmp.ne.s32.totalorder %s152, %s153
    %p164 = scmp.eq.s32.totalorder %s15, 0
    %p165 = por %p163, %p164
    %p166 = scmp.ne.s32.totalorder %s152, %s153
    %p167 = scmp.eq.s32.totalorder %s16, 2
    %p168 = por %p166, %p167
    %p170 = scmp.ne.s32.totalorder %s153, %s169
    %p171 = scmp.eq.s32.totalorder %s16, 0
    %p172 = por %p170, %p171
    %p173 = scmp.le.s32.totalorder 1, %s10
    %p174 = scmp.lt.s32.totalorder %s10, 4
    %p175 = pnand %p173, %p174
    %p176 = pneg %p175
    // Predicated region
    $region9: #{deepspeech2_forward.7} parent=5 // pred_check
      _
    $region10: #{deepspeech2_forward.7} parent=5 // pred_check_branch
      %178 = sbr.rel (%p175) target = $region12
    $region11: #{deepspeech2_forward.7} parent=5 // pred_region
      %s179 = ssub.s32 %s10, 1
      // Predicated region
      $region13: #{deepspeech2_forward.7} parent=11 // pred_check
        %p180 = pneg %p85
      $region14: #{deepspeech2_forward.7} parent=11 // pred_check_branch
        %182 = sbr.rel (%p180) target = $region16
      $region15: #{deepspeech2_forward.7} parent=11 // pred_region
        %s183 = smul.u32 64, %s22
        %p184 = scmp.lt.s32.totalorder %s183, 63
        %s185 = scalar_select %p184, %s183, 63
        %p186 = scmp.lt.s32.totalorder %s21, 0
        %s187 = scalar_select %p186, %s21, 0
        %s188 = sadd.s32 %s187, %s185
        %s189 = smul.addr %s188, 4
        %s190 = scalar_lea.vmem %s1, %s189
        %s191 = smul.u32 64, %s22
      $region16: #{deepspeech2_forward.7} parent=11 // pred_fallthru
        _
      // Predicated region
      $region17: #{deepspeech2_forward.7} parent=11 // pred_check
        %p192 = pneg %p111
      $region18: #{deepspeech2_forward.7} parent=11 // pred_check_branch
        %194 = sbr.rel (%p192) target = $region20
      $region19: #{deepspeech2_forward.7} parent=11 // pred_region
        %p195 = scmp.lt.s32.totalorder %s21, 0
        %s196 = scalar_select %p195, %s21, 0
        %s197 = scalar_lea.vmem %s2, %s196
      $region20: #{deepspeech2_forward.7} parent=11 // pred_fallthru
        _
      // Predicated region
      $region21: #{deepspeech2_forward.7} parent=11 // pred_check
        %p198 = pneg %p137
      $region22: #{deepspeech2_forward.7} parent=11 // pred_check_branch
        %200 = sbr.rel (%p198) target = $region24
      $region23: #{deepspeech2_forward.7} parent=11 // pred_region
        %p201 = scmp.lt.s32.totalorder %s21, 0
        %s202 = scalar_select %p201, %s21, 0
        %s203 = scalar_lea.vmem %s3, %s202
      $region24: #{deepspeech2_forward.7} parent=11 // pred_fallthru
        _
    $region12: #{deepspeech2_forward.7} parent=5 // pred_fallthru
      _
    %p204 = scmp.lt.s32.totalorder %s10, 3
    // Predicated region
    $region25: #{deepspeech2_forward.7} parent=5 // pred_check
      %p205 = pneg %p204
    $region26: #{deepspeech2_forward.7} parent=5 // pred_check_branch
      %207 = sbr.rel (%p205) target = $region28
    $region27: #{deepspeech2_forward.7} parent=5 // pred_region
      // Predicated region
      $region29: #{deepspeech2_forward.7} parent=27 // pred_check
        %p208 = pneg %p51
      $region30: #{deepspeech2_forward.7} parent=27 // pred_check_branch
        %210 = sbr.rel (%p208) target = $region32
      $region31: #{deepspeech2_forward.7} parent=27 // pred_region
        %s211 = smul.u32 32, %s17
        %s212 = smul.u32 4, %s19
        %p213 = scmp.lt.s32.totalorder %s211, 95
        %s214 = scalar_select %p213, %s211, 95
        %p215 = scmp.lt.s32.totalorder %s212, 3
        %s216 = scalar_select %p215, %s212, 3
        %s217 = smul.addr %s214, 4
        %s218 = sadd.s32 %s216, %s217
        %s219 = smul.addr %s218, 4
        %s220 = scalar_lea.vmem %s0, %s219
        %s221 = smul.u32 32, %s17
        %s222 = smul.u32 4, %s19
      $region32: #{deepspeech2_forward.7} parent=27 // pred_fallthru
        _
    $region28: #{deepspeech2_forward.7} parent=5 // pred_fallthru
      _
    %p223 = scmp.le.s32.totalorder 1, %s10
    %p224 = scmp.lt.s32.totalorder %s10, 4
    %p225 = pnand %p223, %p224
    %p226 = pneg %p225
    // Predicated region
    $region33: #{deepspeech2_forward.7} parent=5 // pred_check
      _
    $region34: #{deepspeech2_forward.7} parent=5 // pred_check_branch
      %228 = sbr.rel (%p225) target = $region36
    $region35: #{deepspeech2_forward.7} parent=5 // pred_region
      %s229 = ssub.s32 %s10, 1
      %s230 = smul.u32 32, %s20
      %s231 = smul.u32 4, %s22
      %p232 = scmp.lt.s32.totalorder %s230, 95
      %s233 = scalar_select %p232, %s230, 95
      %p234 = scmp.lt.s32.totalorder %s231, 3
      %s235 = scalar_select %p234, %s231, 3
      %s236 = smul.addr %s233, 4
      %s237 = sadd.s32 %s235, %s236
      %s238 = smul.addr %s237, 4
      %s239 = scalar_lea.vmem %s0, %s238
      %p240 = pneg %p57
      %p241 = pneg %p54
      %s242 = smul.u32 64, %s22
      %p243 = scmp.lt.s32.totalorder %s242, 63
      %s244 = scalar_select %p243, %s242, 63
      %p245 = scmp.lt.s32.totalorder %s21, 0
      %s246 = scalar_select %p245, %s21, 0
      %s247 = sadd.s32 %s246, %s244
      %s248 = smul.addr %s247, 4
      %s249 = scalar_lea.vmem %s1, %s248
      %p250 = pneg %p85
      %p251 = pneg %p82
      %p252 = scmp.lt.s32.totalorder %s21, 0
      %s253 = scalar_select %p252, %s21, 0
      %s254 = scalar_lea.vmem %s2, %s253
      %p255 = pneg %p111
      %p256 = pneg %p108
      %p257 = scmp.lt.s32.totalorder %s21, 0
      %s258 = scalar_select %p257, %s21, 0
      %s259 = scalar_lea.vmem %s3, %s258
      %p260 = pneg %p137
      %p261 = pneg %p134
      %p262 = pneg %p165
      %p263 = pneg %p162
      %s264 = smul.u32 32, %s20
      %p265 = scmp.lt.s32.totalorder %s264, 95
      %s266 = scalar_select %p265, %s264, 95
      %p267 = scmp.lt.s32.totalorder %s21, 0
      %s268 = scalar_select %p267, %s21, 0
      %s269 = sadd.s32 %s268, %s266
      %s270 = smul.addr %s269, 4
      %s271 = scalar_lea.vmem %s4, %s270
      %s272 = smul.u32 32, %s20
      %s273 = smul.u32 4, %s22
      %p274 = scmp.lt.s32.totalorder %s272, 95
      %s275 = scalar_select %p274, %s272, 95
      %p276 = scmp.lt.s32.totalorder %s273, 3
      %s277 = scalar_select %p276, %s273, 3
      %s278 = smul.addr %s275, 4
      %s279 = sadd.s32 %s277, %s278
      %s280 = smul.addr %s279, 4
      %s281 = scalar_lea.vmem %s0, %s280
      %s282 = smul.u32 32, %s20
      %s283 = smul.u32 4, %s22
      %s284 = smul.u32 64, %s22
      %p285 = scmp.lt.s32.totalorder %s284, 63
      %s286 = scalar_select %p285, %s284, 63
      %p287 = scmp.lt.s32.totalorder %s21, 0
      %s288 = scalar_select %p287, %s21, 0
      %s289 = sadd.s32 %s288, %s286
      %s290 = smul.addr %s289, 4
      %s291 = scalar_lea.vmem %s1, %s290
      %s292 = smul.u32 64, %s22
      %p293 = scmp.lt.s32.totalorder %s21, 0
      %s294 = scalar_select %p293, %s21, 0
      %s295 = scalar_lea.vmem %s2, %s294
      %p296 = scmp.lt.s32.totalorder %s21, 0
      %s297 = scalar_select %p296, %s21, 0
      %s298 = scalar_lea.vmem %s3, %s297
      %s299 = smul.u32 32, %s20
      %p300 = scmp.lt.s32.totalorder %s299, 95
      %s301 = scalar_select %p300, %s299, 95
      %p302 = scmp.lt.s32.totalorder %s21, 0
      %s303 = scalar_select %p302, %s21, 0
      %s304 = sadd.s32 %s303, %s301
      %s305 = smul.addr %s304, 4
      %s306 = scalar_lea.vmem %s4, %s305
      %s307 = smul.u32 32, %s20
      %p308 = scmp.eq.s32.totalorder %s22, 0
      // Predicated region
      $region37: #{deepspeech2_forward.7} parent=35 // pred_check
        %p309 = pneg %p308
      $region38: #{deepspeech2_forward.7} parent=35 // pred_check_branch
        %311 = sbr.rel (%p309) target = $region40
      $region39: #{deepspeech2_forward.7} parent=35 // pred_region
        %312 = vst [vmem:[#allocation2] sm:$0xff] 0.0
        %313 = vst [vmem:[#allocation2 + $0x8] sm:$0xff] 0.0
        %314 = vst [vmem:[#allocation2 + $0x10] sm:$0xff] 0.0
        %315 = vst [vmem:[#allocation2 + $0x18] sm:$0xff] 0.0
        %316 = vst [vmem:[#allocation2 + $0x20] sm:$0xff] 0.0
        %317 = vst [vmem:[#allocation2 + $0x28] sm:$0xff] 0.0
        %318 = vst [vmem:[#allocation2 + $0x30] sm:$0xff] 0.0
        %319 = vst [vmem:[#allocation2 + $0x38] sm:$0xff] 0.0
        %320 = vst [vmem:[#allocation2 + $0x40] sm:$0xff] 0.0
        %321 = vst [vmem:[#allocation2 + $0x48] sm:$0xff] 0.0
        %322 = vst [vmem:[#allocation2 + $0x50] sm:$0xff] 0.0
        %323 = vst [vmem:[#allocation2 + $0x58] sm:$0xff] 0.0
        %324 = vst [vmem:[#allocation2 + $0x60] sm:$0xff] 0.0
        %325 = vst [vmem:[#allocation2 + $0x68] sm:$0xff] 0.0
        %326 = vst [vmem:[#allocation2 + $0x70] sm:$0xff] 0.0
        %327 = vst [vmem:[#allocation2 + $0x78] sm:$0xff] 0.0
        %328 = vst [vmem:[#allocation2 + $0x80] sm:$0xff] 0.0
        %329 = vst [vmem:[#allocation2 + $0x88] sm:$0xff] 0.0
        %330 = vst [vmem:[#allocation2 + $0x90] sm:$0xff] 0.0
        %331 = vst [vmem:[#allocation2 + $0x98] sm:$0xff] 0.0
        %332 = vst [vmem:[#allocation2 + $0xa0] sm:$0xff] 0.0
        %333 = vst [vmem:[#allocation2 + $0xa8] sm:$0xff] 0.0
        %334 = vst [vmem:[#allocation2 + $0xb0] sm:$0xff] 0.0
        %335 = vst [vmem:[#allocation2 + $0xb8] sm:$0xff] 0.0
        %336 = vst [vmem:[#allocation2 + $0xc0] sm:$0xff] 0.0
        %337 = vst [vmem:[#allocation2 + $0xc8] sm:$0xff] 0.0
        %338 = vst [vmem:[#allocation2 + $0xd0] sm:$0xff] 0.0
        %339 = vst [vmem:[#allocation2 + $0xd8] sm:$0xff] 0.0
        %340 = vst [vmem:[#allocation2 + $0xe0] sm:$0xff] 0.0
        %341 = vst [vmem:[#allocation2 + $0xe8] sm:$0xff] 0.0
        %342 = vst [vmem:[#allocation2 + $0xf0] sm:$0xff] 0.0
        %343 = vst [vmem:[#allocation2 + $0xf8] sm:$0xff] 0.0
      $region40: #{deepspeech2_forward.7} parent=35 // pred_fallthru
        _
      %v344 = vld [vmem:[#allocation2] sm:$0xff]
      %v345 = vld [vmem:[#allocation2 + $0x8] sm:$0xff]
      %v346 = vld [vmem:[#allocation2 + $0x10] sm:$0xff]
      %v347 = vld [vmem:[#allocation2 + $0x18] sm:$0xff]
      %v348 = vld [vmem:[#allocation2 + $0x20] sm:$0xff]
      %v349 = vld [vmem:[#allocation2 + $0x28] sm:$0xff]
      %v350 = vld [vmem:[#allocation2 + $0x30] sm:$0xff]
      %v351 = vld [vmem:[#allocation2 + $0x38] sm:$0xff]
      %v352 = vld [vmem:[#allocation2 + $0x40] sm:$0xff]
      %v353 = vld [vmem:[#allocation2 + $0x48] sm:$0xff]
      %v354 = vld [vmem:[#allocation2 + $0x50] sm:$0xff]
      %v355 = vld [vmem:[#allocation2 + $0x58] sm:$0xff]
      %v356 = vld [vmem:[#allocation2 + $0x60] sm:$0xff]
      %v357 = vld [vmem:[#allocation2 + $0x68] sm:$0xff]
      %v358 = vld [vmem:[#allocation2 + $0x70] sm:$0xff]
      %v359 = vld [vmem:[#allocation2 + $0x78] sm:$0xff]
      %v360 = vld [vmem:[#allocation2 + $0x80] sm:$0xff]
      %v361 = vld [vmem:[#allocation2 + $0x88] sm:$0xff]
      %v362 = vld [vmem:[#allocation2 + $0x90] sm:$0xff]
      %v363 = vld [vmem:[#allocation2 + $0x98] sm:$0xff]
      %v364 = vld [vmem:[#allocation2 + $0xa0] sm:$0xff]
      %v365 = vld [vmem:[#allocation2 + $0xa8] sm:$0xff]
      %v366 = vld [vmem:[#allocation2 + $0xb0] sm:$0xff]
      %v367 = vld [vmem:[#allocation2 + $0xb8] sm:$0xff]
      %v368 = vld [vmem:[#allocation2 + $0xc0] sm:$0xff]
      %v369 = vld [vmem:[#allocation2 + $0xc8] sm:$0xff]
      %v370 = vld [vmem:[#allocation2 + $0xd0] sm:$0xff]
      %v371 = vld [vmem:[#allocation2 + $0xd8] sm:$0xff]
      %v372 = vld [vmem:[#allocation2 + $0xe0] sm:$0xff]
      %v373 = vld [vmem:[#allocation2 + $0xe8] sm:$0xff]
      %v374 = vld [vmem:[#allocation2 + $0xf0] sm:$0xff]
      %v375 = vld [vmem:[#allocation2 + $0xf8] sm:$0xff]
      %v376 = vld [vmem:[%s281] sm:$0xff]
      %v377 = vld [vmem:[%s281 + $0x8] sm:$0xff]
      %v378 = vld [vmem:[%s281 + $0x10] sm:$0xff]
      %v379 = vld [vmem:[%s281 + $0x18] sm:$0xff]
      %v380 = vld [vmem:[%s281 + $0x20] sm:$0xff]
      %v381 = vld [vmem:[%s281 + $0x28] sm:$0xff]
      %v382 = vld [vmem:[%s281 + $0x30] sm:$0xff]
      %v383 = vld [vmem:[%s281 + $0x38] sm:$0xff]
      %v384 = vld [vmem:[%s281 + $0x40] sm:$0xff]
      %v385 = vld [vmem:[%s281 + $0x48] sm:$0xff]
      %v386 = vld [vmem:[%s281 + $0x50] sm:$0xff]
      %v387 = vld [vmem:[%s281 + $0x58] sm:$0xff]
      %v388 = vld [vmem:[%s281 + $0x60] sm:$0xff]
      %v389 = vld [vmem:[%s281 + $0x68] sm:$0xff]
      %v390 = vld [vmem:[%s281 + $0x70] sm:$0xff]
      %v391 = vld [vmem:[%s281 + $0x78] sm:$0xff]
      %v392 = vld [vmem:[%s281 + $0x80] sm:$0xff]
      %v393 = vld [vmem:[%s281 + $0x88] sm:$0xff]
      %v394 = vld [vmem:[%s281 + $0x90] sm:$0xff]
      %v395 = vld [vmem:[%s281 + $0x98] sm:$0xff]
      %v396 = vld [vmem:[%s281 + $0xa0] sm:$0xff]
      %v397 = vld [vmem:[%s281 + $0xa8] sm:$0xff]
      %v398 = vld [vmem:[%s281 + $0xb0] sm:$0xff]
      %v399 = vld [vmem:[%s281 + $0xb8] sm:$0xff]
      %v400 = vld [vmem:[%s281 + $0xc0] sm:$0xff]
      %v401 = vld [vmem:[%s281 + $0xc8] sm:$0xff]
      %v402 = vld [vmem:[%s281 + $0xd0] sm:$0xff]
      %v403 = vld [vmem:[%s281 + $0xd8] sm:$0xff]
      %v404 = vld [vmem:[%s281 + $0xe0] sm:$0xff]
      %v405 = vld [vmem:[%s281 + $0xe8] sm:$0xff]
      %v406 = vld [vmem:[%s281 + $0xf0] sm:$0xff]
      %v407 = vld [vmem:[%s281 + $0xf8] sm:$0xff]
      %v408 = vld [vmem:[%s281 + $0x100] sm:$0xff]
      %v409 = vld [vmem:[%s281 + $0x108] sm:$0xff]
      %v410 = vld [vmem:[%s281 + $0x110] sm:$0xff]
      %v411 = vld [vmem:[%s281 + $0x118] sm:$0xff]
      %v412 = vld [vmem:[%s281 + $0x120] sm:$0xff]
      %v413 = vld [vmem:[%s281 + $0x128] sm:$0xff]
      %v414 = vld [vmem:[%s281 + $0x130] sm:$0xff]
      %v415 = vld [vmem:[%s281 + $0x138] sm:$0xff]
      %v416 = vld [vmem:[%s281 + $0x140] sm:$0xff]
      %v417 = vld [vmem:[%s281 + $0x148] sm:$0xff]
      %v418 = vld [vmem:[%s281 + $0x150] sm:$0xff]
      %v419 = vld [vmem:[%s281 + $0x158] sm:$0xff]
      %v420 = vld [vmem:[%s281 + $0x160] sm:$0xff]
      %v421 = vld [vmem:[%s281 + $0x168] sm:$0xff]
      %v422 = vld [vmem:[%s281 + $0x170] sm:$0xff]
      %v423 = vld [vmem:[%s281 + $0x178] sm:$0xff]
      %v424 = vld [vmem:[%s281 + $0x180] sm:$0xff]
      %v425 = vld [vmem:[%s281 + $0x188] sm:$0xff]
      %v426 = vld [vmem:[%s281 + $0x190] sm:$0xff]
      %v427 = vld [vmem:[%s281 + $0x198] sm:$0xff]
      %v428 = vld [vmem:[%s281 + $0x1a0] sm:$0xff]
      %v429 = vld [vmem:[%s281 + $0x1a8] sm:$0xff]
      %v430 = vld [vmem:[%s281 + $0x1b0] sm:$0xff]
      %v431 = vld [vmem:[%s281 + $0x1b8] sm:$0xff]
      %v432 = vld [vmem:[%s281 + $0x1c0] sm:$0xff]
      %v433 = vld [vmem:[%s281 + $0x1c8] sm:$0xff]
      %v434 = vld [vmem:[%s281 + $0x1d0] sm:$0xff]
      %v435 = vld [vmem:[%s281 + $0x1d8] sm:$0xff]
      %v436 = vld [vmem:[%s281 + $0x1e0] sm:$0xff]
      %v437 = vld [vmem:[%s281 + $0x1e8] sm:$0xff]
      %v438 = vld [vmem:[%s281 + $0x1f0] sm:$0xff]
      %v439 = vld [vmem:[%s281 + $0x1f8] sm:$0xff]
      %v440 = vld [vmem:[%s291] sm:$0xf]
      %v441 = vld [vmem:[%s291 + $0x4] sm:$0xf]
      %v442 = vld [vmem:[%s291 + $0x8] sm:$0xf]
      %v443 = vld [vmem:[%s291 + $0xc] sm:$0xf]
      %v444 = vld [vmem:[%s291 + $0x10] sm:$0xf]
      %v445 = vld [vmem:[%s291 + $0x14] sm:$0xf]
      %v446 = vld [vmem:[%s291 + $0x18] sm:$0xf]
      %v447 = vld [vmem:[%s291 + $0x1c] sm:$0xf]
      %v448 = vld [vmem:[%s291 + $0x20] sm:$0xf]
      %v449 = vld [vmem:[%s291 + $0x24] sm:$0xf]
      %v450 = vld [vmem:[%s291 + $0x28] sm:$0xf]
      %v451 = vld [vmem:[%s291 + $0x2c] sm:$0xf]
      %v452 = vld [vmem:[%s291 + $0x30] sm:$0xf]
      %v453 = vld [vmem:[%s291 + $0x34] sm:$0xf]
      %v454 = vld [vmem:[%s291 + $0x38] sm:$0xf]
      %v455 = vld [vmem:[%s291 + $0x3c] sm:$0xf]
      %v456 = vld [vmem:[%s291 + $0x40] sm:$0xf]
      %v457 = vld [vmem:[%s291 + $0x44] sm:$0xf]
      %v458 = vld [vmem:[%s291 + $0x48] sm:$0xf]
      %v459 = vld [vmem:[%s291 + $0x4c] sm:$0xf]
      %v460 = vld [vmem:[%s291 + $0x50] sm:$0xf]
      %v461 = vld [vmem:[%s291 + $0x54] sm:$0xf]
      %v462 = vld [vmem:[%s291 + $0x58] sm:$0xf]
      %v463 = vld [vmem:[%s291 + $0x5c] sm:$0xf]
      %v464 = vld [vmem:[%s291 + $0x60] sm:$0xf]
      %v465 = vld [vmem:[%s291 + $0x64] sm:$0xf]
      %v466 = vld [vmem:[%s291 + $0x68] sm:$0xf]
      %v467 = vld [vmem:[%s291 + $0x6c] sm:$0xf]
      %v468 = vld [vmem:[%s291 + $0x70] sm:$0xf]
      %v469 = vld [vmem:[%s291 + $0x74] sm:$0xf]
      %v470 = vld [vmem:[%s291 + $0x78] sm:$0xf]
      %v471 = vld [vmem:[%s291 + $0x7c] sm:$0xf]
      %v472 = vld [vmem:[%s291 + $0x80] sm:$0xf]
      %v473 = vld [vmem:[%s291 + $0x84] sm:$0xf]
      %v474 = vld [vmem:[%s291 + $0x88] sm:$0xf]
      %v475 = vld [vmem:[%s291 + $0x8c] sm:$0xf]
      %v476 = vld [vmem:[%s291 + $0x90] sm:$0xf]
      %v477 = vld [vmem:[%s291 + $0x94] sm:$0xf]
      %v478 = vld [vmem:[%s291 + $0x98] sm:$0xf]
      %v479 = vld [vmem:[%s291 + $0x9c] sm:$0xf]
      %v480 = vld [vmem:[%s291 + $0xa0] sm:$0xf]
      %v481 = vld [vmem:[%s291 + $0xa4] sm:$0xf]
      %v482 = vld [vmem:[%s291 + $0xa8] sm:$0xf]
      %v483 = vld [vmem:[%s291 + $0xac] sm:$0xf]
      %v484 = vld [vmem:[%s291 + $0xb0] sm:$0xf]
      %v485 = vld [vmem:[%s291 + $0xb4] sm:$0xf]
      %v486 = vld [vmem:[%s291 + $0xb8] sm:$0xf]
      %v487 = vld [vmem:[%s291 + $0xbc] sm:$0xf]
      %v488 = vld [vmem:[%s291 + $0xc0] sm:$0xf]
      %v489 = vld [vmem:[%s291 + $0xc4] sm:$0xf]
      %v490 = vld [vmem:[%s291 + $0xc8] sm:$0xf]
      %v491 = vld [vmem:[%s291 + $0xcc] sm:$0xf]
      %v492 = vld [vmem:[%s291 + $0xd0] sm:$0xf]
      %v493 = vld [vmem:[%s291 + $0xd4] sm:$0xf]
      %v494 = vld [vmem:[%s291 + $0xd8] sm:$0xf]
      %v495 = vld [vmem:[%s291 + $0xdc] sm:$0xf]
      %v496 = vld [vmem:[%s291 + $0xe0] sm:$0xf]
      %v497 = vld [vmem:[%s291 + $0xe4] sm:$0xf]
      %v498 = vld [vmem:[%s291 + $0xe8] sm:$0xf]
      %v499 = vld [vmem:[%s291 + $0xec] sm:$0xf]
      %v500 = vld [vmem:[%s291 + $0xf0] sm:$0xf]
      %v501 = vld [vmem:[%s291 + $0xf4] sm:$0xf]
      %v502 = vld [vmem:[%s291 + $0xf8] sm:$0xf]
      %v503 = vld [vmem:[%s291 + $0xfc] sm:$0xf]
      %v568 = vunpack.c.l.b16 %v376
      %v569 = vunpack.c.h.b16 %v376
      %v570 = vunpack.c.l.b16 %v377
      %v571 = vunpack.c.h.b16 %v377
      %v572 = vunpack.c.l.b16 %v378
      %v573 = vunpack.c.h.b16 %v378
      %v574 = vunpack.c.l.b16 %v379
      %v575 = vunpack.c.h.b16 %v379
      %v576 = vunpack.c.l.b16 %v380
      %v577 = vunpack.c.h.b16 %v380
      %v578 = vunpack.c.l.b16 %v381
      %v579 = vunpack.c.h.b16 %v381
      %v580 = vunpack.c.l.b16 %v382
      %v581 = vunpack.c.h.b16 %v382
      %v582 = vunpack.c.l.b16 %v383
      %v583 = vunpack.c.h.b16 %v383
      %v584 = vunpack.c.l.b16 %v384
      %v585 = vunpack.c.h.b16 %v384
      %v586 = vunpack.c.l.b16 %v385
      %v587 = vunpack.c.h.b16 %v385
      %v588 = vunpack.c.l.b16 %v386
      %v589 = vunpack.c.h.b16 %v386
      %v590 = vunpack.c.l.b16 %v387
      %v591 = vunpack.c.h.b16 %v387
      %v592 = vunpack.c.l.b16 %v388
      %v593 = vunpack.c.h.b16 %v388
      %v594 = vunpack.c.l.b16 %v389
      %v595 = vunpack.c.h.b16 %v389
      %v596 = vunpack.c.l.b16 %v390
      %v597 = vunpack.c.h.b16 %v390
      %v598 = vunpack.c.l.b16 %v391
      %v599 = vunpack.c.h.b16 %v391
      %v600 = vunpack.c.l.b16 %v392
      %v601 = vunpack.c.h.b16 %v392
      %v602 = vunpack.c.l.b16 %v393
      %v603 = vunpack.c.h.b16 %v393
      %v604 = vunpack.c.l.b16 %v394
      %v605 = vunpack.c.h.b16 %v394
      %v606 = vunpack.c.l.b16 %v395
      %v607 = vunpack.c.h.b16 %v395
      %v608 = vunpack.c.l.b16 %v396
      %v609 = vunpack.c.h.b16 %v396
      %v610 = vunpack.c.l.b16 %v397
      %v611 = vunpack.c.h.b16 %v397
      %v612 = vunpack.c.l.b16 %v398
      %v613 = vunpack.c.h.b16 %v398
      %v614 = vunpack.c.l.b16 %v399
      %v615 = vunpack.c.h.b16 %v399
      %v616 = vunpack.c.l.b16 %v400
      %v617 = vunpack.c.h.b16 %v400
      %v618 = vunpack.c.l.b16 %v401
      %v619 = vunpack.c.h.b16 %v401
      %v620 = vunpack.c.l.b16 %v402
      %v621 = vunpack.c.h.b16 %v402
      %v622 = vunpack.c.l.b16 %v403
      %v623 = vunpack.c.h.b16 %v403
      %v624 = vunpack.c.l.b16 %v404
      %v625 = vunpack.c.h.b16 %v404
      %v626 = vunpack.c.l.b16 %v405
      %v627 = vunpack.c.h.b16 %v405
      %v628 = vunpack.c.l.b16 %v406
      %v629 = vunpack.c.h.b16 %v406
      %v630 = vunpack.c.l.b16 %v407
      %v631 = vunpack.c.h.b16 %v407
      %v632 = vunpack.c.l.b16 %v408
      %v633 = vunpack.c.h.b16 %v408
      %v634 = vunpack.c.l.b16 %v409
      %v635 = vunpack.c.h.b16 %v409
      %v636 = vunpack.c.l.b16 %v410
      %v637 = vunpack.c.h.b16 %v410
      %v638 = vunpack.c.l.b16 %v411
      %v639 = vunpack.c.h.b16 %v411
      %v640 = vunpack.c.l.b16 %v412
      %v641 = vunpack.c.h.b16 %v412
      %v642 = vunpack.c.l.b16 %v413
      %v643 = vunpack.c.h.b16 %v413
      %v644 = vunpack.c.l.b16 %v414
      %v645 = vunpack.c.h.b16 %v414
      %v646 = vunpack.c.l.b16 %v415
      %v647 = vunpack.c.h.b16 %v415
      %v648 = vunpack.c.l.b16 %v416
      %v649 = vunpack.c.h.b16 %v416
      %v650 = vunpack.c.l.b16 %v417
      %v651 = vunpack.c.h.b16 %v417
      %v652 = vunpack.c.l.b16 %v418
      %v653 = vunpack.c.h.b16 %v418
      %v654 = vunpack.c.l.b16 %v419
      %v655 = vunpack.c.h.b16 %v419
      %v656 = vunpack.c.l.b16 %v420
      %v657 = vunpack.c.h.b16 %v420
      %v658 = vunpack.c.l.b16 %v421
      %v659 = vunpack.c.h.b16 %v421
      %v660 = vunpack.c.l.b16 %v422
      %v661 = vunpack.c.h.b16 %v422
      %v662 = vunpack.c.l.b16 %v423
      %v663 = vunpack.c.h.b16 %v423
      %v664 = vunpack.c.l.b16 %v424
      %v665 = vunpack.c.h.b16 %v424
      %v666 = vunpack.c.l.b16 %v425
      %v667 = vunpack.c.h.b16 %v425
      %v668 = vunpack.c.l.b16 %v426
      %v669 = vunpack.c.h.b16 %v426
      %v670 = vunpack.c.l.b16 %v427
      %v671 = vunpack.c.h.b16 %v427
      %v672 = vunpack.c.l.b16 %v428
      %v673 = vunpack.c.h.b16 %v428
      %v674 = vunpack.c.l.b16 %v429
      %v675 = vunpack.c.h.b16 %v429
      %v676 = vunpack.c.l.b16 %v430
      %v677 = vunpack.c.h.b16 %v430
      %v678 = vunpack.c.l.b16 %v431
      %v679 = vunpack.c.h.b16 %v431
      %v680 = vunpack.c.l.b16 %v432
      %v681 = vunpack.c.h.b16 %v432
      %v682 = vunpack.c.l.b16 %v433
      %v683 = vunpack.c.h.b16 %v433
      %v684 = vunpack.c.l.b16 %v434
      %v685 = vunpack.c.h.b16 %v434
      %v686 = vunpack.c.l.b16 %v435
      %v687 = vunpack.c.h.b16 %v435
      %v688 = vunpack.c.l.b16 %v436
      %v689 = vunpack.c.h.b16 %v436
      %v690 = vunpack.c.l.b16 %v437
      %v691 = vunpack.c.h.b16 %v437
      %v692 = vunpack.c.l.b16 %v438
      %v693 = vunpack.c.h.b16 %v438
      %v694 = vunpack.c.l.b16 %v439
      %v695 = vunpack.c.h.b16 %v439
      %v696 = vpack.c.b16 %v572, %v568
      %v697 = vpack.c.b16 %v573, %v569
      %v698 = vpack.c.b16 %v574, %v570
      %v699 = vpack.c.b16 %v575, %v571
      %v700 = vpack.c.b16 %v580, %v576
      %v701 = vpack.c.b16 %v581, %v577
      %v702 = vpack.c.b16 %v582, %v578
      %v703 = vpack.c.b16 %v583, %v579
      %v704 = vpack.c.b16 %v588, %v584
      %v705 = vpack.c.b16 %v589, %v585
      %v706 = vpack.c.b16 %v590, %v586
      %v707 = vpack.c.b16 %v591, %v587
      %v708 = vpack.c.b16 %v596, %v592
      %v709 = vpack.c.b16 %v597, %v593
      %v710 = vpack.c.b16 %v598, %v594
      %v711 = vpack.c.b16 %v599, %v595
      %v712 = vpack.c.b16 %v604, %v600
      %v713 = vpack.c.b16 %v605, %v601
      %v714 = vpack.c.b16 %v606, %v602
      %v715 = vpack.c.b16 %v607, %v603
      %v716 = vpack.c.b16 %v612, %v608
      %v717 = vpack.c.b16 %v613, %v609
      %v718 = vpack.c.b16 %v614, %v610
      %v719 = vpack.c.b16 %v615, %v611
      %v720 = vpack.c.b16 %v620, %v616
      %v721 = vpack.c.b16 %v621, %v617
      %v722 = vpack.c.b16 %v622, %v618
      %v723 = vpack.c.b16 %v623, %v619
      %v724 = vpack.c.b16 %v628, %v624
      %v725 = vpack.c.b16 %v629, %v625
      %v726 = vpack.c.b16 %v630, %v626
      %v727 = vpack.c.b16 %v631, %v627
      %v728 = vpack.c.b16 %v636, %v632
      %v729 = vpack.c.b16 %v637, %v633
      %v730 = vpack.c.b16 %v638, %v634
      %v731 = vpack.c.b16 %v639, %v635
      %v732 = vpack.c.b16 %v644, %v640
      %v733 = vpack.c.b16 %v645, %v641
      %v734 = vpack.c.b16 %v646, %v642
      %v735 = vpack.c.b16 %v647, %v643
      %v736 = vpack.c.b16 %v652, %v648
      %v737 = vpack.c.b16 %v653, %v649
      %v738 = vpack.c.b16 %v654, %v650
      %v739 = vpack.c.b16 %v655, %v651
      %v740 = vpack.c.b16 %v660, %v656
      %v741 = vpack.c.b16 %v661, %v657
      %v742 = vpack.c.b16 %v662, %v658
      %v743 = vpack.c.b16 %v663, %v659
      %v744 = vpack.c.b16 %v668, %v664
      %v745 = vpack.c.b16 %v669, %v665
      %v746 = vpack.c.b16 %v670, %v666
      %v747 = vpack.c.b16 %v671, %v667
      %v748 = vpack.c.b16 %v676, %v672
      %v749 = vpack.c.b16 %v677, %v673
      %v750 = vpack.c.b16 %v678, %v674
      %v751 = vpack.c.b16 %v679, %v675
      %v752 = vpack.c.b16 %v684, %v680
      %v753 = vpack.c.b16 %v685, %v681
      %v754 = vpack.c.b16 %v686, %v682
      %v755 = vpack.c.b16 %v687, %v683
      %v756 = vpack.c.b16 %v692, %v688
      %v757 = vpack.c.b16 %v693, %v689
      %v758 = vpack.c.b16 %v694, %v690
      %v759 = vpack.c.b16 %v695, %v691
      %v888 = vunpack.c.l.b16 %v440
      %v889 = vunpack.c.l.b16 %v441
      %v890 = vunpack.c.l.b16 %v442
      %v891 = vunpack.c.l.b16 %v443
      %v892 = vunpack.c.l.b16 %v444
      %v893 = vunpack.c.l.b16 %v445
      %v894 = vunpack.c.l.b16 %v446
      %v895 = vunpack.c.l.b16 %v447
      %v896 = vunpack.c.l.b16 %v448
      %v897 = vunpack.c.l.b16 %v449
      %v898 = vunpack.c.l.b16 %v450
      %v899 = vunpack.c.l.b16 %v451
      %v900 = vunpack.c.l.b16 %v452
      %v901 = vunpack.c.l.b16 %v453
      %v902 = vunpack.c.l.b16 %v454
      %v903 = vunpack.c.l.b16 %v455
      %v904 = vunpack.c.l.b16 %v456
      %v905 = vunpack.c.l.b16 %v457
      %v906 = vunpack.c.l.b16 %v458
      %v907 = vunpack.c.l.b16 %v459
      %v908 = vunpack.c.l.b16 %v460
      %v909 = vunpack.c.l.b16 %v461
      %v910 = vunpack.c.l.b16 %v462
      %v911 = vunpack.c.l.b16 %v463
      %v912 = vunpack.c.l.b16 %v464
      %v913 = vunpack.c.l.b16 %v465
      %v914 = vunpack.c.l.b16 %v466
      %v915 = vunpack.c.l.b16 %v467
      %v916 = vunpack.c.l.b16 %v468
      %v917 = vunpack.c.l.b16 %v469
      %v918 = vunpack.c.l.b16 %v470
      %v919 = vunpack.c.l.b16 %v471
      %v920 = vunpack.c.l.b16 %v472
      %v921 = vunpack.c.l.b16 %v473
      %v922 = vunpack.c.l.b16 %v474
      %v923 = vunpack.c.l.b16 %v475
      %v924 = vunpack.c.l.b16 %v476
      %v925 = vunpack.c.l.b16 %v477
      %v926 = vunpack.c.l.b16 %v478
      %v927 = vunpack.c.l.b16 %v479
      %v928 = vunpack.c.l.b16 %v480
      %v929 = vunpack.c.l.b16 %v481
      %v930 = vunpack.c.l.b16 %v482
      %v931 = vunpack.c.l.b16 %v483
      %v932 = vunpack.c.l.b16 %v484
      %v933 = vunpack.c.l.b16 %v485
      %v934 = vunpack.c.l.b16 %v486
      %v935 = vunpack.c.l.b16 %v487
      %v936 = vunpack.c.l.b16 %v488
      %v937 = vunpack.c.l.b16 %v489
      %v938 = vunpack.c.l.b16 %v490
      %v939 = vunpack.c.l.b16 %v491
      %v940 = vunpack.c.l.b16 %v492
      %v941 = vunpack.c.l.b16 %v493
      %v942 = vunpack.c.l.b16 %v494
      %v943 = vunpack.c.l.b16 %v495
      %v944 = vunpack.c.l.b16 %v496
      %v945 = vunpack.c.l.b16 %v497
      %v946 = vunpack.c.l.b16 %v498
      %v947 = vunpack.c.l.b16 %v499
      %v948 = vunpack.c.l.b16 %v500
      %v949 = vunpack.c.l.b16 %v501
      %v950 = vunpack.c.l.b16 %v502
      %v951 = vunpack.c.l.b16 %v503
      %v952 = vpack.c.b16 %v889, %v888
      %v953 = vpack.c.b16 %v891, %v890
      %v954 = vpack.c.b16 %v893, %v892
      %v955 = vpack.c.b16 %v895, %v894
      %v956 = vpack.c.b16 %v897, %v896
      %v957 = vpack.c.b16 %v899, %v898
      %v958 = vpack.c.b16 %v901, %v900
      %v959 = vpack.c.b16 %v903, %v902
      %v960 = vpack.c.b16 %v905, %v904
      %v961 = vpack.c.b16 %v907, %v906
      %v962 = vpack.c.b16 %v909, %v908
      %v963 = vpack.c.b16 %v911, %v910
      %v964 = vpack.c.b16 %v913, %v912
      %v965 = vpack.c.b16 %v915, %v914
      %v966 = vpack.c.b16 %v917, %v916
      %v967 = vpack.c.b16 %v919, %v918
      %v968 = vpack.c.b16 %v921, %v920
      %v969 = vpack.c.b16 %v923, %v922
      %v970 = vpack.c.b16 %v925, %v924
      %v971 = vpack.c.b16 %v927, %v926
      %v972 = vpack.c.b16 %v929, %v928
      %v973 = vpack.c.b16 %v931, %v930
      %v974 = vpack.c.b16 %v933, %v932
      %v975 = vpack.c.b16 %v935, %v934
      %v976 = vpack.c.b16 %v937, %v936
      %v977 = vpack.c.b16 %v939, %v938
      %v978 = vpack.c.b16 %v941, %v940
      %v979 = vpack.c.b16 %v943, %v942
      %v980 = vpack.c.b16 %v945, %v944
      %v981 = vpack.c.b16 %v947, %v946
      %v982 = vpack.c.b16 %v949, %v948
      %v983 = vpack.c.b16 %v951, %v950
      %1016 = vmatpush.bf16.msra.mxu0 %v959
      %1017 = vmatpush.bf16.msra.mxu0 %v958
      %1018 = vmatpush.bf16.msra.mxu0 %v957
      %1019 = vmatpush.bf16.msra.mxu0 %v956
      %1020 = vmatpush.bf16.msra.mxu0 %v955
      %1021 = vmatpush.bf16.msra.mxu0 %v954
      %1022 = vmatpush.bf16.msra.mxu0 %v953
      %1023 = vmatpush.bf16.msra.mxu0 %v952
      %1024 = vmatmul.bf16.gmra.mxu0 %v696
      %v1025 = vpop.f32.mrf.mxu0
      %v1026 = vadd.f32 0.0, %v1025
      %v1027 = vpop.f32.mrf.mxu0
      %v1028 = vadd.f32 0.0, %v1027
      %1029 = vmatmul.bf16.gmra.mxu0 %v700
      %v1030 = vpop.f32.mrf.mxu0
      %v1031 = vadd.f32 0.0, %v1030
      %v1032 = vpop.f32.mrf.mxu0
      %v1033 = vadd.f32 0.0, %v1032
      %1034 = vmatmul.bf16.gmra.mxu0 %v704
      %v1035 = vpop.f32.mrf.mxu0
      %v1036 = vadd.f32 0.0, %v1035
      %v1037 = vpop.f32.mrf.mxu0
      %v1038 = vadd.f32 0.0, %v1037
      %1039 = vmatmul.bf16.gmra.mxu0 %v708
      %v1040 = vpop.f32.mrf.mxu0
      %v1041 = vadd.f32 0.0, %v1040
      %v1042 = vpop.f32.mrf.mxu0
      %v1043 = vadd.f32 0.0, %v1042
      %1044 = vmatmul.bf16.gmra.mxu0 %v712
      %v1045 = vpop.f32.mrf.mxu0
      %v1046 = vadd.f32 0.0, %v1045
      %v1047 = vpop.f32.mrf.mxu0
      %v1048 = vadd.f32 0.0, %v1047
      %1049 = vmatmul.bf16.gmra.mxu0 %v716
      %v1050 = vpop.f32.mrf.mxu0
      %v1051 = vadd.f32 0.0, %v1050
      %v1052 = vpop.f32.mrf.mxu0
      %v1053 = vadd.f32 0.0, %v1052
      %1054 = vmatmul.bf16.gmra.mxu0 %v720
      %v1055 = vpop.f32.mrf.mxu0
      %v1056 = vadd.f32 0.0, %v1055
      %v1057 = vpop.f32.mrf.mxu0
      %v1058 = vadd.f32 0.0, %v1057
      %1059 = vmatmul.bf16.gmra.mxu0 %v724
      %v1060 = vpop.f32.mrf.mxu0
      %v1061 = vadd.f32 0.0, %v1060
      %v1062 = vpop.f32.mrf.mxu0
      %v1063 = vadd.f32 0.0, %v1062
      %1064 = vmatmul.bf16.gmra.mxu0 %v728
      %v1065 = vpop.f32.mrf.mxu0
      %v1066 = vadd.f32 0.0, %v1065
      %v1067 = vpop.f32.mrf.mxu0
      %v1068 = vadd.f32 0.0, %v1067
      %1069 = vmatmul.bf16.gmra.mxu0 %v732
      %v1070 = vpop.f32.mrf.mxu0
      %v1071 = vadd.f32 0.0, %v1070
      %v1072 = vpop.f32.mrf.mxu0
      %v1073 = vadd.f32 0.0, %v1072
      %1074 = vmatmul.bf16.gmra.mxu0 %v736
      %v1075 = vpop.f32.mrf.mxu0
      %v1076 = vadd.f32 0.0, %v1075
      %v1077 = vpop.f32.mrf.mxu0
      %v1078 = vadd.f32 0.0, %v1077
      %1079 = vmatmul.bf16.gmra.mxu0 %v740
      %v1080 = vpop.f32.mrf.mxu0
      %v1081 = vadd.f32 0.0, %v1080
      %v1082 = vpop.f32.mrf.mxu0
      %v1083 = vadd.f32 0.0, %v1082
      %1084 = vmatmul.bf16.gmra.mxu0 %v744
      %v1085 = vpop.f32.mrf.mxu0
      %v1086 = vadd.f32 0.0, %v1085
      %v1087 = vpop.f32.mrf.mxu0
      %v1088 = vadd.f32 0.0, %v1087
      %1089 = vmatmul.bf16.gmra.mxu0 %v748
      %v1090 = vpop.f32.mrf.mxu0
      %v1091 = vadd.f32 0.0, %v1090
      %v1092 = vpop.f32.mrf.mxu0
      %v1093 = vadd.f32 0.0, %v1092
      %1094 = vmatmul.bf16.gmra.mxu0 %v752
      %v1095 = vpop.f32.mrf.mxu0
      %v1096 = vadd.f32 0.0, %v1095
      %v1097 = vpop.f32.mrf.mxu0
      %v1098 = vadd.f32 0.0, %v1097
      %1099 = vmatmul.bf16.gmra.mxu0 %v756
      %v1100 = vpop.f32.mrf.mxu0
      %v1101 = vadd.f32 0.0, %v1100
      %v1102 = vpop.f32.mrf.mxu0
      %v1103 = vadd.f32 0.0, %v1102
      %1104 = vdwg.mxu0
      %1105 = vmatpush.bf16.msra.mxu0 %v967
      %1106 = vmatpush.bf16.msra.mxu0 %v966
      %1107 = vmatpush.bf16.msra.mxu0 %v965
      %1108 = vmatpush.bf16.msra.mxu0 %v964
      %1109 = vmatpush.bf16.msra.mxu0 %v963
      %1110 = vmatpush.bf16.msra.mxu0 %v962
      %1111 = vmatpush.bf16.msra.mxu0 %v961
      %1112 = vmatpush.bf16.msra.mxu0 %v960
      %1113 = vmatmul.bf16.gmra.mxu0 %v697
      %v1114 = vpop.f32.mrf.mxu0
      %v1115 = vadd.f32 %v1026, %v1114
      %v1116 = vpop.f32.mrf.mxu0
      %v1117 = vadd.f32 %v1028, %v1116
      %1118 = vmatmul.bf16.gmra.mxu0 %v701
      %v1119 = vpop.f32.mrf.mxu0
      %v1120 = vadd.f32 %v1031, %v1119
      %v1121 = vpop.f32.mrf.mxu0
      %v1122 = vadd.f32 %v1033, %v1121
      %1123 = vmatmul.bf16.gmra.mxu0 %v705
      %v1124 = vpop.f32.mrf.mxu0
      %v1125 = vadd.f32 %v1036, %v1124
      %v1126 = vpop.f32.mrf.mxu0
      %v1127 = vadd.f32 %v1038, %v1126
      %1128 = vmatmul.bf16.gmra.mxu0 %v709
      %v1129 = vpop.f32.mrf.mxu0
      %v1130 = vadd.f32 %v1041, %v1129
      %v1131 = vpop.f32.mrf.mxu0
      %v1132 = vadd.f32 %v1043, %v1131
      %1133 = vmatmul.bf16.gmra.mxu0 %v713
      %v1134 = vpop.f32.mrf.mxu0
      %v1135 = vadd.f32 %v1046, %v1134
      %v1136 = vpop.f32.mrf.mxu0
      %v1137 = vadd.f32 %v1048, %v1136
      %1138 = vmatmul.bf16.gmra.mxu0 %v717
      %v1139 = vpop.f32.mrf.mxu0
      %v1140 = vadd.f32 %v1051, %v1139
      %v1141 = vpop.f32.mrf.mxu0
      %v1142 = vadd.f32 %v1053, %v1141
      %1143 = vmatmul.bf16.gmra.mxu0 %v721
      %v1144 = vpop.f32.mrf.mxu0
      %v1145 = vadd.f32 %v1056, %v1144
      %v1146 = vpop.f32.mrf.mxu0
      %v1147 = vadd.f32 %v1058, %v1146
      %1148 = vmatmul.bf16.gmra.mxu0 %v725
      %v1149 = vpop.f32.mrf.mxu0
      %v1150 = vadd.f32 %v1061, %v1149
      %v1151 = vpop.f32.mrf.mxu0
      %v1152 = vadd.f32 %v1063, %v1151
      %1153 = vmatmul.bf16.gmra.mxu0 %v729
      %v1154 = vpop.f32.mrf.mxu0
      %v1155 = vadd.f32 %v1066, %v1154
      %v1156 = vpop.f32.mrf.mxu0
      %v1157 = vadd.f32 %v1068, %v1156
      %1158 = vmatmul.bf16.gmra.mxu0 %v733
      %v1159 = vpop.f32.mrf.mxu0
      %v1160 = vadd.f32 %v1071, %v1159
      %v1161 = vpop.f32.mrf.mxu0
      %v1162 = vadd.f32 %v1073, %v1161
      %1163 = vmatmul.bf16.gmra.mxu0 %v737
      %v1164 = vpop.f32.mrf.mxu0
      %v1165 = vadd.f32 %v1076, %v1164
      %v1166 = vpop.f32.mrf.mxu0
      %v1167 = vadd.f32 %v1078, %v1166
      %1168 = vmatmul.bf16.gmra.mxu0 %v741
      %v1169 = vpop.f32.mrf.mxu0
      %v1170 = vadd.f32 %v1081, %v1169
      %v1171 = vpop.f32.mrf.mxu0
      %v1172 = vadd.f32 %v1083, %v1171
      %1173 = vmatmul.bf16.gmra.mxu0 %v745
      %v1174 = vpop.f32.mrf.mxu0
      %v1175 = vadd.f32 %v1086, %v1174
      %v1176 = vpop.f32.mrf.mxu0
      %v1177 = vadd.f32 %v1088, %v1176
      %1178 = vmatmul.bf16.gmra.mxu0 %v749
      %v1179 = vpop.f32.mrf.mxu0
      %v1180 = vadd.f32 %v1091, %v1179
      %v1181 = vpop.f32.mrf.mxu0
      %v1182 = vadd.f32 %v1093, %v1181
      %1183 = vmatmul.bf16.gmra.mxu0 %v753
      %v1184 = vpop.f32.mrf.mxu0
      %v1185 = vadd.f32 %v1096, %v1184
      %v1186 = vpop.f32.mrf.mxu0
      %v1187 = vadd.f32 %v1098, %v1186
      %1188 = vmatmul.bf16.gmra.mxu0 %v757
      %v1189 = vpop.f32.mrf.mxu0
      %v1190 = vadd.f32 %v1101, %v1189
      %v1191 = vpop.f32.mrf.mxu0
      %v1192 = vadd.f32 %v1103, %v1191
      %1193 = vdwg.mxu0
      %1194 = vmatpush.bf16.msra.mxu0 %v975
      %1195 = vmatpush.bf16.msra.mxu0 %v974
      %1196 = vmatpush.bf16.msra.mxu0 %v973
      %1197 = vmatpush.bf16.msra.mxu0 %v972
      %1198 = vmatpush.bf16.msra.mxu0 %v971
      %1199 = vmatpush.bf16.msra.mxu0 %v970
      %1200 = vmatpush.bf16.msra.mxu0 %v969
      %1201 = vmatpush.bf16.msra.mxu0 %v968
      %1202 = vmatmul.bf16.gmra.mxu0 %v698
      %v1203 = vpop.f32.mrf.mxu0
      %v1204 = vadd.f32 %v1115, %v1203
      %v1205 = vpop.f32.mrf.mxu0
      %v1206 = vadd.f32 %v1117, %v1205
      %1207 = vmatmul.bf16.gmra.mxu0 %v702
      %v1208 = vpop.f32.mrf.mxu0
      %v1209 = vadd.f32 %v1120, %v1208
      %v1210 = vpop.f32.mrf.mxu0
      %v1211 = vadd.f32 %v1122, %v1210
      %1212 = vmatmul.bf16.gmra.mxu0 %v706
      %v1213 = vpop.f32.mrf.mxu0
      %v1214 = vadd.f32 %v1125, %v1213
      %v1215 = vpop.f32.mrf.mxu0
      %v1216 = vadd.f32 %v1127, %v1215
      %1217 = vmatmul.bf16.gmra.mxu0 %v710
      %v1218 = vpop.f32.mrf.mxu0
      %v1219 = vadd.f32 %v1130, %v1218
      %v1220 = vpop.f32.mrf.mxu0
      %v1221 = vadd.f32 %v1132, %v1220
      %1222 = vmatmul.bf16.gmra.mxu0 %v714
      %v1223 = vpop.f32.mrf.mxu0
      %v1224 = vadd.f32 %v1135, %v1223
      %v1225 = vpop.f32.mrf.mxu0
      %v1226 = vadd.f32 %v1137, %v1225
      %1227 = vmatmul.bf16.gmra.mxu0 %v718
      %v1228 = vpop.f32.mrf.mxu0
      %v1229 = vadd.f32 %v1140, %v1228
      %v1230 = vpop.f32.mrf.mxu0
      %v1231 = vadd.f32 %v1142, %v1230
      %1232 = vmatmul.bf16.gmra.mxu0 %v722
      %v1233 = vpop.f32.mrf.mxu0
      %v1234 = vadd.f32 %v1145, %v1233
      %v1235 = vpop.f32.mrf.mxu0
      %v1236 = vadd.f32 %v1147, %v1235
      %1237 = vmatmul.bf16.gmra.mxu0 %v726
      %v1238 = vpop.f32.mrf.mxu0
      %v1239 = vadd.f32 %v1150, %v1238
      %v1240 = vpop.f32.mrf.mxu0
      %v1241 = vadd.f32 %v1152, %v1240
      %1242 = vmatmul.bf16.gmra.mxu0 %v730
      %v1243 = vpop.f32.mrf.mxu0
      %v1244 = vadd.f32 %v1155, %v1243
      %v1245 = vpop.f32.mrf.mxu0
      %v1246 = vadd.f32 %v1157, %v1245
      %1247 = vmatmul.bf16.gmra.mxu0 %v734
      %v1248 = vpop.f32.mrf.mxu0
      %v1249 = vadd.f32 %v1160, %v1248
      %v1250 = vpop.f32.mrf.mxu0
      %v1251 = vadd.f32 %v1162, %v1250
      %1252 = vmatmul.bf16.gmra.mxu0 %v738
      %v1253 = vpop.f32.mrf.mxu0
      %v1254 = vadd.f32 %v1165, %v1253
      %v1255 = vpop.f32.mrf.mxu0
      %v1256 = vadd.f32 %v1167, %v1255
      %1257 = vmatmul.bf16.gmra.mxu0 %v742
      %v1258 = vpop.f32.mrf.mxu0
      %v1259 = vadd.f32 %v1170, %v1258
      %v1260 = vpop.f32.mrf.mxu0
      %v1261 = vadd.f32 %v1172, %v1260
      %1262 = vmatmul.bf16.gmra.mxu0 %v746
      %v1263 = vpop.f32.mrf.mxu0
      %v1264 = vadd.f32 %v1175, %v1263
      %v1265 = vpop.f32.mrf.mxu0
      %v1266 = vadd.f32 %v1177, %v1265
      %1267 = vmatmul.bf16.gmra.mxu0 %v750
      %v1268 = vpop.f32.mrf.mxu0
      %v1269 = vadd.f32 %v1180, %v1268
      %v1270 = vpop.f32.mrf.mxu0
      %v1271 = vadd.f32 %v1182, %v1270
      %1272 = vmatmul.bf16.gmra.mxu0 %v754
      %v1273 = vpop.f32.mrf.mxu0
      %v1274 = vadd.f32 %v1185, %v1273
      %v1275 = vpop.f32.mrf.mxu0
      %v1276 = vadd.f32 %v1187, %v1275
      %1277 = vmatmul.bf16.gmra.mxu0 %v758
      %v1278 = vpop.f32.mrf.mxu0
      %v1279 = vadd.f32 %v1190, %v1278
      %v1280 = vpop.f32.mrf.mxu0
      %v1281 = vadd.f32 %v1192, %v1280
      %1282 = vdwg.mxu0
      %1283 = vmatpush.bf16.msra.mxu0 %v983
      %1284 = vmatpush.bf16.msra.mxu0 %v982
      %1285 = vmatpush.bf16.msra.mxu0 %v981
      %1286 = vmatpush.bf16.msra.mxu0 %v980
      %1287 = vmatpush.bf16.msra.mxu0 %v979
      %1288 = vmatpush.bf16.msra.mxu0 %v978
      %1289 = vmatpush.bf16.msra.mxu0 %v977
      %1290 = vmatpush.bf16.msra.mxu0 %v976
      %1291 = vmatmul.bf16.gmra.mxu0 %v699
      %v1292 = vpop.f32.mrf.mxu0
      %v1293 = vadd.f32 %v1204, %v1292
      %v1294 = vpop.f32.mrf.mxu0
      %v1295 = vadd.f32 %v1206, %v1294
      %1296 = vmatmul.bf16.gmra.mxu0 %v703
      %v1297 = vpop.f32.mrf.mxu0
      %v1298 = vadd.f32 %v1209, %v1297
      %v1299 = vpop.f32.mrf.mxu0
      %v1300 = vadd.f32 %v1211, %v1299
      %1301 = vmatmul.bf16.gmra.mxu0 %v707
      %v1302 = vpop.f32.mrf.mxu0
      %v1303 = vadd.f32 %v1214, %v1302
      %v1304 = vpop.f32.mrf.mxu0
      %v1305 = vadd.f32 %v1216, %v1304
      %1306 = vmatmul.bf16.gmra.mxu0 %v711
      %v1307 = vpop.f32.mrf.mxu0
      %v1308 = vadd.f32 %v1219, %v1307
      %v1309 = vpop.f32.mrf.mxu0
      %v1310 = vadd.f32 %v1221, %v1309
      %1311 = vmatmul.bf16.gmra.mxu0 %v715
      %v1312 = vpop.f32.mrf.mxu0
      %v1313 = vadd.f32 %v1224, %v1312
      %v1314 = vpop.f32.mrf.mxu0
      %v1315 = vadd.f32 %v1226, %v1314
      %1316 = vmatmul.bf16.gmra.mxu0 %v719
      %v1317 = vpop.f32.mrf.mxu0
      %v1318 = vadd.f32 %v1229, %v1317
      %v1319 = vpop.f32.mrf.mxu0
      %v1320 = vadd.f32 %v1231, %v1319
      %1321 = vmatmul.bf16.gmra.mxu0 %v723
      %v1322 = vpop.f32.mrf.mxu0
      %v1323 = vadd.f32 %v1234, %v1322
      %v1324 = vpop.f32.mrf.mxu0
      %v1325 = vadd.f32 %v1236, %v1324
      %1326 = vmatmul.bf16.gmra.mxu0 %v727
      %v1327 = vpop.f32.mrf.mxu0
      %v1328 = vadd.f32 %v1239, %v1327
      %v1329 = vpop.f32.mrf.mxu0
      %v1330 = vadd.f32 %v1241, %v1329
      %1331 = vmatmul.bf16.gmra.mxu0 %v731
      %v1332 = vpop.f32.mrf.mxu0
      %v1333 = vadd.f32 %v1244, %v1332
      %v1334 = vpop.f32.mrf.mxu0
      %v1335 = vadd.f32 %v1246, %v1334
      %1336 = vmatmul.bf16.gmra.mxu0 %v735
      %v1337 = vpop.f32.mrf.mxu0
      %v1338 = vadd.f32 %v1249, %v1337
      %v1339 = vpop.f32.mrf.mxu0
      %v1340 = vadd.f32 %v1251, %v1339
      %1341 = vmatmul.bf16.gmra.mxu0 %v739
      %v1342 = vpop.f32.mrf.mxu0
      %v1343 = vadd.f32 %v1254, %v1342
      %v1344 = vpop.f32.mrf.mxu0
      %v1345 = vadd.f32 %v1256, %v1344
      %1346 = vmatmul.bf16.gmra.mxu0 %v743
      %v1347 = vpop.f32.mrf.mxu0
      %v1348 = vadd.f32 %v1259, %v1347
      %v1349 = vpop.f32.mrf.mxu0
      %v1350 = vadd.f32 %v1261, %v1349
      %1351 = vmatmul.bf16.gmra.mxu0 %v747
      %v1352 = vpop.f32.mrf.mxu0
      %v1353 = vadd.f32 %v1264, %v1352
      %v1354 = vpop.f32.mrf.mxu0
      %v1355 = vadd.f32 %v1266, %v1354
      %1356 = vmatmul.bf16.gmra.mxu0 %v751
      %v1357 = vpop.f32.mrf.mxu0
      %v1358 = vadd.f32 %v1269, %v1357
      %v1359 = vpop.f32.mrf.mxu0
      %v1360 = vadd.f32 %v1271, %v1359
      %1361 = vmatmul.bf16.gmra.mxu0 %v755
      %v1362 = vpop.f32.mrf.mxu0
      %v1363 = vadd.f32 %v1274, %v1362
      %v1364 = vpop.f32.mrf.mxu0
      %v1365 = vadd.f32 %v1276, %v1364
      %1366 = vmatmul.bf16.gmra.mxu0 %v759
      %v1367 = vpop.f32.mrf.mxu0
      %v1368 = vadd.f32 %v1279, %v1367
      %v1369 = vpop.f32.mrf.mxu0
      %v1370 = vadd.f32 %v1281, %v1369
      %1371 = vdwg.mxu0
      %v1372 = vadd.f32 %v344, %v1293
      %v1373 = vadd.f32 %v345, %v1295
      %v1374 = vadd.f32 %v346, %v1298
      %v1375 = vadd.f32 %v347, %v1300
      %v1376 = vadd.f32 %v348, %v1303
      %v1377 = vadd.f32 %v349, %v1305
      %v1378 = vadd.f32 %v350, %v1308
      %v1379 = vadd.f32 %v351, %v1310
      %v1380 = vadd.f32 %v352, %v1313
      %v1381 = vadd.f32 %v353, %v1315
      %v1382 = vadd.f32 %v354, %v1318
      %v1383 = vadd.f32 %v355, %v1320
      %v1384 = vadd.f32 %v356, %v1323
      %v1385 = vadd.f32 %v357, %v1325
      %v1386 = vadd.f32 %v358, %v1328
      %v1387 = vadd.f32 %v359, %v1330
      %v1388 = vadd.f32 %v360, %v1333
      %v1389 = vadd.f32 %v361, %v1335
      %v1390 = vadd.f32 %v362, %v1338
      %v1391 = vadd.f32 %v363, %v1340
      %v1392 = vadd.f32 %v364, %v1343
      %v1393 = vadd.f32 %v365, %v1345
      %v1394 = vadd.f32 %v366, %v1348
      %v1395 = vadd.f32 %v367, %v1350
      %v1396 = vadd.f32 %v368, %v1353
      %v1397 = vadd.f32 %v369, %v1355
      %v1398 = vadd.f32 %v370, %v1358
      %v1399 = vadd.f32 %v371, %v1360
      %v1400 = vadd.f32 %v372, %v1363
      %v1401 = vadd.f32 %v373, %v1365
      %v1402 = vadd.f32 %v374, %v1368
      %v1403 = vadd.f32 %v375, %v1370
      %1404 = vst [vmem:[#allocation2] sm:$0xff] %v1372
      %1405 = vst [vmem:[#allocation2 + $0x8] sm:$0xff] %v1373
      %1406 = vst [vmem:[#allocation2 + $0x10] sm:$0xff] %v1374
      %1407 = vst [vmem:[#allocation2 + $0x18] sm:$0xff] %v1375
      %1408 = vst [vmem:[#allocation2 + $0x20] sm:$0xff] %v1376
      %1409 = vst [vmem:[#allocation2 + $0x28] sm:$0xff] %v1377
      %1410 = vst [vmem:[#allocation2 + $0x30] sm:$0xff] %v1378
      %1411 = vst [vmem:[#allocation2 + $0x38] sm:$0xff] %v1379
      %1412 = vst [vmem:[#allocation2 + $0x40] sm:$0xff] %v1380
      %1413 = vst [vmem:[#allocation2 + $0x48] sm:$0xff] %v1381
      %1414 = vst [vmem:[#allocation2 + $0x50] sm:$0xff] %v1382
      %1415 = vst [vmem:[#allocation2 + $0x58] sm:$0xff] %v1383
      %1416 = vst [vmem:[#allocation2 + $0x60] sm:$0xff] %v1384
      %1417 = vst [vmem:[#allocation2 + $0x68] sm:$0xff] %v1385
      %1418 = vst [vmem:[#allocation2 + $0x70] sm:$0xff] %v1386
      %1419 = vst [vmem:[#allocation2 + $0x78] sm:$0xff] %v1387
      %1420 = vst [vmem:[#allocation2 + $0x80] sm:$0xff] %v1388
      %1421 = vst [vmem:[#allocation2 + $0x88] sm:$0xff] %v1389
      %1422 = vst [vmem:[#allocation2 + $0x90] sm:$0xff] %v1390
      %1423 = vst [vmem:[#allocation2 + $0x98] sm:$0xff] %v1391
      %1424 = vst [vmem:[#allocation2 + $0xa0] sm:$0xff] %v1392
      %1425 = vst [vmem:[#allocation2 + $0xa8] sm:$0xff] %v1393
      %1426 = vst [vmem:[#allocation2 + $0xb0] sm:$0xff] %v1394
      %1427 = vst [vmem:[#allocation2 + $0xb8] sm:$0xff] %v1395
      %1428 = vst [vmem:[#allocation2 + $0xc0] sm:$0xff] %v1396
      %1429 = vst [vmem:[#allocation2 + $0xc8] sm:$0xff] %v1397
      %1430 = vst [vmem:[#allocation2 + $0xd0] sm:$0xff] %v1398
      %1431 = vst [vmem:[#allocation2 + $0xd8] sm:$0xff] %v1399
      %1432 = vst [vmem:[#allocation2 + $0xe0] sm:$0xff] %v1400
      %1433 = vst [vmem:[#allocation2 + $0xe8] sm:$0xff] %v1401
      %1434 = vst [vmem:[#allocation2 + $0xf0] sm:$0xff] %v1402
      %1435 = vst [vmem:[#allocation2 + $0xf8] sm:$0xff] %v1403
      // Predicated region
      $region41: #{deepspeech2_forward.7} parent=35 // pred_check
        %p1436 = pneg %p308
      $region42: #{deepspeech2_forward.7} parent=35 // pred_check_branch
        %1438 = sbr.rel (%p1436) target = $region44
      $region43: #{deepspeech2_forward.7} parent=35 // pred_region
        %v1439 = vld [vmem:[#allocation2] sm:$0xff]
        %v1440 = vld [vmem:[#allocation2 + $0x8] sm:$0xff]
        %v1441 = vld [vmem:[#allocation2 + $0x10] sm:$0xff]
        %v1442 = vld [vmem:[#allocation2 + $0x18] sm:$0xff]
        %v1443 = vld [vmem:[#allocation2 + $0x20] sm:$0xff]
        %v1444 = vld [vmem:[#allocation2 + $0x28] sm:$0xff]
        %v1445 = vld [vmem:[#allocation2 + $0x30] sm:$0xff]
        %v1446 = vld [vmem:[#allocation2 + $0x38] sm:$0xff]
        %v1447 = vld [vmem:[#allocation2 + $0x40] sm:$0xff]
        %v1448 = vld [vmem:[#allocation2 + $0x48] sm:$0xff]
        %v1449 = vld [vmem:[#allocation2 + $0x50] sm:$0xff]
        %v1450 = vld [vmem:[#allocation2 + $0x58] sm:$0xff]
        %v1451 = vld [vmem:[#allocation2 + $0x60] sm:$0xff]
        %v1452 = vld [vmem:[#allocation2 + $0x68] sm:$0xff]
        %v1453 = vld [vmem:[#allocation2 + $0x70] sm:$0xff]
        %v1454 = vld [vmem:[#allocation2 + $0x78] sm:$0xff]
        %v1455 = vld [vmem:[#allocation2 + $0x80] sm:$0xff]
        %v1456 = vld [vmem:[#allocation2 + $0x88] sm:$0xff]
        %v1457 = vld [vmem:[#allocation2 + $0x90] sm:$0xff]
        %v1458 = vld [vmem:[#allocation2 + $0x98] sm:$0xff]
        %v1459 = vld [vmem:[#allocation2 + $0xa0] sm:$0xff]
        %v1460 = vld [vmem:[#allocation2 + $0xa8] sm:$0xff]
        %v1461 = vld [vmem:[#allocation2 + $0xb0] sm:$0xff]
        %v1462 = vld [vmem:[#allocation2 + $0xb8] sm:$0xff]
        %v1463 = vld [vmem:[#allocation2 + $0xc0] sm:$0xff]
        %v1464 = vld [vmem:[#allocation2 + $0xc8] sm:$0xff]
        %v1465 = vld [vmem:[#allocation2 + $0xd0] sm:$0xff]
        %v1466 = vld [vmem:[#allocation2 + $0xd8] sm:$0xff]
        %v1467 = vld [vmem:[#allocation2 + $0xe0] sm:$0xff]
        %v1468 = vld [vmem:[#allocation2 + $0xe8] sm:$0xff]
        %v1469 = vld [vmem:[#allocation2 + $0xf0] sm:$0xff]
        %v1470 = vld [vmem:[#allocation2 + $0xf8] sm:$0xff]
        %v1471 = vld [vmem:[%s295] sm:$0x1]
        %v1473 = vperm.slane %v1471, 0
        %v1475 = vmul.f32 %v1439, %v1473
        %v1476 = vmul.f32 %v1440, %v1473
        %v1477 = vmul.f32 %v1441, %v1473
        %v1478 = vmul.f32 %v1442, %v1473
        %v1479 = vmul.f32 %v1443, %v1473
        %v1480 = vmul.f32 %v1444, %v1473
        %v1481 = vmul.f32 %v1445, %v1473
        %v1482 = vmul.f32 %v1446, %v1473
        %v1483 = vmul.f32 %v1447, %v1473
        %v1484 = vmul.f32 %v1448, %v1473
        %v1485 = vmul.f32 %v1449, %v1473
        %v1486 = vmul.f32 %v1450, %v1473
        %v1487 = vmul.f32 %v1451, %v1473
        %v1488 = vmul.f32 %v1452, %v1473
        %v1489 = vmul.f32 %v1453, %v1473
        %v1490 = vmul.f32 %v1454, %v1473
        %v1491 = vmul.f32 %v1455, %v1473
        %v1492 = vmul.f32 %v1456, %v1473
        %v1493 = vmul.f32 %v1457, %v1473
        %v1494 = vmul.f32 %v1458, %v1473
        %v1495 = vmul.f32 %v1459, %v1473
        %v1496 = vmul.f32 %v1460, %v1473
        %v1497 = vmul.f32 %v1461, %v1473
        %v1498 = vmul.f32 %v1462, %v1473
        %v1499 = vmul.f32 %v1463, %v1473
        %v1500 = vmul.f32 %v1464, %v1473
        %v1501 = vmul.f32 %v1465, %v1473
        %v1502 = vmul.f32 %v1466, %v1473
        %v1503 = vmul.f32 %v1467, %v1473
        %v1504 = vmul.f32 %v1468, %v1473
        %v1505 = vmul.f32 %v1469, %v1473
        %v1506 = vmul.f32 %v1470, %v1473
        %v1507 = vld [vmem:[%s298] sm:$0x1]
        %v1509 = vperm.slane %v1507, 0
        %v1511 = vadd.f32 %v1475, %v1509
        %v1512 = vadd.f32 %v1476, %v1509
        %v1513 = vadd.f32 %v1477, %v1509
        %v1514 = vadd.f32 %v1478, %v1509
        %v1515 = vadd.f32 %v1479, %v1509
        %v1516 = vadd.f32 %v1480, %v1509
        %v1517 = vadd.f32 %v1481, %v1509
        %v1518 = vadd.f32 %v1482, %v1509
        %v1519 = vadd.f32 %v1483, %v1509
        %v1520 = vadd.f32 %v1484, %v1509
        %v1521 = vadd.f32 %v1485, %v1509
        %v1522 = vadd.f32 %v1486, %v1509
        %v1523 = vadd.f32 %v1487, %v1509
        %v1524 = vadd.f32 %v1488, %v1509
        %v1525 = vadd.f32 %v1489, %v1509
        %v1526 = vadd.f32 %v1490, %v1509
        %v1527 = vadd.f32 %v1491, %v1509
        %v1528 = vadd.f32 %v1492, %v1509
        %v1529 = vadd.f32 %v1493, %v1509
        %v1530 = vadd.f32 %v1494, %v1509
        %v1531 = vadd.f32 %v1495, %v1509
        %v1532 = vadd.f32 %v1496, %v1509
        %v1533 = vadd.f32 %v1497, %v1509
        %v1534 = vadd.f32 %v1498, %v1509
        %v1535 = vadd.f32 %v1499, %v1509
        %v1536 = vadd.f32 %v1500, %v1509
        %v1537 = vadd.f32 %v1501, %v1509
        %v1538 = vadd.f32 %v1502, %v1509
        %v1539 = vadd.f32 %v1503, %v1509
        %v1540 = vadd.f32 %v1504, %v1509
        %v1541 = vadd.f32 %v1505, %v1509
        %v1542 = vadd.f32 %v1506, %v1509
        %v1543 = vmax.f32 %v1511, 0.0
        %v1544 = vmax.f32 %v1512, 0.0
        %v1545 = vmax.f32 %v1513, 0.0
        %v1546 = vmax.f32 %v1514, 0.0
        %v1547 = vmax.f32 %v1515, 0.0
        %v1548 = vmax.f32 %v1516, 0.0
        %v1549 = vmax.f32 %v1517, 0.0
        %v1550 = vmax.f32 %v1518, 0.0
        %v1551 = vmax.f32 %v1519, 0.0
        %v1552 = vmax.f32 %v1520, 0.0
        %v1553 = vmax.f32 %v1521, 0.0
        %v1554 = vmax.f32 %v1522, 0.0
        %v1555 = vmax.f32 %v1523, 0.0
        %v1556 = vmax.f32 %v1524, 0.0
        %v1557 = vmax.f32 %v1525, 0.0
        %v1558 = vmax.f32 %v1526, 0.0
        %v1559 = vmax.f32 %v1527, 0.0
        %v1560 = vmax.f32 %v1528, 0.0
        %v1561 = vmax.f32 %v1529, 0.0
        %v1562 = vmax.f32 %v1530, 0.0
        %v1563 = vmax.f32 %v1531, 0.0
        %v1564 = vmax.f32 %v1532, 0.0
        %v1565 = vmax.f32 %v1533, 0.0
        %v1566 = vmax.f32 %v1534, 0.0
        %v1567 = vmax.f32 %v1535, 0.0
        %v1568 = vmax.f32 %v1536, 0.0
        %v1569 = vmax.f32 %v1537, 0.0
        %v1570 = vmax.f32 %v1538, 0.0
        %v1571 = vmax.f32 %v1539, 0.0
        %v1572 = vmax.f32 %v1540, 0.0
        %v1573 = vmax.f32 %v1541, 0.0
        %v1574 = vmax.f32 %v1542, 0.0
        %v1575 = vmin.f32 %v1543, 20.0
        %v1576 = vmin.f32 %v1544, 20.0
        %v1577 = vmin.f32 %v1545, 20.0
        %v1578 = vmin.f32 %v1546, 20.0
        %v1579 = vmin.f32 %v1547, 20.0
        %v1580 = vmin.f32 %v1548, 20.0
        %v1581 = vmin.f32 %v1549, 20.0
        %v1582 = vmin.f32 %v1550, 20.0
        %v1583 = vmin.f32 %v1551, 20.0
        %v1584 = vmin.f32 %v1552, 20.0
        %v1585 = vmin.f32 %v1553, 20.0
        %v1586 = vmin.f32 %v1554, 20.0
        %v1587 = vmin.f32 %v1555, 20.0
        %v1588 = vmin.f32 %v1556, 20.0
        %v1589 = vmin.f32 %v1557, 20.0
        %v1590 = vmin.f32 %v1558, 20.0
        %v1591 = vmin.f32 %v1559, 20.0
        %v1592 = vmin.f32 %v1560, 20.0
        %v1593 = vmin.f32 %v1561, 20.0
        %v1594 = vmin.f32 %v1562, 20.0
        %v1595 = vmin.f32 %v1563, 20.0
        %v1596 = vmin.f32 %v1564, 20.0
        %v1597 = vmin.f32 %v1565, 20.0
        %v1598 = vmin.f32 %v1566, 20.0
        %v1599 = vmin.f32 %v1567, 20.0
        %v1600 = vmin.f32 %v1568, 20.0
        %v1601 = vmin.f32 %v1569, 20.0
        %v1602 = vmin.f32 %v1570, 20.0
        %v1603 = vmin.f32 %v1571, 20.0
        %v1604 = vmin.f32 %v1572, 20.0
        %v1605 = vmin.f32 %v1573, 20.0
        %v1606 = vmin.f32 %v1574, 20.0
        %v1607 = vpack.c.bf16 %v1575, %v1575
        %v1608 = vpack.c.bf16 %v1576, %v1576
        %v1609 = vpack.c.bf16 %v1577, %v1577
        %v1610 = vpack.c.bf16 %v1578, %v1578
        %v1611 = vpack.c.bf16 %v1579, %v1579
        %v1612 = vpack.c.bf16 %v1580, %v1580
        %v1613 = vpack.c.bf16 %v1581, %v1581
        %v1614 = vpack.c.bf16 %v1582, %v1582
        %v1615 = vpack.c.bf16 %v1583, %v1583
        %v1616 = vpack.c.bf16 %v1584, %v1584
        %v1617 = vpack.c.bf16 %v1585, %v1585
        %v1618 = vpack.c.bf16 %v1586, %v1586
        %v1619 = vpack.c.bf16 %v1587, %v1587
        %v1620 = vpack.c.bf16 %v1588, %v1588
        %v1621 = vpack.c.bf16 %v1589, %v1589
        %v1622 = vpack.c.bf16 %v1590, %v1590
        %v1623 = vpack.c.bf16 %v1591, %v1591
        %v1624 = vpack.c.bf16 %v1592, %v1592
        %v1625 = vpack.c.bf16 %v1593, %v1593
        %v1626 = vpack.c.bf16 %v1594, %v1594
        %v1627 = vpack.c.bf16 %v1595, %v1595
        %v1628 = vpack.c.bf16 %v1596, %v1596
        %v1629 = vpack.c.bf16 %v1597, %v1597
        %v1630 = vpack.c.bf16 %v1598, %v1598
        %v1631 = vpack.c.bf16 %v1599, %v1599
        %v1632 = vpack.c.bf16 %v1600, %v1600
        %v1633 = vpack.c.bf16 %v1601, %v1601
        %v1634 = vpack.c.bf16 %v1602, %v1602
        %v1635 = vpack.c.bf16 %v1603, %v1603
        %v1636 = vpack.c.bf16 %v1604, %v1604
        %v1637 = vpack.c.bf16 %v1605, %v1605
        %v1638 = vpack.c.bf16 %v1606, %v1606
        %1639 = vst [vmem:[%s306] sm:$0xf] %v1607
        %1640 = vst [vmem:[%s306 + $0x4] sm:$0xf] %v1608
        %1641 = vst [vmem:[%s306 + $0x8] sm:$0xf] %v1609
        %1642 = vst [vmem:[%s306 + $0xc] sm:$0xf] %v1610
        %1643 = vst [vmem:[%s306 + $0x10] sm:$0xf] %v1611
        %1644 = vst [vmem:[%s306 + $0x14] sm:$0xf] %v1612
        %1645 = vst [vmem:[%s306 + $0x18] sm:$0xf] %v1613
        %1646 = vst [vmem:[%s306 + $0x1c] sm:$0xf] %v1614
        %1647 = vst [vmem:[%s306 + $0x20] sm:$0xf] %v1615
        %1648 = vst [vmem:[%s306 + $0x24] sm:$0xf] %v1616
        %1649 = vst [vmem:[%s306 + $0x28] sm:$0xf] %v1617
        %1650 = vst [vmem:[%s306 + $0x2c] sm:$0xf] %v1618
        %1651 = vst [vmem:[%s306 + $0x30] sm:$0xf] %v1619
        %1652 = vst [vmem:[%s306 + $0x34] sm:$0xf] %v1620
        %1653 = vst [vmem:[%s306 + $0x38] sm:$0xf] %v1621
        %1654 = vst [vmem:[%s306 + $0x3c] sm:$0xf] %v1622
        %1655 = vst [vmem:[%s306 + $0x40] sm:$0xf] %v1623
        %1656 = vst [vmem:[%s306 + $0x44] sm:$0xf] %v1624
        %1657 = vst [vmem:[%s306 + $0x48] sm:$0xf] %v1625
        %1658 = vst [vmem:[%s306 + $0x4c] sm:$0xf] %v1626
        %1659 = vst [vmem:[%s306 + $0x50] sm:$0xf] %v1627
        %1660 = vst [vmem:[%s306 + $0x54] sm:$0xf] %v1628
        %1661 = vst [vmem:[%s306 + $0x58] sm:$0xf] %v1629
        %1662 = vst [vmem:[%s306 + $0x5c] sm:$0xf] %v1630
        %1663 = vst [vmem:[%s306 + $0x60] sm:$0xf] %v1631
        %1664 = vst [vmem:[%s306 + $0x64] sm:$0xf] %v1632
        %1665 = vst [vmem:[%s306 + $0x68] sm:$0xf] %v1633
        %1666 = vst [vmem:[%s306 + $0x6c] sm:$0xf] %v1634
        %1667 = vst [vmem:[%s306 + $0x70] sm:$0xf] %v1635
        %1668 = vst [vmem:[%s306 + $0x74] sm:$0xf] %v1636
        %1669 = vst [vmem:[%s306 + $0x78] sm:$0xf] %v1637
        %1670 = vst [vmem:[%s306 + $0x7c] sm:$0xf] %v1638
      $region44: #{deepspeech2_forward.7} parent=35 // pred_fallthru
        _
      %s1671 = smul.u32 32, %s20
      %p1672 = scmp.lt.s32.totalorder %s1671, 95
      %s1673 = scalar_select %p1672, %s1671, 95
      %p1674 = scmp.lt.s32.totalorder %s21, 0
      %s1675 = scalar_select %p1674, %s21, 0
      %s1676 = sadd.s32 %s1675, %s1673
      %s1677 = smul.addr %s1676, 4
      %s1678 = scalar_lea.vmem %s4, %s1677
      // Predicated region
      $region45: #{deepspeech2_forward.7} parent=35 // pred_check
        %p1679 = pneg %p162
      $region46: #{deepspeech2_forward.7} parent=35 // pred_check_branch
        %1681 = sbr.rel (%p1679) target = $region48
      $region47: #{deepspeech2_forward.7} parent=35 // pred_region
        %s1682 = smul.u32 32, %s20
      $region48: #{deepspeech2_forward.7} parent=35 // pred_fallthru
        _
    $region36: #{deepspeech2_forward.7} parent=5 // pred_fallthru
      _
    %p1683 = scmp.le.s32.totalorder 2, %s10
    // Predicated region
    $region49: #{deepspeech2_forward.7} parent=5 // pred_check
      %p1684 = pneg %p1683
    $region50: #{deepspeech2_forward.7} parent=5 // pred_check_branch
      %1686 = sbr.rel (%p1684) target = $region52
    $region51: #{deepspeech2_forward.7} parent=5 // pred_region
      %s1687 = ssub.s32 %s10, 2
      // Predicated region
      $region53: #{deepspeech2_forward.7} parent=51 // pred_check
        %p1688 = pneg %p168
      $region54: #{deepspeech2_forward.7} parent=51 // pred_check_branch
        %1690 = sbr.rel (%p1688) target = $region56
      $region55: #{deepspeech2_forward.7} parent=51 // pred_region
        %s1691 = smul.u32 32, %s23
        %p1692 = scmp.lt.s32.totalorder %s1691, 95
        %s1693 = scalar_select %p1692, %s1691, 95
        %p1694 = scmp.lt.s32.totalorder %s24, 0
        %s1695 = scalar_select %p1694, %s24, 0
        %s1696 = sadd.s32 %s1695, %s1693
        %s1697 = smul.addr %s1696, 4
        %s1698 = scalar_lea.vmem %s4, %s1697
      $region56: #{deepspeech2_forward.7} parent=51 // pred_fallthru
        _
    $region52: #{deepspeech2_forward.7} parent=5 // pred_fallthru
      _
  $region6: #{deepspeech2_forward.7} parent=0 // loop_footer
    %s14 = sadd.s32 1, %s10
  $region7: #{deepspeech2_forward.7} parent=0 // loop_footer_branch
    %9 = sbr.rel target = $region3
  $region8: #{deepspeech2_forward.7} parent=0 // loop_exit
    _

// kernel: deepspeech2_forward.8
$region0: #{deepspeech2_forward.8}
  #allocation0 [shape = 'u32[]', space=smem, size = 0x4, offset = 0x4, fixed_abs, tag = 'smem constant byte address 0x4 - core index']
  #allocation1 [shape = 'u32[72,128]{1,0:T(1,128)}', space=vmem, size = 0x9000, scoped, tag = 'internal scratch']
  #allocation2 [shape = 'f32[16,128]{1,0:T(8,128)}', space=vmem, size = 0x2000, scoped, tag = 'scratch operand']
  %s0 = inlined_call_operand.vmem [shape: bf16[1,16,7680], index: 0, kind: input, shape index: {}]
  %s1 = inlined_call_operand.vmem [shape: bf16[1,7680,128], index: 1, kind: input, shape index: {}]
  %s2 = inlined_call_operand.vmem [shape: f32[1,128], index: 2, kind: input, shape index: {}]
  %s3 = inlined_call_operand.vmem [shape: f32[1,128], index: 3, kind: input, shape index: {}]
  %s4 = inlined_call_operand.vmem [shape: bf16[16,128], index: 4, kind: output, shape index: {}]
  %s5 = sld [smem:[#allocation0]]
  $region80: #{deepspeech2_forward.8} parent=0
    _
  %s7 = ssub.s32 1, %s5
  %s8 = scalar_select 0, %s7, %s5
  $region1: #{deepspeech2_forward.8} parent=0
    #allocation3 [shape = 'u8[32768]{0}', space=vmem, size = 0x8000, scoped, tag = 'input window, operand 0']
    loop: start=0, step=1, limit=17
    $region2: #{deepspeech2_forward.8} parent=1 // loop_pre_header
      _
    $region3: #{deepspeech2_forward.8} parent=1 // loop_header
      %s10 = sphi 0, %s14
      %p11 = scmp.ge.s32.totalorder %s10, 17
      %s17 = sphi 0, %s36
      %s18 = sphi 0, %s32
      %s19 = sphi 0, %s28
      %s20 = sphi 0, %s17
      %s21 = sphi 0, %s18
      %s22 = sphi 0, %s19
      %s23 = sphi 0, %s20
      %s24 = sphi 0, %s21
      %s25 = sphi 0, %s22
      %s41 = sphi 0, %s43
      %s44 = sphi 0, %s41
      %s45 = sphi 0, %s44
      %s61 = sphi 0, %s45
      %s69 = sphi 0, %s71
      %s72 = sphi 0, %s69
      %s73 = sphi 0, %s72
      %s89 = sphi 0, %s73
      %s95 = sphi 0, %s97
      %s98 = sphi 0, %s95
      %s99 = sphi 0, %s98
      %s115 = sphi 0, %s99
      %s121 = sphi 0, %s123
      %s124 = sphi 0, %s121
      %s125 = sphi 0, %s124
      %s141 = sphi 0, %s125
      %s149 = sphi 0, %s151
      %s152 = sphi 0, %s149
      %s153 = sphi 0, %s152
      %s169 = sphi 0, %s153
    $region4: #{deepspeech2_forward.8} parent=1 // loop_header_branch
      %13 = sbr.rel (%p11) target = $region8
    $region5: #{deepspeech2_forward.8} parent=1 // loop_body
      %s15 = ssub.s32 %s10, 1
      %s16 = ssub.s32 %s10, 2
      %s26 = sadd.s32 1, %s19
      %p27 = scmp.ge.s32.totalorder %s26, 15
      %s28 = scalar_select %p27, 0, %s26
      %s29 = sadd.s32 1, %s18
      %s30 = scalar_select %p27, %s29, %s18
      %p31 = scmp.ge.s32.totalorder %s30, 1
      %s32 = scalar_select %p31, 0, %s30
      %s33 = sadd.s32 1, %s17
      %s34 = scalar_select %p31, %s33, %s17
      %p35 = scmp.ge.s32.totalorder %s34, 1
      %s36 = scalar_select %p35, 0, %s34
      %s37 = ssub.s32 %s17, %s36
      %s38 = ssub.s32 %s19, %s28
      %s39 = sor.u32 %s37, %s38
      %p40 = scmp.eq.s32.totalorder %s39, 0
      %s42 = sadd.s32 %s41, 1
      %s43 = scalar_select %p40, %s41, %s42
      %p46 = pneg %p40
      %p47 = scmp.eq.s32.totalorder %s10, 14
      %p48 = por %p46, %p47
      %p49 = scmp.ne.s32.totalorder %s41, %s44
      %p50 = scmp.eq.s32.totalorder %s10, 0
      %p51 = por %p49, %p50
      %p52 = scmp.ne.s32.totalorder %s41, %s44
      %p53 = scmp.eq.s32.totalorder %s15, 14
      %p54 = por %p52, %p53
      %p55 = scmp.ne.s32.totalorder %s44, %s45
      %p56 = scmp.eq.s32.totalorder %s15, 0
      %p57 = por %p55, %p56
      %p58 = scmp.ne.s32.totalorder %s44, %s45
      %p59 = scmp.eq.s32.totalorder %s16, 14
      %p60 = por %p58, %p59
      %p62 = scmp.ne.s32.totalorder %s45, %s61
      %p63 = scmp.eq.s32.totalorder %s16, 0
      %p64 = por %p62, %p63
      %s65 = ssub.s32 %s19, %s28
      %s66 = ssub.s32 %s18, %s32
      %s67 = sor.u32 %s65, %s66
      %p68 = scmp.eq.s32.totalorder %s67, 0
      %s70 = sadd.s32 %s69, 1
      %s71 = scalar_select %p68, %s69, %s70
      %p74 = pneg %p68
      %p75 = scmp.eq.s32.totalorder %s10, 14
      %p76 = por %p74, %p75
      %p77 = scmp.ne.s32.totalorder %s69, %s72
      %p78 = scmp.eq.s32.totalorder %s10, 0
      %p79 = por %p77, %p78
      %p80 = scmp.ne.s32.totalorder %s69, %s72
      %p81 = scmp.eq.s32.totalorder %s15, 14
      %p82 = por %p80, %p81
      %p83 = scmp.ne.s32.totalorder %s72, %s73
      %p84 = scmp.eq.s32.totalorder %s15, 0
      %p85 = por %p83, %p84
      %p86 = scmp.ne.s32.totalorder %s72, %s73
      %p87 = scmp.eq.s32.totalorder %s16, 14
      %p88 = por %p86, %p87
      %p90 = scmp.ne.s32.totalorder %s73, %s89
      %p91 = scmp.eq.s32.totalorder %s16, 0
      %p92 = por %p90, %p91
      %s93 = ssub.s32 %s18, %s32
      %p94 = scmp.eq.s32.totalorder %s93, 0
      %s96 = sadd.s32 %s95, 1
      %s97 = scalar_select %p94, %s95, %s96
      %p100 = pneg %p94
      %p101 = scmp.eq.s32.totalorder %s10, 14
      %p102 = por %p100, %p101
      %p103 = scmp.ne.s32.totalorder %s95, %s98
      %p104 = scmp.eq.s32.totalorder %s10, 0
      %p105 = por %p103, %p104
      %p106 = scmp.ne.s32.totalorder %s95, %s98
      %p107 = scmp.eq.s32.totalorder %s15, 14
      %p108 = por %p106, %p107
      %p109 = scmp.ne.s32.totalorder %s98, %s99
      %p110 = scmp.eq.s32.totalorder %s15, 0
      %p111 = por %p109, %p110
      %p112 = scmp.ne.s32.totalorder %s98, %s99
      %p113 = scmp.eq.s32.totalorder %s16, 14
      %p114 = por %p112, %p113
      %p116 = scmp.ne.s32.totalorder %s99, %s115
      %p117 = scmp.eq.s32.totalorder %s16, 0
      %p118 = por %p116, %p117
      %s119 = ssub.s32 %s18, %s32
      %p120 = scmp.eq.s32.totalorder %s119, 0
      %s122 = sadd.s32 %s121, 1
      %s123 = scalar_select %p120, %s121, %s122
      %p126 = pneg %p120
      %p127 = scmp.eq.s32.totalorder %s10, 14
      %p128 = por %p126, %p127
      %p129 = scmp.ne.s32.totalorder %s121, %s124
      %p130 = scmp.eq.s32.totalorder %s10, 0
      %p131 = por %p129, %p130
      %p132 = scmp.ne.s32.totalorder %s121, %s124
      %p133 = scmp.eq.s32.totalorder %s15, 14
      %p134 = por %p132, %p133
      %p135 = scmp.ne.s32.totalorder %s124, %s125
      %p136 = scmp.eq.s32.totalorder %s15, 0
      %p137 = por %p135, %p136
      %p138 = scmp.ne.s32.totalorder %s124, %s125
      %p139 = scmp.eq.s32.totalorder %s16, 14
      %p140 = por %p138, %p139
      %p142 = scmp.ne.s32.totalorder %s125, %s141
      %p143 = scmp.eq.s32.totalorder %s16, 0
      %p144 = por %p142, %p143
      %s145 = ssub.s32 %s17, %s36
      %s146 = ssub.s32 %s18, %s32
      %s147 = sor.u32 %s145, %s146
      %p148 = scmp.eq.s32.totalorder %s147, 0
      %s150 = sadd.s32 %s149, 1
      %s151 = scalar_select %p148, %s149, %s150
      %p154 = pneg %p148
      %p155 = scmp.eq.s32.totalorder %s10, 14
      %p156 = por %p154, %p155
      %p157 = scmp.ne.s32.totalorder %s149, %s152
      %p158 = scmp.eq.s32.totalorder %s10, 0
      %p159 = por %p157, %p158
      %p160 = scmp.ne.s32.totalorder %s149, %s152
      %p161 = scmp.eq.s32.totalorder %s15, 14
      %p162 = por %p160, %p161
      %p163 = scmp.ne.s32.totalorder %s152, %s153
      %p164 = scmp.eq.s32.totalorder %s15, 0
      %p165 = por %p163, %p164
      %p166 = scmp.ne.s32.totalorder %s152, %s153
      %p167 = scmp.eq.s32.totalorder %s16, 14
      %p168 = por %p166, %p167
      %p170 = scmp.ne.s32.totalorder %s153, %s169
      %p171 = scmp.eq.s32.totalorder %s16, 0
      %p172 = por %p170, %p171
      %p173 = scmp.le.s32.totalorder 1, %s10
      %p174 = scmp.lt.s32.totalorder %s10, 16
      %p175 = pnand %p173, %p174
      %p176 = pneg %p175
      // Predicated region
      $region9: #{deepspeech2_forward.8} parent=5 // pred_check
        _
      $region10: #{deepspeech2_forward.8} parent=5 // pred_check_branch
        %178 = sbr.rel (%p175) target = $region12
      $region11: #{deepspeech2_forward.8} parent=5 // pred_region
        %s179 = ssub.s32 %s10, 1
        // Predicated region
        $region13: #{deepspeech2_forward.8} parent=11 // pred_check
          %p180 = pneg %p111
        $region14: #{deepspeech2_forward.8} parent=11 // pred_check_branch
          %182 = sbr.rel (%p180) target = $region16
        $region15: #{deepspeech2_forward.8} parent=11 // pred_region
          %p183 = scmp.lt.s32.totalorder %s21, 0
          %s184 = scalar_select %p183, %s21, 0
          %s185 = scalar_lea.vmem %s2, %s184
        $region16: #{deepspeech2_forward.8} parent=11 // pred_fallthru
          _
        // Predicated region
        $region17: #{deepspeech2_forward.8} parent=11 // pred_check
          %p186 = pneg %p137
        $region18: #{deepspeech2_forward.8} parent=11 // pred_check_branch
          %188 = sbr.rel (%p186) target = $region20
        $region19: #{deepspeech2_forward.8} parent=11 // pred_region
          %p189 = scmp.lt.s32.totalorder %s21, 0
          %s190 = scalar_select %p189, %s21, 0
          %s191 = scalar_lea.vmem %s3, %s190
        $region20: #{deepspeech2_forward.8} parent=11 // pred_fallthru
          _
      $region12: #{deepspeech2_forward.8} parent=5 // pred_fallthru
        _
      %p192 = scmp.lt.s32.totalorder %s10, 15
      // Predicated region
      $region21: #{deepspeech2_forward.8} parent=5 // pred_check
        %p193 = pneg %p192
      $region22: #{deepspeech2_forward.8} parent=5 // pred_check_branch
        %195 = sbr.rel (%p193) target = $region24
      $region23: #{deepspeech2_forward.8} parent=5 // pred_region
        // Predicated region
        $region25: #{deepspeech2_forward.8} parent=23 // pred_check
          %p196 = pneg %p51
        $region26: #{deepspeech2_forward.8} parent=23 // pred_check_branch
          %198 = sbr.rel (%p196) target = $region28
        $region27: #{deepspeech2_forward.8} parent=23 // pred_region
          %s199 = sand.u32 %s41, 1
          %s200 = sand.u32 %s41, 1
          %s201 = smul.addr %s200, 32
          %s202 = scalar_lea.vmem [#allocation3], %s201
          %s203 = smul.u32 2, %s17
          %s204 = smul.u32 4, %s19
          %s205 = smul.addr %s203, 60
          %s206 = sadd.s32 %s204, %s205
          %s207 = smul.addr %s206, 4
          %s208 = scalar_lea.vmem %s0, %s207
          // Predicated region
          $region29: #{deepspeech2_forward.8} parent=27 // pred_check
            _
          $region30: #{deepspeech2_forward.8} parent=27 // pred_check_branch
            %210 = sbr.rel (0) target = $region32
          $region31: #{deepspeech2_forward.8} parent=27 // pred_region
            // Predicated region
            $region33: #{deepspeech2_forward.8} parent=31 // pred_check
              _
            $region34: #{deepspeech2_forward.8} parent=31 // pred_check_branch
              %212 = sbr.rel (0) target = $region36
            $region35: #{deepspeech2_forward.8} parent=31 // pred_region
              loop: start=0, step=1, limit=1
              $region37: #{deepspeech2_forward.8} parent=35 // loop_pre_header
                _
              $region38: #{deepspeech2_forward.8} parent=35 // loop_header
                %s214 = sphi 0, %s218
                %p215 = scmp.ge.s32.totalorder %s214, 1
                %s219 = sphi %s208, %s208
                %s220 = sphi %s202, %s202
              $region39: #{deepspeech2_forward.8} parent=35 // loop_header_branch
                %217 = sbr.rel (%p215) target = $region43
              $region40: #{deepspeech2_forward.8} parent=35 // loop_body
                %v221 = vld [vmem:[%s219] sm:$0xff]
                %222 = vst [vmem:[%s220] sm:$0xff] %v221
                %v223 = vld [vmem:[%s219 + $0x8] sm:$0xff]
                %224 = vst [vmem:[%s220 + $0x8] sm:$0xff] %v223
                %v225 = vld [vmem:[%s219 + $0xf0] sm:$0xff]
                %226 = vst [vmem:[%s220 + $0x10] sm:$0xff] %v225
                %v227 = vld [vmem:[%s219 + $0xf8] sm:$0xff]
                %228 = vst [vmem:[%s220 + $0x18] sm:$0xff] %v227
              $region41: #{deepspeech2_forward.8} parent=35 // loop_footer
                %s218 = sadd.s32 1, %s214
              $region42: #{deepspeech2_forward.8} parent=35 // loop_footer_branch
                %213 = sbr.rel target = $region38
              $region43: #{deepspeech2_forward.8} parent=35 // loop_exit
                _
            $region36: #{deepspeech2_forward.8} parent=31 // pred_fallthru
              _
            // Predicated region
            $region44: #{deepspeech2_forward.8} parent=31 // pred_check
              _
            $region45: #{deepspeech2_forward.8} parent=31 // pred_check_branch
              %230 = sbr.rel target = $region47
            $region46: #{deepspeech2_forward.8} parent=31 // pred_region
              _
            $region47: #{deepspeech2_forward.8} parent=31 // pred_fallthru
              _
          $region32: #{deepspeech2_forward.8} parent=27 // pred_fallthru
            _
          %231 = vnop
        $region28: #{deepspeech2_forward.8} parent=23 // pred_fallthru
          _
        // Predicated region
        $region48: #{deepspeech2_forward.8} parent=23 // pred_check
          %p232 = pneg %p79
        $region49: #{deepspeech2_forward.8} parent=23 // pred_check_branch
          %234 = sbr.rel (%p232) target = $region51
        $region50: #{deepspeech2_forward.8} parent=23 // pred_region
          %s235 = smul.u32 64, %s19
          %p236 = scmp.lt.s32.totalorder %s235, 959
          %s237 = scalar_select %p236, %s235, 959
          %p238 = scmp.lt.s32.totalorder %s18, 0
          %s239 = scalar_select %p238, %s18, 0
          %s240 = sadd.s32 %s239, %s237
          %s241 = smul.addr %s240, 4
          %s242 = scalar_lea.vmem %s1, %s241
          %s243 = smul.u32 64, %s19
        $region51: #{deepspeech2_forward.8} parent=23 // pred_fallthru
          _
      $region24: #{deepspeech2_forward.8} parent=5 // pred_fallthru
        _
      %p244 = scmp.le.s32.totalorder 1, %s10
      %p245 = scmp.lt.s32.totalorder %s10, 16
      %p246 = pnand %p244, %p245
      %p247 = pneg %p246
      // Predicated region
      $region52: #{deepspeech2_forward.8} parent=5 // pred_check
        _
      $region53: #{deepspeech2_forward.8} parent=5 // pred_check_branch
        %249 = sbr.rel (%p246) target = $region55
      $region54: #{deepspeech2_forward.8} parent=5 // pred_region
        %s250 = ssub.s32 %s10, 1
        %s251 = sand.u32 %s44, 1
        %s252 = sand.u32 %s44, 1
        %s253 = smul.addr %s252, 32
        %s254 = scalar_lea.vmem [#allocation3], %s253
        // Predicated region
        $region56: #{deepspeech2_forward.8} parent=54 // pred_check
          %p255 = pneg %p57
        $region57: #{deepspeech2_forward.8} parent=54 // pred_check_branch
          %257 = sbr.rel (%p255) target = $region59
        $region58: #{deepspeech2_forward.8} parent=54 // pred_region
          _
        $region59: #{deepspeech2_forward.8} parent=54 // pred_fallthru
          _
        %s258 = sand.u32 %s44, 1
        %s259 = sand.u32 %s44, 1
        %s260 = smul.addr %s259, 32
        %s261 = scalar_lea.vmem [#allocation3], %s260
        %p262 = pneg %p57
        %p263 = pneg %p54
        %s264 = smul.u32 64, %s22
        %p265 = scmp.lt.s32.totalorder %s264, 959
        %s266 = scalar_select %p265, %s264, 959
        %p267 = scmp.lt.s32.totalorder %s21, 0
        %s268 = scalar_select %p267, %s21, 0
        %s269 = sadd.s32 %s268, %s266
        %s270 = smul.addr %s269, 4
        %s271 = scalar_lea.vmem %s1, %s270
        %p272 = pneg %p85
        %p273 = pneg %p82
        %p274 = scmp.lt.s32.totalorder %s21, 0
        %s275 = scalar_select %p274, %s21, 0
        %s276 = scalar_lea.vmem %s2, %s275
        %p277 = pneg %p111
        %p278 = pneg %p108
        %p279 = scmp.lt.s32.totalorder %s21, 0
        %s280 = scalar_select %p279, %s21, 0
        %s281 = scalar_lea.vmem %s3, %s280
        %p282 = pneg %p137
        %p283 = pneg %p134
        %p284 = pneg %p165
        %p285 = pneg %p162
        %s286 = smul.u32 2, %s20
        %p287 = scmp.lt.s32.totalorder %s286, 1
        %s288 = scalar_select %p287, %s286, 1
        %p289 = scmp.lt.s32.totalorder %s21, 0
        %s290 = scalar_select %p289, %s21, 0
        %s291 = sadd.s32 %s290, %s288
        %s292 = smul.addr %s291, 4
        %s293 = scalar_lea.vmem %s4, %s292
        %s294 = smul.u32 2, %s20
        %s295 = smul.u32 4, %s22
        %s296 = smul.u32 64, %s22
        %p297 = scmp.lt.s32.totalorder %s296, 959
        %s298 = scalar_select %p297, %s296, 959
        %p299 = scmp.lt.s32.totalorder %s21, 0
        %s300 = scalar_select %p299, %s21, 0
        %s301 = sadd.s32 %s300, %s298
        %s302 = smul.addr %s301, 4
        %s303 = scalar_lea.vmem %s1, %s302
        %s304 = smul.u32 64, %s22
        %p305 = scmp.lt.s32.totalorder %s21, 0
        %s306 = scalar_select %p305, %s21, 0
        %s307 = scalar_lea.vmem %s2, %s306
        %p308 = scmp.lt.s32.totalorder %s21, 0
        %s309 = scalar_select %p308, %s21, 0
        %s310 = scalar_lea.vmem %s3, %s309
        %s311 = smul.u32 2, %s20
        %p312 = scmp.lt.s32.totalorder %s311, 1
        %s313 = scalar_select %p312, %s311, 1
        %p314 = scmp.lt.s32.totalorder %s21, 0
        %s315 = scalar_select %p314, %s21, 0
        %s316 = sadd.s32 %s315, %s313
        %s317 = smul.addr %s316, 4
        %s318 = scalar_lea.vmem %s4, %s317
        %s319 = smul.u32 2, %s20
        %p320 = scmp.eq.s32.totalorder %s22, 0
        // Predicated region
        $region60: #{deepspeech2_forward.8} parent=54 // pred_check
          %p321 = pneg %p320
        $region61: #{deepspeech2_forward.8} parent=54 // pred_check_branch
          %323 = sbr.rel (%p321) target = $region63
        $region62: #{deepspeech2_forward.8} parent=54 // pred_region
          %324 = vst [vmem:[#allocation2] sm:$0xff] 0.0
          %325 = vst [vmem:[#allocation2 + $0x8] sm:$0xff] 0.0
        $region63: #{deepspeech2_forward.8} parent=54 // pred_fallthru
          _
        %v326 = vld [vmem:[#allocation2] sm:$0xff]
        %v327 = vld [vmem:[#allocation2 + $0x8] sm:$0xff]
        %v328 = vld [vmem:[%s254] sm:$0xff]
        %v329 = vld [vmem:[%s254 + $0x8] sm:$0xff]
        %v330 = vld [vmem:[%s254 + $0x10] sm:$0xff]
        %v331 = vld [vmem:[%s254 + $0x18] sm:$0xff]
        %v332 = vld [vmem:[%s303] sm:$0xf]
        %v333 = vld [vmem:[%s303 + $0x4] sm:$0xf]
        %v334 = vld [vmem:[%s303 + $0x8] sm:$0xf]
        %v335 = vld [vmem:[%s303 + $0xc] sm:$0xf]
        %v336 = vld [vmem:[%s303 + $0x10] sm:$0xf]
        %v337 = vld [vmem:[%s303 + $0x14] sm:$0xf]
        %v338 = vld [vmem:[%s303 + $0x18] sm:$0xf]
        %v339 = vld [vmem:[%s303 + $0x1c] sm:$0xf]
        %v340 = vld [vmem:[%s303 + $0x20] sm:$0xf]
        %v341 = vld [vmem:[%s303 + $0x24] sm:$0xf]
        %v342 = vld [vmem:[%s303 + $0x28] sm:$0xf]
        %v343 = vld [vmem:[%s303 + $0x2c] sm:$0xf]
        %v344 = vld [vmem:[%s303 + $0x30] sm:$0xf]
        %v345 = vld [vmem:[%s303 + $0x34] sm:$0xf]
        %v346 = vld [vmem:[%s303 + $0x38] sm:$0xf]
        %v347 = vld [vmem:[%s303 + $0x3c] sm:$0xf]
        %v348 = vld [vmem:[%s303 + $0x40] sm:$0xf]
        %v349 = vld [vmem:[%s303 + $0x44] sm:$0xf]
        %v350 = vld [vmem:[%s303 + $0x48] sm:$0xf]
        %v351 = vld [vmem:[%s303 + $0x4c] sm:$0xf]
        %v352 = vld [vmem:[%s303 + $0x50] sm:$0xf]
        %v353 = vld [vmem:[%s303 + $0x54] sm:$0xf]
        %v354 = vld [vmem:[%s303 + $0x58] sm:$0xf]
        %v355 = vld [vmem:[%s303 + $0x5c] sm:$0xf]
        %v356 = vld [vmem:[%s303 + $0x60] sm:$0xf]
        %v357 = vld [vmem:[%s303 + $0x64] sm:$0xf]
        %v358 = vld [vmem:[%s303 + $0x68] sm:$0xf]
        %v359 = vld [vmem:[%s303 + $0x6c] sm:$0xf]
        %v360 = vld [vmem:[%s303 + $0x70] sm:$0xf]
        %v361 = vld [vmem:[%s303 + $0x74] sm:$0xf]
        %v362 = vld [vmem:[%s303 + $0x78] sm:$0xf]
        %v363 = vld [vmem:[%s303 + $0x7c] sm:$0xf]
        %v364 = vld [vmem:[%s303 + $0x80] sm:$0xf]
        %v365 = vld [vmem:[%s303 + $0x84] sm:$0xf]
        %v366 = vld [vmem:[%s303 + $0x88] sm:$0xf]
        %v367 = vld [vmem:[%s303 + $0x8c] sm:$0xf]
        %v368 = vld [vmem:[%s303 + $0x90] sm:$0xf]
        %v369 = vld [vmem:[%s303 + $0x94] sm:$0xf]
        %v370 = vld [vmem:[%s303 + $0x98] sm:$0xf]
        %v371 = vld [vmem:[%s303 + $0x9c] sm:$0xf]
        %v372 = vld [vmem:[%s303 + $0xa0] sm:$0xf]
        %v373 = vld [vmem:[%s303 + $0xa4] sm:$0xf]
        %v374 = vld [vmem:[%s303 + $0xa8] sm:$0xf]
        %v375 = vld [vmem:[%s303 + $0xac] sm:$0xf]
        %v376 = vld [vmem:[%s303 + $0xb0] sm:$0xf]
        %v377 = vld [vmem:[%s303 + $0xb4] sm:$0xf]
        %v378 = vld [vmem:[%s303 + $0xb8] sm:$0xf]
        %v379 = vld [vmem:[%s303 + $0xbc] sm:$0xf]
        %v380 = vld [vmem:[%s303 + $0xc0] sm:$0xf]
        %v381 = vld [vmem:[%s303 + $0xc4] sm:$0xf]
        %v382 = vld [vmem:[%s303 + $0xc8] sm:$0xf]
        %v383 = vld [vmem:[%s303 + $0xcc] sm:$0xf]
        %v384 = vld [vmem:[%s303 + $0xd0] sm:$0xf]
        %v385 = vld [vmem:[%s303 + $0xd4] sm:$0xf]
        %v386 = vld [vmem:[%s303 + $0xd8] sm:$0xf]
        %v387 = vld [vmem:[%s303 + $0xdc] sm:$0xf]
        %v388 = vld [vmem:[%s303 + $0xe0] sm:$0xf]
        %v389 = vld [vmem:[%s303 + $0xe4] sm:$0xf]
        %v390 = vld [vmem:[%s303 + $0xe8] sm:$0xf]
        %v391 = vld [vmem:[%s303 + $0xec] sm:$0xf]
        %v392 = vld [vmem:[%s303 + $0xf0] sm:$0xf]
        %v393 = vld [vmem:[%s303 + $0xf4] sm:$0xf]
        %v394 = vld [vmem:[%s303 + $0xf8] sm:$0xf]
        %v395 = vld [vmem:[%s303 + $0xfc] sm:$0xf]
        %v400 = vunpack.c.l.b16 %v328
        %v401 = vunpack.c.h.b16 %v328
        %v402 = vunpack.c.l.b16 %v329
        %v403 = vunpack.c.h.b16 %v329
        %v404 = vunpack.c.l.b16 %v330
        %v405 = vunpack.c.h.b16 %v330
        %v406 = vunpack.c.l.b16 %v331
        %v407 = vunpack.c.h.b16 %v331
        %v408 = vpack.c.b16 %v404, %v400
        %v409 = vpack.c.b16 %v405, %v401
        %v410 = vpack.c.b16 %v406, %v402
        %v411 = vpack.c.b16 %v407, %v403
        %v480 = vunpack.c.l.b16 %v332
        %v481 = vunpack.c.l.b16 %v333
        %v482 = vunpack.c.l.b16 %v334
        %v483 = vunpack.c.l.b16 %v335
        %v484 = vunpack.c.l.b16 %v336
        %v485 = vunpack.c.l.b16 %v337
        %v486 = vunpack.c.l.b16 %v338
        %v487 = vunpack.c.l.b16 %v339
        %v488 = vunpack.c.l.b16 %v340
        %v489 = vunpack.c.l.b16 %v341
        %v490 = vunpack.c.l.b16 %v342
        %v491 = vunpack.c.l.b16 %v343
        %v492 = vunpack.c.l.b16 %v344
        %v493 = vunpack.c.l.b16 %v345
        %v494 = vunpack.c.l.b16 %v346
        %v495 = vunpack.c.l.b16 %v347
        %v496 = vunpack.c.l.b16 %v348
        %v497 = vunpack.c.l.b16 %v349
        %v498 = vunpack.c.l.b16 %v350
        %v499 = vunpack.c.l.b16 %v351
        %v500 = vunpack.c.l.b16 %v352
        %v501 = vunpack.c.l.b16 %v353
        %v502 = vunpack.c.l.b16 %v354
        %v503 = vunpack.c.l.b16 %v355
        %v504 = vunpack.c.l.b16 %v356
        %v505 = vunpack.c.l.b16 %v357
        %v506 = vunpack.c.l.b16 %v358
        %v507 = vunpack.c.l.b16 %v359
        %v508 = vunpack.c.l.b16 %v360
        %v509 = vunpack.c.l.b16 %v361
        %v510 = vunpack.c.l.b16 %v362
        %v511 = vunpack.c.l.b16 %v363
        %v512 = vunpack.c.l.b16 %v364
        %v513 = vunpack.c.l.b16 %v365
        %v514 = vunpack.c.l.b16 %v366
        %v515 = vunpack.c.l.b16 %v367
        %v516 = vunpack.c.l.b16 %v368
        %v517 = vunpack.c.l.b16 %v369
        %v518 = vunpack.c.l.b16 %v370
        %v519 = vunpack.c.l.b16 %v371
        %v520 = vunpack.c.l.b16 %v372
        %v521 = vunpack.c.l.b16 %v373
        %v522 = vunpack.c.l.b16 %v374
        %v523 = vunpack.c.l.b16 %v375
        %v524 = vunpack.c.l.b16 %v376
        %v525 = vunpack.c.l.b16 %v377
        %v526 = vunpack.c.l.b16 %v378
        %v527 = vunpack.c.l.b16 %v379
        %v528 = vunpack.c.l.b16 %v380
        %v529 = vunpack.c.l.b16 %v381
        %v530 = vunpack.c.l.b16 %v382
        %v531 = vunpack.c.l.b16 %v383
        %v532 = vunpack.c.l.b16 %v384
        %v533 = vunpack.c.l.b16 %v385
        %v534 = vunpack.c.l.b16 %v386
        %v535 = vunpack.c.l.b16 %v387
        %v536 = vunpack.c.l.b16 %v388
        %v537 = vunpack.c.l.b16 %v389
        %v538 = vunpack.c.l.b16 %v390
        %v539 = vunpack.c.l.b16 %v391
        %v540 = vunpack.c.l.b16 %v392
        %v541 = vunpack.c.l.b16 %v393
        %v542 = vunpack.c.l.b16 %v394
        %v543 = vunpack.c.l.b16 %v395
        %v544 = vpack.c.b16 %v481, %v480
        %v545 = vpack.c.b16 %v483, %v482
        %v546 = vpack.c.b16 %v485, %v484
        %v547 = vpack.c.b16 %v487, %v486
        %v548 = vpack.c.b16 %v489, %v488
        %v549 = vpack.c.b16 %v491, %v490
        %v550 = vpack.c.b16 %v493, %v492
        %v551 = vpack.c.b16 %v495, %v494
        %v552 = vpack.c.b16 %v497, %v496
        %v553 = vpack.c.b16 %v499, %v498
        %v554 = vpack.c.b16 %v501, %v500
        %v555 = vpack.c.b16 %v503, %v502
        %v556 = vpack.c.b16 %v505, %v504
        %v557 = vpack.c.b16 %v507, %v506
        %v558 = vpack.c.b16 %v509, %v508
        %v559 = vpack.c.b16 %v511, %v510
        %v560 = vpack.c.b16 %v513, %v512
        %v561 = vpack.c.b16 %v515, %v514
        %v562 = vpack.c.b16 %v517, %v516
        %v563 = vpack.c.b16 %v519, %v518
        %v564 = vpack.c.b16 %v521, %v520
        %v565 = vpack.c.b16 %v523, %v522
        %v566 = vpack.c.b16 %v525, %v524
        %v567 = vpack.c.b16 %v527, %v526
        %v568 = vpack.c.b16 %v529, %v528
        %v569 = vpack.c.b16 %v531, %v530
        %v570 = vpack.c.b16 %v533, %v532
        %v571 = vpack.c.b16 %v535, %v534
        %v572 = vpack.c.b16 %v537, %v536
        %v573 = vpack.c.b16 %v539, %v538
        %v574 = vpack.c.b16 %v541, %v540
        %v575 = vpack.c.b16 %v543, %v542
        %608 = vmatpush.bf16.msra.mxu0 %v551
        %609 = vmatpush.bf16.msra.mxu0 %v550
        %610 = vmatpush.bf16.msra.mxu0 %v549
        %611 = vmatpush.bf16.msra.mxu0 %v548
        %612 = vmatpush.bf16.msra.mxu0 %v547
        %613 = vmatpush.bf16.msra.mxu0 %v546
        %614 = vmatpush.bf16.msra.mxu0 %v545
        %615 = vmatpush.bf16.msra.mxu0 %v544
        %616 = vmatmul.bf16.gmra.mxu0 %v408
        %v617 = vpop.f32.mrf.mxu0
        %v618 = vadd.f32 0.0, %v617
        %v619 = vpop.f32.mrf.mxu0
        %v620 = vadd.f32 0.0, %v619
        %621 = vdwg.mxu0
        %622 = vmatpush.bf16.msra.mxu0 %v559
        %623 = vmatpush.bf16.msra.mxu0 %v558
        %624 = vmatpush.bf16.msra.mxu0 %v557
        %625 = vmatpush.bf16.msra.mxu0 %v556
        %626 = vmatpush.bf16.msra.mxu0 %v555
        %627 = vmatpush.bf16.msra.mxu0 %v554
        %628 = vmatpush.bf16.msra.mxu0 %v553
        %629 = vmatpush.bf16.msra.mxu0 %v552
        %630 = vmatmul.bf16.gmra.mxu0 %v409
        %v631 = vpop.f32.mrf.mxu0
        %v632 = vadd.f32 %v618, %v631
        %v633 = vpop.f32.mrf.mxu0
        %v634 = vadd.f32 %v620, %v633
        %635 = vdwg.mxu0
        %636 = vmatpush.bf16.msra.mxu0 %v567
        %637 = vmatpush.bf16.msra.mxu0 %v566
        %638 = vmatpush.bf16.msra.mxu0 %v565
        %639 = vmatpush.bf16.msra.mxu0 %v564
        %640 = vmatpush.bf16.msra.mxu0 %v563
        %641 = vmatpush.bf16.msra.mxu0 %v562
        %642 = vmatpush.bf16.msra.mxu0 %v561
        %643 = vmatpush.bf16.msra.mxu0 %v560
        %644 = vmatmul.bf16.gmra.mxu0 %v410
        %v645 = vpop.f32.mrf.mxu0
        %v646 = vadd.f32 %v632, %v645
        %v647 = vpop.f32.mrf.mxu0
        %v648 = vadd.f32 %v634, %v647
        %649 = vdwg.mxu0
        %650 = vmatpush.bf16.msra.mxu0 %v575
        %651 = vmatpush.bf16.msra.mxu0 %v574
        %652 = vmatpush.bf16.msra.mxu0 %v573
        %653 = vmatpush.bf16.msra.mxu0 %v572
        %654 = vmatpush.bf16.msra.mxu0 %v571
        %655 = vmatpush.bf16.msra.mxu0 %v570
        %656 = vmatpush.bf16.msra.mxu0 %v569
        %657 = vmatpush.bf16.msra.mxu0 %v568
        %658 = vmatmul.bf16.gmra.mxu0 %v411
        %v659 = vpop.f32.mrf.mxu0
        %v660 = vadd.f32 %v646, %v659
        %v661 = vpop.f32.mrf.mxu0
        %v662 = vadd.f32 %v648, %v661
        %663 = vdwg.mxu0
        %v664 = vadd.f32 %v326, %v660
        %v665 = vadd.f32 %v327, %v662
        %666 = vst [vmem:[#allocation2] sm:$0xff] %v664
        %667 = vst [vmem:[#allocation2 + $0x8] sm:$0xff] %v665
        %p668 = scmp.eq.s32.totalorder %s22, 14
        // Predicated region
        $region64: #{deepspeech2_forward.8} parent=54 // pred_check
          %p669 = pneg %p668
        $region65: #{deepspeech2_forward.8} parent=54 // pred_check_branch
          %671 = sbr.rel (%p669) target = $region67
        $region66: #{deepspeech2_forward.8} parent=54 // pred_region
          %v672 = vld [vmem:[#allocation2] sm:$0xff]
          %v673 = vld [vmem:[#allocation2 + $0x8] sm:$0xff]
          %v674 = vld [vmem:[%s307] sm:$0x1]
          %v676 = vperm.slane %v674, 0
          %v678 = vmul.f32 %v672, %v676
          %v679 = vmul.f32 %v673, %v676
          %v680 = vld [vmem:[%s310] sm:$0x1]
          %v682 = vperm.slane %v680, 0
          %v684 = vadd.f32 %v678, %v682
          %v685 = vadd.f32 %v679, %v682
          %v686 = vmax.f32 %v684, 0.0
          %v687 = vmax.f32 %v685, 0.0
          %v688 = vmin.f32 %v686, 20.0
          %v689 = vmin.f32 %v687, 20.0
          %v690 = vpack.c.bf16 %v688, %v688
          %v691 = vpack.c.bf16 %v689, %v689
          %692 = vst [vmem:[%s318] sm:$0xf] %v690
          %693 = vst [vmem:[%s318 + $0x4] sm:$0xf] %v691
        $region67: #{deepspeech2_forward.8} parent=54 // pred_fallthru
          _
        %s694 = smul.u32 2, %s20
        %p695 = scmp.lt.s32.totalorder %s694, 1
        %s696 = scalar_select %p695, %s694, 1
        %p697 = scmp.lt.s32.totalorder %s21, 0
        %s698 = scalar_select %p697, %s21, 0
        %s699 = sadd.s32 %s698, %s696
        %s700 = smul.addr %s699, 4
        %s701 = scalar_lea.vmem %s4, %s700
        // Predicated region
        $region68: #{deepspeech2_forward.8} parent=54 // pred_check
          %p702 = pneg %p162
        $region69: #{deepspeech2_forward.8} parent=54 // pred_check_branch
          %704 = sbr.rel (%p702) target = $region71
        $region70: #{deepspeech2_forward.8} parent=54 // pred_region
          %s705 = smul.u32 2, %s20
        $region71: #{deepspeech2_forward.8} parent=54 // pred_fallthru
          _
        // Predicated region
        $region72: #{deepspeech2_forward.8} parent=54 // pred_check
          %p706 = pneg %p162
        $region73: #{deepspeech2_forward.8} parent=54 // pred_check_branch
          %708 = sbr.rel (%p706) target = $region75
        $region74: #{deepspeech2_forward.8} parent=54 // pred_region
          %s709 = smul.u32 2, %s20
          %p710 = scmp.lt.s32.totalorder %s709, 1
          %s711 = scalar_select %p710, %s709, 1
          %p712 = scmp.lt.s32.totalorder %s21, 0
          %s713 = scalar_select %p712, %s21, 0
          %s714 = sadd.s32 %s713, %s711
          %s715 = smul.addr %s714, 4
          %s716 = scalar_lea.vmem %s4, %s715
        $region75: #{deepspeech2_forward.8} parent=54 // pred_fallthru
          _
      $region55: #{deepspeech2_forward.8} parent=5 // pred_fallthru
        _
      %p717 = scmp.le.s32.totalorder 2, %s10
      // Predicated region
      $region76: #{deepspeech2_forward.8} parent=5 // pred_check
        %p718 = pneg %p717
      $region77: #{deepspeech2_forward.8} parent=5 // pred_check_branch
        %720 = sbr.rel (%p718) target = $region79
      $region78: #{deepspeech2_forward.8} parent=5 // pred_region
        %s721 = ssub.s32 %s10, 2
      $region79: #{deepspeech2_forward.8} parent=5 // pred_fallthru
        _
    $region6: #{deepspeech2_forward.8} parent=1 // loop_footer
      %s14 = sadd.s32 1, %s10
    $region7: #{deepspeech2_forward.8} parent=1 // loop_footer_branch
      %9 = sbr.rel target = $region3
    $region8: #{deepspeech2_forward.8} parent=1 // loop_exit
      _

// kernel: deepspeech2_forward.9
$region0: #{deepspeech2_forward.9}
  #allocation0 [shape = 'u32[]', space=smem, size = 0x4, offset = 0x4, fixed_abs, tag = 'smem constant byte address 0x4 - core index']
  #allocation1 [shape = 'u32[72,128]{1,0:T(1,128)}', space=vmem, size = 0x9000, scoped, tag = 'internal scratch']
  #allocation2 [shape = 'f32[16,512]{1,0:T(8,128)}', space=vmem, size = 0x8000, scoped, tag = 'scratch operand']
  %s0 = inlined_call_operand.vmem [shape: bf16[1,16,128], index: 0, kind: input, shape index: {}]
  %s1 = inlined_call_operand.vmem [shape: bf16[1,128,1024], index: 1, kind: input, shape index: {}]
  %s2 = inlined_call_operand.vmem [shape: f32[1,1024], index: 2, kind: input, shape index: {}]
  %s3 = inlined_call_operand.vmem [shape: f32[1,1024], index: 3, kind: input, shape index: {}]
  %s4 = inlined_call_operand.vmem [shape: bf16[16,1024], index: 4, kind: output, shape index: {}]
  %s5 = sld [smem:[#allocation0]]
  $region99: #{deepspeech2_forward.9} parent=0
    _
  %s7 = ssub.s32 1, %s5
  %s8 = scalar_select 0, %s7, %s5
  $region1: #{deepspeech2_forward.9} parent=0
    #allocation3 [shape = 'u8[262144]{0}', space=vmem, size = 0x40000, scoped, tag = 'input window, operand 1']
    #allocation4 [shape = 'u8[32768]{0}', space=vmem, size = 0x8000, scoped, tag = 'output window, operand 0']
    loop: start=0, step=1, limit=4
    $region2: #{deepspeech2_forward.9} parent=1 // loop_pre_header
      _
    $region3: #{deepspeech2_forward.9} parent=1 // loop_header
      %s10 = sphi 0, %s14
      %p11 = scmp.ge.s32.totalorder %s10, 4
      %s17 = sphi 0, %s36
      %s18 = sphi 0, %s32
      %s19 = sphi 0, %s28
      %s20 = sphi 0, %s17
      %s21 = sphi 0, %s18
      %s22 = sphi 0, %s19
      %s23 = sphi 0, %s20
      %s24 = sphi 0, %s21
      %s25 = sphi 0, %s22
      %s41 = sphi 0, %s43
      %s44 = sphi 0, %s41
      %s45 = sphi 0, %s44
      %s61 = sphi 0, %s45
      %s69 = sphi 0, %s71
      %s72 = sphi 0, %s69
      %s73 = sphi 0, %s72
      %s89 = sphi 0, %s73
      %s95 = sphi 0, %s97
      %s98 = sphi 0, %s95
      %s99 = sphi 0, %s98
      %s115 = sphi 0, %s99
      %s121 = sphi 0, %s123
      %s124 = sphi 0, %s121
      %s125 = sphi 0, %s124
      %s141 = sphi 0, %s125
      %s149 = sphi 0, %s151
      %s152 = sphi 0, %s149
      %s153 = sphi 0, %s152
      %s169 = sphi 0, %s153
    $region4: #{deepspeech2_forward.9} parent=1 // loop_header_branch
      %13 = sbr.rel (%p11) target = $region8
    $region5: #{deepspeech2_forward.9} parent=1 // loop_body
      %s15 = ssub.s32 %s10, 1
      %s16 = ssub.s32 %s10, 2
      %s26 = sadd.s32 1, %s19
      %p27 = scmp.ge.s32.totalorder %s26, 1
      %s28 = scalar_select %p27, 0, %s26
      %s29 = sadd.s32 1, %s18
      %s30 = scalar_select %p27, %s29, %s18
      %p31 = scmp.ge.s32.totalorder %s30, 2
      %s32 = scalar_select %p31, 0, %s30
      %s33 = sadd.s32 1, %s17
      %s34 = scalar_select %p31, %s33, %s17
      %p35 = scmp.ge.s32.totalorder %s34, 1
      %s36 = scalar_select %p35, 0, %s34
      %s37 = ssub.s32 %s17, %s36
      %s38 = ssub.s32 %s19, %s28
      %s39 = sor.u32 %s37, %s38
      %p40 = scmp.eq.s32.totalorder %s39, 0
      %s42 = sadd.s32 %s41, 1
      %s43 = scalar_select %p40, %s41, %s42
      %p46 = pneg %p40
      %p47 = scmp.eq.s32.totalorder %s10, 1
      %p48 = por %p46, %p47
      %p49 = scmp.ne.s32.totalorder %s41, %s44
      %p50 = scmp.eq.s32.totalorder %s10, 0
      %p51 = por %p49, %p50
      %p52 = scmp.ne.s32.totalorder %s41, %s44
      %p53 = scmp.eq.s32.totalorder %s15, 1
      %p54 = por %p52, %p53
      %p55 = scmp.ne.s32.totalorder %s44, %s45
      %p56 = scmp.eq.s32.totalorder %s15, 0
      %p57 = por %p55, %p56
      %p58 = scmp.ne.s32.totalorder %s44, %s45
      %p59 = scmp.eq.s32.totalorder %s16, 1
      %p60 = por %p58, %p59
      %p62 = scmp.ne.s32.totalorder %s45, %s61
      %p63 = scmp.eq.s32.totalorder %s16, 0
      %p64 = por %p62, %p63
      %s65 = ssub.s32 %s19, %s28
      %s66 = ssub.s32 %s18, %s32
      %s67 = sor.u32 %s65, %s66
      %p68 = scmp.eq.s32.totalorder %s67, 0
      %s70 = sadd.s32 %s69, 1
      %s71 = scalar_select %p68, %s69, %s70
      %p74 = pneg %p68
      %p75 = scmp.eq.s32.totalorder %s10, 1
      %p76 = por %p74, %p75
      %p77 = scmp.ne.s32.totalorder %s69, %s72
      %p78 = scmp.eq.s32.totalorder %s10, 0
      %p79 = por %p77, %p78
      %p80 = scmp.ne.s32.totalorder %s69, %s72
      %p81 = scmp.eq.s32.totalorder %s15, 1
      %p82 = por %p80, %p81
      %p83 = scmp.ne.s32.totalorder %s72, %s73
      %p84 = scmp.eq.s32.totalorder %s15, 0
      %p85 = por %p83, %p84
      %p86 = scmp.ne.s32.totalorder %s72, %s73
      %p87 = scmp.eq.s32.totalorder %s16, 1
      %p88 = por %p86, %p87
      %p90 = scmp.ne.s32.totalorder %s73, %s89
      %p91 = scmp.eq.s32.totalorder %s16, 0
      %p92 = por %p90, %p91
      %s93 = ssub.s32 %s18, %s32
      %p94 = scmp.eq.s32.totalorder %s93, 0
      %s96 = sadd.s32 %s95, 1
      %s97 = scalar_select %p94, %s95, %s96
      %p100 = pneg %p94
      %p101 = scmp.eq.s32.totalorder %s10, 1
      %p102 = por %p100, %p101
      %p103 = scmp.ne.s32.totalorder %s95, %s98
      %p104 = scmp.eq.s32.totalorder %s10, 0
      %p105 = por %p103, %p104
      %p106 = scmp.ne.s32.totalorder %s95, %s98
      %p107 = scmp.eq.s32.totalorder %s15, 1
      %p108 = por %p106, %p107
      %p109 = scmp.ne.s32.totalorder %s98, %s99
      %p110 = scmp.eq.s32.totalorder %s15, 0
      %p111 = por %p109, %p110
      %p112 = scmp.ne.s32.totalorder %s98, %s99
      %p113 = scmp.eq.s32.totalorder %s16, 1
      %p114 = por %p112, %p113
      %p116 = scmp.ne.s32.totalorder %s99, %s115
      %p117 = scmp.eq.s32.totalorder %s16, 0
      %p118 = por %p116, %p117
      %s119 = ssub.s32 %s18, %s32
      %p120 = scmp.eq.s32.totalorder %s119, 0
      %s122 = sadd.s32 %s121, 1
      %s123 = scalar_select %p120, %s121, %s122
      %p126 = pneg %p120
      %p127 = scmp.eq.s32.totalorder %s10, 1
      %p128 = por %p126, %p127
      %p129 = scmp.ne.s32.totalorder %s121, %s124
      %p130 = scmp.eq.s32.totalorder %s10, 0
      %p131 = por %p129, %p130
      %p132 = scmp.ne.s32.totalorder %s121, %s124
      %p133 = scmp.eq.s32.totalorder %s15, 1
      %p134 = por %p132, %p133
      %p135 = scmp.ne.s32.totalorder %s124, %s125
      %p136 = scmp.eq.s32.totalorder %s15, 0
      %p137 = por %p135, %p136
      %p138 = scmp.ne.s32.totalorder %s124, %s125
      %p139 = scmp.eq.s32.totalorder %s16, 1
      %p140 = por %p138, %p139
      %p142 = scmp.ne.s32.totalorder %s125, %s141
      %p143 = scmp.eq.s32.totalorder %s16, 0
      %p144 = por %p142, %p143
      %s145 = ssub.s32 %s17, %s36
      %s146 = ssub.s32 %s18, %s32
      %s147 = sor.u32 %s145, %s146
      %p148 = scmp.eq.s32.totalorder %s147, 0
      %s150 = sadd.s32 %s149, 1
      %s151 = scalar_select %p148, %s149, %s150
      %p154 = pneg %p148
      %p155 = scmp.eq.s32.totalorder %s10, 1
      %p156 = por %p154, %p155
      %p157 = scmp.ne.s32.totalorder %s149, %s152
      %p158 = scmp.eq.s32.totalorder %s10, 0
      %p159 = por %p157, %p158
      %p160 = scmp.ne.s32.totalorder %s149, %s152
      %p161 = scmp.eq.s32.totalorder %s15, 1
      %p162 = por %p160, %p161
      %p163 = scmp.ne.s32.totalorder %s152, %s153
      %p164 = scmp.eq.s32.totalorder %s15, 0
      %p165 = por %p163, %p164
      %p166 = scmp.ne.s32.totalorder %s152, %s153
      %p167 = scmp.eq.s32.totalorder %s16, 1
      %p168 = por %p166, %p167
      %p170 = scmp.ne.s32.totalorder %s153, %s169
      %p171 = scmp.eq.s32.totalorder %s16, 0
      %p172 = por %p170, %p171
      %p173 = scmp.le.s32.totalorder 1, %s10
      %p174 = scmp.lt.s32.totalorder %s10, 3
      %p175 = pnand %p173, %p174
      %p176 = pneg %p175
      // Predicated region
      $region9: #{deepspeech2_forward.9} parent=5 // pred_check
        _
      $region10: #{deepspeech2_forward.9} parent=5 // pred_check_branch
        %178 = sbr.rel (%p175) target = $region12
      $region11: #{deepspeech2_forward.9} parent=5 // pred_region
        %s179 = ssub.s32 %s10, 1
        // Predicated region
        $region13: #{deepspeech2_forward.9} parent=11 // pred_check
          %p180 = pneg %p57
        $region14: #{deepspeech2_forward.9} parent=11 // pred_check_branch
          %182 = sbr.rel (%p180) target = $region16
        $region15: #{deepspeech2_forward.9} parent=11 // pred_region
          %s183 = smul.u32 2, %s20
          %p184 = scmp.lt.s32.totalorder %s183, 1
          %s185 = scalar_select %p184, %s183, 1
          %p186 = scmp.lt.s32.totalorder %s22, 0
          %s187 = scalar_select %p186, %s22, 0
          %s188 = sadd.s32 %s187, %s185
          %s189 = smul.addr %s188, 4
          %s190 = scalar_lea.vmem %s0, %s189
          %s191 = smul.u32 2, %s20
        $region16: #{deepspeech2_forward.9} parent=11 // pred_fallthru
          _
      $region12: #{deepspeech2_forward.9} parent=5 // pred_fallthru
        _
      %p192 = scmp.lt.s32.totalorder %s10, 2
      // Predicated region
      $region17: #{deepspeech2_forward.9} parent=5 // pred_check
        %p193 = pneg %p192
      $region18: #{deepspeech2_forward.9} parent=5 // pred_check_branch
        %195 = sbr.rel (%p193) target = $region20
      $region19: #{deepspeech2_forward.9} parent=5 // pred_region
        // Predicated region
        $region21: #{deepspeech2_forward.9} parent=19 // pred_check
          %p196 = pneg %p79
        $region22: #{deepspeech2_forward.9} parent=19 // pred_check_branch
          %198 = sbr.rel (%p196) target = $region24
        $region23: #{deepspeech2_forward.9} parent=19 // pred_region
          %s199 = sand.u32 %s69, 1
          %s200 = sand.u32 %s69, 1
          %s201 = smul.addr %s200, 256
          %s202 = scalar_lea.vmem [#allocation3], %s201
          %s203 = smul.u32 16, %s19
          %s204 = smul.u32 4, %s18
          %s205 = smul.addr %s203, 8
          %s206 = sadd.s32 %s204, %s205
          %s207 = smul.addr %s206, 4
          %s208 = scalar_lea.vmem %s1, %s207
          // Predicated region
          $region25: #{deepspeech2_forward.9} parent=23 // pred_check
            _
          $region26: #{deepspeech2_forward.9} parent=23 // pred_check_branch
            %210 = sbr.rel (0) target = $region28
          $region27: #{deepspeech2_forward.9} parent=23 // pred_region
            // Predicated region
            $region29: #{deepspeech2_forward.9} parent=27 // pred_check
              _
            $region30: #{deepspeech2_forward.9} parent=27 // pred_check_branch
              %212 = sbr.rel (0) target = $region32
            $region31: #{deepspeech2_forward.9} parent=27 // pred_region
              loop: start=0, step=1, limit=1
              $region33: #{deepspeech2_forward.9} parent=31 // loop_pre_header
                _
              $region34: #{deepspeech2_forward.9} parent=31 // loop_header
                %s214 = sphi 0, %s218
                %p215 = scmp.ge.s32.totalorder %s214, 1
                %s219 = sphi %s208, %s208
                %s220 = sphi %s202, %s202
              $region35: #{deepspeech2_forward.9} parent=31 // loop_header_branch
                %217 = sbr.rel (%p215) target = $region39
              $region36: #{deepspeech2_forward.9} parent=31 // loop_body
                %v221 = vld [vmem:[%s219] sm:$0xff]
                %222 = vst [vmem:[%s220] sm:$0xff] %v221
                %v223 = vld [vmem:[%s219 + $0x8] sm:$0xff]
                %224 = vst [vmem:[%s220 + $0x8] sm:$0xff] %v223
                %v225 = vld [vmem:[%s219 + $0x20] sm:$0xff]
                %226 = vst [vmem:[%s220 + $0x10] sm:$0xff] %v225
                %v227 = vld [vmem:[%s219 + $0x28] sm:$0xff]
                %228 = vst [vmem:[%s220 + $0x18] sm:$0xff] %v227
                %v229 = vld [vmem:[%s219 + $0x40] sm:$0xff]
                %230 = vst [vmem:[%s220 + $0x20] sm:$0xff] %v229
                %v231 = vld [vmem:[%s219 + $0x48] sm:$0xff]
                %232 = vst [vmem:[%s220 + $0x28] sm:$0xff] %v231
                %v233 = vld [vmem:[%s219 + $0x60] sm:$0xff]
                %234 = vst [vmem:[%s220 + $0x30] sm:$0xff] %v233
                %v235 = vld [vmem:[%s219 + $0x68] sm:$0xff]
                %236 = vst [vmem:[%s220 + $0x38] sm:$0xff] %v235
                %v237 = vld [vmem:[%s219 + $0x80] sm:$0xff]
                %238 = vst [vmem:[%s220 + $0x40] sm:$0xff] %v237
                %v239 = vld [vmem:[%s219 + $0x88] sm:$0xff]
                %240 = vst [vmem:[%s220 + $0x48] sm:$0xff] %v239
                %v241 = vld [vmem:[%s219 + $0xa0] sm:$0xff]
                %242 = vst [vmem:[%s220 + $0x50] sm:$0xff] %v241
                %v243 = vld [vmem:[%s219 + $0xa8] sm:$0xff]
                %244 = vst [vmem:[%s220 + $0x58] sm:$0xff] %v243
                %v245 = vld [vmem:[%s219 + $0xc0] sm:$0xff]
                %246 = vst [vmem:[%s220 + $0x60] sm:$0xff] %v245
                %v247 = vld [vmem:[%s219 + $0xc8] sm:$0xff]
                %248 = vst [vmem:[%s220 + $0x68] sm:$0xff] %v247
                %v249 = vld [vmem:[%s219 + $0xe0] sm:$0xff]
                %250 = vst [vmem:[%s220 + $0x70] sm:$0xff] %v249
                %v251 = vld [vmem:[%s219 + $0xe8] sm:$0xff]
                %252 = vst [vmem:[%s220 + $0x78] sm:$0xff] %v251
                %v253 = vld [vmem:[%s219 + $0x100] sm:$0xff]
                %254 = vst [vmem:[%s220 + $0x80] sm:$0xff] %v253
                %v255 = vld [vmem:[%s219 + $0x108] sm:$0xff]
                %256 = vst [vmem:[%s220 + $0x88] sm:$0xff] %v255
                %v257 = vld [vmem:[%s219 + $0x120] sm:$0xff]
                %258 = vst [vmem:[%s220 + $0x90] sm:$0xff] %v257
                %v259 = vld [vmem:[%s219 + $0x128] sm:$0xff]
                %260 = vst [vmem:[%s220 + $0x98] sm:$0xff] %v259
                %v261 = vld [vmem:[%s219 + $0x140] sm:$0xff]
                %262 = vst [vmem:[%s220 + $0xa0] sm:$0xff] %v261
                %v263 = vld [vmem:[%s219 + $0x148] sm:$0xff]
                %264 = vst [vmem:[%s220 + $0xa8] sm:$0xff] %v263
                %v265 = vld [vmem:[%s219 + $0x160] sm:$0xff]
                %266 = vst [vmem:[%s220 + $0xb0] sm:$0xff] %v265
                %v267 = vld [vmem:[%s219 + $0x168] sm:$0xff]
                %268 = vst [vmem:[%s220 + $0xb8] sm:$0xff] %v267
                %v269 = vld [vmem:[%s219 + $0x180] sm:$0xff]
                %270 = vst [vmem:[%s220 + $0xc0] sm:$0xff] %v269
                %v271 = vld [vmem:[%s219 + $0x188] sm:$0xff]
                %272 = vst [vmem:[%s220 + $0xc8] sm:$0xff] %v271
                %v273 = vld [vmem:[%s219 + $0x1a0] sm:$0xff]
                %274 = vst [vmem:[%s220 + $0xd0] sm:$0xff] %v273
                %v275 = vld [vmem:[%s219 + $0x1a8] sm:$0xff]
                %276 = vst [vmem:[%s220 + $0xd8] sm:$0xff] %v275
                %v277 = vld [vmem:[%s219 + $0x1c0] sm:$0xff]
                %278 = vst [vmem:[%s220 + $0xe0] sm:$0xff] %v277
                %v279 = vld [vmem:[%s219 + $0x1c8] sm:$0xff]
                %280 = vst [vmem:[%s220 + $0xe8] sm:$0xff] %v279
                %v281 = vld [vmem:[%s219 + $0x1e0] sm:$0xff]
                %282 = vst [vmem:[%s220 + $0xf0] sm:$0xff] %v281
                %v283 = vld [vmem:[%s219 + $0x1e8] sm:$0xff]
                %284 = vst [vmem:[%s220 + $0xf8] sm:$0xff] %v283
              $region37: #{deepspeech2_forward.9} parent=31 // loop_footer
                %s218 = sadd.s32 1, %s214
              $region38: #{deepspeech2_forward.9} parent=31 // loop_footer_branch
                %213 = sbr.rel target = $region34
              $region39: #{deepspeech2_forward.9} parent=31 // loop_exit
                _
            $region32: #{deepspeech2_forward.9} parent=27 // pred_fallthru
              _
            // Predicated region
            $region40: #{deepspeech2_forward.9} parent=27 // pred_check
              _
            $region41: #{deepspeech2_forward.9} parent=27 // pred_check_branch
              %286 = sbr.rel target = $region43
            $region42: #{deepspeech2_forward.9} parent=27 // pred_region
              _
            $region43: #{deepspeech2_forward.9} parent=27 // pred_fallthru
              _
          $region28: #{deepspeech2_forward.9} parent=23 // pred_fallthru
            _
          %287 = vnop
        $region24: #{deepspeech2_forward.9} parent=19 // pred_fallthru
          _
        // Predicated region
        $region44: #{deepspeech2_forward.9} parent=19 // pred_check
          %p288 = pneg %p105
        $region45: #{deepspeech2_forward.9} parent=19 // pred_check_branch
          %290 = sbr.rel (%p288) target = $region47
        $region46: #{deepspeech2_forward.9} parent=19 // pred_region
          %s291 = smul.u32 4, %s18
          %p292 = scmp.lt.s32.totalorder %s291, 7
          %s293 = scalar_select %p292, %s291, 7
          %s294 = scalar_lea.vmem %s2, %s293
          %s295 = smul.u32 4, %s18
        $region47: #{deepspeech2_forward.9} parent=19 // pred_fallthru
          _
        // Predicated region
        $region48: #{deepspeech2_forward.9} parent=19 // pred_check
          %p296 = pneg %p131
        $region49: #{deepspeech2_forward.9} parent=19 // pred_check_branch
          %298 = sbr.rel (%p296) target = $region51
        $region50: #{deepspeech2_forward.9} parent=19 // pred_region
          %s299 = smul.u32 4, %s18
          %p300 = scmp.lt.s32.totalorder %s299, 7
          %s301 = scalar_select %p300, %s299, 7
          %s302 = scalar_lea.vmem %s3, %s301
          %s303 = smul.u32 4, %s18
        $region51: #{deepspeech2_forward.9} parent=19 // pred_fallthru
          _
      $region20: #{deepspeech2_forward.9} parent=5 // pred_fallthru
        _
      %p304 = scmp.le.s32.totalorder 1, %s10
      %p305 = scmp.lt.s32.totalorder %s10, 3
      %p306 = pnand %p304, %p305
      %p307 = pneg %p306
      // Predicated region
      $region52: #{deepspeech2_forward.9} parent=5 // pred_check
        _
      $region53: #{deepspeech2_forward.9} parent=5 // pred_check_branch
        %309 = sbr.rel (%p306) target = $region55
      $region54: #{deepspeech2_forward.9} parent=5 // pred_region
        %s310 = ssub.s32 %s10, 1
        %s311 = sand.u32 %s72, 1
        %s312 = sand.u32 %s72, 1
        %s313 = smul.addr %s312, 256
        %s314 = scalar_lea.vmem [#allocation3], %s313
        // Predicated region
        $region56: #{deepspeech2_forward.9} parent=54 // pred_check
          %p315 = pneg %p85
        $region57: #{deepspeech2_forward.9} parent=54 // pred_check_branch
          %317 = sbr.rel (%p315) target = $region59
        $region58: #{deepspeech2_forward.9} parent=54 // pred_region
          _
        $region59: #{deepspeech2_forward.9} parent=54 // pred_fallthru
          _
        %s318 = smul.u32 2, %s20
        %p319 = scmp.lt.s32.totalorder %s318, 1
        %s320 = scalar_select %p319, %s318, 1
        %p321 = scmp.lt.s32.totalorder %s22, 0
        %s322 = scalar_select %p321, %s22, 0
        %s323 = sadd.s32 %s322, %s320
        %s324 = smul.addr %s323, 4
        %s325 = scalar_lea.vmem %s0, %s324
        %p326 = pneg %p57
        %p327 = pneg %p54
        %s328 = sand.u32 %s72, 1
        %s329 = sand.u32 %s72, 1
        %s330 = smul.addr %s329, 256
        %s331 = scalar_lea.vmem [#allocation3], %s330
        %p332 = pneg %p85
        %p333 = pneg %p82
        %s334 = smul.u32 4, %s21
        %p335 = scmp.lt.s32.totalorder %s334, 7
        %s336 = scalar_select %p335, %s334, 7
        %s337 = scalar_lea.vmem %s2, %s336
        %p338 = pneg %p111
        %p339 = pneg %p108
        %s340 = smul.u32 4, %s21
        %p341 = scmp.lt.s32.totalorder %s340, 7
        %s342 = scalar_select %p341, %s340, 7
        %s343 = scalar_lea.vmem %s3, %s342
        %p344 = pneg %p137
        %p345 = pneg %p134
        %p346 = pneg %p165
        %p347 = pneg %p162
        %s348 = sand.u32 %s152, 1
        %s349 = sand.u32 %s152, 1
        %s350 = smul.addr %s349, 32
        %s351 = scalar_lea.vmem [#allocation4], %s350
        %s352 = smul.u32 2, %s20
        %p353 = scmp.lt.s32.totalorder %s352, 1
        %s354 = scalar_select %p353, %s352, 1
        %p355 = scmp.lt.s32.totalorder %s22, 0
        %s356 = scalar_select %p355, %s22, 0
        %s357 = sadd.s32 %s356, %s354
        %s358 = smul.addr %s357, 4
        %s359 = scalar_lea.vmem %s0, %s358
        %s360 = smul.u32 2, %s20
        %s361 = smul.u32 16, %s22
        %s362 = smul.u32 4, %s21
        %s363 = smul.u32 4, %s21
        %p364 = scmp.lt.s32.totalorder %s363, 7
        %s365 = scalar_select %p364, %s363, 7
        %s366 = scalar_lea.vmem %s2, %s365
        %s367 = smul.u32 4, %s21
        %s368 = smul.u32 4, %s21
        %p369 = scmp.lt.s32.totalorder %s368, 7
        %s370 = scalar_select %p369, %s368, 7
        %s371 = scalar_lea.vmem %s3, %s370
        %s372 = smul.u32 4, %s21
        %s373 = smul.u32 2, %s20
        %s374 = smul.u32 4, %s21
        %p375 = scmp.eq.s32.totalorder %s22, 0
        // Predicated region
        $region60: #{deepspeech2_forward.9} parent=54 // pred_check
          %p376 = pneg %p375
        $region61: #{deepspeech2_forward.9} parent=54 // pred_check_branch
          %378 = sbr.rel (%p376) target = $region63
        $region62: #{deepspeech2_forward.9} parent=54 // pred_region
          %379 = vst [vmem:[#allocation2] sm:$0xff] 0.0
          %380 = vst [vmem:[#allocation2 + $0x8] sm:$0xff] 0.0
          %381 = vst [vmem:[#allocation2 + $0x10] sm:$0xff] 0.0
          %382 = vst [vmem:[#allocation2 + $0x18] sm:$0xff] 0.0
          %383 = vst [vmem:[#allocation2 + $0x20] sm:$0xff] 0.0
          %384 = vst [vmem:[#allocation2 + $0x28] sm:$0xff] 0.0
          %385 = vst [vmem:[#allocation2 + $0x30] sm:$0xff] 0.0
          %386 = vst [vmem:[#allocation2 + $0x38] sm:$0xff] 0.0
        $region63: #{deepspeech2_forward.9} parent=54 // pred_fallthru
          _
        %v387 = vld [vmem:[#allocation2] sm:$0xff]
        %v388 = vld [vmem:[#allocation2 + $0x8] sm:$0xff]
        %v389 = vld [vmem:[#allocation2 + $0x10] sm:$0xff]
        %v390 = vld [vmem:[#allocation2 + $0x18] sm:$0xff]
        %v391 = vld [vmem:[#allocation2 + $0x20] sm:$0xff]
        %v392 = vld [vmem:[#allocation2 + $0x28] sm:$0xff]
        %v393 = vld [vmem:[#allocation2 + $0x30] sm:$0xff]
        %v394 = vld [vmem:[#allocation2 + $0x38] sm:$0xff]
        %v395 = vld [vmem:[%s359] sm:$0xf]
        %v396 = vld [vmem:[%s359 + $0x4] sm:$0xf]
        %v397 = vld [vmem:[%s314] sm:$0xff]
        %v398 = vld [vmem:[%s314 + $0x8] sm:$0xff]
        %v399 = vld [vmem:[%s314 + $0x10] sm:$0xff]
        %v400 = vld [vmem:[%s314 + $0x18] sm:$0xff]
        %v401 = vld [vmem:[%s314 + $0x20] sm:$0xff]
        %v402 = vld [vmem:[%s314 + $0x28] sm:$0xff]
        %v403 = vld [vmem:[%s314 + $0x30] sm:$0xff]
        %v404 = vld [vmem:[%s314 + $0x38] sm:$0xff]
        %v405 = vld [vmem:[%s314 + $0x40] sm:$0xff]
        %v406 = vld [vmem:[%s314 + $0x48] sm:$0xff]
        %v407 = vld [vmem:[%s314 + $0x50] sm:$0xff]
        %v408 = vld [vmem:[%s314 + $0x58] sm:$0xff]
        %v409 = vld [vmem:[%s314 + $0x60] sm:$0xff]
        %v410 = vld [vmem:[%s314 + $0x68] sm:$0xff]
        %v411 = vld [vmem:[%s314 + $0x70] sm:$0xff]
        %v412 = vld [vmem:[%s314 + $0x78] sm:$0xff]
        %v413 = vld [vmem:[%s314 + $0x80] sm:$0xff]
        %v414 = vld [vmem:[%s314 + $0x88] sm:$0xff]
        %v415 = vld [vmem:[%s314 + $0x90] sm:$0xff]
        %v416 = vld [vmem:[%s314 + $0x98] sm:$0xff]
        %v417 = vld [vmem:[%s314 + $0xa0] sm:$0xff]
        %v418 = vld [vmem:[%s314 + $0xa8] sm:$0xff]
        %v419 = vld [vmem:[%s314 + $0xb0] sm:$0xff]
        %v420 = vld [vmem:[%s314 + $0xb8] sm:$0xff]
        %v421 = vld [vmem:[%s314 + $0xc0] sm:$0xff]
        %v422 = vld [vmem:[%s314 + $0xc8] sm:$0xff]
        %v423 = vld [vmem:[%s314 + $0xd0] sm:$0xff]
        %v424 = vld [vmem:[%s314 + $0xd8] sm:$0xff]
        %v425 = vld [vmem:[%s314 + $0xe0] sm:$0xff]
        %v426 = vld [vmem:[%s314 + $0xe8] sm:$0xff]
        %v427 = vld [vmem:[%s314 + $0xf0] sm:$0xff]
        %v428 = vld [vmem:[%s314 + $0xf8] sm:$0xff]
        %v431 = vunpack.c.l.b16 %v395
        %v432 = vunpack.c.l.b16 %v396
        %v433 = vpack.c.b16 %v432, %v431
        %v467 = vunpack.c.l.b16 %v397
        %v468 = vunpack.c.h.b16 %v397
        %v469 = vunpack.c.l.b16 %v398
        %v470 = vunpack.c.h.b16 %v398
        %v471 = vunpack.c.l.b16 %v399
        %v472 = vunpack.c.h.b16 %v399
        %v473 = vunpack.c.l.b16 %v400
        %v474 = vunpack.c.h.b16 %v400
        %v475 = vunpack.c.l.b16 %v401
        %v476 = vunpack.c.h.b16 %v401
        %v477 = vunpack.c.l.b16 %v402
        %v478 = vunpack.c.h.b16 %v402
        %v479 = vunpack.c.l.b16 %v403
        %v480 = vunpack.c.h.b16 %v403
        %v481 = vunpack.c.l.b16 %v404
        %v482 = vunpack.c.h.b16 %v404
        %v483 = vunpack.c.l.b16 %v405
        %v484 = vunpack.c.h.b16 %v405
        %v485 = vunpack.c.l.b16 %v406
        %v486 = vunpack.c.h.b16 %v406
        %v487 = vunpack.c.l.b16 %v407
        %v488 = vunpack.c.h.b16 %v407
        %v489 = vunpack.c.l.b16 %v408
        %v490 = vunpack.c.h.b16 %v408
        %v491 = vunpack.c.l.b16 %v409
        %v492 = vunpack.c.h.b16 %v409
        %v493 = vunpack.c.l.b16 %v410
        %v494 = vunpack.c.h.b16 %v410
        %v495 = vunpack.c.l.b16 %v411
        %v496 = vunpack.c.h.b16 %v411
        %v497 = vunpack.c.l.b16 %v412
        %v498 = vunpack.c.h.b16 %v412
        %v499 = vunpack.c.l.b16 %v413
        %v500 = vunpack.c.h.b16 %v413
        %v501 = vunpack.c.l.b16 %v414
        %v502 = vunpack.c.h.b16 %v414
        %v503 = vunpack.c.l.b16 %v415
        %v504 = vunpack.c.h.b16 %v415
        %v505 = vunpack.c.l.b16 %v416
        %v506 = vunpack.c.h.b16 %v416
        %v507 = vunpack.c.l.b16 %v417
        %v508 = vunpack.c.h.b16 %v417
        %v509 = vunpack.c.l.b16 %v418
        %v510 = vunpack.c.h.b16 %v418
        %v511 = vunpack.c.l.b16 %v419
        %v512 = vunpack.c.h.b16 %v419
        %v513 = vunpack.c.l.b16 %v420
        %v514 = vunpack.c.h.b16 %v420
        %v515 = vunpack.c.l.b16 %v421
        %v516 = vunpack.c.h.b16 %v421
        %v517 = vunpack.c.l.b16 %v422
        %v518 = vunpack.c.h.b16 %v422
        %v519 = vunpack.c.l.b16 %v423
        %v520 = vunpack.c.h.b16 %v423
        %v521 = vunpack.c.l.b16 %v424
        %v522 = vunpack.c.h.b16 %v424
        %v523 = vunpack.c.l.b16 %v425
        %v524 = vunpack.c.h.b16 %v425
        %v525 = vunpack.c.l.b16 %v426
        %v526 = vunpack.c.h.b16 %v426
        %v527 = vunpack.c.l.b16 %v427
        %v528 = vunpack.c.h.b16 %v427
        %v529 = vunpack.c.l.b16 %v428
        %v530 = vunpack.c.h.b16 %v428
        %v531 = vpack.c.b16 %v471, %v467
        %v532 = vpack.c.b16 %v472, %v468
        %v533 = vpack.c.b16 %v473, %v469
        %v534 = vpack.c.b16 %v474, %v470
        %v535 = vpack.c.b16 %v479, %v475
        %v536 = vpack.c.b16 %v480, %v476
        %v537 = vpack.c.b16 %v481, %v477
        %v538 = vpack.c.b16 %v482, %v478
        %v539 = vpack.c.b16 %v487, %v483
        %v540 = vpack.c.b16 %v488, %v484
        %v541 = vpack.c.b16 %v489, %v485
        %v542 = vpack.c.b16 %v490, %v486
        %v543 = vpack.c.b16 %v495, %v491
        %v544 = vpack.c.b16 %v496, %v492
        %v545 = vpack.c.b16 %v497, %v493
        %v546 = vpack.c.b16 %v498, %v494
        %v547 = vpack.c.b16 %v503, %v499
        %v548 = vpack.c.b16 %v504, %v500
        %v549 = vpack.c.b16 %v505, %v501
        %v550 = vpack.c.b16 %v506, %v502
        %v551 = vpack.c.b16 %v511, %v507
        %v552 = vpack.c.b16 %v512, %v508
        %v553 = vpack.c.b16 %v513, %v509
        %v554 = vpack.c.b16 %v514, %v510
        %v555 = vpack.c.b16 %v519, %v515
        %v556 = vpack.c.b16 %v520, %v516
        %v557 = vpack.c.b16 %v521, %v517
        %v558 = vpack.c.b16 %v522, %v518
        %v559 = vpack.c.b16 %v527, %v523
        %v560 = vpack.c.b16 %v528, %v524
        %v561 = vpack.c.b16 %v529, %v525
        %v562 = vpack.c.b16 %v530, %v526
        %595 = vmatpush.bf16.msra.mxu0 %v559
        %596 = vmatpush.bf16.msra.mxu0 %v555
        %597 = vmatpush.bf16.msra.mxu0 %v551
        %598 = vmatpush.bf16.msra.mxu0 %v547
        %599 = vmatpush.bf16.msra.mxu0 %v543
        %600 = vmatpush.bf16.msra.mxu0 %v539
        %601 = vmatpush.bf16.msra.mxu0 %v535
        %602 = vmatpush.bf16.msra.mxu0 %v531
        %603 = vmatmul.bf16.gmra.mxu0 %v433
        %v604 = vpop.f32.mrf.mxu0
        %v605 = vadd.f32 0.0, %v604
        %v606 = vpop.f32.mrf.mxu0
        %v607 = vadd.f32 0.0, %v606
        %608 = vdwg.mxu0
        %609 = vmatpush.bf16.msra.mxu0 %v560
        %610 = vmatpush.bf16.msra.mxu0 %v556
        %611 = vmatpush.bf16.msra.mxu0 %v552
        %612 = vmatpush.bf16.msra.mxu0 %v548
        %613 = vmatpush.bf16.msra.mxu0 %v544
        %614 = vmatpush.bf16.msra.mxu0 %v540
        %615 = vmatpush.bf16.msra.mxu0 %v536
        %616 = vmatpush.bf16.msra.mxu0 %v532
        %617 = vmatmul.bf16.gmra.mxu0 %v433
        %v618 = vpop.f32.mrf.mxu0
        %v619 = vadd.f32 0.0, %v618
        %v620 = vpop.f32.mrf.mxu0
        %v621 = vadd.f32 0.0, %v620
        %622 = vdwg.mxu0
        %623 = vmatpush.bf16.msra.mxu0 %v561
        %624 = vmatpush.bf16.msra.mxu0 %v557
        %625 = vmatpush.bf16.msra.mxu0 %v553
        %626 = vmatpush.bf16.msra.mxu0 %v549
        %627 = vmatpush.bf16.msra.mxu0 %v545
        %628 = vmatpush.bf16.msra.mxu0 %v541
        %629 = vmatpush.bf16.msra.mxu0 %v537
        %630 = vmatpush.bf16.msra.mxu0 %v533
        %631 = vmatmul.bf16.gmra.mxu0 %v433
        %v632 = vpop.f32.mrf.mxu0
        %v633 = vadd.f32 0.0, %v632
        %v634 = vpop.f32.mrf.mxu0
        %v635 = vadd.f32 0.0, %v634
        %636 = vdwg.mxu0
        %637 = vmatpush.bf16.msra.mxu0 %v562
        %638 = vmatpush.bf16.msra.mxu0 %v558
        %639 = vmatpush.bf16.msra.mxu0 %v554
        %640 = vmatpush.bf16.msra.mxu0 %v550
        %641 = vmatpush.bf16.msra.mxu0 %v546
        %642 = vmatpush.bf16.msra.mxu0 %v542
        %643 = vmatpush.bf16.msra.mxu0 %v538
        %644 = vmatpush.bf16.msra.mxu0 %v534
        %645 = vmatmul.bf16.gmra.mxu0 %v433
        %v646 = vpop.f32.mrf.mxu0
        %v647 = vadd.f32 0.0, %v646
        %v648 = vpop.f32.mrf.mxu0
        %v649 = vadd.f32 0.0, %v648
        %650 = vdwg.mxu0
        %v651 = vadd.f32 %v387, %v605
        %v652 = vadd.f32 %v388, %v619
        %v653 = vadd.f32 %v389, %v633
        %v654 = vadd.f32 %v390, %v647
        %v655 = vadd.f32 %v391, %v607
        %v656 = vadd.f32 %v392, %v621
        %v657 = vadd.f32 %v393, %v635
        %v658 = vadd.f32 %v394, %v649
        %659 = vst [vmem:[#allocation2] sm:$0xff] %v651
        %660 = vst [vmem:[#allocation2 + $0x8] sm:$0xff] %v652
        %661 = vst [vmem:[#allocation2 + $0x10] sm:$0xff] %v653
        %662 = vst [vmem:[#allocation2 + $0x18] sm:$0xff] %v654
        %663 = vst [vmem:[#allocation2 + $0x20] sm:$0xff] %v655
        %664 = vst [vmem:[#allocation2 + $0x28] sm:$0xff] %v656
        %665 = vst [vmem:[#allocation2 + $0x30] sm:$0xff] %v657
        %666 = vst [vmem:[#allocation2 + $0x38] sm:$0xff] %v658
        // Predicated region
        $region64: #{deepspeech2_forward.9} parent=54 // pred_check
          %p667 = pneg %p375
        $region65: #{deepspeech2_forward.9} parent=54 // pred_check_branch
          %669 = sbr.rel (%p667) target = $region67
        $region66: #{deepspeech2_forward.9} parent=54 // pred_region
          %v670 = vld [vmem:[#allocation2] sm:$0xff]
          %v671 = vld [vmem:[#allocation2 + $0x8] sm:$0xff]
          %v672 = vld [vmem:[#allocation2 + $0x10] sm:$0xff]
          %v673 = vld [vmem:[#allocation2 + $0x18] sm:$0xff]
          %v674 = vld [vmem:[#allocation2 + $0x20] sm:$0xff]
          %v675 = vld [vmem:[#allocation2 + $0x28] sm:$0xff]
          %v676 = vld [vmem:[#allocation2 + $0x30] sm:$0xff]
          %v677 = vld [vmem:[#allocation2 + $0x38] sm:$0xff]
          %v678 = vld [vmem:[%s366] sm:$0xf]
          %v680 = vperm.slane %v678, 0
          %v681 = vperm.slane %v678, 1
          %v682 = vperm.slane %v678, 2
          %v683 = vperm.slane %v678, 3
          %v688 = vmul.f32 %v670, %v680
          %v689 = vmul.f32 %v671, %v681
          %v690 = vmul.f32 %v672, %v682
          %v691 = vmul.f32 %v673, %v683
          %v692 = vmul.f32 %v674, %v680
          %v693 = vmul.f32 %v675, %v681
          %v694 = vmul.f32 %v676, %v682
          %v695 = vmul.f32 %v677, %v683
          %v696 = vld [vmem:[%s371] sm:$0xf]
          %v698 = vperm.slane %v696, 0
          %v699 = vperm.slane %v696, 1
          %v700 = vperm.slane %v696, 2
          %v701 = vperm.slane %v696, 3
          %v706 = vadd.f32 %v688, %v698
          %v707 = vadd.f32 %v689, %v699
          %v708 = vadd.f32 %v690, %v700
          %v709 = vadd.f32 %v691, %v701
          %v710 = vadd.f32 %v692, %v698
          %v711 = vadd.f32 %v693, %v699
          %v712 = vadd.f32 %v694, %v700
          %v713 = vadd.f32 %v695, %v701
          %v714 = vpack.c.bf16 %v707, %v706
          %v715 = vpack.c.bf16 %v709, %v708
          %v716 = vpack.c.bf16 %v711, %v710
          %v717 = vpack.c.bf16 %v713, %v712
          %718 = vst [vmem:[%s351] sm:$0xff] %v714
          %719 = vst [vmem:[%s351 + $0x8] sm:$0xff] %v715
          %720 = vst [vmem:[%s351 + $0x10] sm:$0xff] %v716
          %721 = vst [vmem:[%s351 + $0x18] sm:$0xff] %v717
        $region67: #{deepspeech2_forward.9} parent=54 // pred_fallthru
          _
        %s722 = sand.u32 %s152, 1
        %s723 = sand.u32 %s152, 1
        %s724 = smul.addr %s723, 32
        %s725 = scalar_lea.vmem [#allocation4], %s724
        // Predicated region
        $region68: #{deepspeech2_forward.9} parent=54 // pred_check
          %p726 = pneg %p162
        $region69: #{deepspeech2_forward.9} parent=54 // pred_check_branch
          %728 = sbr.rel (%p726) target = $region71
        $region70: #{deepspeech2_forward.9} parent=54 // pred_region
          %s729 = smul.u32 2, %s20
          %s730 = smul.u32 4, %s21
          %s731 = smul.addr %s729, 8
          %s732 = sadd.s32 %s730, %s731
          %s733 = smul.addr %s732, 4
          %s734 = scalar_lea.vmem %s4, %s733
          // Predicated region
          $region72: #{deepspeech2_forward.9} parent=70 // pred_check
            _
          $region73: #{deepspeech2_forward.9} parent=70 // pred_check_branch
            %736 = sbr.rel (0) target = $region75
          $region74: #{deepspeech2_forward.9} parent=70 // pred_region
            // Predicated region
            $region76: #{deepspeech2_forward.9} parent=74 // pred_check
              _
            $region77: #{deepspeech2_forward.9} parent=74 // pred_check_branch
              %738 = sbr.rel (0) target = $region79
            $region78: #{deepspeech2_forward.9} parent=74 // pred_region
              loop: start=0, step=1, limit=1
              $region80: #{deepspeech2_forward.9} parent=78 // loop_pre_header
                _
              $region81: #{deepspeech2_forward.9} parent=78 // loop_header
                %s740 = sphi 0, %s744
                %p741 = scmp.ge.s32.totalorder %s740, 1
                %s745 = sphi %s725, %s725
                %s746 = sphi %s734, %s734
              $region82: #{deepspeech2_forward.9} parent=78 // loop_header_branch
                %743 = sbr.rel (%p741) target = $region86
              $region83: #{deepspeech2_forward.9} parent=78 // loop_body
                %v747 = vld [vmem:[%s745] sm:$0xff]
                %748 = vst [vmem:[%s746] sm:$0xff] %v747
                %v749 = vld [vmem:[%s745 + $0x8] sm:$0xff]
                %750 = vst [vmem:[%s746 + $0x8] sm:$0xff] %v749
                %v751 = vld [vmem:[%s745 + $0x10] sm:$0xff]
                %752 = vst [vmem:[%s746 + $0x20] sm:$0xff] %v751
                %v753 = vld [vmem:[%s745 + $0x18] sm:$0xff]
                %754 = vst [vmem:[%s746 + $0x28] sm:$0xff] %v753
              $region84: #{deepspeech2_forward.9} parent=78 // loop_footer
                %s744 = sadd.s32 1, %s740
              $region85: #{deepspeech2_forward.9} parent=78 // loop_footer_branch
                %739 = sbr.rel target = $region81
              $region86: #{deepspeech2_forward.9} parent=78 // loop_exit
                _
            $region79: #{deepspeech2_forward.9} parent=74 // pred_fallthru
              _
            // Predicated region
            $region87: #{deepspeech2_forward.9} parent=74 // pred_check
              _
            $region88: #{deepspeech2_forward.9} parent=74 // pred_check_branch
              %756 = sbr.rel target = $region90
            $region89: #{deepspeech2_forward.9} parent=74 // pred_region
              _
            $region90: #{deepspeech2_forward.9} parent=74 // pred_fallthru
              _
          $region75: #{deepspeech2_forward.9} parent=70 // pred_fallthru
            _
          %757 = vnop
        $region71: #{deepspeech2_forward.9} parent=54 // pred_fallthru
          _
      $region55: #{deepspeech2_forward.9} parent=5 // pred_fallthru
        _
      %p758 = scmp.le.s32.totalorder 2, %s10
      // Predicated region
      $region91: #{deepspeech2_forward.9} parent=5 // pred_check
        %p759 = pneg %p758
      $region92: #{deepspeech2_forward.9} parent=5 // pred_check_branch
        %761 = sbr.rel (%p759) target = $region94
      $region93: #{deepspeech2_forward.9} parent=5 // pred_region
        %s762 = ssub.s32 %s10, 2
        // Predicated region
        $region95: #{deepspeech2_forward.9} parent=93 // pred_check
          %p763 = pneg %p168
        $region96: #{deepspeech2_forward.9} parent=93 // pred_check_branch
          %765 = sbr.rel (%p763) target = $region98
        $region97: #{deepspeech2_forward.9} parent=93 // pred_region
          %s766 = sand.u32 %s153, 1
          %s767 = sand.u32 %s153, 1
          %s768 = smul.addr %s767, 32
          %s769 = scalar_lea.vmem [#allocation4], %s768
        $region98: #{deepspeech2_forward.9} parent=93 // pred_fallthru
          _
      $region94: #{deepspeech2_forward.9} parent=5 // pred_fallthru
        _
    $region6: #{deepspeech2_forward.9} parent=1 // loop_footer
      %s14 = sadd.s32 1, %s10
    $region7: #{deepspeech2_forward.9} parent=1 // loop_footer_branch
      %9 = sbr.rel target = $region3
    $region8: #{deepspeech2_forward.9} parent=1 // loop_exit
      _

// kernel: deepspeech2_forward.11
$region0: #{deepspeech2_forward.11}
  #allocation0 [shape = 'u32[]', space=smem, size = 0x4, offset = 0x4, fixed_abs, tag = 'smem constant byte address 0x4 - core index']
  #allocation1 [shape = 'u32[72,128]{1,0:T(1,128)}', space=vmem, size = 0x9000, scoped, tag = 'internal scratch']
  #allocation2 [shape = 'f32[16,512]{1,0:T(8,128)}', space=vmem, size = 0x8000, scoped, tag = 'scratch operand']
  %s0 = inlined_call_operand.vmem [shape: bf16[2,16,128], index: 0, kind: input, shape index: {}]
  %s1 = inlined_call_operand.vmem [shape: bf16[2,128,1024], index: 1, kind: input, shape index: {}]
  %s2 = inlined_call_operand.vmem [shape: f32[1,1024], index: 2, kind: input, shape index: {}]
  %s3 = inlined_call_operand.vmem [shape: f32[1,1024], index: 3, kind: input, shape index: {}]
  %s4 = inlined_call_operand.vmem [shape: bf16[16,1024], index: 4, kind: output, shape index: {}]
  %s5 = sld [smem:[#allocation0]]
  $region99: #{deepspeech2_forward.11} parent=0
    _
  %s7 = ssub.s32 1, %s5
  %s8 = scalar_select 0, %s7, %s5
  $region1: #{deepspeech2_forward.11} parent=0
    #allocation3 [shape = 'u8[524288]{0}', space=vmem, size = 0x80000, scoped, tag = 'input window, operand 1']
    #allocation4 [shape = 'u8[32768]{0}', space=vmem, size = 0x8000, scoped, tag = 'output window, operand 0']
    loop: start=0, step=1, limit=4
    $region2: #{deepspeech2_forward.11} parent=1 // loop_pre_header
      _
    $region3: #{deepspeech2_forward.11} parent=1 // loop_header
      %s10 = sphi 0, %s14
      %p11 = scmp.ge.s32.totalorder %s10, 4
      %s17 = sphi 0, %s36
      %s18 = sphi 0, %s32
      %s19 = sphi 0, %s28
      %s20 = sphi 0, %s17
      %s21 = sphi 0, %s18
      %s22 = sphi 0, %s19
      %s23 = sphi 0, %s20
      %s24 = sphi 0, %s21
      %s25 = sphi 0, %s22
      %s41 = sphi 0, %s43
      %s44 = sphi 0, %s41
      %s45 = sphi 0, %s44
      %s61 = sphi 0, %s45
      %s69 = sphi 0, %s71
      %s72 = sphi 0, %s69
      %s73 = sphi 0, %s72
      %s89 = sphi 0, %s73
      %s95 = sphi 0, %s97
      %s98 = sphi 0, %s95
      %s99 = sphi 0, %s98
      %s115 = sphi 0, %s99
      %s121 = sphi 0, %s123
      %s124 = sphi 0, %s121
      %s125 = sphi 0, %s124
      %s141 = sphi 0, %s125
      %s149 = sphi 0, %s151
      %s152 = sphi 0, %s149
      %s153 = sphi 0, %s152
      %s169 = sphi 0, %s153
    $region4: #{deepspeech2_forward.11} parent=1 // loop_header_branch
      %13 = sbr.rel (%p11) target = $region8
    $region5: #{deepspeech2_forward.11} parent=1 // loop_body
      %s15 = ssub.s32 %s10, 1
      %s16 = ssub.s32 %s10, 2
      %s26 = sadd.s32 1, %s19
      %p27 = scmp.ge.s32.totalorder %s26, 1
      %s28 = scalar_select %p27, 0, %s26
      %s29 = sadd.s32 1, %s18
      %s30 = scalar_select %p27, %s29, %s18
      %p31 = scmp.ge.s32.totalorder %s30, 2
      %s32 = scalar_select %p31, 0, %s30
      %s33 = sadd.s32 1, %s17
      %s34 = scalar_select %p31, %s33, %s17
      %p35 = scmp.ge.s32.totalorder %s34, 1
      %s36 = scalar_select %p35, 0, %s34
      %s37 = ssub.s32 %s17, %s36
      %s38 = ssub.s32 %s19, %s28
      %s39 = sor.u32 %s37, %s38
      %p40 = scmp.eq.s32.totalorder %s39, 0
      %s42 = sadd.s32 %s41, 1
      %s43 = scalar_select %p40, %s41, %s42
      %p46 = pneg %p40
      %p47 = scmp.eq.s32.totalorder %s10, 1
      %p48 = por %p46, %p47
      %p49 = scmp.ne.s32.totalorder %s41, %s44
      %p50 = scmp.eq.s32.totalorder %s10, 0
      %p51 = por %p49, %p50
      %p52 = scmp.ne.s32.totalorder %s41, %s44
      %p53 = scmp.eq.s32.totalorder %s15, 1
      %p54 = por %p52, %p53
      %p55 = scmp.ne.s32.totalorder %s44, %s45
      %p56 = scmp.eq.s32.totalorder %s15, 0
      %p57 = por %p55, %p56
      %p58 = scmp.ne.s32.totalorder %s44, %s45
      %p59 = scmp.eq.s32.totalorder %s16, 1
      %p60 = por %p58, %p59
      %p62 = scmp.ne.s32.totalorder %s45, %s61
      %p63 = scmp.eq.s32.totalorder %s16, 0
      %p64 = por %p62, %p63
      %s65 = ssub.s32 %s19, %s28
      %s66 = ssub.s32 %s18, %s32
      %s67 = sor.u32 %s65, %s66
      %p68 = scmp.eq.s32.totalorder %s67, 0
      %s70 = sadd.s32 %s69, 1
      %s71 = scalar_select %p68, %s69, %s70
      %p74 = pneg %p68
      %p75 = scmp.eq.s32.totalorder %s10, 1
      %p76 = por %p74, %p75
      %p77 = scmp.ne.s32.totalorder %s69, %s72
      %p78 = scmp.eq.s32.totalorder %s10, 0
      %p79 = por %p77, %p78
      %p80 = scmp.ne.s32.totalorder %s69, %s72
      %p81 = scmp.eq.s32.totalorder %s15, 1
      %p82 = por %p80, %p81
      %p83 = scmp.ne.s32.totalorder %s72, %s73
      %p84 = scmp.eq.s32.totalorder %s15, 0
      %p85 = por %p83, %p84
      %p86 = scmp.ne.s32.totalorder %s72, %s73
      %p87 = scmp.eq.s32.totalorder %s16, 1
      %p88 = por %p86, %p87
      %p90 = scmp.ne.s32.totalorder %s73, %s89
      %p91 = scmp.eq.s32.totalorder %s16, 0
      %p92 = por %p90, %p91
      %s93 = ssub.s32 %s18, %s32
      %p94 = scmp.eq.s32.totalorder %s93, 0
      %s96 = sadd.s32 %s95, 1
      %s97 = scalar_select %p94, %s95, %s96
      %p100 = pneg %p94
      %p101 = scmp.eq.s32.totalorder %s10, 1
      %p102 = por %p100, %p101
      %p103 = scmp.ne.s32.totalorder %s95, %s98
      %p104 = scmp.eq.s32.totalorder %s10, 0
      %p105 = por %p103, %p104
      %p106 = scmp.ne.s32.totalorder %s95, %s98
      %p107 = scmp.eq.s32.totalorder %s15, 1
      %p108 = por %p106, %p107
      %p109 = scmp.ne.s32.totalorder %s98, %s99
      %p110 = scmp.eq.s32.totalorder %s15, 0
      %p111 = por %p109, %p110
      %p112 = scmp.ne.s32.totalorder %s98, %s99
      %p113 = scmp.eq.s32.totalorder %s16, 1
      %p114 = por %p112, %p113
      %p116 = scmp.ne.s32.totalorder %s99, %s115
      %p117 = scmp.eq.s32.totalorder %s16, 0
      %p118 = por %p116, %p117
      %s119 = ssub.s32 %s18, %s32
      %p120 = scmp.eq.s32.totalorder %s119, 0
      %s122 = sadd.s32 %s121, 1
      %s123 = scalar_select %p120, %s121, %s122
      %p126 = pneg %p120
      %p127 = scmp.eq.s32.totalorder %s10, 1
      %p128 = por %p126, %p127
      %p129 = scmp.ne.s32.totalorder %s121, %s124
      %p130 = scmp.eq.s32.totalorder %s10, 0
      %p131 = por %p129, %p130
      %p132 = scmp.ne.s32.totalorder %s121, %s124
      %p133 = scmp.eq.s32.totalorder %s15, 1
      %p134 = por %p132, %p133
      %p135 = scmp.ne.s32.totalorder %s124, %s125
      %p136 = scmp.eq.s32.totalorder %s15, 0
      %p137 = por %p135, %p136
      %p138 = scmp.ne.s32.totalorder %s124, %s125
      %p139 = scmp.eq.s32.totalorder %s16, 1
      %p140 = por %p138, %p139
      %p142 = scmp.ne.s32.totalorder %s125, %s141
      %p143 = scmp.eq.s32.totalorder %s16, 0
      %p144 = por %p142, %p143
      %s145 = ssub.s32 %s17, %s36
      %s146 = ssub.s32 %s18, %s32
      %s147 = sor.u32 %s145, %s146
      %p148 = scmp.eq.s32.totalorder %s147, 0
      %s150 = sadd.s32 %s149, 1
      %s151 = scalar_select %p148, %s149, %s150
      %p154 = pneg %p148
      %p155 = scmp.eq.s32.totalorder %s10, 1
      %p156 = por %p154, %p155
      %p157 = scmp.ne.s32.totalorder %s149, %s152
      %p158 = scmp.eq.s32.totalorder %s10, 0
      %p159 = por %p157, %p158
      %p160 = scmp.ne.s32.totalorder %s149, %s152
      %p161 = scmp.eq.s32.totalorder %s15, 1
      %p162 = por %p160, %p161
      %p163 = scmp.ne.s32.totalorder %s152, %s153
      %p164 = scmp.eq.s32.totalorder %s15, 0
      %p165 = por %p163, %p164
      %p166 = scmp.ne.s32.totalorder %s152, %s153
      %p167 = scmp.eq.s32.totalorder %s16, 1
      %p168 = por %p166, %p167
      %p170 = scmp.ne.s32.totalorder %s153, %s169
      %p171 = scmp.eq.s32.totalorder %s16, 0
      %p172 = por %p170, %p171
      %p173 = scmp.le.s32.totalorder 1, %s10
      %p174 = scmp.lt.s32.totalorder %s10, 3
      %p175 = pnand %p173, %p174
      %p176 = pneg %p175
      // Predicated region
      $region9: #{deepspeech2_forward.11} parent=5 // pred_check
        _
      $region10: #{deepspeech2_forward.11} parent=5 // pred_check_branch
        %178 = sbr.rel (%p175) target = $region12
      $region11: #{deepspeech2_forward.11} parent=5 // pred_region
        %s179 = ssub.s32 %s10, 1
        // Predicated region
        $region13: #{deepspeech2_forward.11} parent=11 // pred_check
          %p180 = pneg %p57
        $region14: #{deepspeech2_forward.11} parent=11 // pred_check_branch
          %182 = sbr.rel (%p180) target = $region16
        $region15: #{deepspeech2_forward.11} parent=11 // pred_region
          %s183 = smul.u32 2, %s20
          %p184 = scmp.lt.s32.totalorder %s183, 1
          %s185 = scalar_select %p184, %s183, 1
          %p186 = scmp.lt.s32.totalorder %s22, 0
          %s187 = scalar_select %p186, %s22, 0
          %s188 = sadd.s32 %s187, %s185
          %s189 = smul.addr %s188, 4
          %s190 = scalar_lea.vmem %s0, %s189
          %s191 = smul.u32 2, %s20
        $region16: #{deepspeech2_forward.11} parent=11 // pred_fallthru
          _
      $region12: #{deepspeech2_forward.11} parent=5 // pred_fallthru
        _
      %p192 = scmp.lt.s32.totalorder %s10, 2
      // Predicated region
      $region17: #{deepspeech2_forward.11} parent=5 // pred_check
        %p193 = pneg %p192
      $region18: #{deepspeech2_forward.11} parent=5 // pred_check_branch
        %195 = sbr.rel (%p193) target = $region20
      $region19: #{deepspeech2_forward.11} parent=5 // pred_region
        // Predicated region
        $region21: #{deepspeech2_forward.11} parent=19 // pred_check
          %p196 = pneg %p79
        $region22: #{deepspeech2_forward.11} parent=19 // pred_check_branch
          %198 = sbr.rel (%p196) target = $region24
        $region23: #{deepspeech2_forward.11} parent=19 // pred_region
          %s199 = sand.u32 %s69, 1
          %s200 = sand.u32 %s69, 1
          %s201 = smul.addr %s200, 512
          %s202 = scalar_lea.vmem [#allocation3], %s201
          %s203 = smul.u32 16, %s19
          %s204 = smul.u32 4, %s18
          %s205 = smul.addr %s203, 8
          %s206 = sadd.s32 %s204, %s205
          %s207 = smul.addr %s206, 4
          %s208 = scalar_lea.vmem %s1, %s207
          // Predicated region
          $region25: #{deepspeech2_forward.11} parent=23 // pred_check
            _
          $region26: #{deepspeech2_forward.11} parent=23 // pred_check_branch
            %210 = sbr.rel (0) target = $region28
          $region27: #{deepspeech2_forward.11} parent=23 // pred_region
            // Predicated region
            $region29: #{deepspeech2_forward.11} parent=27 // pred_check
              _
            $region30: #{deepspeech2_forward.11} parent=27 // pred_check_branch
              %212 = sbr.rel (0) target = $region32
            $region31: #{deepspeech2_forward.11} parent=27 // pred_region
              loop: start=0, step=1, limit=1
              $region33: #{deepspeech2_forward.11} parent=31 // loop_pre_header
                _
              $region34: #{deepspeech2_forward.11} parent=31 // loop_header
                %s214 = sphi 0, %s218
                %p215 = scmp.ge.s32.totalorder %s214, 1
                %s219 = sphi %s208, %s208
                %s220 = sphi %s202, %s202
              $region35: #{deepspeech2_forward.11} parent=31 // loop_header_branch
                %217 = sbr.rel (%p215) target = $region39
              $region36: #{deepspeech2_forward.11} parent=31 // loop_body
                %v221 = vld [vmem:[%s219] sm:$0xff]
                %222 = vst [vmem:[%s220] sm:$0xff] %v221
                %v223 = vld [vmem:[%s219 + $0x8] sm:$0xff]
                %224 = vst [vmem:[%s220 + $0x8] sm:$0xff] %v223
                %v225 = vld [vmem:[%s219 + $0x20] sm:$0xff]
                %226 = vst [vmem:[%s220 + $0x10] sm:$0xff] %v225
                %v227 = vld [vmem:[%s219 + $0x28] sm:$0xff]
                %228 = vst [vmem:[%s220 + $0x18] sm:$0xff] %v227
                %v229 = vld [vmem:[%s219 + $0x40] sm:$0xff]
                %230 = vst [vmem:[%s220 + $0x20] sm:$0xff] %v229
                %v231 = vld [vmem:[%s219 + $0x48] sm:$0xff]
                %232 = vst [vmem:[%s220 + $0x28] sm:$0xff] %v231
                %v233 = vld [vmem:[%s219 + $0x60] sm:$0xff]
                %234 = vst [vmem:[%s220 + $0x30] sm:$0xff] %v233
                %v235 = vld [vmem:[%s219 + $0x68] sm:$0xff]
                %236 = vst [vmem:[%s220 + $0x38] sm:$0xff] %v235
                %v237 = vld [vmem:[%s219 + $0x80] sm:$0xff]
                %238 = vst [vmem:[%s220 + $0x40] sm:$0xff] %v237
                %v239 = vld [vmem:[%s219 + $0x88] sm:$0xff]
                %240 = vst [vmem:[%s220 + $0x48] sm:$0xff] %v239
                %v241 = vld [vmem:[%s219 + $0xa0] sm:$0xff]
                %242 = vst [vmem:[%s220 + $0x50] sm:$0xff] %v241
                %v243 = vld [vmem:[%s219 + $0xa8] sm:$0xff]
                %244 = vst [vmem:[%s220 + $0x58] sm:$0xff] %v243
                %v245 = vld [vmem:[%s219 + $0xc0] sm:$0xff]
                %246 = vst [vmem:[%s220 + $0x60] sm:$0xff] %v245
                %v247 = vld [vmem:[%s219 + $0xc8] sm:$0xff]
                %248 = vst [vmem:[%s220 + $0x68] sm:$0xff] %v247
                %v249 = vld [vmem:[%s219 + $0xe0] sm:$0xff]
                %250 = vst [vmem:[%s220 + $0x70] sm:$0xff] %v249
                %v251 = vld [vmem:[%s219 + $0xe8] sm:$0xff]
                %252 = vst [vmem:[%s220 + $0x78] sm:$0xff] %v251
                %v253 = vld [vmem:[%s219 + $0x100] sm:$0xff]
                %254 = vst [vmem:[%s220 + $0x80] sm:$0xff] %v253
                %v255 = vld [vmem:[%s219 + $0x108] sm:$0xff]
                %256 = vst [vmem:[%s220 + $0x88] sm:$0xff] %v255
                %v257 = vld [vmem:[%s219 + $0x120] sm:$0xff]
                %258 = vst [vmem:[%s220 + $0x90] sm:$0xff] %v257
                %v259 = vld [vmem:[%s219 + $0x128] sm:$0xff]
                %260 = vst [vmem:[%s220 + $0x98] sm:$0xff] %v259
                %v261 = vld [vmem:[%s219 + $0x140] sm:$0xff]
                %262 = vst [vmem:[%s220 + $0xa0] sm:$0xff] %v261
                %v263 = vld [vmem:[%s219 + $0x148] sm:$0xff]
                %264 = vst [vmem:[%s220 + $0xa8] sm:$0xff] %v263
                %v265 = vld [vmem:[%s219 + $0x160] sm:$0xff]
                %266 = vst [vmem:[%s220 + $0xb0] sm:$0xff] %v265
                %v267 = vld [vmem:[%s219 + $0x168] sm:$0xff]
                %268 = vst [vmem:[%s220 + $0xb8] sm:$0xff] %v267
                %v269 = vld [vmem:[%s219 + $0x180] sm:$0xff]
                %270 = vst [vmem:[%s220 + $0xc0] sm:$0xff] %v269
                %v271 = vld [vmem:[%s219 + $0x188] sm:$0xff]
                %272 = vst [vmem:[%s220 + $0xc8] sm:$0xff] %v271
                %v273 = vld [vmem:[%s219 + $0x1a0] sm:$0xff]
                %274 = vst [vmem:[%s220 + $0xd0] sm:$0xff] %v273
                %v275 = vld [vmem:[%s219 + $0x1a8] sm:$0xff]
                %276 = vst [vmem:[%s220 + $0xd8] sm:$0xff] %v275
                %v277 = vld [vmem:[%s219 + $0x1c0] sm:$0xff]
                %278 = vst [vmem:[%s220 + $0xe0] sm:$0xff] %v277
                %v279 = vld [vmem:[%s219 + $0x1c8] sm:$0xff]
                %280 = vst [vmem:[%s220 + $0xe8] sm:$0xff] %v279
                %v281 = vld [vmem:[%s219 + $0x1e0] sm:$0xff]
                %282 = vst [vmem:[%s220 + $0xf0] sm:$0xff] %v281
                %v283 = vld [vmem:[%s219 + $0x1e8] sm:$0xff]
                %284 = vst [vmem:[%s220 + $0xf8] sm:$0xff] %v283
                %v285 = vld [vmem:[%s219 + $0x200] sm:$0xff]
                %286 = vst [vmem:[%s220 + $0x100] sm:$0xff] %v285
                %v287 = vld [vmem:[%s219 + $0x208] sm:$0xff]
                %288 = vst [vmem:[%s220 + $0x108] sm:$0xff] %v287
                %v289 = vld [vmem:[%s219 + $0x220] sm:$0xff]
                %290 = vst [vmem:[%s220 + $0x110] sm:$0xff] %v289
                %v291 = vld [vmem:[%s219 + $0x228] sm:$0xff]
                %292 = vst [vmem:[%s220 + $0x118] sm:$0xff] %v291
                %v293 = vld [vmem:[%s219 + $0x240] sm:$0xff]
                %294 = vst [vmem:[%s220 + $0x120] sm:$0xff] %v293
                %v295 = vld [vmem:[%s219 + $0x248] sm:$0xff]
                %296 = vst [vmem:[%s220 + $0x128] sm:$0xff] %v295
                %v297 = vld [vmem:[%s219 + $0x260] sm:$0xff]
                %298 = vst [vmem:[%s220 + $0x130] sm:$0xff] %v297
                %v299 = vld [vmem:[%s219 + $0x268] sm:$0xff]
                %300 = vst [vmem:[%s220 + $0x138] sm:$0xff] %v299
                %v301 = vld [vmem:[%s219 + $0x280] sm:$0xff]
                %302 = vst [vmem:[%s220 + $0x140] sm:$0xff] %v301
                %v303 = vld [vmem:[%s219 + $0x288] sm:$0xff]
                %304 = vst [vmem:[%s220 + $0x148] sm:$0xff] %v303
                %v305 = vld [vmem:[%s219 + $0x2a0] sm:$0xff]
                %306 = vst [vmem:[%s220 + $0x150] sm:$0xff] %v305
                %v307 = vld [vmem:[%s219 + $0x2a8] sm:$0xff]
                %308 = vst [vmem:[%s220 + $0x158] sm:$0xff] %v307
                %v309 = vld [vmem:[%s219 + $0x2c0] sm:$0xff]
                %310 = vst [vmem:[%s220 + $0x160] sm:$0xff] %v309
                %v311 = vld [vmem:[%s219 + $0x2c8] sm:$0xff]
                %312 = vst [vmem:[%s220 + $0x168] sm:$0xff] %v311
                %v313 = vld [vmem:[%s219 + $0x2e0] sm:$0xff]
                %314 = vst [vmem:[%s220 + $0x170] sm:$0xff] %v313
                %v315 = vld [vmem:[%s219 + $0x2e8] sm:$0xff]
                %316 = vst [vmem:[%s220 + $0x178] sm:$0xff] %v315
                %v317 = vld [vmem:[%s219 + $0x300] sm:$0xff]
                %318 = vst [vmem:[%s220 + $0x180] sm:$0xff] %v317
                %v319 = vld [vmem:[%s219 + $0x308] sm:$0xff]
                %320 = vst [vmem:[%s220 + $0x188] sm:$0xff] %v319
                %v321 = vld [vmem:[%s219 + $0x320] sm:$0xff]
                %322 = vst [vmem:[%s220 + $0x190] sm:$0xff] %v321
                %v323 = vld [vmem:[%s219 + $0x328] sm:$0xff]
                %324 = vst [vmem:[%s220 + $0x198] sm:$0xff] %v323
                %v325 = vld [vmem:[%s219 + $0x340] sm:$0xff]
                %326 = vst [vmem:[%s220 + $0x1a0] sm:$0xff] %v325
                %v327 = vld [vmem:[%s219 + $0x348] sm:$0xff]
                %328 = vst [vmem:[%s220 + $0x1a8] sm:$0xff] %v327
                %v329 = vld [vmem:[%s219 + $0x360] sm:$0xff]
                %330 = vst [vmem:[%s220 + $0x1b0] sm:$0xff] %v329
                %v331 = vld [vmem:[%s219 + $0x368] sm:$0xff]
                %332 = vst [vmem:[%s220 + $0x1b8] sm:$0xff] %v331
                %v333 = vld [vmem:[%s219 + $0x380] sm:$0xff]
                %334 = vst [vmem:[%s220 + $0x1c0] sm:$0xff] %v333
                %v335 = vld [vmem:[%s219 + $0x388] sm:$0xff]
                %336 = vst [vmem:[%s220 + $0x1c8] sm:$0xff] %v335
                %v337 = vld [vmem:[%s219 + $0x3a0] sm:$0xff]
                %338 = vst [vmem:[%s220 + $0x1d0] sm:$0xff] %v337
                %v339 = vld [vmem:[%s219 + $0x3a8] sm:$0xff]
                %340 = vst [vmem:[%s220 + $0x1d8] sm:$0xff] %v339
                %v341 = vld [vmem:[%s219 + $0x3c0] sm:$0xff]
                %342 = vst [vmem:[%s220 + $0x1e0] sm:$0xff] %v341
                %v343 = vld [vmem:[%s219 + $0x3c8] sm:$0xff]
                %344 = vst [vmem:[%s220 + $0x1e8] sm:$0xff] %v343
                %v345 = vld [vmem:[%s219 + $0x3e0] sm:$0xff]
                %346 = vst [vmem:[%s220 + $0x1f0] sm:$0xff] %v345
                %v347 = vld [vmem:[%s219 + $0x3e8] sm:$0xff]
                %348 = vst [vmem:[%s220 + $0x1f8] sm:$0xff] %v347
              $region37: #{deepspeech2_forward.11} parent=31 // loop_footer
                %s218 = sadd.s32 1, %s214
              $region38: #{deepspeech2_forward.11} parent=31 // loop_footer_branch
                %213 = sbr.rel target = $region34
              $region39: #{deepspeech2_forward.11} parent=31 // loop_exit
                _
            $region32: #{deepspeech2_forward.11} parent=27 // pred_fallthru
              _
            // Predicated region
            $region40: #{deepspeech2_forward.11} parent=27 // pred_check
              _
            $region41: #{deepspeech2_forward.11} parent=27 // pred_check_branch
              %350 = sbr.rel target = $region43
            $region42: #{deepspeech2_forward.11} parent=27 // pred_region
              _
            $region43: #{deepspeech2_forward.11} parent=27 // pred_fallthru
              _
          $region28: #{deepspeech2_forward.11} parent=23 // pred_fallthru
            _
          %351 = vnop
        $region24: #{deepspeech2_forward.11} parent=19 // pred_fallthru
          _
        // Predicated region
        $region44: #{deepspeech2_forward.11} parent=19 // pred_check
          %p352 = pneg %p105
        $region45: #{deepspeech2_forward.11} parent=19 // pred_check_branch
          %354 = sbr.rel (%p352) target = $region47
        $region46: #{deepspeech2_forward.11} parent=19 // pred_region
          %s355 = smul.u32 4, %s18
          %p356 = scmp.lt.s32.totalorder %s355, 7
          %s357 = scalar_select %p356, %s355, 7
          %s358 = scalar_lea.vmem %s2, %s357
          %s359 = smul.u32 4, %s18
        $region47: #{deepspeech2_forward.11} parent=19 // pred_fallthru
          _
        // Predicated region
        $region48: #{deepspeech2_forward.11} parent=19 // pred_check
          %p360 = pneg %p131
        $region49: #{deepspeech2_forward.11} parent=19 // pred_check_branch
          %362 = sbr.rel (%p360) target = $region51
        $region50: #{deepspeech2_forward.11} parent=19 // pred_region
          %s363 = smul.u32 4, %s18
          %p364 = scmp.lt.s32.totalorder %s363, 7
          %s365 = scalar_select %p364, %s363, 7
          %s366 = scalar_lea.vmem %s3, %s365
          %s367 = smul.u32 4, %s18
        $region51: #{deepspeech2_forward.11} parent=19 // pred_fallthru
          _
      $region20: #{deepspeech2_forward.11} parent=5 // pred_fallthru
        _
      %p368 = scmp.le.s32.totalorder 1, %s10
      %p369 = scmp.lt.s32.totalorder %s10, 3
      %p370 = pnand %p368, %p369
      %p371 = pneg %p370
      // Predicated region
      $region52: #{deepspeech2_forward.11} parent=5 // pred_check
        _
      $region53: #{deepspeech2_forward.11} parent=5 // pred_check_branch
        %373 = sbr.rel (%p370) target = $region55
      $region54: #{deepspeech2_forward.11} parent=5 // pred_region
        %s374 = ssub.s32 %s10, 1
        %s375 = sand.u32 %s72, 1
        %s376 = sand.u32 %s72, 1
        %s377 = smul.addr %s376, 512
        %s378 = scalar_lea.vmem [#allocation3], %s377
        // Predicated region
        $region56: #{deepspeech2_forward.11} parent=54 // pred_check
          %p379 = pneg %p85
        $region57: #{deepspeech2_forward.11} parent=54 // pred_check_branch
          %381 = sbr.rel (%p379) target = $region59
        $region58: #{deepspeech2_forward.11} parent=54 // pred_region
          _
        $region59: #{deepspeech2_forward.11} parent=54 // pred_fallthru
          _
        %s382 = smul.u32 2, %s20
        %p383 = scmp.lt.s32.totalorder %s382, 1
        %s384 = scalar_select %p383, %s382, 1
        %p385 = scmp.lt.s32.totalorder %s22, 0
        %s386 = scalar_select %p385, %s22, 0
        %s387 = sadd.s32 %s386, %s384
        %s388 = smul.addr %s387, 4
        %s389 = scalar_lea.vmem %s0, %s388
        %p390 = pneg %p57
        %p391 = pneg %p54
        %s392 = sand.u32 %s72, 1
        %s393 = sand.u32 %s72, 1
        %s394 = smul.addr %s393, 512
        %s395 = scalar_lea.vmem [#allocation3], %s394
        %p396 = pneg %p85
        %p397 = pneg %p82
        %s398 = smul.u32 4, %s21
        %p399 = scmp.lt.s32.totalorder %s398, 7
        %s400 = scalar_select %p399, %s398, 7
        %s401 = scalar_lea.vmem %s2, %s400
        %p402 = pneg %p111
        %p403 = pneg %p108
        %s404 = smul.u32 4, %s21
        %p405 = scmp.lt.s32.totalorder %s404, 7
        %s406 = scalar_select %p405, %s404, 7
        %s407 = scalar_lea.vmem %s3, %s406
        %p408 = pneg %p137
        %p409 = pneg %p134
        %p410 = pneg %p165
        %p411 = pneg %p162
        %s412 = sand.u32 %s152, 1
        %s413 = sand.u32 %s152, 1
        %s414 = smul.addr %s413, 32
        %s415 = scalar_lea.vmem [#allocation4], %s414
        %s416 = smul.u32 2, %s20
        %p417 = scmp.lt.s32.totalorder %s416, 1
        %s418 = scalar_select %p417, %s416, 1
        %p419 = scmp.lt.s32.totalorder %s22, 0
        %s420 = scalar_select %p419, %s22, 0
        %s421 = sadd.s32 %s420, %s418
        %s422 = smul.addr %s421, 4
        %s423 = scalar_lea.vmem %s0, %s422
        %s424 = smul.u32 2, %s20
        %s425 = smul.u32 16, %s22
        %s426 = smul.u32 4, %s21
        %s427 = smul.u32 4, %s21
        %p428 = scmp.lt.s32.totalorder %s427, 7
        %s429 = scalar_select %p428, %s427, 7
        %s430 = scalar_lea.vmem %s2, %s429
        %s431 = smul.u32 4, %s21
        %s432 = smul.u32 4, %s21
        %p433 = scmp.lt.s32.totalorder %s432, 7
        %s434 = scalar_select %p433, %s432, 7
        %s435 = scalar_lea.vmem %s3, %s434
        %s436 = smul.u32 4, %s21
        %s437 = smul.u32 2, %s20
        %s438 = smul.u32 4, %s21
        %p439 = scmp.eq.s32.totalorder %s22, 0
        // Predicated region
        $region60: #{deepspeech2_forward.11} parent=54 // pred_check
          %p440 = pneg %p439
        $region61: #{deepspeech2_forward.11} parent=54 // pred_check_branch
          %442 = sbr.rel (%p440) target = $region63
        $region62: #{deepspeech2_forward.11} parent=54 // pred_region
          %443 = vst [vmem:[#allocation2] sm:$0xff] 0.0
          %444 = vst [vmem:[#allocation2 + $0x8] sm:$0xff] 0.0
          %445 = vst [vmem:[#allocation2 + $0x10] sm:$0xff] 0.0
          %446 = vst [vmem:[#allocation2 + $0x18] sm:$0xff] 0.0
          %447 = vst [vmem:[#allocation2 + $0x20] sm:$0xff] 0.0
          %448 = vst [vmem:[#allocation2 + $0x28] sm:$0xff] 0.0
          %449 = vst [vmem:[#allocation2 + $0x30] sm:$0xff] 0.0
          %450 = vst [vmem:[#allocation2 + $0x38] sm:$0xff] 0.0
        $region63: #{deepspeech2_forward.11} parent=54 // pred_fallthru
          _
        %v451 = vld [vmem:[#allocation2] sm:$0xff]
        %v452 = vld [vmem:[#allocation2 + $0x8] sm:$0xff]
        %v453 = vld [vmem:[#allocation2 + $0x10] sm:$0xff]
        %v454 = vld [vmem:[#allocation2 + $0x18] sm:$0xff]
        %v455 = vld [vmem:[#allocation2 + $0x20] sm:$0xff]
        %v456 = vld [vmem:[#allocation2 + $0x28] sm:$0xff]
        %v457 = vld [vmem:[#allocation2 + $0x30] sm:$0xff]
        %v458 = vld [vmem:[#allocation2 + $0x38] sm:$0xff]
        %v459 = vld [vmem:[%s423] sm:$0xf]
        %v460 = vld [vmem:[%s423 + $0x4] sm:$0xf]
        %v461 = vld [vmem:[%s378] sm:$0xff]
        %v462 = vld [vmem:[%s378 + $0x8] sm:$0xff]
        %v463 = vld [vmem:[%s378 + $0x10] sm:$0xff]
        %v464 = vld [vmem:[%s378 + $0x18] sm:$0xff]
        %v465 = vld [vmem:[%s378 + $0x20] sm:$0xff]
        %v466 = vld [vmem:[%s378 + $0x28] sm:$0xff]
        %v467 = vld [vmem:[%s378 + $0x30] sm:$0xff]
        %v468 = vld [vmem:[%s378 + $0x38] sm:$0xff]
        %v469 = vld [vmem:[%s378 + $0x40] sm:$0xff]
        %v470 = vld [vmem:[%s378 + $0x48] sm:$0xff]
        %v471 = vld [vmem:[%s378 + $0x50] sm:$0xff]
        %v472 = vld [vmem:[%s378 + $0x58] sm:$0xff]
        %v473 = vld [vmem:[%s378 + $0x60] sm:$0xff]
        %v474 = vld [vmem:[%s378 + $0x68] sm:$0xff]
        %v475 = vld [vmem:[%s378 + $0x70] sm:$0xff]
        %v476 = vld [vmem:[%s378 + $0x78] sm:$0xff]
        %v477 = vld [vmem:[%s378 + $0x80] sm:$0xff]
        %v478 = vld [vmem:[%s378 + $0x88] sm:$0xff]
        %v479 = vld [vmem:[%s378 + $0x90] sm:$0xff]
        %v480 = vld [vmem:[%s378 + $0x98] sm:$0xff]
        %v481 = vld [vmem:[%s378 + $0xa0] sm:$0xff]
        %v482 = vld [vmem:[%s378 + $0xa8] sm:$0xff]
        %v483 = vld [vmem:[%s378 + $0xb0] sm:$0xff]
        %v484 = vld [vmem:[%s378 + $0xb8] sm:$0xff]
        %v485 = vld [vmem:[%s378 + $0xc0] sm:$0xff]
        %v486 = vld [vmem:[%s378 + $0xc8] sm:$0xff]
        %v487 = vld [vmem:[%s378 + $0xd0] sm:$0xff]
        %v488 = vld [vmem:[%s378 + $0xd8] sm:$0xff]
        %v489 = vld [vmem:[%s378 + $0xe0] sm:$0xff]
        %v490 = vld [vmem:[%s378 + $0xe8] sm:$0xff]
        %v491 = vld [vmem:[%s378 + $0xf0] sm:$0xff]
        %v492 = vld [vmem:[%s378 + $0xf8] sm:$0xff]
        %v495 = vunpack.c.l.b16 %v459
        %v496 = vunpack.c.l.b16 %v460
        %v497 = vpack.c.b16 %v496, %v495
        %v531 = vunpack.c.l.b16 %v461
        %v532 = vunpack.c.h.b16 %v461
        %v533 = vunpack.c.l.b16 %v462
        %v534 = vunpack.c.h.b16 %v462
        %v535 = vunpack.c.l.b16 %v463
        %v536 = vunpack.c.h.b16 %v463
        %v537 = vunpack.c.l.b16 %v464
        %v538 = vunpack.c.h.b16 %v464
        %v539 = vunpack.c.l.b16 %v465
        %v540 = vunpack.c.h.b16 %v465
        %v541 = vunpack.c.l.b16 %v466
        %v542 = vunpack.c.h.b16 %v466
        %v543 = vunpack.c.l.b16 %v467
        %v544 = vunpack.c.h.b16 %v467
        %v545 = vunpack.c.l.b16 %v468
        %v546 = vunpack.c.h.b16 %v468
        %v547 = vunpack.c.l.b16 %v469
        %v548 = vunpack.c.h.b16 %v469
        %v549 = vunpack.c.l.b16 %v470
        %v550 = vunpack.c.h.b16 %v470
        %v551 = vunpack.c.l.b16 %v471
        %v552 = vunpack.c.h.b16 %v471
        %v553 = vunpack.c.l.b16 %v472
        %v554 = vunpack.c.h.b16 %v472
        %v555 = vunpack.c.l.b16 %v473
        %v556 = vunpack.c.h.b16 %v473
        %v557 = vunpack.c.l.b16 %v474
        %v558 = vunpack.c.h.b16 %v474
        %v559 = vunpack.c.l.b16 %v475
        %v560 = vunpack.c.h.b16 %v475
        %v561 = vunpack.c.l.b16 %v476
        %v562 = vunpack.c.h.b16 %v476
        %v563 = vunpack.c.l.b16 %v477
        %v564 = vunpack.c.h.b16 %v477
        %v565 = vunpack.c.l.b16 %v478
        %v566 = vunpack.c.h.b16 %v478
        %v567 = vunpack.c.l.b16 %v479
        %v568 = vunpack.c.h.b16 %v479
        %v569 = vunpack.c.l.b16 %v480
        %v570 = vunpack.c.h.b16 %v480
        %v571 = vunpack.c.l.b16 %v481
        %v572 = vunpack.c.h.b16 %v481
        %v573 = vunpack.c.l.b16 %v482
        %v574 = vunpack.c.h.b16 %v482
        %v575 = vunpack.c.l.b16 %v483
        %v576 = vunpack.c.h.b16 %v483
        %v577 = vunpack.c.l.b16 %v484
        %v578 = vunpack.c.h.b16 %v484
        %v579 = vunpack.c.l.b16 %v485
        %v580 = vunpack.c.h.b16 %v485
        %v581 = vunpack.c.l.b16 %v486
        %v582 = vunpack.c.h.b16 %v486
        %v583 = vunpack.c.l.b16 %v487
        %v584 = vunpack.c.h.b16 %v487
        %v585 = vunpack.c.l.b16 %v488
        %v586 = vunpack.c.h.b16 %v488
        %v587 = vunpack.c.l.b16 %v489
        %v588 = vunpack.c.h.b16 %v489
        %v589 = vunpack.c.l.b16 %v490
        %v590 = vunpack.c.h.b16 %v490
        %v591 = vunpack.c.l.b16 %v491
        %v592 = vunpack.c.h.b16 %v491
        %v593 = vunpack.c.l.b16 %v492
        %v594 = vunpack.c.h.b16 %v492
        %v595 = vpack.c.b16 %v535, %v531
        %v596 = vpack.c.b16 %v536, %v532
        %v597 = vpack.c.b16 %v537, %v533
        %v598 = vpack.c.b16 %v538, %v534
        %v599 = vpack.c.b16 %v543, %v539
        %v600 = vpack.c.b16 %v544, %v540
        %v601 = vpack.c.b16 %v545, %v541
        %v602 = vpack.c.b16 %v546, %v542
        %v603 = vpack.c.b16 %v551, %v547
        %v604 = vpack.c.b16 %v552, %v548
        %v605 = vpack.c.b16 %v553, %v549
        %v606 = vpack.c.b16 %v554, %v550
        %v607 = vpack.c.b16 %v559, %v555
        %v608 = vpack.c.b16 %v560, %v556
        %v609 = vpack.c.b16 %v561, %v557
        %v610 = vpack.c.b16 %v562, %v558
        %v611 = vpack.c.b16 %v567, %v563
        %v612 = vpack.c.b16 %v568, %v564
        %v613 = vpack.c.b16 %v569, %v565
        %v614 = vpack.c.b16 %v570, %v566
        %v615 = vpack.c.b16 %v575, %v571
        %v616 = vpack.c.b16 %v576, %v572
        %v617 = vpack.c.b16 %v577, %v573
        %v618 = vpack.c.b16 %v578, %v574
        %v619 = vpack.c.b16 %v583, %v579
        %v620 = vpack.c.b16 %v584, %v580
        %v621 = vpack.c.b16 %v585, %v581
        %v622 = vpack.c.b16 %v586, %v582
        %v623 = vpack.c.b16 %v591, %v587
        %v624 = vpack.c.b16 %v592, %v588
        %v625 = vpack.c.b16 %v593, %v589
        %v626 = vpack.c.b16 %v594, %v590
        %659 = vmatpush.bf16.msra.mxu0 %v623
        %660 = vmatpush.bf16.msra.mxu0 %v619
        %661 = vmatpush.bf16.msra.mxu0 %v615
        %662 = vmatpush.bf16.msra.mxu0 %v611
        %663 = vmatpush.bf16.msra.mxu0 %v607
        %664 = vmatpush.bf16.msra.mxu0 %v603
        %665 = vmatpush.bf16.msra.mxu0 %v599
        %666 = vmatpush.bf16.msra.mxu0 %v595
        %667 = vmatmul.bf16.gmra.mxu0 %v497
        %v668 = vpop.f32.mrf.mxu0
        %v669 = vadd.f32 0.0, %v668
        %v670 = vpop.f32.mrf.mxu0
        %v671 = vadd.f32 0.0, %v670
        %672 = vdwg.mxu0
        %673 = vmatpush.bf16.msra.mxu0 %v624
        %674 = vmatpush.bf16.msra.mxu0 %v620
        %675 = vmatpush.bf16.msra.mxu0 %v616
        %676 = vmatpush.bf16.msra.mxu0 %v612
        %677 = vmatpush.bf16.msra.mxu0 %v608
        %678 = vmatpush.bf16.msra.mxu0 %v604
        %679 = vmatpush.bf16.msra.mxu0 %v600
        %680 = vmatpush.bf16.msra.mxu0 %v596
        %681 = vmatmul.bf16.gmra.mxu0 %v497
        %v682 = vpop.f32.mrf.mxu0
        %v683 = vadd.f32 0.0, %v682
        %v684 = vpop.f32.mrf.mxu0
        %v685 = vadd.f32 0.0, %v684
        %686 = vdwg.mxu0
        %687 = vmatpush.bf16.msra.mxu0 %v625
        %688 = vmatpush.bf16.msra.mxu0 %v621
        %689 = vmatpush.bf16.msra.mxu0 %v617
        %690 = vmatpush.bf16.msra.mxu0 %v613
        %691 = vmatpush.bf16.msra.mxu0 %v609
        %692 = vmatpush.bf16.msra.mxu0 %v605
        %693 = vmatpush.bf16.msra.mxu0 %v601
        %694 = vmatpush.bf16.msra.mxu0 %v597
        %695 = vmatmul.bf16.gmra.mxu0 %v497
        %v696 = vpop.f32.mrf.mxu0
        %v697 = vadd.f32 0.0, %v696
        %v698 = vpop.f32.mrf.mxu0
        %v699 = vadd.f32 0.0, %v698
        %700 = vdwg.mxu0
        %701 = vmatpush.bf16.msra.mxu0 %v626
        %702 = vmatpush.bf16.msra.mxu0 %v622
        %703 = vmatpush.bf16.msra.mxu0 %v618
        %704 = vmatpush.bf16.msra.mxu0 %v614
        %705 = vmatpush.bf16.msra.mxu0 %v610
        %706 = vmatpush.bf16.msra.mxu0 %v606
        %707 = vmatpush.bf16.msra.mxu0 %v602
        %708 = vmatpush.bf16.msra.mxu0 %v598
        %709 = vmatmul.bf16.gmra.mxu0 %v497
        %v710 = vpop.f32.mrf.mxu0
        %v711 = vadd.f32 0.0, %v710
        %v712 = vpop.f32.mrf.mxu0
        %v713 = vadd.f32 0.0, %v712
        %714 = vdwg.mxu0
        %v715 = vadd.f32 %v451, %v669
        %v716 = vadd.f32 %v452, %v683
        %v717 = vadd.f32 %v453, %v697
        %v718 = vadd.f32 %v454, %v711
        %v719 = vadd.f32 %v455, %v671
        %v720 = vadd.f32 %v456, %v685
        %v721 = vadd.f32 %v457, %v699
        %v722 = vadd.f32 %v458, %v713
        %723 = vst [vmem:[#allocation2] sm:$0xff] %v715
        %724 = vst [vmem:[#allocation2 + $0x8] sm:$0xff] %v716
        %725 = vst [vmem:[#allocation2 + $0x10] sm:$0xff] %v717
        %726 = vst [vmem:[#allocation2 + $0x18] sm:$0xff] %v718
        %727 = vst [vmem:[#allocation2 + $0x20] sm:$0xff] %v719
        %728 = vst [vmem:[#allocation2 + $0x28] sm:$0xff] %v720
        %729 = vst [vmem:[#allocation2 + $0x30] sm:$0xff] %v721
        %730 = vst [vmem:[#allocation2 + $0x38] sm:$0xff] %v722
        %v731 = vld [vmem:[#allocation2] sm:$0xff]
        %v732 = vld [vmem:[#allocation2 + $0x8] sm:$0xff]
        %v733 = vld [vmem:[#allocation2 + $0x10] sm:$0xff]
        %v734 = vld [vmem:[#allocation2 + $0x18] sm:$0xff]
        %v735 = vld [vmem:[#allocation2 + $0x20] sm:$0xff]
        %v736 = vld [vmem:[#allocation2 + $0x28] sm:$0xff]
        %v737 = vld [vmem:[#allocation2 + $0x30] sm:$0xff]
        %v738 = vld [vmem:[#allocation2 + $0x38] sm:$0xff]
        %s739 = scalar_lea.vmem %s423, 8
        %v740 = vld [vmem:[%s739] sm:$0xf]
        %v741 = vld [vmem:[%s739 + $0x4] sm:$0xf]
        %s742 = scalar_lea.vmem %s378, 256 [#allocation3]
        %v743 = vld [vmem:[%s742] sm:$0xff]
        %v744 = vld [vmem:[%s742 + $0x8] sm:$0xff]
        %v745 = vld [vmem:[%s742 + $0x10] sm:$0xff]
        %v746 = vld [vmem:[%s742 + $0x18] sm:$0xff]
        %v747 = vld [vmem:[%s742 + $0x20] sm:$0xff]
        %v748 = vld [vmem:[%s742 + $0x28] sm:$0xff]
        %v749 = vld [vmem:[%s742 + $0x30] sm:$0xff]
        %v750 = vld [vmem:[%s742 + $0x38] sm:$0xff]
        %v751 = vld [vmem:[%s742 + $0x40] sm:$0xff]
        %v752 = vld [vmem:[%s742 + $0x48] sm:$0xff]
        %v753 = vld [vmem:[%s742 + $0x50] sm:$0xff]
        %v754 = vld [vmem:[%s742 + $0x58] sm:$0xff]
        %v755 = vld [vmem:[%s742 + $0x60] sm:$0xff]
        %v756 = vld [vmem:[%s742 + $0x68] sm:$0xff]
        %v757 = vld [vmem:[%s742 + $0x70] sm:$0xff]
        %v758 = vld [vmem:[%s742 + $0x78] sm:$0xff]
        %v759 = vld [vmem:[%s742 + $0x80] sm:$0xff]
        %v760 = vld [vmem:[%s742 + $0x88] sm:$0xff]
        %v761 = vld [vmem:[%s742 + $0x90] sm:$0xff]
        %v762 = vld [vmem:[%s742 + $0x98] sm:$0xff]
        %v763 = vld [vmem:[%s742 + $0xa0] sm:$0xff]
        %v764 = vld [vmem:[%s742 + $0xa8] sm:$0xff]
        %v765 = vld [vmem:[%s742 + $0xb0] sm:$0xff]
        %v766 = vld [vmem:[%s742 + $0xb8] sm:$0xff]
        %v767 = vld [vmem:[%s742 + $0xc0] sm:$0xff]
        %v768 = vld [vmem:[%s742 + $0xc8] sm:$0xff]
        %v769 = vld [vmem:[%s742 + $0xd0] sm:$0xff]
        %v770 = vld [vmem:[%s742 + $0xd8] sm:$0xff]
        %v771 = vld [vmem:[%s742 + $0xe0] sm:$0xff]
        %v772 = vld [vmem:[%s742 + $0xe8] sm:$0xff]
        %v773 = vld [vmem:[%s742 + $0xf0] sm:$0xff]
        %v774 = vld [vmem:[%s742 + $0xf8] sm:$0xff]
        %v777 = vunpack.c.l.b16 %v740
        %v778 = vunpack.c.l.b16 %v741
        %v779 = vpack.c.b16 %v778, %v777
        %v813 = vunpack.c.l.b16 %v743
        %v814 = vunpack.c.h.b16 %v743
        %v815 = vunpack.c.l.b16 %v744
        %v816 = vunpack.c.h.b16 %v744
        %v817 = vunpack.c.l.b16 %v745
        %v818 = vunpack.c.h.b16 %v745
        %v819 = vunpack.c.l.b16 %v746
        %v820 = vunpack.c.h.b16 %v746
        %v821 = vunpack.c.l.b16 %v747
        %v822 = vunpack.c.h.b16 %v747
        %v823 = vunpack.c.l.b16 %v748
        %v824 = vunpack.c.h.b16 %v748
        %v825 = vunpack.c.l.b16 %v749
        %v826 = vunpack.c.h.b16 %v749
        %v827 = vunpack.c.l.b16 %v750
        %v828 = vunpack.c.h.b16 %v750
        %v829 = vunpack.c.l.b16 %v751
        %v830 = vunpack.c.h.b16 %v751
        %v831 = vunpack.c.l.b16 %v752
        %v832 = vunpack.c.h.b16 %v752
        %v833 = vunpack.c.l.b16 %v753
        %v834 = vunpack.c.h.b16 %v753
        %v835 = vunpack.c.l.b16 %v754
        %v836 = vunpack.c.h.b16 %v754
        %v837 = vunpack.c.l.b16 %v755
        %v838 = vunpack.c.h.b16 %v755
        %v839 = vunpack.c.l.b16 %v756
        %v840 = vunpack.c.h.b16 %v756
        %v841 = vunpack.c.l.b16 %v757
        %v842 = vunpack.c.h.b16 %v757
        %v843 = vunpack.c.l.b16 %v758
        %v844 = vunpack.c.h.b16 %v758
        %v845 = vunpack.c.l.b16 %v759
        %v846 = vunpack.c.h.b16 %v759
        %v847 = vunpack.c.l.b16 %v760
        %v848 = vunpack.c.h.b16 %v760
        %v849 = vunpack.c.l.b16 %v761
        %v850 = vunpack.c.h.b16 %v761
        %v851 = vunpack.c.l.b16 %v762
        %v852 = vunpack.c.h.b16 %v762
        %v853 = vunpack.c.l.b16 %v763
        %v854 = vunpack.c.h.b16 %v763
        %v855 = vunpack.c.l.b16 %v764
        %v856 = vunpack.c.h.b16 %v764
        %v857 = vunpack.c.l.b16 %v765
        %v858 = vunpack.c.h.b16 %v765
        %v859 = vunpack.c.l.b16 %v766
        %v860 = vunpack.c.h.b16 %v766
        %v861 = vunpack.c.l.b16 %v767
        %v862 = vunpack.c.h.b16 %v767
        %v863 = vunpack.c.l.b16 %v768
        %v864 = vunpack.c.h.b16 %v768
        %v865 = vunpack.c.l.b16 %v769
        %v866 = vunpack.c.h.b16 %v769
        %v867 = vunpack.c.l.b16 %v770
        %v868 = vunpack.c.h.b16 %v770
        %v869 = vunpack.c.l.b16 %v771
        %v870 = vunpack.c.h.b16 %v771
        %v871 = vunpack.c.l.b16 %v772
        %v872 = vunpack.c.h.b16 %v772
        %v873 = vunpack.c.l.b16 %v773
        %v874 = vunpack.c.h.b16 %v773
        %v875 = vunpack.c.l.b16 %v774
        %v876 = vunpack.c.h.b16 %v774
        %v877 = vpack.c.b16 %v817, %v813
        %v878 = vpack.c.b16 %v818, %v814
        %v879 = vpack.c.b16 %v819, %v815
        %v880 = vpack.c.b16 %v820, %v816
        %v881 = vpack.c.b16 %v825, %v821
        %v882 = vpack.c.b16 %v826, %v822
        %v883 = vpack.c.b16 %v827, %v823
        %v884 = vpack.c.b16 %v828, %v824
        %v885 = vpack.c.b16 %v833, %v829
        %v886 = vpack.c.b16 %v834, %v830
        %v887 = vpack.c.b16 %v835, %v831
        %v888 = vpack.c.b16 %v836, %v832
        %v889 = vpack.c.b16 %v841, %v837
        %v890 = vpack.c.b16 %v842, %v838
        %v891 = vpack.c.b16 %v843, %v839
        %v892 = vpack.c.b16 %v844, %v840
        %v893 = vpack.c.b16 %v849, %v845
        %v894 = vpack.c.b16 %v850, %v846
        %v895 = vpack.c.b16 %v851, %v847
        %v896 = vpack.c.b16 %v852, %v848
        %v897 = vpack.c.b16 %v857, %v853
        %v898 = vpack.c.b16 %v858, %v854
        %v899 = vpack.c.b16 %v859, %v855
        %v900 = vpack.c.b16 %v860, %v856
        %v901 = vpack.c.b16 %v865, %v861
        %v902 = vpack.c.b16 %v866, %v862
        %v903 = vpack.c.b16 %v867, %v863
        %v904 = vpack.c.b16 %v868, %v864
        %v905 = vpack.c.b16 %v873, %v869
        %v906 = vpack.c.b16 %v874, %v870
        %v907 = vpack.c.b16 %v875, %v871
        %v908 = vpack.c.b16 %v876, %v872
        %941 = vmatpush.bf16.msra.mxu0 %v905
        %942 = vmatpush.bf16.msra.mxu0 %v901
        %943 = vmatpush.bf16.msra.mxu0 %v897
        %944 = vmatpush.bf16.msra.mxu0 %v893
        %945 = vmatpush.bf16.msra.mxu0 %v889
        %946 = vmatpush.bf16.msra.mxu0 %v885
        %947 = vmatpush.bf16.msra.mxu0 %v881
        %948 = vmatpush.bf16.msra.mxu0 %v877
        %949 = vmatmul.bf16.gmra.mxu0 %v779
        %v950 = vpop.f32.mrf.mxu0
        %v951 = vadd.f32 0.0, %v950
        %v952 = vpop.f32.mrf.mxu0
        %v953 = vadd.f32 0.0, %v952
        %954 = vdwg.mxu0
        %955 = vmatpush.bf16.msra.mxu0 %v906
        %956 = vmatpush.bf16.msra.mxu0 %v902
        %957 = vmatpush.bf16.msra.mxu0 %v898
        %958 = vmatpush.bf16.msra.mxu0 %v894
        %959 = vmatpush.bf16.msra.mxu0 %v890
        %960 = vmatpush.bf16.msra.mxu0 %v886
        %961 = vmatpush.bf16.msra.mxu0 %v882
        %962 = vmatpush.bf16.msra.mxu0 %v878
        %963 = vmatmul.bf16.gmra.mxu0 %v779
        %v964 = vpop.f32.mrf.mxu0
        %v965 = vadd.f32 0.0, %v964
        %v966 = vpop.f32.mrf.mxu0
        %v967 = vadd.f32 0.0, %v966
        %968 = vdwg.mxu0
        %969 = vmatpush.bf16.msra.mxu0 %v907
        %970 = vmatpush.bf16.msra.mxu0 %v903
        %971 = vmatpush.bf16.msra.mxu0 %v899
        %972 = vmatpush.bf16.msra.mxu0 %v895
        %973 = vmatpush.bf16.msra.mxu0 %v891
        %974 = vmatpush.bf16.msra.mxu0 %v887
        %975 = vmatpush.bf16.msra.mxu0 %v883
        %976 = vmatpush.bf16.msra.mxu0 %v879
        %977 = vmatmul.bf16.gmra.mxu0 %v779
        %v978 = vpop.f32.mrf.mxu0
        %v979 = vadd.f32 0.0, %v978
        %v980 = vpop.f32.mrf.mxu0
        %v981 = vadd.f32 0.0, %v980
        %982 = vdwg.mxu0
        %983 = vmatpush.bf16.msra.mxu0 %v908
        %984 = vmatpush.bf16.msra.mxu0 %v904
        %985 = vmatpush.bf16.msra.mxu0 %v900
        %986 = vmatpush.bf16.msra.mxu0 %v896
        %987 = vmatpush.bf16.msra.mxu0 %v892
        %988 = vmatpush.bf16.msra.mxu0 %v888
        %989 = vmatpush.bf16.msra.mxu0 %v884
        %990 = vmatpush.bf16.msra.mxu0 %v880
        %991 = vmatmul.bf16.gmra.mxu0 %v779
        %v992 = vpop.f32.mrf.mxu0
        %v993 = vadd.f32 0.0, %v992
        %v994 = vpop.f32.mrf.mxu0
        %v995 = vadd.f32 0.0, %v994
        %996 = vdwg.mxu0
        %v997 = vadd.f32 %v731, %v951
        %v998 = vadd.f32 %v732, %v965
        %v999 = vadd.f32 %v733, %v979
        %v1000 = vadd.f32 %v734, %v993
        %v1001 = vadd.f32 %v735, %v953
        %v1002 = vadd.f32 %v736, %v967
        %v1003 = vadd.f32 %v737, %v981
        %v1004 = vadd.f32 %v738, %v995
        %1005 = vst [vmem:[#allocation2] sm:$0xff] %v997
        %1006 = vst [vmem:[#allocation2 + $0x8] sm:$0xff] %v998
        %1007 = vst [vmem:[#allocation2 + $0x10] sm:$0xff] %v999
        %1008 = vst [vmem:[#allocation2 + $0x18] sm:$0xff] %v1000
        %1009 = vst [vmem:[#allocation2 + $0x20] sm:$0xff] %v1001
        %1010 = vst [vmem:[#allocation2 + $0x28] sm:$0xff] %v1002
        %1011 = vst [vmem:[#allocation2 + $0x30] sm:$0xff] %v1003
        %1012 = vst [vmem:[#allocation2 + $0x38] sm:$0xff] %v1004
        // Predicated region
        $region64: #{deepspeech2_forward.11} parent=54 // pred_check
          %p1013 = pneg %p439
        $region65: #{deepspeech2_forward.11} parent=54 // pred_check_branch
          %1015 = sbr.rel (%p1013) target = $region67
        $region66: #{deepspeech2_forward.11} parent=54 // pred_region
          %v1016 = vld [vmem:[#allocation2] sm:$0xff]
          %v1017 = vld [vmem:[#allocation2 + $0x8] sm:$0xff]
          %v1018 = vld [vmem:[#allocation2 + $0x10] sm:$0xff]
          %v1019 = vld [vmem:[#allocation2 + $0x18] sm:$0xff]
          %v1020 = vld [vmem:[#allocation2 + $0x20] sm:$0xff]
          %v1021 = vld [vmem:[#allocation2 + $0x28] sm:$0xff]
          %v1022 = vld [vmem:[#allocation2 + $0x30] sm:$0xff]
          %v1023 = vld [vmem:[#allocation2 + $0x38] sm:$0xff]
          %v1024 = vld [vmem:[%s430] sm:$0xf]
          %v1026 = vperm.slane %v1024, 0
          %v1027 = vperm.slane %v1024, 1
          %v1028 = vperm.slane %v1024, 2
          %v1029 = vperm.slane %v1024, 3
          %v1034 = vmul.f32 %v1016, %v1026
          %v1035 = vmul.f32 %v1017, %v1027
          %v1036 = vmul.f32 %v1018, %v1028
          %v1037 = vmul.f32 %v1019, %v1029
          %v1038 = vmul.f32 %v1020, %v1026
          %v1039 = vmul.f32 %v1021, %v1027
          %v1040 = vmul.f32 %v1022, %v1028
          %v1041 = vmul.f32 %v1023, %v1029
          %v1042 = vld [vmem:[%s435] sm:$0xf]
          %v1044 = vperm.slane %v1042, 0
          %v1045 = vperm.slane %v1042, 1
          %v1046 = vperm.slane %v1042, 2
          %v1047 = vperm.slane %v1042, 3
          %v1052 = vadd.f32 %v1034, %v1044
          %v1053 = vadd.f32 %v1035, %v1045
          %v1054 = vadd.f32 %v1036, %v1046
          %v1055 = vadd.f32 %v1037, %v1047
          %v1056 = vadd.f32 %v1038, %v1044
          %v1057 = vadd.f32 %v1039, %v1045
          %v1058 = vadd.f32 %v1040, %v1046
          %v1059 = vadd.f32 %v1041, %v1047
          %v1060 = vpack.c.bf16 %v1053, %v1052
          %v1061 = vpack.c.bf16 %v1055, %v1054
          %v1062 = vpack.c.bf16 %v1057, %v1056
          %v1063 = vpack.c.bf16 %v1059, %v1058
          %1064 = vst [vmem:[%s415] sm:$0xff] %v1060
          %1065 = vst [vmem:[%s415 + $0x8] sm:$0xff] %v1061
          %1066 = vst [vmem:[%s415 + $0x10] sm:$0xff] %v1062
          %1067 = vst [vmem:[%s415 + $0x18] sm:$0xff] %v1063
        $region67: #{deepspeech2_forward.11} parent=54 // pred_fallthru
          _
        %s1068 = sand.u32 %s152, 1
        %s1069 = sand.u32 %s152, 1
        %s1070 = smul.addr %s1069, 32
        %s1071 = scalar_lea.vmem [#allocation4], %s1070
        // Predicated region
        $region68: #{deepspeech2_forward.11} parent=54 // pred_check
          %p1072 = pneg %p162
        $region69: #{deepspeech2_forward.11} parent=54 // pred_check_branch
          %1074 = sbr.rel (%p1072) target = $region71
        $region70: #{deepspeech2_forward.11} parent=54 // pred_region
          %s1075 = smul.u32 2, %s20
          %s1076 = smul.u32 4, %s21
          %s1077 = smul.addr %s1075, 8
          %s1078 = sadd.s32 %s1076, %s1077
          %s1079 = smul.addr %s1078, 4
          %s1080 = scalar_lea.vmem %s4, %s1079
          // Predicated region
          $region72: #{deepspeech2_forward.11} parent=70 // pred_check
            _
          $region73: #{deepspeech2_forward.11} parent=70 // pred_check_branch
            %1082 = sbr.rel (0) target = $region75
          $region74: #{deepspeech2_forward.11} parent=70 // pred_region
            // Predicated region
            $region76: #{deepspeech2_forward.11} parent=74 // pred_check
              _
            $region77: #{deepspeech2_forward.11} parent=74 // pred_check_branch
              %1084 = sbr.rel (0) target = $region79
            $region78: #{deepspeech2_forward.11} parent=74 // pred_region
              loop: start=0, step=1, limit=1
              $region80: #{deepspeech2_forward.11} parent=78 // loop_pre_header
                _
              $region81: #{deepspeech2_forward.11} parent=78 // loop_header
                %s1086 = sphi 0, %s1090
                %p1087 = scmp.ge.s32.totalorder %s1086, 1
                %s1091 = sphi %s1071, %s1071
                %s1092 = sphi %s1080, %s1080
              $region82: #{deepspeech2_forward.11} parent=78 // loop_header_branch
                %1089 = sbr.rel (%p1087) target = $region86
              $region83: #{deepspeech2_forward.11} parent=78 // loop_body
                %v1093 = vld [vmem:[%s1091] sm:$0xff]
                %1094 = vst [vmem:[%s1092] sm:$0xff] %v1093
                %v1095 = vld [vmem:[%s1091 + $0x8] sm:$0xff]
                %1096 = vst [vmem:[%s1092 + $0x8] sm:$0xff] %v1095
                %v1097 = vld [vmem:[%s1091 + $0x10] sm:$0xff]
                %1098 = vst [vmem:[%s1092 + $0x20] sm:$0xff] %v1097
                %v1099 = vld [vmem:[%s1091 + $0x18] sm:$0xff]
                %1100 = vst [vmem:[%s1092 + $0x28] sm:$0xff] %v1099
              $region84: #{deepspeech2_forward.11} parent=78 // loop_footer
                %s1090 = sadd.s32 1, %s1086
              $region85: #{deepspeech2_forward.11} parent=78 // loop_footer_branch
                %1085 = sbr.rel target = $region81
              $region86: #{deepspeech2_forward.11} parent=78 // loop_exit
                _
            $region79: #{deepspeech2_forward.11} parent=74 // pred_fallthru
              _
            // Predicated region
            $region87: #{deepspeech2_forward.11} parent=74 // pred_check
              _
            $region88: #{deepspeech2_forward.11} parent=74 // pred_check_branch
              %1102 = sbr.rel target = $region90
            $region89: #{deepspeech2_forward.11} parent=74 // pred_region
              _
            $region90: #{deepspeech2_forward.11} parent=74 // pred_fallthru
              _
          $region75: #{deepspeech2_forward.11} parent=70 // pred_fallthru
            _
          %1103 = vnop
        $region71: #{deepspeech2_forward.11} parent=54 // pred_fallthru
          _
      $region55: #{deepspeech2_forward.11} parent=5 // pred_fallthru
        _
      %p1104 = scmp.le.s32.totalorder 2, %s10
      // Predicated region
      $region91: #{deepspeech2_forward.11} parent=5 // pred_check
        %p1105 = pneg %p1104
      $region92: #{deepspeech2_forward.11} parent=5 // pred_check_branch
        %1107 = sbr.rel (%p1105) target = $region94
      $region93: #{deepspeech2_forward.11} parent=5 // pred_region
        %s1108 = ssub.s32 %s10, 2
        // Predicated region
        $region95: #{deepspeech2_forward.11} parent=93 // pred_check
          %p1109 = pneg %p168
        $region96: #{deepspeech2_forward.11} parent=93 // pred_check_branch
          %1111 = sbr.rel (%p1109) target = $region98
        $region97: #{deepspeech2_forward.11} parent=93 // pred_region
          %s1112 = sand.u32 %s153, 1
          %s1113 = sand.u32 %s153, 1
          %s1114 = smul.addr %s1113, 32
          %s1115 = scalar_lea.vmem [#allocation4], %s1114
        $region98: #{deepspeech2_forward.11} parent=93 // pred_fallthru
          _
      $region94: #{deepspeech2_forward.11} parent=5 // pred_fallthru
        _
    $region6: #{deepspeech2_forward.11} parent=1 // loop_footer
      %s14 = sadd.s32 1, %s10
    $region7: #{deepspeech2_forward.11} parent=1 // loop_footer_branch
      %9 = sbr.rel target = $region3
    $region8: #{deepspeech2_forward.11} parent=1 // loop_exit
      _

// kernel: deepspeech2_forward.13
$region0: #{deepspeech2_forward.13}
  #allocation0 [shape = 'u32[]', space=smem, size = 0x4, offset = 0x4, fixed_abs, tag = 'smem constant byte address 0x4 - core index']
  #allocation1 [shape = 'u32[72,128]{1,0:T(1,128)}', space=vmem, size = 0x9000, scoped, tag = 'internal scratch']
  #allocation2 [shape = 'f32[16,128]{1,0:T(8,128)}', space=vmem, size = 0x2000, scoped, tag = 'scratch operand']
  %s0 = inlined_call_operand.vmem [shape: bf16[2,16,128], index: 0, kind: input, shape index: {}]
  %s1 = inlined_call_operand.vmem [shape: bf16[2,128,128], index: 1, kind: input, shape index: {}]
  %s2 = inlined_call_operand.vmem [shape: f32[1,128], index: 2, kind: input, shape index: {}]
  %s3 = inlined_call_operand.vmem [shape: f32[1,128], index: 3, kind: input, shape index: {}]
  %s4 = inlined_call_operand.hbm [shape: f32[16,128], index: 4, kind: output, shape index: {}]
  %s5 = sld [smem:[#allocation0]]
  $region34: #{deepspeech2_forward.13} parent=0
    _
  %s7 = ssub.s32 1, %s5
  %s8 = scalar_select 0, %s7, %s5
  $region1: #{deepspeech2_forward.13} parent=0
    #allocation3 [shape = 'u8[8192]{0}', space=vmem, size = 0x2000, scoped, tag = 'output window, operand 0, single buffered']
    #allocation4 [shape = 's32[1]{0}', space=sflag, size = 0x4, scoped, tag = 'scoped memory for deepspeech2_forward.13']
    %9 = vsyncpa [#allocation4], 0
    // Predicated region
    $region2: #{deepspeech2_forward.13} parent=1 // pred_check
      _
    $region3: #{deepspeech2_forward.13} parent=1 // pred_check_branch
      %11 = sbr.rel (0) target = $region5
    $region4: #{deepspeech2_forward.13} parent=1 // pred_region
      _
    $region5: #{deepspeech2_forward.13} parent=1 // pred_fallthru
      _
    // Predicated region
    $region6: #{deepspeech2_forward.13} parent=1 // pred_check
      _
    $region7: #{deepspeech2_forward.13} parent=1 // pred_check_branch
      %13 = sbr.rel (0) target = $region9
    $region8: #{deepspeech2_forward.13} parent=1 // pred_region
      _
    $region9: #{deepspeech2_forward.13} parent=1 // pred_fallthru
      _
    // Predicated region
    $region10: #{deepspeech2_forward.13} parent=1 // pred_check
      _
    $region11: #{deepspeech2_forward.13} parent=1 // pred_check_branch
      %15 = sbr.rel (0) target = $region13
    $region12: #{deepspeech2_forward.13} parent=1 // pred_region
      _
    $region13: #{deepspeech2_forward.13} parent=1 // pred_fallthru
      _
    // Predicated region
    $region14: #{deepspeech2_forward.13} parent=1 // pred_check
      _
    $region15: #{deepspeech2_forward.13} parent=1 // pred_check_branch
      %17 = sbr.rel (0) target = $region17
    $region16: #{deepspeech2_forward.13} parent=1 // pred_region
      _
    $region17: #{deepspeech2_forward.13} parent=1 // pred_fallthru
      _
    %p18 = scmp.eq.s32.totalorder 0, 0
    // Predicated region
    $region18: #{deepspeech2_forward.13} parent=1 // pred_check
      %p19 = pneg %p18
    $region19: #{deepspeech2_forward.13} parent=1 // pred_check_branch
      %21 = sbr.rel (%p19) target = $region21
    $region20: #{deepspeech2_forward.13} parent=1 // pred_region
      %22 = vst [vmem:[#allocation2] sm:$0xff] 0.0
      %23 = vst [vmem:[#allocation2 + $0x8] sm:$0xff] 0.0
    $region21: #{deepspeech2_forward.13} parent=1 // pred_fallthru
      _
    %v24 = vld [vmem:[#allocation2] sm:$0xff]
    %v25 = vld [vmem:[#allocation2 + $0x8] sm:$0xff]
    %v26 = vld [vmem:[%s0] sm:$0xf]
    %v27 = vld [vmem:[%s0 + $0x4] sm:$0xf]
    %v28 = vld [vmem:[%s1] sm:$0xf]
    %v29 = vld [vmem:[%s1 + $0x4] sm:$0xf]
    %v30 = vld [vmem:[%s1 + $0x8] sm:$0xf]
    %v31 = vld [vmem:[%s1 + $0xc] sm:$0xf]
    %v32 = vld [vmem:[%s1 + $0x10] sm:$0xf]
    %v33 = vld [vmem:[%s1 + $0x14] sm:$0xf]
    %v34 = vld [vmem:[%s1 + $0x18] sm:$0xf]
    %v35 = vld [vmem:[%s1 + $0x1c] sm:$0xf]
    %v36 = vld [vmem:[%s1 + $0x20] sm:$0xf]
    %v37 = vld [vmem:[%s1 + $0x24] sm:$0xf]
    %v38 = vld [vmem:[%s1 + $0x28] sm:$0xf]
    %v39 = vld [vmem:[%s1 + $0x2c] sm:$0xf]
    %v40 = vld [vmem:[%s1 + $0x30] sm:$0xf]
    %v41 = vld [vmem:[%s1 + $0x34] sm:$0xf]
    %v42 = vld [vmem:[%s1 + $0x38] sm:$0xf]
    %v43 = vld [vmem:[%s1 + $0x3c] sm:$0xf]
    %v46 = vunpack.c.l.b16 %v26
    %v47 = vunpack.c.l.b16 %v27
    %v48 = vpack.c.b16 %v47, %v46
    %v66 = vunpack.c.l.b16 %v28
    %v67 = vunpack.c.l.b16 %v29
    %v68 = vunpack.c.l.b16 %v30
    %v69 = vunpack.c.l.b16 %v31
    %v70 = vunpack.c.l.b16 %v32
    %v71 = vunpack.c.l.b16 %v33
    %v72 = vunpack.c.l.b16 %v34
    %v73 = vunpack.c.l.b16 %v35
    %v74 = vunpack.c.l.b16 %v36
    %v75 = vunpack.c.l.b16 %v37
    %v76 = vunpack.c.l.b16 %v38
    %v77 = vunpack.c.l.b16 %v39
    %v78 = vunpack.c.l.b16 %v40
    %v79 = vunpack.c.l.b16 %v41
    %v80 = vunpack.c.l.b16 %v42
    %v81 = vunpack.c.l.b16 %v43
    %v82 = vpack.c.b16 %v67, %v66
    %v83 = vpack.c.b16 %v69, %v68
    %v84 = vpack.c.b16 %v71, %v70
    %v85 = vpack.c.b16 %v73, %v72
    %v86 = vpack.c.b16 %v75, %v74
    %v87 = vpack.c.b16 %v77, %v76
    %v88 = vpack.c.b16 %v79, %v78
    %v89 = vpack.c.b16 %v81, %v80
    %98 = vmatpush.bf16.msra.mxu0 %v89
    %99 = vmatpush.bf16.msra.mxu0 %v88
    %100 = vmatpush.bf16.msra.mxu0 %v87
    %101 = vmatpush.bf16.msra.mxu0 %v86
    %102 = vmatpush.bf16.msra.mxu0 %v85
    %103 = vmatpush.bf16.msra.mxu0 %v84
    %104 = vmatpush.bf16.msra.mxu0 %v83
    %105 = vmatpush.bf16.msra.mxu0 %v82
    %106 = vmatmul.bf16.gmra.mxu0 %v48
    %v107 = vpop.f32.mrf.mxu0
    %v108 = vadd.f32 0.0, %v107
    %v109 = vpop.f32.mrf.mxu0
    %v110 = vadd.f32 0.0, %v109
    %111 = vdwg.mxu0
    %v112 = vadd.f32 %v24, %v108
    %v113 = vadd.f32 %v25, %v110
    %114 = vst [vmem:[#allocation2] sm:$0xff] %v112
    %115 = vst [vmem:[#allocation2 + $0x8] sm:$0xff] %v113
    %v116 = vld [vmem:[#allocation2] sm:$0xff]
    %v117 = vld [vmem:[#allocation2 + $0x8] sm:$0xff]
    %s118 = scalar_lea.vmem %s0, 8
    %v119 = vld [vmem:[%s118] sm:$0xf]
    %v120 = vld [vmem:[%s118 + $0x4] sm:$0xf]
    %s121 = scalar_lea.vmem %s1, 64
    %v122 = vld [vmem:[%s121] sm:$0xf]
    %v123 = vld [vmem:[%s121 + $0x4] sm:$0xf]
    %v124 = vld [vmem:[%s121 + $0x8] sm:$0xf]
    %v125 = vld [vmem:[%s121 + $0xc] sm:$0xf]
    %v126 = vld [vmem:[%s121 + $0x10] sm:$0xf]
    %v127 = vld [vmem:[%s121 + $0x14] sm:$0xf]
    %v128 = vld [vmem:[%s121 + $0x18] sm:$0xf]
    %v129 = vld [vmem:[%s121 + $0x1c] sm:$0xf]
    %v130 = vld [vmem:[%s121 + $0x20] sm:$0xf]
    %v131 = vld [vmem:[%s121 + $0x24] sm:$0xf]
    %v132 = vld [vmem:[%s121 + $0x28] sm:$0xf]
    %v133 = vld [vmem:[%s121 + $0x2c] sm:$0xf]
    %v134 = vld [vmem:[%s121 + $0x30] sm:$0xf]
    %v135 = vld [vmem:[%s121 + $0x34] sm:$0xf]
    %v136 = vld [vmem:[%s121 + $0x38] sm:$0xf]
    %v137 = vld [vmem:[%s121 + $0x3c] sm:$0xf]
    %v140 = vunpack.c.l.b16 %v119
    %v141 = vunpack.c.l.b16 %v120
    %v142 = vpack.c.b16 %v141, %v140
    %v160 = vunpack.c.l.b16 %v122
    %v161 = vunpack.c.l.b16 %v123
    %v162 = vunpack.c.l.b16 %v124
    %v163 = vunpack.c.l.b16 %v125
    %v164 = vunpack.c.l.b16 %v126
    %v165 = vunpack.c.l.b16 %v127
    %v166 = vunpack.c.l.b16 %v128
    %v167 = vunpack.c.l.b16 %v129
    %v168 = vunpack.c.l.b16 %v130
    %v169 = vunpack.c.l.b16 %v131
    %v170 = vunpack.c.l.b16 %v132
    %v171 = vunpack.c.l.b16 %v133
    %v172 = vunpack.c.l.b16 %v134
    %v173 = vunpack.c.l.b16 %v135
    %v174 = vunpack.c.l.b16 %v136
    %v175 = vunpack.c.l.b16 %v137
    %v176 = vpack.c.b16 %v161, %v160
    %v177 = vpack.c.b16 %v163, %v162
    %v178 = vpack.c.b16 %v165, %v164
    %v179 = vpack.c.b16 %v167, %v166
    %v180 = vpack.c.b16 %v169, %v168
    %v181 = vpack.c.b16 %v171, %v170
    %v182 = vpack.c.b16 %v173, %v172
    %v183 = vpack.c.b16 %v175, %v174
    %192 = vmatpush.bf16.msra.mxu0 %v183
    %193 = vmatpush.bf16.msra.mxu0 %v182
    %194 = vmatpush.bf16.msra.mxu0 %v181
    %195 = vmatpush.bf16.msra.mxu0 %v180
    %196 = vmatpush.bf16.msra.mxu0 %v179
    %197 = vmatpush.bf16.msra.mxu0 %v178
    %198 = vmatpush.bf16.msra.mxu0 %v177
    %199 = vmatpush.bf16.msra.mxu0 %v176
    %200 = vmatmul.bf16.gmra.mxu0 %v142
    %v201 = vpop.f32.mrf.mxu0
    %v202 = vadd.f32 0.0, %v201
    %v203 = vpop.f32.mrf.mxu0
    %v204 = vadd.f32 0.0, %v203
    %205 = vdwg.mxu0
    %v206 = vadd.f32 %v116, %v202
    %v207 = vadd.f32 %v117, %v204
    %208 = vst [vmem:[#allocation2] sm:$0xff] %v206
    %209 = vst [vmem:[#allocation2 + $0x8] sm:$0xff] %v207
    // Predicated region
    $region22: #{deepspeech2_forward.13} parent=1 // pred_check
      %p210 = pneg %p18
    $region23: #{deepspeech2_forward.13} parent=1 // pred_check_branch
      %212 = sbr.rel (%p210) target = $region25
    $region24: #{deepspeech2_forward.13} parent=1 // pred_region
      %v213 = vld [vmem:[#allocation2] sm:$0xff]
      %v214 = vld [vmem:[#allocation2 + $0x8] sm:$0xff]
      %v215 = vld [vmem:[%s2] sm:$0x1]
      %v217 = vperm.slane %v215, 0
      %v219 = vmul.f32 %v213, %v217
      %v220 = vmul.f32 %v214, %v217
      %v221 = vld [vmem:[%s3] sm:$0x1]
      %v223 = vperm.slane %v221, 0
      %v225 = vadd.f32 %v219, %v223
      %v226 = vadd.f32 %v220, %v223
      %227 = vst [vmem:[#allocation3] sm:$0xff] %v225
      %228 = vst [vmem:[#allocation3 + $0x8] sm:$0xff] %v226
    $region25: #{deepspeech2_forward.13} parent=1 // pred_fallthru
      _
    // Predicated region
    $region26: #{deepspeech2_forward.13} parent=1 // pred_check
      _
    $region27: #{deepspeech2_forward.13} parent=1 // pred_check_branch
      %230 = sbr.rel (0) target = $region29
    $region28: #{deepspeech2_forward.13} parent=1 // pred_region
      %232 = vsyncadd [#allocation4], 0
      %s233 = sshll.u32 [#allocation3], 4
      %s234 = int_to_ptr.vmem [resolvable:$true] %s233
      %s235 = sshll.u32 %s4, 4
      %s236 = int_to_ptr.hbm [resolvable:$true] %s235
      %241 = dma.vmem_to_hbm [thread:$0]  %s234, 256, %s236, [#allocation4], 128, 128, 8
    $region29: #{deepspeech2_forward.13} parent=1 // pred_fallthru
      _
    // Predicated region
    $region30: #{deepspeech2_forward.13} parent=1 // pred_check
      _
    $region31: #{deepspeech2_forward.13} parent=1 // pred_check_branch
      %243 = sbr.rel (0) target = $region33
    $region32: #{deepspeech2_forward.13} parent=1 // pred_region
      %245 = dma.done [#allocation4], 256
    $region33: #{deepspeech2_forward.13} parent=1 // pred_fallthru
      _
    %246 = vsyncpa [#allocation4], 1

// kernel: deepspeech2_forward.10
$region0: #{deepspeech2_forward.10}
  #allocation0 [shape = 'u32[]', space=smem, size = 0x4, offset = 0x4, fixed_abs, tag = 'smem constant byte address 0x4 - core index']
  #allocation1 [shape = 'u32[72,128]{1,0:T(1,128)}', space=vmem, size = 0x9000, scoped, tag = 'internal scratch']
  #allocation2 [shape = 'bf16[128,512]{1,0:T(8,128)(2,1)}', space=vmem, size = 0x20000, scoped, tag = 'scratch operand']
  #allocation3 [shape = 'f32[2,128]{1,0:T(2,128)}', space=vmem, size = 0x400, scoped, tag = 'scratch operand']
  #allocation4 [shape = 'f32[2,128]{1,0:T(2,128)}', space=vmem, size = 0x400, scoped, tag = 'scratch operand']
  #allocation5 [shape = 's32[1]{0}', space=sflag, size = 0x4, scoped, tag = 'scratch operand']
  #allocation7 [shape = 's32[]', space=sflag, size = 0x4, offset = 0, fixed_abs, tag = 'sflag constant byte address 0x0 - dummy sync flag']
  %s0 = inlined_call_operand.vmem [shape: bf16[8,2,1024], index: 0, kind: input, shape index: {}]
  %s1 = inlined_call_operand.vmem [shape: bf16[2,128,512], index: 1, kind: input, shape index: {}]
  %s2 = inlined_call_operand.vmem [shape: bf16[2,8,2,128], index: 2, kind: output, shape index: {}]
  %s3 = sld [smem:[#allocation0]]
  $region101: #{deepspeech2_forward.10} parent=0
    _
  %s5 = ssub.s32 1, %s3
  %s6 = scalar_select 0, %s5, %s3
  $region1: #{deepspeech2_forward.10} parent=0
    #allocation6 [shape = 'u8[32768]{0}', space=vmem, size = 0x8000, scoped, tag = 'input window, operand 0']
    loop: start=0, step=1, limit=4
    $region2: #{deepspeech2_forward.10} parent=1 // loop_pre_header
      _
    $region3: #{deepspeech2_forward.10} parent=1 // loop_header
      %s8 = sphi 0, %s12
      %p9 = scmp.ge.s32.totalorder %s8, 4
      %s15 = sphi 0, %s27
      %s16 = sphi 0, %s23
      %s17 = sphi 0, %s15
      %s18 = sphi 0, %s16
      %s19 = sphi 0, %s17
      %s20 = sphi 0, %s18
      %s40 = sphi 0, %s42
      %s43 = sphi 0, %s40
      %s44 = sphi 0, %s43
      %s60 = sphi 0, %s44
      %s76 = sphi 0, %s78
      %s79 = sphi 0, %s76
      %s80 = sphi 0, %s79
      %s96 = sphi 0, %s80
    $region4: #{deepspeech2_forward.10} parent=1 // loop_header_branch
      %11 = sbr.rel (%p9) target = $region8
    $region5: #{deepspeech2_forward.10} parent=1 // loop_body
      %s13 = ssub.s32 %s8, 1
      %s14 = ssub.s32 %s8, 2
      %s21 = sadd.s32 1, %s16
      %p22 = scmp.ge.s32.totalorder %s21, 1
      %s23 = scalar_select %p22, 0, %s21
      %s24 = sadd.s32 1, %s15
      %s25 = scalar_select %p22, %s24, %s15
      %p26 = scmp.ge.s32.totalorder %s25, 2
      %s27 = scalar_select %p26, 0, %s25
      %s28 = smul.u32 %s16, 2
      %s29 = ssub.s32 0, %s28
      %s30 = smul.u32 %s15, %s29
      %s31 = sadd.s32 %s16, %s30
      %s32 = smul.u32 %s23, 2
      %s33 = ssub.s32 0, %s32
      %s34 = smul.u32 %s27, %s33
      %s35 = sadd.s32 %s23, %s34
      %s36 = ssub.s32 %s31, %s35
      %s37 = ssub.s32 %s15, %s27
      %s38 = sor.u32 %s36, %s37
      %p39 = scmp.eq.s32.totalorder %s38, 0
      %s41 = sadd.s32 %s40, 1
      %s42 = scalar_select %p39, %s40, %s41
      %p45 = pneg %p39
      %p46 = scmp.eq.s32.totalorder %s8, 1
      %p47 = por %p45, %p46
      %p48 = scmp.ne.s32.totalorder %s40, %s43
      %p49 = scmp.eq.s32.totalorder %s8, 0
      %p50 = por %p48, %p49
      %p51 = scmp.ne.s32.totalorder %s40, %s43
      %p52 = scmp.eq.s32.totalorder %s13, 1
      %p53 = por %p51, %p52
      %p54 = scmp.ne.s32.totalorder %s43, %s44
      %p55 = scmp.eq.s32.totalorder %s13, 0
      %p56 = por %p54, %p55
      %p57 = scmp.ne.s32.totalorder %s43, %s44
      %p58 = scmp.eq.s32.totalorder %s14, 1
      %p59 = por %p57, %p58
      %p61 = scmp.ne.s32.totalorder %s44, %s60
      %p62 = scmp.eq.s32.totalorder %s14, 0
      %p63 = por %p61, %p62
      %s64 = smul.u32 %s16, 2
      %s65 = ssub.s32 0, %s64
      %s66 = smul.u32 %s15, %s65
      %s67 = sadd.s32 %s16, %s66
      %s68 = smul.u32 %s23, 2
      %s69 = ssub.s32 0, %s68
      %s70 = smul.u32 %s27, %s69
      %s71 = sadd.s32 %s23, %s70
      %s72 = ssub.s32 %s15, %s27
      %s73 = ssub.s32 %s67, %s71
      %s74 = sor.u32 %s72, %s73
      %p75 = scmp.eq.s32.totalorder %s74, 0
      %s77 = sadd.s32 %s76, 1
      %s78 = scalar_select %p75, %s76, %s77
      %p81 = pneg %p75
      %p82 = scmp.eq.s32.totalorder %s8, 1
      %p83 = por %p81, %p82
      %p84 = scmp.ne.s32.totalorder %s76, %s79
      %p85 = scmp.eq.s32.totalorder %s8, 0
      %p86 = por %p84, %p85
      %p87 = scmp.ne.s32.totalorder %s76, %s79
      %p88 = scmp.eq.s32.totalorder %s13, 1
      %p89 = por %p87, %p88
      %p90 = scmp.ne.s32.totalorder %s79, %s80
      %p91 = scmp.eq.s32.totalorder %s13, 0
      %p92 = por %p90, %p91
      %p93 = scmp.ne.s32.totalorder %s79, %s80
      %p94 = scmp.eq.s32.totalorder %s14, 1
      %p95 = por %p93, %p94
      %p97 = scmp.ne.s32.totalorder %s80, %s96
      %p98 = scmp.eq.s32.totalorder %s14, 0
      %p99 = por %p97, %p98
      %p100 = scmp.le.s32.totalorder 1, %s8
      %p101 = scmp.lt.s32.totalorder %s8, 3
      %p102 = pnand %p100, %p101
      %p103 = pneg %p102
      // Predicated region
      $region9: #{deepspeech2_forward.10} parent=5 // pred_check
        _
      $region10: #{deepspeech2_forward.10} parent=5 // pred_check_branch
        %105 = sbr.rel (%p102) target = $region12
      $region11: #{deepspeech2_forward.10} parent=5 // pred_region
        %s106 = ssub.s32 %s8, 1
      $region12: #{deepspeech2_forward.10} parent=5 // pred_fallthru
        _
      %p107 = scmp.lt.s32.totalorder %s8, 2
      // Predicated region
      $region13: #{deepspeech2_forward.10} parent=5 // pred_check
        %p108 = pneg %p107
      $region14: #{deepspeech2_forward.10} parent=5 // pred_check_branch
        %110 = sbr.rel (%p108) target = $region16
      $region15: #{deepspeech2_forward.10} parent=5 // pred_region
        // Predicated region
        $region17: #{deepspeech2_forward.10} parent=15 // pred_check
          %p111 = pneg %p50
        $region18: #{deepspeech2_forward.10} parent=15 // pred_check_branch
          %113 = sbr.rel (%p111) target = $region20
        $region19: #{deepspeech2_forward.10} parent=15 // pred_region
          %s114 = sand.u32 %s40, 1
          %s115 = sand.u32 %s40, 1
          %s116 = smul.addr %s115, 32
          %s117 = scalar_lea.vmem [#allocation6], %s116
          %s118 = smul.u32 %s16, 2
          %s119 = ssub.s32 0, %s118
          %s120 = smul.u32 %s15, %s119
          %s121 = sadd.s32 %s16, %s120
          %s122 = smul.u32 8, %s121
          %s123 = smul.u32 4, %s15
          %s124 = smul.addr %s122, 8
          %s125 = sadd.s32 %s123, %s124
          %s126 = scalar_lea.vmem %s0, %s125
          // Predicated region
          $region21: #{deepspeech2_forward.10} parent=19 // pred_check
            _
          $region22: #{deepspeech2_forward.10} parent=19 // pred_check_branch
            %128 = sbr.rel (0) target = $region24
          $region23: #{deepspeech2_forward.10} parent=19 // pred_region
            // Predicated region
            $region25: #{deepspeech2_forward.10} parent=23 // pred_check
              _
            $region26: #{deepspeech2_forward.10} parent=23 // pred_check_branch
              %130 = sbr.rel target = $region28
            $region27: #{deepspeech2_forward.10} parent=23 // pred_region
              // Predicated region
              $region40: #{deepspeech2_forward.10} parent=27 // pred_check
                _
              $region41: #{deepspeech2_forward.10} parent=27 // pred_check_branch
                %160 = sbr.rel (0) target = $region43
              $region42: #{deepspeech2_forward.10} parent=27 // pred_region
                loop: start=0, step=1, limit=1
                $region44: #{deepspeech2_forward.10} parent=42 // loop_pre_header
                  _
                $region45: #{deepspeech2_forward.10} parent=42 // loop_header
                  %s162 = sphi 0, %s166
                  %p163 = scmp.ge.s32.totalorder %s162, 1
                  %s167 = sphi %s126, %s126
                  %s168 = sphi %s117, %s117
                $region46: #{deepspeech2_forward.10} parent=42 // loop_header_branch
                  %165 = sbr.rel (%p163) target = $region50
                $region47: #{deepspeech2_forward.10} parent=42 // loop_body
                  _
                $region48: #{deepspeech2_forward.10} parent=42 // loop_footer
                  %s166 = sadd.s32 1, %s162
                $region49: #{deepspeech2_forward.10} parent=42 // loop_footer_branch
                  %161 = sbr.rel target = $region45
                $region50: #{deepspeech2_forward.10} parent=42 // loop_exit
                  _
                %s170 = ssub.s32 16, 1
                loop: start=0, step=1, limit=1
                $region51: #{deepspeech2_forward.10} parent=42 // loop_pre_header
                  _
                $region52: #{deepspeech2_forward.10} parent=42 // loop_header
                  %s172 = sphi 0, %s176
                  %p173 = scmp.ge.s32.totalorder %s172, 1
                  %s177 = sphi %s126, %s126
                  %s178 = sphi %s117, %s117
                $region53: #{deepspeech2_forward.10} parent=42 // loop_header_branch
                  %175 = sbr.rel (%p173) target = $region57
                $region54: #{deepspeech2_forward.10} parent=42 // loop_body
                  %v179 = vld [vmem:[%s177] sm:%s170]
                  %180 = vst [vmem:[%s178] sm:%s170] %v179
                  %v181 = vld [vmem:[%s177 + $0x8] sm:%s170]
                  %182 = vst [vmem:[%s178 + $0x4] sm:%s170] %v181
                  %v183 = vld [vmem:[%s177 + $0x10] sm:%s170]
                  %184 = vst [vmem:[%s178 + $0x8] sm:%s170] %v183
                  %v185 = vld [vmem:[%s177 + $0x18] sm:%s170]
                  %186 = vst [vmem:[%s178 + $0xc] sm:%s170] %v185
                  %v187 = vld [vmem:[%s177 + $0x20] sm:%s170]
                  %188 = vst [vmem:[%s178 + $0x10] sm:%s170] %v187
                  %v189 = vld [vmem:[%s177 + $0x28] sm:%s170]
                  %190 = vst [vmem:[%s178 + $0x14] sm:%s170] %v189
                  %v191 = vld [vmem:[%s177 + $0x30] sm:%s170]
                  %192 = vst [vmem:[%s178 + $0x18] sm:%s170] %v191
                  %v193 = vld [vmem:[%s177 + $0x38] sm:%s170]
                  %194 = vst [vmem:[%s178 + $0x1c] sm:%s170] %v193
                $region55: #{deepspeech2_forward.10} parent=42 // loop_footer
                  %s176 = sadd.s32 1, %s172
                $region56: #{deepspeech2_forward.10} parent=42 // loop_footer_branch
                  %171 = sbr.rel target = $region52
                $region57: #{deepspeech2_forward.10} parent=42 // loop_exit
                  _
              $region43: #{deepspeech2_forward.10} parent=27 // pred_fallthru
                _
            $region28: #{deepspeech2_forward.10} parent=23 // pred_fallthru
              _
            // Predicated region
            $region29: #{deepspeech2_forward.10} parent=23 // pred_check
              _
            $region30: #{deepspeech2_forward.10} parent=23 // pred_check_branch
              %132 = sbr.rel (0) target = $region32
            $region31: #{deepspeech2_forward.10} parent=23 // pred_region
              %s134 = ssub.s32 16, 1
              loop: start=0, step=1, limit=1
              $region33: #{deepspeech2_forward.10} parent=31 // loop_pre_header
                _
              $region34: #{deepspeech2_forward.10} parent=31 // loop_header
                %s136 = sphi 0, %s140
                %p137 = scmp.ge.s32.totalorder %s136, 1
                %s141 = sphi %s126, %s126
                %s142 = sphi %s117, %s117
              $region35: #{deepspeech2_forward.10} parent=31 // loop_header_branch
                %139 = sbr.rel (%p137) target = $region39
              $region36: #{deepspeech2_forward.10} parent=31 // loop_body
                %v143 = vld [vmem:[%s141] sm:%s134]
                %144 = vst [vmem:[%s142] sm:%s134] %v143
                %v145 = vld [vmem:[%s141 + $0x8] sm:%s134]
                %146 = vst [vmem:[%s142 + $0x4] sm:%s134] %v145
                %v147 = vld [vmem:[%s141 + $0x10] sm:%s134]
                %148 = vst [vmem:[%s142 + $0x8] sm:%s134] %v147
                %v149 = vld [vmem:[%s141 + $0x18] sm:%s134]
                %150 = vst [vmem:[%s142 + $0xc] sm:%s134] %v149
                %v151 = vld [vmem:[%s141 + $0x20] sm:%s134]
                %152 = vst [vmem:[%s142 + $0x10] sm:%s134] %v151
                %v153 = vld [vmem:[%s141 + $0x28] sm:%s134]
                %154 = vst [vmem:[%s142 + $0x14] sm:%s134] %v153
                %v155 = vld [vmem:[%s141 + $0x30] sm:%s134]
                %156 = vst [vmem:[%s142 + $0x18] sm:%s134] %v155
                %v157 = vld [vmem:[%s141 + $0x38] sm:%s134]
                %158 = vst [vmem:[%s142 + $0x1c] sm:%s134] %v157
              $region37: #{deepspeech2_forward.10} parent=31 // loop_footer
                %s140 = sadd.s32 1, %s136
              $region38: #{deepspeech2_forward.10} parent=31 // loop_footer_branch
                %135 = sbr.rel target = $region34
              $region39: #{deepspeech2_forward.10} parent=31 // loop_exit
                _
            $region32: #{deepspeech2_forward.10} parent=23 // pred_fallthru
              _
          $region24: #{deepspeech2_forward.10} parent=19 // pred_fallthru
            _
          %195 = vnop
        $region20: #{deepspeech2_forward.10} parent=15 // pred_fallthru
          _
      $region16: #{deepspeech2_forward.10} parent=5 // pred_fallthru
        _
      %p196 = scmp.le.s32.totalorder 1, %s8
      %p197 = scmp.lt.s32.totalorder %s8, 3
      %p198 = pnand %p196, %p197
      %p199 = pneg %p198
      // Predicated region
      $region58: #{deepspeech2_forward.10} parent=5 // pred_check
        _
      $region59: #{deepspeech2_forward.10} parent=5 // pred_check_branch
        %201 = sbr.rel (%p198) target = $region61
      $region60: #{deepspeech2_forward.10} parent=5 // pred_region
        %s202 = ssub.s32 %s8, 1
        %s203 = sand.u32 %s43, 1
        %s204 = sand.u32 %s43, 1
        %s205 = smul.addr %s204, 32
        %s206 = scalar_lea.vmem [#allocation6], %s205
        // Predicated region
        $region62: #{deepspeech2_forward.10} parent=60 // pred_check
          %p207 = pneg %p56
        $region63: #{deepspeech2_forward.10} parent=60 // pred_check_branch
          %209 = sbr.rel (%p207) target = $region65
        $region64: #{deepspeech2_forward.10} parent=60 // pred_region
          _
        $region65: #{deepspeech2_forward.10} parent=60 // pred_fallthru
          _
        %s210 = sand.u32 %s43, 1
        %s211 = sand.u32 %s43, 1
        %s212 = smul.addr %s211, 32
        %s213 = scalar_lea.vmem [#allocation6], %s212
        %p214 = pneg %p56
        %p215 = pneg %p53
        %p216 = pneg %p92
        %p217 = pneg %p89
        %s218 = smul.u32 %s18, 2
        %s219 = ssub.s32 0, %s218
        %s220 = smul.u32 %s17, %s219
        %s221 = sadd.s32 %s18, %s220
        %s222 = smul.u32 8, %s221
        %p223 = scmp.lt.s32.totalorder %s17, 1
        %s224 = scalar_select %p223, %s17, 1
        %p225 = scmp.lt.s32.totalorder %s222, 7
        %s226 = scalar_select %p225, %s222, 7
        %s227 = smul.addr %s224, 8
        %s228 = sadd.s32 %s226, %s227
        %s229 = scalar_lea.vmem %s2, %s228
        %s230 = smul.u32 %s18, 2
        %s231 = ssub.s32 0, %s230
        %s232 = smul.u32 %s17, %s231
        %s233 = sadd.s32 %s18, %s232
        %s234 = smul.u32 8, %s233
        %s235 = smul.u32 4, %s17
        %s236 = smul.u32 %s18, 2
        %s237 = ssub.s32 0, %s236
        %s238 = smul.u32 %s17, %s237
        %s239 = sadd.s32 %s18, %s238
        %s240 = smul.u32 8, %s239
        %p241 = scmp.lt.s32.totalorder %s17, 1
        %s242 = scalar_select %p241, %s17, 1
        %p243 = scmp.lt.s32.totalorder %s240, 7
        %s244 = scalar_select %p243, %s240, 7
        %s245 = smul.addr %s242, 8
        %s246 = sadd.s32 %s244, %s245
        %s247 = scalar_lea.vmem %s2, %s246
        %s248 = smul.u32 %s18, 2
        %s249 = ssub.s32 0, %s248
        %s250 = smul.u32 %s17, %s249
        %s251 = sadd.s32 %s18, %s250
        %s252 = smul.u32 8, %s251
        %p253 = scmp.eq.s32.totalorder %s18, 0
        // Predicated region
        $region66: #{deepspeech2_forward.10} parent=60 // pred_check
          %p254 = pneg %p253
        $region67: #{deepspeech2_forward.10} parent=60 // pred_check_branch
          %256 = sbr.rel (%p254) target = $region69
        $region68: #{deepspeech2_forward.10} parent=60 // pred_region
          %s257 = smul.u32 %s17, 64
          %s258 = smul.addr %s257, 4
          %s259 = scalar_lea.vmem %s1, %s258
          // Predicated region
          $region70: #{deepspeech2_forward.10} parent=68 // pred_check
            _
          $region71: #{deepspeech2_forward.10} parent=68 // pred_check_branch
            %261 = sbr.rel (0) target = $region73
          $region72: #{deepspeech2_forward.10} parent=68 // pred_region
            loop: start=0, step=1, limit=1
            $region74: #{deepspeech2_forward.10} parent=72 // loop_pre_header
              _
            $region75: #{deepspeech2_forward.10} parent=72 // loop_header
              %s263 = sphi 0, %s267
              %p264 = scmp.ge.s32.totalorder %s263, 1
              %s268 = sphi %s259, %s259
              %s269 = sphi [#allocation2], [#allocation2]
            $region76: #{deepspeech2_forward.10} parent=72 // loop_header_branch
              %266 = sbr.rel (%p264) target = $region80
            $region77: #{deepspeech2_forward.10} parent=72 // loop_body
              %v270 = vld [vmem:[%s268] sm:$0xff]
              %271 = vst [vmem:[%s269] sm:$0xff] %v270
              %v272 = vld [vmem:[%s268 + $0x8] sm:$0xff]
              %273 = vst [vmem:[%s269 + $0x8] sm:$0xff] %v272
              %v274 = vld [vmem:[%s268 + $0x10] sm:$0xff]
              %275 = vst [vmem:[%s269 + $0x10] sm:$0xff] %v274
              %v276 = vld [vmem:[%s268 + $0x18] sm:$0xff]
              %277 = vst [vmem:[%s269 + $0x18] sm:$0xff] %v276
              %v278 = vld [vmem:[%s268 + $0x20] sm:$0xff]
              %279 = vst [vmem:[%s269 + $0x20] sm:$0xff] %v278
              %v280 = vld [vmem:[%s268 + $0x28] sm:$0xff]
              %281 = vst [vmem:[%s269 + $0x28] sm:$0xff] %v280
              %v282 = vld [vmem:[%s268 + $0x30] sm:$0xff]
              %283 = vst [vmem:[%s269 + $0x30] sm:$0xff] %v282
              %v284 = vld [vmem:[%s268 + $0x38] sm:$0xff]
              %285 = vst [vmem:[%s269 + $0x38] sm:$0xff] %v284
              %v286 = vld [vmem:[%s268 + $0x40] sm:$0xff]
              %287 = vst [vmem:[%s269 + $0x40] sm:$0xff] %v286
              %v288 = vld [vmem:[%s268 + $0x48] sm:$0xff]
              %289 = vst [vmem:[%s269 + $0x48] sm:$0xff] %v288
              %v290 = vld [vmem:[%s268 + $0x50] sm:$0xff]
              %291 = vst [vmem:[%s269 + $0x50] sm:$0xff] %v290
              %v292 = vld [vmem:[%s268 + $0x58] sm:$0xff]
              %293 = vst [vmem:[%s269 + $0x58] sm:$0xff] %v292
              %v294 = vld [vmem:[%s268 + $0x60] sm:$0xff]
              %295 = vst [vmem:[%s269 + $0x60] sm:$0xff] %v294
              %v296 = vld [vmem:[%s268 + $0x68] sm:$0xff]
              %297 = vst [vmem:[%s269 + $0x68] sm:$0xff] %v296
              %v298 = vld [vmem:[%s268 + $0x70] sm:$0xff]
              %299 = vst [vmem:[%s269 + $0x70] sm:$0xff] %v298
              %v300 = vld [vmem:[%s268 + $0x78] sm:$0xff]
              %301 = vst [vmem:[%s269 + $0x78] sm:$0xff] %v300
              %v302 = vld [vmem:[%s268 + $0x80] sm:$0xff]
              %303 = vst [vmem:[%s269 + $0x80] sm:$0xff] %v302
              %v304 = vld [vmem:[%s268 + $0x88] sm:$0xff]
              %305 = vst [vmem:[%s269 + $0x88] sm:$0xff] %v304
              %v306 = vld [vmem:[%s268 + $0x90] sm:$0xff]
              %307 = vst [vmem:[%s269 + $0x90] sm:$0xff] %v306
              %v308 = vld [vmem:[%s268 + $0x98] sm:$0xff]
              %309 = vst [vmem:[%s269 + $0x98] sm:$0xff] %v308
              %v310 = vld [vmem:[%s268 + $0xa0] sm:$0xff]
              %311 = vst [vmem:[%s269 + $0xa0] sm:$0xff] %v310
              %v312 = vld [vmem:[%s268 + $0xa8] sm:$0xff]
              %313 = vst [vmem:[%s269 + $0xa8] sm:$0xff] %v312
              %v314 = vld [vmem:[%s268 + $0xb0] sm:$0xff]
              %315 = vst [vmem:[%s269 + $0xb0] sm:$0xff] %v314
              %v316 = vld [vmem:[%s268 + $0xb8] sm:$0xff]
              %317 = vst [vmem:[%s269 + $0xb8] sm:$0xff] %v316
              %v318 = vld [vmem:[%s268 + $0xc0] sm:$0xff]
              %319 = vst [vmem:[%s269 + $0xc0] sm:$0xff] %v318
              %v320 = vld [vmem:[%s268 + $0xc8] sm:$0xff]
              %321 = vst [vmem:[%s269 + $0xc8] sm:$0xff] %v320
              %v322 = vld [vmem:[%s268 + $0xd0] sm:$0xff]
              %323 = vst [vmem:[%s269 + $0xd0] sm:$0xff] %v322
              %v324 = vld [vmem:[%s268 + $0xd8] sm:$0xff]
              %325 = vst [vmem:[%s269 + $0xd8] sm:$0xff] %v324
              %v326 = vld [vmem:[%s268 + $0xe0] sm:$0xff]
              %327 = vst [vmem:[%s269 + $0xe0] sm:$0xff] %v326
              %v328 = vld [vmem:[%s268 + $0xe8] sm:$0xff]
              %329 = vst [vmem:[%s269 + $0xe8] sm:$0xff] %v328
              %v330 = vld [vmem:[%s268 + $0xf0] sm:$0xff]
              %331 = vst [vmem:[%s269 + $0xf0] sm:$0xff] %v330
              %v332 = vld [vmem:[%s268 + $0xf8] sm:$0xff]
              %333 = vst [vmem:[%s269 + $0xf8] sm:$0xff] %v332
            $region78: #{deepspeech2_forward.10} parent=72 // loop_footer
              %s267 = sadd.s32 1, %s263
            $region79: #{deepspeech2_forward.10} parent=72 // loop_footer_branch
              %262 = sbr.rel target = $region75
            $region80: #{deepspeech2_forward.10} parent=72 // loop_exit
              _
          $region73: #{deepspeech2_forward.10} parent=68 // pred_fallthru
            _
          // Predicated region
          $region81: #{deepspeech2_forward.10} parent=68 // pred_check
            _
          $region82: #{deepspeech2_forward.10} parent=68 // pred_check_branch
            %335 = sbr.rel target = $region84
          $region83: #{deepspeech2_forward.10} parent=68 // pred_region
            _
          $region84: #{deepspeech2_forward.10} parent=68 // pred_fallthru
            _
          // Predicated region
          $region85: #{deepspeech2_forward.10} parent=68 // pred_check
            _
          $region86: #{deepspeech2_forward.10} parent=68 // pred_check_branch
            %338 = sbr.rel (0) target = $region88
          $region87: #{deepspeech2_forward.10} parent=68 // pred_region
            %339 = vsyncadd [#allocation5], 4096
          $region88: #{deepspeech2_forward.10} parent=68 // pred_fallthru
            _
          %s340 = smul.u32 4, 16
          %s341 = smul.u32 %s340, 4
          %s342 = sshll.u32 %s341, 4
          %343 = dma.done [#allocation5], %s342
          %344 = vst [vmem:[#allocation3] sm:$0x3] 0.0
          %345 = vst [vmem:[#allocation4] sm:$0x3] 0.0
        $region69: #{deepspeech2_forward.10} parent=60 // pred_fallthru
          _
        %s346 = smul.u32 %s17, 7
        %s347 = smul.u32 %s346, 4
        %s348 = scalar_lea.vmem %s206, %s347 [#allocation6]
        %v349 = vld [vmem:[%s348] sm:$0xf]
        %v350 = vunpack.c.l.bf16 %v349
        %v351 = vld [vmem:[#allocation3] sm:$0x3]
        %v352 = vpack.c.bf16 %v351, %v351
        %v353 = vld [vmem:[#allocation2] sm:$0xff]
        %v354 = vld [vmem:[#allocation2 + $0x8] sm:$0xff]
        %v355 = vld [vmem:[#allocation2 + $0x10] sm:$0xff]
        %v356 = vld [vmem:[#allocation2 + $0x18] sm:$0xff]
        %v357 = vld [vmem:[#allocation2 + $0x20] sm:$0xff]
        %v358 = vld [vmem:[#allocation2 + $0x28] sm:$0xff]
        %v359 = vld [vmem:[#allocation2 + $0x30] sm:$0xff]
        %v360 = vld [vmem:[#allocation2 + $0x38] sm:$0xff]
        %v361 = vld [vmem:[#allocation2 + $0x40] sm:$0xff]
        %v362 = vld [vmem:[#allocation2 + $0x48] sm:$0xff]
        %v363 = vld [vmem:[#allocation2 + $0x50] sm:$0xff]
        %v364 = vld [vmem:[#allocation2 + $0x58] sm:$0xff]
        %v365 = vld [vmem:[#allocation2 + $0x60] sm:$0xff]
        %v366 = vld [vmem:[#allocation2 + $0x68] sm:$0xff]
        %v367 = vld [vmem:[#allocation2 + $0x70] sm:$0xff]
        %v368 = vld [vmem:[#allocation2 + $0x78] sm:$0xff]
        %v369 = vld [vmem:[#allocation2 + $0x80] sm:$0xff]
        %v370 = vld [vmem:[#allocation2 + $0x88] sm:$0xff]
        %v371 = vld [vmem:[#allocation2 + $0x90] sm:$0xff]
        %v372 = vld [vmem:[#allocation2 + $0x98] sm:$0xff]
        %v373 = vld [vmem:[#allocation2 + $0xa0] sm:$0xff]
        %v374 = vld [vmem:[#allocation2 + $0xa8] sm:$0xff]
        %v375 = vld [vmem:[#allocation2 + $0xb0] sm:$0xff]
        %v376 = vld [vmem:[#allocation2 + $0xb8] sm:$0xff]
        %v377 = vld [vmem:[#allocation2 + $0xc0] sm:$0xff]
        %v378 = vld [vmem:[#allocation2 + $0xc8] sm:$0xff]
        %v379 = vld [vmem:[#allocation2 + $0xd0] sm:$0xff]
        %v380 = vld [vmem:[#allocation2 + $0xd8] sm:$0xff]
        %v381 = vld [vmem:[#allocation2 + $0xe0] sm:$0xff]
        %v382 = vld [vmem:[#allocation2 + $0xe8] sm:$0xff]
        %v383 = vld [vmem:[#allocation2 + $0xf0] sm:$0xff]
        %v384 = vld [vmem:[#allocation2 + $0xf8] sm:$0xff]
        %v417 = vunpack.c.l.b16 %v353
        %v418 = vunpack.c.h.b16 %v353
        %v419 = vunpack.c.l.b16 %v354
        %v420 = vunpack.c.h.b16 %v354
        %v421 = vunpack.c.l.b16 %v355
        %v422 = vunpack.c.h.b16 %v355
        %v423 = vunpack.c.l.b16 %v356
        %v424 = vunpack.c.h.b16 %v356
        %v425 = vunpack.c.l.b16 %v357
        %v426 = vunpack.c.h.b16 %v357
        %v427 = vunpack.c.l.b16 %v358
        %v428 = vunpack.c.h.b16 %v358
        %v429 = vunpack.c.l.b16 %v359
        %v430 = vunpack.c.h.b16 %v359
        %v431 = vunpack.c.l.b16 %v360
        %v432 = vunpack.c.h.b16 %v360
        %v433 = vunpack.c.l.b16 %v361
        %v434 = vunpack.c.h.b16 %v361
        %v435 = vunpack.c.l.b16 %v362
        %v436 = vunpack.c.h.b16 %v362
        %v437 = vunpack.c.l.b16 %v363
        %v438 = vunpack.c.h.b16 %v363
        %v439 = vunpack.c.l.b16 %v364
        %v440 = vunpack.c.h.b16 %v364
        %v441 = vunpack.c.l.b16 %v365
        %v442 = vunpack.c.h.b16 %v365
        %v443 = vunpack.c.l.b16 %v366
        %v444 = vunpack.c.h.b16 %v366
        %v445 = vunpack.c.l.b16 %v367
        %v446 = vunpack.c.h.b16 %v367
        %v447 = vunpack.c.l.b16 %v368
        %v448 = vunpack.c.h.b16 %v368
        %v449 = vunpack.c.l.b16 %v369
        %v450 = vunpack.c.h.b16 %v369
        %v451 = vunpack.c.l.b16 %v370
        %v452 = vunpack.c.h.b16 %v370
        %v453 = vunpack.c.l.b16 %v371
        %v454 = vunpack.c.h.b16 %v371
        %v455 = vunpack.c.l.b16 %v372
        %v456 = vunpack.c.h.b16 %v372
        %v457 = vunpack.c.l.b16 %v373
        %v458 = vunpack.c.h.b16 %v373
        %v459 = vunpack.c.l.b16 %v374
        %v460 = vunpack.c.h.b16 %v374
        %v461 = vunpack.c.l.b16 %v375
        %v462 = vunpack.c.h.b16 %v375
        %v463 = vunpack.c.l.b16 %v376
        %v464 = vunpack.c.h.b16 %v376
        %v465 = vunpack.c.l.b16 %v377
        %v466 = vunpack.c.h.b16 %v377
        %v467 = vunpack.c.l.b16 %v378
        %v468 = vunpack.c.h.b16 %v378
        %v469 = vunpack.c.l.b16 %v379
        %v470 = vunpack.c.h.b16 %v379
        %v471 = vunpack.c.l.b16 %v380
        %v472 = vunpack.c.h.b16 %v380
        %v473 = vunpack.c.l.b16 %v381
        %v474 = vunpack.c.h.b16 %v381
        %v475 = vunpack.c.l.b16 %v382
        %v476 = vunpack.c.h.b16 %v382
        %v477 = vunpack.c.l.b16 %v383
        %v478 = vunpack.c.h.b16 %v383
        %v479 = vunpack.c.l.b16 %v384
        %v480 = vunpack.c.h.b16 %v384
        %v481 = vpack.c.b16 %v421, %v417
        %v482 = vpack.c.b16 %v422, %v418
        %v483 = vpack.c.b16 %v423, %v419
        %v484 = vpack.c.b16 %v424, %v420
        %v485 = vpack.c.b16 %v429, %v425
        %v486 = vpack.c.b16 %v430, %v426
        %v487 = vpack.c.b16 %v431, %v427
        %v488 = vpack.c.b16 %v432, %v428
        %v489 = vpack.c.b16 %v437, %v433
        %v490 = vpack.c.b16 %v438, %v434
        %v491 = vpack.c.b16 %v439, %v435
        %v492 = vpack.c.b16 %v440, %v436
        %v493 = vpack.c.b16 %v445, %v441
        %v494 = vpack.c.b16 %v446, %v442
        %v495 = vpack.c.b16 %v447, %v443
        %v496 = vpack.c.b16 %v448, %v444
        %v497 = vpack.c.b16 %v453, %v449
        %v498 = vpack.c.b16 %v454, %v450
        %v499 = vpack.c.b16 %v455, %v451
        %v500 = vpack.c.b16 %v456, %v452
        %v501 = vpack.c.b16 %v461, %v457
        %v502 = vpack.c.b16 %v462, %v458
        %v503 = vpack.c.b16 %v463, %v459
        %v504 = vpack.c.b16 %v464, %v460
        %v505 = vpack.c.b16 %v469, %v465
        %v506 = vpack.c.b16 %v470, %v466
        %v507 = vpack.c.b16 %v471, %v467
        %v508 = vpack.c.b16 %v472, %v468
        %v509 = vpack.c.b16 %v477, %v473
        %v510 = vpack.c.b16 %v478, %v474
        %v511 = vpack.c.b16 %v479, %v475
        %v512 = vpack.c.b16 %v480, %v476
        %545 = vmatpush.bf16.msra.mxu0 %v509
        %546 = vmatpush.bf16.msra.mxu0 %v505
        %547 = vmatpush.bf16.msra.mxu0 %v501
        %548 = vmatpush.bf16.msra.mxu0 %v497
        %549 = vmatpush.bf16.msra.mxu0 %v493
        %550 = vmatpush.bf16.msra.mxu0 %v489
        %551 = vmatpush.bf16.msra.mxu0 %v485
        %552 = vmatpush.bf16.msra.mxu0 %v481
        %553 = vmatmul.bf16.gmra.mxu0 %v352
        %v554 = vpop.f32.mrf.mxu0
        %v555 = vadd.f32 0.0, %v554
        %v556 = vpop.f32.mrf.mxu0
        %557 = vdwg.mxu0
        %558 = vmatpush.bf16.msra.mxu0 %v510
        %559 = vmatpush.bf16.msra.mxu0 %v506
        %560 = vmatpush.bf16.msra.mxu0 %v502
        %561 = vmatpush.bf16.msra.mxu0 %v498
        %562 = vmatpush.bf16.msra.mxu0 %v494
        %563 = vmatpush.bf16.msra.mxu0 %v490
        %564 = vmatpush.bf16.msra.mxu0 %v486
        %565 = vmatpush.bf16.msra.mxu0 %v482
        %566 = vmatmul.bf16.gmra.mxu0 %v352
        %v567 = vpop.f32.mrf.mxu0
        %v568 = vadd.f32 0.0, %v567
        %v569 = vpop.f32.mrf.mxu0
        %570 = vdwg.mxu0
        %571 = vmatpush.bf16.msra.mxu0 %v511
        %572 = vmatpush.bf16.msra.mxu0 %v507
        %573 = vmatpush.bf16.msra.mxu0 %v503
        %574 = vmatpush.bf16.msra.mxu0 %v499
        %575 = vmatpush.bf16.msra.mxu0 %v495
        %576 = vmatpush.bf16.msra.mxu0 %v491
        %577 = vmatpush.bf16.msra.mxu0 %v487
        %578 = vmatpush.bf16.msra.mxu0 %v483
        %579 = vmatmul.bf16.gmra.mxu0 %v352
        %v580 = vpop.f32.mrf.mxu0
        %v581 = vadd.f32 0.0, %v580
        %v582 = vpop.f32.mrf.mxu0
        %583 = vdwg.mxu0
        %584 = vmatpush.bf16.msra.mxu0 %v512
        %585 = vmatpush.bf16.msra.mxu0 %v508
        %586 = vmatpush.bf16.msra.mxu0 %v504
        %587 = vmatpush.bf16.msra.mxu0 %v500
        %588 = vmatpush.bf16.msra.mxu0 %v496
        %589 = vmatpush.bf16.msra.mxu0 %v492
        %590 = vmatpush.bf16.msra.mxu0 %v488
        %591 = vmatpush.bf16.msra.mxu0 %v484
        %592 = vmatmul.bf16.gmra.mxu0 %v352
        %v593 = vpop.f32.mrf.mxu0
        %v594 = vadd.f32 0.0, %v593
        %v595 = vpop.f32.mrf.mxu0
        %596 = vdwg.mxu0
        %v601 = vrot.slane %v568, 6
        %v602 = vrot.slane %v581, 4
        %v603 = vrot.slane %v594, 2
        %vm604 = vcmask 1041408
        %v605 = vsel %vm604, %v555, %v601
        %vm606 = vcmask 1045508
        %v607 = vsel %vm606, %v602, %v603
        %vm608 = vcmask 1043456
        %v609 = vsel %vm608, %v605, %v607
        %v611 = vadd.f32 %v350, %v609
        %v612 = vxor.u32 %v611, 2147483648
        %v613 = vmul.f32 %v612, 1.442695
        %v614 = vpow.pop %v613
        %v615 = vadd.f32 %v614, 1.0
        %v616 = vrcp.pop %v615
        %v617 = vmul.f32 %v615, %v616
        %v618 = vsub.f32 1.0, %v617
        %v619 = vmul.f32 %v616, %v618
        %v620 = vadd.f32 %v616, %v619
        %vm621 = vweird.f32 %v615
        %vm622 = vweird.f32 %v616
        %vm623 = vmor %vm621, %vm622
        %v624 = vsel %vm623, %v616, %v620
        %v625 = vand.u32 2147483647, %v615
        %vm626 = vcmp.eq.f32.partialorder %v625, 8.507059e+37
        %v627 = vand.u32 %v615, 2147483648
        %v628 = vor.u32 1.1754944e-38, %v627
        %v629 = vsel %vm626, %v628, %v624
        %v630 = vmul.f32 1.0, %v629
        %v632 = vrot.slane %v611, 2
        %v634 = vxor.u32 %v632, 2147483648
        %v635 = vmul.f32 %v634, 1.442695
        %v636 = vpow.pop %v635
        %v637 = vadd.f32 %v636, 1.0
        %v638 = vrcp.pop %v637
        %v639 = vmul.f32 %v637, %v638
        %v640 = vsub.f32 1.0, %v639
        %v641 = vmul.f32 %v638, %v640
        %v642 = vadd.f32 %v638, %v641
        %vm643 = vweird.f32 %v637
        %vm644 = vweird.f32 %v638
        %vm645 = vmor %vm643, %vm644
        %v646 = vsel %vm645, %v638, %v642
        %v647 = vand.u32 2147483647, %v637
        %vm648 = vcmp.eq.f32.partialorder %v647, 8.507059e+37
        %v649 = vand.u32 %v637, 2147483648
        %v650 = vor.u32 1.1754944e-38, %v649
        %v651 = vsel %vm648, %v650, %v646
        %v652 = vmul.f32 1.0, %v651
        %v653 = vrot.slane %v611, 4
        %v655 = vtanh.pop %v653
        %v656 = vrot.slane %v611, 6
        %v658 = vxor.u32 %v656, 2147483648
        %v659 = vmul.f32 %v658, 1.442695
        %v660 = vpow.pop %v659
        %v661 = vadd.f32 %v660, 1.0
        %v662 = vrcp.pop %v661
        %v663 = vmul.f32 %v661, %v662
        %v664 = vsub.f32 1.0, %v663
        %v665 = vmul.f32 %v662, %v664
        %v666 = vadd.f32 %v662, %v665
        %vm667 = vweird.f32 %v661
        %vm668 = vweird.f32 %v662
        %vm669 = vmor %vm667, %vm668
        %v670 = vsel %vm669, %v662, %v666
        %v671 = vand.u32 2147483647, %v661
        %vm672 = vcmp.eq.f32.partialorder %v671, 8.507059e+37
        %v673 = vand.u32 %v661, 2147483648
        %v674 = vor.u32 1.1754944e-38, %v673
        %v675 = vsel %vm672, %v674, %v670
        %v676 = vmul.f32 1.0, %v675
        %v677 = vld [vmem:[#allocation4] sm:$0x3]
        %v678 = vmul.f32 %v652, %v677
        %v679 = vmul.f32 %v630, %v655
        %v680 = vadd.f32 %v678, %v679
        %v681 = vtanh.pop %v680
        %v682 = vmul.f32 %v676, %v681
        %683 = vst [vmem:[#allocation4] sm:$0x3] %v680
        %684 = vst [vmem:[#allocation3] sm:$0x3] %v682
        %v685 = vpack.c.bf16 %v682, %v682
        %s686 = scalar_lea.vmem %s247, %s346
        %687 = vst [vmem:[%s686] sm:$0x1] %v685
        %s688 = smul.u32 %s17, 5
        %s689 = sadd.s32 %s688, 1
        %s690 = smul.u32 %s689, 4
        %s691 = scalar_lea.vmem %s206, %s690 [#allocation6]
        %v692 = vld [vmem:[%s691] sm:$0xf]
        %v693 = vunpack.c.l.bf16 %v692
        %v694 = vld [vmem:[#allocation3] sm:$0x3]
        %v695 = vpack.c.bf16 %v694, %v694
        %v696 = vld [vmem:[#allocation2] sm:$0xff]
        %v697 = vld [vmem:[#allocation2 + $0x8] sm:$0xff]
        %v698 = vld [vmem:[#allocation2 + $0x10] sm:$0xff]
        %v699 = vld [vmem:[#allocation2 + $0x18] sm:$0xff]
        %v700 = vld [vmem:[#allocation2 + $0x20] sm:$0xff]
        %v701 = vld [vmem:[#allocation2 + $0x28] sm:$0xff]
        %v702 = vld [vmem:[#allocation2 + $0x30] sm:$0xff]
        %v703 = vld [vmem:[#allocation2 + $0x38] sm:$0xff]
        %v704 = vld [vmem:[#allocation2 + $0x40] sm:$0xff]
        %v705 = vld [vmem:[#allocation2 + $0x48] sm:$0xff]
        %v706 = vld [vmem:[#allocation2 + $0x50] sm:$0xff]
        %v707 = vld [vmem:[#allocation2 + $0x58] sm:$0xff]
        %v708 = vld [vmem:[#allocation2 + $0x60] sm:$0xff]
        %v709 = vld [vmem:[#allocation2 + $0x68] sm:$0xff]
        %v710 = vld [vmem:[#allocation2 + $0x70] sm:$0xff]
        %v711 = vld [vmem:[#allocation2 + $0x78] sm:$0xff]
        %v712 = vld [vmem:[#allocation2 + $0x80] sm:$0xff]
        %v713 = vld [vmem:[#allocation2 + $0x88] sm:$0xff]
        %v714 = vld [vmem:[#allocation2 + $0x90] sm:$0xff]
        %v715 = vld [vmem:[#allocation2 + $0x98] sm:$0xff]
        %v716 = vld [vmem:[#allocation2 + $0xa0] sm:$0xff]
        %v717 = vld [vmem:[#allocation2 + $0xa8] sm:$0xff]
        %v718 = vld [vmem:[#allocation2 + $0xb0] sm:$0xff]
        %v719 = vld [vmem:[#allocation2 + $0xb8] sm:$0xff]
        %v720 = vld [vmem:[#allocation2 + $0xc0] sm:$0xff]
        %v721 = vld [vmem:[#allocation2 + $0xc8] sm:$0xff]
        %v722 = vld [vmem:[#allocation2 + $0xd0] sm:$0xff]
        %v723 = vld [vmem:[#allocation2 + $0xd8] sm:$0xff]
        %v724 = vld [vmem:[#allocation2 + $0xe0] sm:$0xff]
        %v725 = vld [vmem:[#allocation2 + $0xe8] sm:$0xff]
        %v726 = vld [vmem:[#allocation2 + $0xf0] sm:$0xff]
        %v727 = vld [vmem:[#allocation2 + $0xf8] sm:$0xff]
        %v760 = vunpack.c.l.b16 %v696
        %v761 = vunpack.c.h.b16 %v696
        %v762 = vunpack.c.l.b16 %v697
        %v763 = vunpack.c.h.b16 %v697
        %v764 = vunpack.c.l.b16 %v698
        %v765 = vunpack.c.h.b16 %v698
        %v766 = vunpack.c.l.b16 %v699
        %v767 = vunpack.c.h.b16 %v699
        %v768 = vunpack.c.l.b16 %v700
        %v769 = vunpack.c.h.b16 %v700
        %v770 = vunpack.c.l.b16 %v701
        %v771 = vunpack.c.h.b16 %v701
        %v772 = vunpack.c.l.b16 %v702
        %v773 = vunpack.c.h.b16 %v702
        %v774 = vunpack.c.l.b16 %v703
        %v775 = vunpack.c.h.b16 %v703
        %v776 = vunpack.c.l.b16 %v704
        %v777 = vunpack.c.h.b16 %v704
        %v778 = vunpack.c.l.b16 %v705
        %v779 = vunpack.c.h.b16 %v705
        %v780 = vunpack.c.l.b16 %v706
        %v781 = vunpack.c.h.b16 %v706
        %v782 = vunpack.c.l.b16 %v707
        %v783 = vunpack.c.h.b16 %v707
        %v784 = vunpack.c.l.b16 %v708
        %v785 = vunpack.c.h.b16 %v708
        %v786 = vunpack.c.l.b16 %v709
        %v787 = vunpack.c.h.b16 %v709
        %v788 = vunpack.c.l.b16 %v710
        %v789 = vunpack.c.h.b16 %v710
        %v790 = vunpack.c.l.b16 %v711
        %v791 = vunpack.c.h.b16 %v711
        %v792 = vunpack.c.l.b16 %v712
        %v793 = vunpack.c.h.b16 %v712
        %v794 = vunpack.c.l.b16 %v713
        %v795 = vunpack.c.h.b16 %v713
        %v796 = vunpack.c.l.b16 %v714
        %v797 = vunpack.c.h.b16 %v714
        %v798 = vunpack.c.l.b16 %v715
        %v799 = vunpack.c.h.b16 %v715
        %v800 = vunpack.c.l.b16 %v716
        %v801 = vunpack.c.h.b16 %v716
        %v802 = vunpack.c.l.b16 %v717
        %v803 = vunpack.c.h.b16 %v717
        %v804 = vunpack.c.l.b16 %v718
        %v805 = vunpack.c.h.b16 %v718
        %v806 = vunpack.c.l.b16 %v719
        %v807 = vunpack.c.h.b16 %v719
        %v808 = vunpack.c.l.b16 %v720
        %v809 = vunpack.c.h.b16 %v720
        %v810 = vunpack.c.l.b16 %v721
        %v811 = vunpack.c.h.b16 %v721
        %v812 = vunpack.c.l.b16 %v722
        %v813 = vunpack.c.h.b16 %v722
        %v814 = vunpack.c.l.b16 %v723
        %v815 = vunpack.c.h.b16 %v723
        %v816 = vunpack.c.l.b16 %v724
        %v817 = vunpack.c.h.b16 %v724
        %v818 = vunpack.c.l.b16 %v725
        %v819 = vunpack.c.h.b16 %v725
        %v820 = vunpack.c.l.b16 %v726
        %v821 = vunpack.c.h.b16 %v726
        %v822 = vunpack.c.l.b16 %v727
        %v823 = vunpack.c.h.b16 %v727
        %v824 = vpack.c.b16 %v764, %v760
        %v825 = vpack.c.b16 %v765, %v761
        %v826 = vpack.c.b16 %v766, %v762
        %v827 = vpack.c.b16 %v767, %v763
        %v828 = vpack.c.b16 %v772, %v768
        %v829 = vpack.c.b16 %v773, %v769
        %v830 = vpack.c.b16 %v774, %v770
        %v831 = vpack.c.b16 %v775, %v771
        %v832 = vpack.c.b16 %v780, %v776
        %v833 = vpack.c.b16 %v781, %v777
        %v834 = vpack.c.b16 %v782, %v778
        %v835 = vpack.c.b16 %v783, %v779
        %v836 = vpack.c.b16 %v788, %v784
        %v837 = vpack.c.b16 %v789, %v785
        %v838 = vpack.c.b16 %v790, %v786
        %v839 = vpack.c.b16 %v791, %v787
        %v840 = vpack.c.b16 %v796, %v792
        %v841 = vpack.c.b16 %v797, %v793
        %v842 = vpack.c.b16 %v798, %v794
        %v843 = vpack.c.b16 %v799, %v795
        %v844 = vpack.c.b16 %v804, %v800
        %v845 = vpack.c.b16 %v805, %v801
        %v846 = vpack.c.b16 %v806, %v802
        %v847 = vpack.c.b16 %v807, %v803
        %v848 = vpack.c.b16 %v812, %v808
        %v849 = vpack.c.b16 %v813, %v809
        %v850 = vpack.c.b16 %v814, %v810
        %v851 = vpack.c.b16 %v815, %v811
        %v852 = vpack.c.b16 %v820, %v816
        %v853 = vpack.c.b16 %v821, %v817
        %v854 = vpack.c.b16 %v822, %v818
        %v855 = vpack.c.b16 %v823, %v819
        %888 = vmatpush.bf16.msra.mxu0 %v852
        %889 = vmatpush.bf16.msra.mxu0 %v848
        %890 = vmatpush.bf16.msra.mxu0 %v844
        %891 = vmatpush.bf16.msra.mxu0 %v840
        %892 = vmatpush.bf16.msra.mxu0 %v836
        %893 = vmatpush.bf16.msra.mxu0 %v832
        %894 = vmatpush.bf16.msra.mxu0 %v828
        %895 = vmatpush.bf16.msra.mxu0 %v824
        %896 = vmatmul.bf16.gmra.mxu0 %v695
        %v897 = vpop.f32.mrf.mxu0
        %v898 = vadd.f32 0.0, %v897
        %v899 = vpop.f32.mrf.mxu0
        %900 = vdwg.mxu0
        %901 = vmatpush.bf16.msra.mxu0 %v853
        %902 = vmatpush.bf16.msra.mxu0 %v849
        %903 = vmatpush.bf16.msra.mxu0 %v845
        %904 = vmatpush.bf16.msra.mxu0 %v841
        %905 = vmatpush.bf16.msra.mxu0 %v837
        %906 = vmatpush.bf16.msra.mxu0 %v833
        %907 = vmatpush.bf16.msra.mxu0 %v829
        %908 = vmatpush.bf16.msra.mxu0 %v825
        %909 = vmatmul.bf16.gmra.mxu0 %v695
        %v910 = vpop.f32.mrf.mxu0
        %v911 = vadd.f32 0.0, %v910
        %v912 = vpop.f32.mrf.mxu0
        %913 = vdwg.mxu0
        %914 = vmatpush.bf16.msra.mxu0 %v854
        %915 = vmatpush.bf16.msra.mxu0 %v850
        %916 = vmatpush.bf16.msra.mxu0 %v846
        %917 = vmatpush.bf16.msra.mxu0 %v842
        %918 = vmatpush.bf16.msra.mxu0 %v838
        %919 = vmatpush.bf16.msra.mxu0 %v834
        %920 = vmatpush.bf16.msra.mxu0 %v830
        %921 = vmatpush.bf16.msra.mxu0 %v826
        %922 = vmatmul.bf16.gmra.mxu0 %v695
        %v923 = vpop.f32.mrf.mxu0
        %v924 = vadd.f32 0.0, %v923
        %v925 = vpop.f32.mrf.mxu0
        %926 = vdwg.mxu0
        %927 = vmatpush.bf16.msra.mxu0 %v855
        %928 = vmatpush.bf16.msra.mxu0 %v851
        %929 = vmatpush.bf16.msra.mxu0 %v847
        %930 = vmatpush.bf16.msra.mxu0 %v843
        %931 = vmatpush.bf16.msra.mxu0 %v839
        %932 = vmatpush.bf16.msra.mxu0 %v835
        %933 = vmatpush.bf16.msra.mxu0 %v831
        %934 = vmatpush.bf16.msra.mxu0 %v827
        %935 = vmatmul.bf16.gmra.mxu0 %v695
        %v936 = vpop.f32.mrf.mxu0
        %v937 = vadd.f32 0.0, %v936
        %v938 = vpop.f32.mrf.mxu0
        %939 = vdwg.mxu0
        %v944 = vrot.slane %v911, 6
        %v945 = vrot.slane %v924, 4
        %v946 = vrot.slane %v937, 2
        %v947 = vsel %vm604, %v898, %v944
        %v948 = vsel %vm606, %v945, %v946
        %v949 = vsel %vm608, %v947, %v948
        %v951 = vadd.f32 %v693, %v949
        %v952 = vxor.u32 %v951, 2147483648
        %v953 = vmul.f32 %v952, 1.442695
        %v954 = vpow.pop %v953
        %v955 = vadd.f32 %v954, 1.0
        %v956 = vrcp.pop %v955
        %v957 = vmul.f32 %v955, %v956
        %v958 = vsub.f32 1.0, %v957
        %v959 = vmul.f32 %v956, %v958
        %v960 = vadd.f32 %v956, %v959
        %vm961 = vweird.f32 %v955
        %vm962 = vweird.f32 %v956
        %vm963 = vmor %vm961, %vm962
        %v964 = vsel %vm963, %v956, %v960
        %v965 = vand.u32 2147483647, %v955
        %vm966 = vcmp.eq.f32.partialorder %v965, 8.507059e+37
        %v967 = vand.u32 %v955, 2147483648
        %v968 = vor.u32 1.1754944e-38, %v967
        %v969 = vsel %vm966, %v968, %v964
        %v970 = vmul.f32 1.0, %v969
        %v972 = vrot.slane %v951, 2
        %v974 = vxor.u32 %v972, 2147483648
        %v975 = vmul.f32 %v974, 1.442695
        %v976 = vpow.pop %v975
        %v977 = vadd.f32 %v976, 1.0
        %v978 = vrcp.pop %v977
        %v979 = vmul.f32 %v977, %v978
        %v980 = vsub.f32 1.0, %v979
        %v981 = vmul.f32 %v978, %v980
        %v982 = vadd.f32 %v978, %v981
        %vm983 = vweird.f32 %v977
        %vm984 = vweird.f32 %v978
        %vm985 = vmor %vm983, %vm984
        %v986 = vsel %vm985, %v978, %v982
        %v987 = vand.u32 2147483647, %v977
        %vm988 = vcmp.eq.f32.partialorder %v987, 8.507059e+37
        %v989 = vand.u32 %v977, 2147483648
        %v990 = vor.u32 1.1754944e-38, %v989
        %v991 = vsel %vm988, %v990, %v986
        %v992 = vmul.f32 1.0, %v991
        %v993 = vrot.slane %v951, 4
        %v995 = vtanh.pop %v993
        %v996 = vrot.slane %v951, 6
        %v998 = vxor.u32 %v996, 2147483648
        %v999 = vmul.f32 %v998, 1.442695
        %v1000 = vpow.pop %v999
        %v1001 = vadd.f32 %v1000, 1.0
        %v1002 = vrcp.pop %v1001
        %v1003 = vmul.f32 %v1001, %v1002
        %v1004 = vsub.f32 1.0, %v1003
        %v1005 = vmul.f32 %v1002, %v1004
        %v1006 = vadd.f32 %v1002, %v1005
        %vm1007 = vweird.f32 %v1001
        %vm1008 = vweird.f32 %v1002
        %vm1009 = vmor %vm1007, %vm1008
        %v1010 = vsel %vm1009, %v1002, %v1006
        %v1011 = vand.u32 2147483647, %v1001
        %vm1012 = vcmp.eq.f32.partialorder %v1011, 8.507059e+37
        %v1013 = vand.u32 %v1001, 2147483648
        %v1014 = vor.u32 1.1754944e-38, %v1013
        %v1015 = vsel %vm1012, %v1014, %v1010
        %v1016 = vmul.f32 1.0, %v1015
        %v1017 = vld [vmem:[#allocation4] sm:$0x3]
        %v1018 = vmul.f32 %v992, %v1017
        %v1019 = vmul.f32 %v970, %v995
        %v1020 = vadd.f32 %v1018, %v1019
        %v1021 = vtanh.pop %v1020
        %v1022 = vmul.f32 %v1016, %v1021
        %1023 = vst [vmem:[#allocation4] sm:$0x3] %v1020
        %1024 = vst [vmem:[#allocation3] sm:$0x3] %v1022
        %v1025 = vpack.c.bf16 %v1022, %v1022
        %s1026 = scalar_lea.vmem %s247, %s689
        %1027 = vst [vmem:[%s1026] sm:$0x1] %v1025
        %s1028 = smul.u32 %s17, 3
        %s1029 = sadd.s32 %s1028, 2
        %s1030 = smul.u32 %s1029, 4
        %s1031 = scalar_lea.vmem %s206, %s1030 [#allocation6]
        %v1032 = vld [vmem:[%s1031] sm:$0xf]
        %v1033 = vunpack.c.l.bf16 %v1032
        %v1034 = vld [vmem:[#allocation3] sm:$0x3]
        %v1035 = vpack.c.bf16 %v1034, %v1034
        %v1036 = vld [vmem:[#allocation2] sm:$0xff]
        %v1037 = vld [vmem:[#allocation2 + $0x8] sm:$0xff]
        %v1038 = vld [vmem:[#allocation2 + $0x10] sm:$0xff]
        %v1039 = vld [vmem:[#allocation2 + $0x18] sm:$0xff]
        %v1040 = vld [vmem:[#allocation2 + $0x20] sm:$0xff]
        %v1041 = vld [vmem:[#allocation2 + $0x28] sm:$0xff]
        %v1042 = vld [vmem:[#allocation2 + $0x30] sm:$0xff]
        %v1043 = vld [vmem:[#allocation2 + $0x38] sm:$0xff]
        %v1044 = vld [vmem:[#allocation2 + $0x40] sm:$0xff]
        %v1045 = vld [vmem:[#allocation2 + $0x48] sm:$0xff]
        %v1046 = vld [vmem:[#allocation2 + $0x50] sm:$0xff]
        %v1047 = vld [vmem:[#allocation2 + $0x58] sm:$0xff]
        %v1048 = vld [vmem:[#allocation2 + $0x60] sm:$0xff]
        %v1049 = vld [vmem:[#allocation2 + $0x68] sm:$0xff]
        %v1050 = vld [vmem:[#allocation2 + $0x70] sm:$0xff]
        %v1051 = vld [vmem:[#allocation2 + $0x78] sm:$0xff]
        %v1052 = vld [vmem:[#allocation2 + $0x80] sm:$0xff]
        %v1053 = vld [vmem:[#allocation2 + $0x88] sm:$0xff]
        %v1054 = vld [vmem:[#allocation2 + $0x90] sm:$0xff]
        %v1055 = vld [vmem:[#allocation2 + $0x98] sm:$0xff]
        %v1056 = vld [vmem:[#allocation2 + $0xa0] sm:$0xff]
        %v1057 = vld [vmem:[#allocation2 + $0xa8] sm:$0xff]
        %v1058 = vld [vmem:[#allocation2 + $0xb0] sm:$0xff]
        %v1059 = vld [vmem:[#allocation2 + $0xb8] sm:$0xff]
        %v1060 = vld [vmem:[#allocation2 + $0xc0] sm:$0xff]
        %v1061 = vld [vmem:[#allocation2 + $0xc8] sm:$0xff]
        %v1062 = vld [vmem:[#allocation2 + $0xd0] sm:$0xff]
        %v1063 = vld [vmem:[#allocation2 + $0xd8] sm:$0xff]
        %v1064 = vld [vmem:[#allocation2 + $0xe0] sm:$0xff]
        %v1065 = vld [vmem:[#allocation2 + $0xe8] sm:$0xff]
        %v1066 = vld [vmem:[#allocation2 + $0xf0] sm:$0xff]
        %v1067 = vld [vmem:[#allocation2 + $0xf8] sm:$0xff]
        %v1100 = vunpack.c.l.b16 %v1036
        %v1101 = vunpack.c.h.b16 %v1036
        %v1102 = vunpack.c.l.b16 %v1037
        %v1103 = vunpack.c.h.b16 %v1037
        %v1104 = vunpack.c.l.b16 %v1038
        %v1105 = vunpack.c.h.b16 %v1038
        %v1106 = vunpack.c.l.b16 %v1039
        %v1107 = vunpack.c.h.b16 %v1039
        %v1108 = vunpack.c.l.b16 %v1040
        %v1109 = vunpack.c.h.b16 %v1040
        %v1110 = vunpack.c.l.b16 %v1041
        %v1111 = vunpack.c.h.b16 %v1041
        %v1112 = vunpack.c.l.b16 %v1042
        %v1113 = vunpack.c.h.b16 %v1042
        %v1114 = vunpack.c.l.b16 %v1043
        %v1115 = vunpack.c.h.b16 %v1043
        %v1116 = vunpack.c.l.b16 %v1044
        %v1117 = vunpack.c.h.b16 %v1044
        %v1118 = vunpack.c.l.b16 %v1045
        %v1119 = vunpack.c.h.b16 %v1045
        %v1120 = vunpack.c.l.b16 %v1046
        %v1121 = vunpack.c.h.b16 %v1046
        %v1122 = vunpack.c.l.b16 %v1047
        %v1123 = vunpack.c.h.b16 %v1047
        %v1124 = vunpack.c.l.b16 %v1048
        %v1125 = vunpack.c.h.b16 %v1048
        %v1126 = vunpack.c.l.b16 %v1049
        %v1127 = vunpack.c.h.b16 %v1049
        %v1128 = vunpack.c.l.b16 %v1050
        %v1129 = vunpack.c.h.b16 %v1050
        %v1130 = vunpack.c.l.b16 %v1051
        %v1131 = vunpack.c.h.b16 %v1051
        %v1132 = vunpack.c.l.b16 %v1052
        %v1133 = vunpack.c.h.b16 %v1052
        %v1134 = vunpack.c.l.b16 %v1053
        %v1135 = vunpack.c.h.b16 %v1053
        %v1136 = vunpack.c.l.b16 %v1054
        %v1137 = vunpack.c.h.b16 %v1054
        %v1138 = vunpack.c.l.b16 %v1055
        %v1139 = vunpack.c.h.b16 %v1055
        %v1140 = vunpack.c.l.b16 %v1056
        %v1141 = vunpack.c.h.b16 %v1056
        %v1142 = vunpack.c.l.b16 %v1057
        %v1143 = vunpack.c.h.b16 %v1057
        %v1144 = vunpack.c.l.b16 %v1058
        %v1145 = vunpack.c.h.b16 %v1058
        %v1146 = vunpack.c.l.b16 %v1059
        %v1147 = vunpack.c.h.b16 %v1059
        %v1148 = vunpack.c.l.b16 %v1060
        %v1149 = vunpack.c.h.b16 %v1060
        %v1150 = vunpack.c.l.b16 %v1061
        %v1151 = vunpack.c.h.b16 %v1061
        %v1152 = vunpack.c.l.b16 %v1062
        %v1153 = vunpack.c.h.b16 %v1062
        %v1154 = vunpack.c.l.b16 %v1063
        %v1155 = vunpack.c.h.b16 %v1063
        %v1156 = vunpack.c.l.b16 %v1064
        %v1157 = vunpack.c.h.b16 %v1064
        %v1158 = vunpack.c.l.b16 %v1065
        %v1159 = vunpack.c.h.b16 %v1065
        %v1160 = vunpack.c.l.b16 %v1066
        %v1161 = vunpack.c.h.b16 %v1066
        %v1162 = vunpack.c.l.b16 %v1067
        %v1163 = vunpack.c.h.b16 %v1067
        %v1164 = vpack.c.b16 %v1104, %v1100
        %v1165 = vpack.c.b16 %v1105, %v1101
        %v1166 = vpack.c.b16 %v1106, %v1102
        %v1167 = vpack.c.b16 %v1107, %v1103
        %v1168 = vpack.c.b16 %v1112, %v1108
        %v1169 = vpack.c.b16 %v1113, %v1109
        %v1170 = vpack.c.b16 %v1114, %v1110
        %v1171 = vpack.c.b16 %v1115, %v1111
        %v1172 = vpack.c.b16 %v1120, %v1116
        %v1173 = vpack.c.b16 %v1121, %v1117
        %v1174 = vpack.c.b16 %v1122, %v1118
        %v1175 = vpack.c.b16 %v1123, %v1119
        %v1176 = vpack.c.b16 %v1128, %v1124
        %v1177 = vpack.c.b16 %v1129, %v1125
        %v1178 = vpack.c.b16 %v1130, %v1126
        %v1179 = vpack.c.b16 %v1131, %v1127
        %v1180 = vpack.c.b16 %v1136, %v1132
        %v1181 = vpack.c.b16 %v1137, %v1133
        %v1182 = vpack.c.b16 %v1138, %v1134
        %v1183 = vpack.c.b16 %v1139, %v1135
        %v1184 = vpack.c.b16 %v1144, %v1140
        %v1185 = vpack.c.b16 %v1145, %v1141
        %v1186 = vpack.c.b16 %v1146, %v1142
        %v1187 = vpack.c.b16 %v1147, %v1143
        %v1188 = vpack.c.b16 %v1152, %v1148
        %v1189 = vpack.c.b16 %v1153, %v1149
        %v1190 = vpack.c.b16 %v1154, %v1150
        %v1191 = vpack.c.b16 %v1155, %v1151
        %v1192 = vpack.c.b16 %v1160, %v1156
        %v1193 = vpack.c.b16 %v1161, %v1157
        %v1194 = vpack.c.b16 %v1162, %v1158
        %v1195 = vpack.c.b16 %v1163, %v1159
        %1228 = vmatpush.bf16.msra.mxu0 %v1192
        %1229 = vmatpush.bf16.msra.mxu0 %v1188
        %1230 = vmatpush.bf16.msra.mxu0 %v1184
        %1231 = vmatpush.bf16.msra.mxu0 %v1180
        %1232 = vmatpush.bf16.msra.mxu0 %v1176
        %1233 = vmatpush.bf16.msra.mxu0 %v1172
        %1234 = vmatpush.bf16.msra.mxu0 %v1168
        %1235 = vmatpush.bf16.msra.mxu0 %v1164
        %1236 = vmatmul.bf16.gmra.mxu0 %v1035
        %v1237 = vpop.f32.mrf.mxu0
        %v1238 = vadd.f32 0.0, %v1237
        %v1239 = vpop.f32.mrf.mxu0
        %1240 = vdwg.mxu0
        %1241 = vmatpush.bf16.msra.mxu0 %v1193
        %1242 = vmatpush.bf16.msra.mxu0 %v1189
        %1243 = vmatpush.bf16.msra.mxu0 %v1185
        %1244 = vmatpush.bf16.msra.mxu0 %v1181
        %1245 = vmatpush.bf16.msra.mxu0 %v1177
        %1246 = vmatpush.bf16.msra.mxu0 %v1173
        %1247 = vmatpush.bf16.msra.mxu0 %v1169
        %1248 = vmatpush.bf16.msra.mxu0 %v1165
        %1249 = vmatmul.bf16.gmra.mxu0 %v1035
        %v1250 = vpop.f32.mrf.mxu0
        %v1251 = vadd.f32 0.0, %v1250
        %v1252 = vpop.f32.mrf.mxu0
        %1253 = vdwg.mxu0
        %1254 = vmatpush.bf16.msra.mxu0 %v1194
        %1255 = vmatpush.bf16.msra.mxu0 %v1190
        %1256 = vmatpush.bf16.msra.mxu0 %v1186
        %1257 = vmatpush.bf16.msra.mxu0 %v1182
        %1258 = vmatpush.bf16.msra.mxu0 %v1178
        %1259 = vmatpush.bf16.msra.mxu0 %v1174
        %1260 = vmatpush.bf16.msra.mxu0 %v1170
        %1261 = vmatpush.bf16.msra.mxu0 %v1166
        %1262 = vmatmul.bf16.gmra.mxu0 %v1035
        %v1263 = vpop.f32.mrf.mxu0
        %v1264 = vadd.f32 0.0, %v1263
        %v1265 = vpop.f32.mrf.mxu0
        %1266 = vdwg.mxu0
        %1267 = vmatpush.bf16.msra.mxu0 %v1195
        %1268 = vmatpush.bf16.msra.mxu0 %v1191
        %1269 = vmatpush.bf16.msra.mxu0 %v1187
        %1270 = vmatpush.bf16.msra.mxu0 %v1183
        %1271 = vmatpush.bf16.msra.mxu0 %v1179
        %1272 = vmatpush.bf16.msra.mxu0 %v1175
        %1273 = vmatpush.bf16.msra.mxu0 %v1171
        %1274 = vmatpush.bf16.msra.mxu0 %v1167
        %1275 = vmatmul.bf16.gmra.mxu0 %v1035
        %v1276 = vpop.f32.mrf.mxu0
        %v1277 = vadd.f32 0.0, %v1276
        %v1278 = vpop.f32.mrf.mxu0
        %1279 = vdwg.mxu0
        %v1284 = vrot.slane %v1251, 6
        %v1285 = vrot.slane %v1264, 4
        %v1286 = vrot.slane %v1277, 2
        %v1287 = vsel %vm604, %v1238, %v1284
        %v1288 = vsel %vm606, %v1285, %v1286
        %v1289 = vsel %vm608, %v1287, %v1288
        %v1291 = vadd.f32 %v1033, %v1289
        %v1292 = vxor.u32 %v1291, 2147483648
        %v1293 = vmul.f32 %v1292, 1.442695
        %v1294 = vpow.pop %v1293
        %v1295 = vadd.f32 %v1294, 1.0
        %v1296 = vrcp.pop %v1295
        %v1297 = vmul.f32 %v1295, %v1296
        %v1298 = vsub.f32 1.0, %v1297
        %v1299 = vmul.f32 %v1296, %v1298
        %v1300 = vadd.f32 %v1296, %v1299
        %vm1301 = vweird.f32 %v1295
        %vm1302 = vweird.f32 %v1296
        %vm1303 = vmor %vm1301, %vm1302
        %v1304 = vsel %vm1303, %v1296, %v1300
        %v1305 = vand.u32 2147483647, %v1295
        %vm1306 = vcmp.eq.f32.partialorder %v1305, 8.507059e+37
        %v1307 = vand.u32 %v1295, 2147483648
        %v1308 = vor.u32 1.1754944e-38, %v1307
        %v1309 = vsel %vm1306, %v1308, %v1304
        %v1310 = vmul.f32 1.0, %v1309
        %v1312 = vrot.slane %v1291, 2
        %v1314 = vxor.u32 %v1312, 2147483648
        %v1315 = vmul.f32 %v1314, 1.442695
        %v1316 = vpow.pop %v1315
        %v1317 = vadd.f32 %v1316, 1.0
        %v1318 = vrcp.pop %v1317
        %v1319 = vmul.f32 %v1317, %v1318
        %v1320 = vsub.f32 1.0, %v1319
        %v1321 = vmul.f32 %v1318, %v1320
        %v1322 = vadd.f32 %v1318, %v1321
        %vm1323 = vweird.f32 %v1317
        %vm1324 = vweird.f32 %v1318
        %vm1325 = vmor %vm1323, %vm1324
        %v1326 = vsel %vm1325, %v1318, %v1322
        %v1327 = vand.u32 2147483647, %v1317
        %vm1328 = vcmp.eq.f32.partialorder %v1327, 8.507059e+37
        %v1329 = vand.u32 %v1317, 2147483648
        %v1330 = vor.u32 1.1754944e-38, %v1329
        %v1331 = vsel %vm1328, %v1330, %v1326
        %v1332 = vmul.f32 1.0, %v1331
        %v1333 = vrot.slane %v1291, 4
        %v1335 = vtanh.pop %v1333
        %v1336 = vrot.slane %v1291, 6
        %v1338 = vxor.u32 %v1336, 2147483648
        %v1339 = vmul.f32 %v1338, 1.442695
        %v1340 = vpow.pop %v1339
        %v1341 = vadd.f32 %v1340, 1.0
        %v1342 = vrcp.pop %v1341
        %v1343 = vmul.f32 %v1341, %v1342
        %v1344 = vsub.f32 1.0, %v1343
        %v1345 = vmul.f32 %v1342, %v1344
        %v1346 = vadd.f32 %v1342, %v1345
        %vm1347 = vweird.f32 %v1341
        %vm1348 = vweird.f32 %v1342
        %vm1349 = vmor %vm1347, %vm1348
        %v1350 = vsel %vm1349, %v1342, %v1346
        %v1351 = vand.u32 2147483647, %v1341
        %vm1352 = vcmp.eq.f32.partialorder %v1351, 8.507059e+37
        %v1353 = vand.u32 %v1341, 2147483648
        %v1354 = vor.u32 1.1754944e-38, %v1353
        %v1355 = vsel %vm1352, %v1354, %v1350
        %v1356 = vmul.f32 1.0, %v1355
        %v1357 = vld [vmem:[#allocation4] sm:$0x3]
        %v1358 = vmul.f32 %v1332, %v1357
        %v1359 = vmul.f32 %v1310, %v1335
        %v1360 = vadd.f32 %v1358, %v1359
        %v1361 = vtanh.pop %v1360
        %v1362 = vmul.f32 %v1356, %v1361
        %1363 = vst [vmem:[#allocation4] sm:$0x3] %v1360
        %1364 = vst [vmem:[#allocation3] sm:$0x3] %v1362
        %v1365 = vpack.c.bf16 %v1362, %v1362
        %s1366 = scalar_lea.vmem %s247, %s1029
        %1367 = vst [vmem:[%s1366] sm:$0x1] %v1365
        %s1368 = sadd.s32 %s17, 3
        %s1369 = smul.u32 %s1368, 4
        %s1370 = scalar_lea.vmem %s206, %s1369 [#allocation6]
        %v1371 = vld [vmem:[%s1370] sm:$0xf]
        %v1372 = vunpack.c.l.bf16 %v1371
        %v1373 = vld [vmem:[#allocation3] sm:$0x3]
        %v1374 = vpack.c.bf16 %v1373, %v1373
        %v1375 = vld [vmem:[#allocation2] sm:$0xff]
        %v1376 = vld [vmem:[#allocation2 + $0x8] sm:$0xff]
        %v1377 = vld [vmem:[#allocation2 + $0x10] sm:$0xff]
        %v1378 = vld [vmem:[#allocation2 + $0x18] sm:$0xff]
        %v1379 = vld [vmem:[#allocation2 + $0x20] sm:$0xff]
        %v1380 = vld [vmem:[#allocation2 + $0x28] sm:$0xff]
        %v1381 = vld [vmem:[#allocation2 + $0x30] sm:$0xff]
        %v1382 = vld [vmem:[#allocation2 + $0x38] sm:$0xff]
        %v1383 = vld [vmem:[#allocation2 + $0x40] sm:$0xff]
        %v1384 = vld [vmem:[#allocation2 + $0x48] sm:$0xff]
        %v1385 = vld [vmem:[#allocation2 + $0x50] sm:$0xff]
        %v1386 = vld [vmem:[#allocation2 + $0x58] sm:$0xff]
        %v1387 = vld [vmem:[#allocation2 + $0x60] sm:$0xff]
        %v1388 = vld [vmem:[#allocation2 + $0x68] sm:$0xff]
        %v1389 = vld [vmem:[#allocation2 + $0x70] sm:$0xff]
        %v1390 = vld [vmem:[#allocation2 + $0x78] sm:$0xff]
        %v1391 = vld [vmem:[#allocation2 + $0x80] sm:$0xff]
        %v1392 = vld [vmem:[#allocation2 + $0x88] sm:$0xff]
        %v1393 = vld [vmem:[#allocation2 + $0x90] sm:$0xff]
        %v1394 = vld [vmem:[#allocation2 + $0x98] sm:$0xff]
        %v1395 = vld [vmem:[#allocation2 + $0xa0] sm:$0xff]
        %v1396 = vld [vmem:[#allocation2 + $0xa8] sm:$0xff]
        %v1397 = vld [vmem:[#allocation2 + $0xb0] sm:$0xff]
        %v1398 = vld [vmem:[#allocation2 + $0xb8] sm:$0xff]
        %v1399 = vld [vmem:[#allocation2 + $0xc0] sm:$0xff]
        %v1400 = vld [vmem:[#allocation2 + $0xc8] sm:$0xff]
        %v1401 = vld [vmem:[#allocation2 + $0xd0] sm:$0xff]
        %v1402 = vld [vmem:[#allocation2 + $0xd8] sm:$0xff]
        %v1403 = vld [vmem:[#allocation2 + $0xe0] sm:$0xff]
        %v1404 = vld [vmem:[#allocation2 + $0xe8] sm:$0xff]
        %v1405 = vld [vmem:[#allocation2 + $0xf0] sm:$0xff]
        %v1406 = vld [vmem:[#allocation2 + $0xf8] sm:$0xff]
        %v1439 = vunpack.c.l.b16 %v1375
        %v1440 = vunpack.c.h.b16 %v1375
        %v1441 = vunpack.c.l.b16 %v1376
        %v1442 = vunpack.c.h.b16 %v1376
        %v1443 = vunpack.c.l.b16 %v1377
        %v1444 = vunpack.c.h.b16 %v1377
        %v1445 = vunpack.c.l.b16 %v1378
        %v1446 = vunpack.c.h.b16 %v1378
        %v1447 = vunpack.c.l.b16 %v1379
        %v1448 = vunpack.c.h.b16 %v1379
        %v1449 = vunpack.c.l.b16 %v1380
        %v1450 = vunpack.c.h.b16 %v1380
        %v1451 = vunpack.c.l.b16 %v1381
        %v1452 = vunpack.c.h.b16 %v1381
        %v1453 = vunpack.c.l.b16 %v1382
        %v1454 = vunpack.c.h.b16 %v1382
        %v1455 = vunpack.c.l.b16 %v1383
        %v1456 = vunpack.c.h.b16 %v1383
        %v1457 = vunpack.c.l.b16 %v1384
        %v1458 = vunpack.c.h.b16 %v1384
        %v1459 = vunpack.c.l.b16 %v1385
        %v1460 = vunpack.c.h.b16 %v1385
        %v1461 = vunpack.c.l.b16 %v1386
        %v1462 = vunpack.c.h.b16 %v1386
        %v1463 = vunpack.c.l.b16 %v1387
        %v1464 = vunpack.c.h.b16 %v1387
        %v1465 = vunpack.c.l.b16 %v1388
        %v1466 = vunpack.c.h.b16 %v1388
        %v1467 = vunpack.c.l.b16 %v1389
        %v1468 = vunpack.c.h.b16 %v1389
        %v1469 = vunpack.c.l.b16 %v1390
        %v1470 = vunpack.c.h.b16 %v1390
        %v1471 = vunpack.c.l.b16 %v1391
        %v1472 = vunpack.c.h.b16 %v1391
        %v1473 = vunpack.c.l.b16 %v1392
        %v1474 = vunpack.c.h.b16 %v1392
        %v1475 = vunpack.c.l.b16 %v1393
        %v1476 = vunpack.c.h.b16 %v1393
        %v1477 = vunpack.c.l.b16 %v1394
        %v1478 = vunpack.c.h.b16 %v1394
        %v1479 = vunpack.c.l.b16 %v1395
        %v1480 = vunpack.c.h.b16 %v1395
        %v1481 = vunpack.c.l.b16 %v1396
        %v1482 = vunpack.c.h.b16 %v1396
        %v1483 = vunpack.c.l.b16 %v1397
        %v1484 = vunpack.c.h.b16 %v1397
        %v1485 = vunpack.c.l.b16 %v1398
        %v1486 = vunpack.c.h.b16 %v1398
        %v1487 = vunpack.c.l.b16 %v1399
        %v1488 = vunpack.c.h.b16 %v1399
        %v1489 = vunpack.c.l.b16 %v1400
        %v1490 = vunpack.c.h.b16 %v1400
        %v1491 = vunpack.c.l.b16 %v1401
        %v1492 = vunpack.c.h.b16 %v1401
        %v1493 = vunpack.c.l.b16 %v1402
        %v1494 = vunpack.c.h.b16 %v1402
        %v1495 = vunpack.c.l.b16 %v1403
        %v1496 = vunpack.c.h.b16 %v1403
        %v1497 = vunpack.c.l.b16 %v1404
        %v1498 = vunpack.c.h.b16 %v1404
        %v1499 = vunpack.c.l.b16 %v1405
        %v1500 = vunpack.c.h.b16 %v1405
        %v1501 = vunpack.c.l.b16 %v1406
        %v1502 = vunpack.c.h.b16 %v1406
        %v1503 = vpack.c.b16 %v1443, %v1439
        %v1504 = vpack.c.b16 %v1444, %v1440
        %v1505 = vpack.c.b16 %v1445, %v1441
        %v1506 = vpack.c.b16 %v1446, %v1442
        %v1507 = vpack.c.b16 %v1451, %v1447
        %v1508 = vpack.c.b16 %v1452, %v1448
        %v1509 = vpack.c.b16 %v1453, %v1449
        %v1510 = vpack.c.b16 %v1454, %v1450
        %v1511 = vpack.c.b16 %v1459, %v1455
        %v1512 = vpack.c.b16 %v1460, %v1456
        %v1513 = vpack.c.b16 %v1461, %v1457
        %v1514 = vpack.c.b16 %v1462, %v1458
        %v1515 = vpack.c.b16 %v1467, %v1463
        %v1516 = vpack.c.b16 %v1468, %v1464
        %v1517 = vpack.c.b16 %v1469, %v1465
        %v1518 = vpack.c.b16 %v1470, %v1466
        %v1519 = vpack.c.b16 %v1475, %v1471
        %v1520 = vpack.c.b16 %v1476, %v1472
        %v1521 = vpack.c.b16 %v1477, %v1473
        %v1522 = vpack.c.b16 %v1478, %v1474
        %v1523 = vpack.c.b16 %v1483, %v1479
        %v1524 = vpack.c.b16 %v1484, %v1480
        %v1525 = vpack.c.b16 %v1485, %v1481
        %v1526 = vpack.c.b16 %v1486, %v1482
        %v1527 = vpack.c.b16 %v1491, %v1487
        %v1528 = vpack.c.b16 %v1492, %v1488
        %v1529 = vpack.c.b16 %v1493, %v1489
        %v1530 = vpack.c.b16 %v1494, %v1490
        %v1531 = vpack.c.b16 %v1499, %v1495
        %v1532 = vpack.c.b16 %v1500, %v1496
        %v1533 = vpack.c.b16 %v1501, %v1497
        %v1534 = vpack.c.b16 %v1502, %v1498
        %1567 = vmatpush.bf16.msra.mxu0 %v1531
        %1568 = vmatpush.bf16.msra.mxu0 %v1527
        %1569 = vmatpush.bf16.msra.mxu0 %v1523
        %1570 = vmatpush.bf16.msra.mxu0 %v1519
        %1571 = vmatpush.bf16.msra.mxu0 %v1515
        %1572 = vmatpush.bf16.msra.mxu0 %v1511
        %1573 = vmatpush.bf16.msra.mxu0 %v1507
        %1574 = vmatpush.bf16.msra.mxu0 %v1503
        %1575 = vmatmul.bf16.gmra.mxu0 %v1374
        %v1576 = vpop.f32.mrf.mxu0
        %v1577 = vadd.f32 0.0, %v1576
        %v1578 = vpop.f32.mrf.mxu0
        %1579 = vdwg.mxu0
        %1580 = vmatpush.bf16.msra.mxu0 %v1532
        %1581 = vmatpush.bf16.msra.mxu0 %v1528
        %1582 = vmatpush.bf16.msra.mxu0 %v1524
        %1583 = vmatpush.bf16.msra.mxu0 %v1520
        %1584 = vmatpush.bf16.msra.mxu0 %v1516
        %1585 = vmatpush.bf16.msra.mxu0 %v1512
        %1586 = vmatpush.bf16.msra.mxu0 %v1508
        %1587 = vmatpush.bf16.msra.mxu0 %v1504
        %1588 = vmatmul.bf16.gmra.mxu0 %v1374
        %v1589 = vpop.f32.mrf.mxu0
        %v1590 = vadd.f32 0.0, %v1589
        %v1591 = vpop.f32.mrf.mxu0
        %1592 = vdwg.mxu0
        %1593 = vmatpush.bf16.msra.mxu0 %v1533
        %1594 = vmatpush.bf16.msra.mxu0 %v1529
        %1595 = vmatpush.bf16.msra.mxu0 %v1525
        %1596 = vmatpush.bf16.msra.mxu0 %v1521
        %1597 = vmatpush.bf16.msra.mxu0 %v1517
        %1598 = vmatpush.bf16.msra.mxu0 %v1513
        %1599 = vmatpush.bf16.msra.mxu0 %v1509
        %1600 = vmatpush.bf16.msra.mxu0 %v1505
        %1601 = vmatmul.bf16.gmra.mxu0 %v1374
        %v1602 = vpop.f32.mrf.mxu0
        %v1603 = vadd.f32 0.0, %v1602
        %v1604 = vpop.f32.mrf.mxu0
        %1605 = vdwg.mxu0
        %1606 = vmatpush.bf16.msra.mxu0 %v1534
        %1607 = vmatpush.bf16.msra.mxu0 %v1530
        %1608 = vmatpush.bf16.msra.mxu0 %v1526
        %1609 = vmatpush.bf16.msra.mxu0 %v1522
        %1610 = vmatpush.bf16.msra.mxu0 %v1518
        %1611 = vmatpush.bf16.msra.mxu0 %v1514
        %1612 = vmatpush.bf16.msra.mxu0 %v1510
        %1613 = vmatpush.bf16.msra.mxu0 %v1506
        %1614 = vmatmul.bf16.gmra.mxu0 %v1374
        %v1615 = vpop.f32.mrf.mxu0
        %v1616 = vadd.f32 0.0, %v1615
        %v1617 = vpop.f32.mrf.mxu0
        %1618 = vdwg.mxu0
        %v1623 = vrot.slane %v1590, 6
        %v1624 = vrot.slane %v1603, 4
        %v1625 = vrot.slane %v1616, 2
        %v1626 = vsel %vm604, %v1577, %v1623
        %v1627 = vsel %vm606, %v1624, %v1625
        %v1628 = vsel %vm608, %v1626, %v1627
        %v1630 = vadd.f32 %v1372, %v1628
        %v1631 = vxor.u32 %v1630, 2147483648
        %v1632 = vmul.f32 %v1631, 1.442695
        %v1633 = vpow.pop %v1632
        %v1634 = vadd.f32 %v1633, 1.0
        %v1635 = vrcp.pop %v1634
        %v1636 = vmul.f32 %v1634, %v1635
        %v1637 = vsub.f32 1.0, %v1636
        %v1638 = vmul.f32 %v1635, %v1637
        %v1639 = vadd.f32 %v1635, %v1638
        %vm1640 = vweird.f32 %v1634
        %vm1641 = vweird.f32 %v1635
        %vm1642 = vmor %vm1640, %vm1641
        %v1643 = vsel %vm1642, %v1635, %v1639
        %v1644 = vand.u32 2147483647, %v1634
        %vm1645 = vcmp.eq.f32.partialorder %v1644, 8.507059e+37
        %v1646 = vand.u32 %v1634, 2147483648
        %v1647 = vor.u32 1.1754944e-38, %v1646
        %v1648 = vsel %vm1645, %v1647, %v1643
        %v1649 = vmul.f32 1.0, %v1648
        %v1651 = vrot.slane %v1630, 2
        %v1653 = vxor.u32 %v1651, 2147483648
        %v1654 = vmul.f32 %v1653, 1.442695
        %v1655 = vpow.pop %v1654
        %v1656 = vadd.f32 %v1655, 1.0
        %v1657 = vrcp.pop %v1656
        %v1658 = vmul.f32 %v1656, %v1657
        %v1659 = vsub.f32 1.0, %v1658
        %v1660 = vmul.f32 %v1657, %v1659
        %v1661 = vadd.f32 %v1657, %v1660
        %vm1662 = vweird.f32 %v1656
        %vm1663 = vweird.f32 %v1657
        %vm1664 = vmor %vm1662, %vm1663
        %v1665 = vsel %vm1664, %v1657, %v1661
        %v1666 = vand.u32 2147483647, %v1656
        %vm1667 = vcmp.eq.f32.partialorder %v1666, 8.507059e+37
        %v1668 = vand.u32 %v1656, 2147483648
        %v1669 = vor.u32 1.1754944e-38, %v1668
        %v1670 = vsel %vm1667, %v1669, %v1665
        %v1671 = vmul.f32 1.0, %v1670
        %v1672 = vrot.slane %v1630, 4
        %v1674 = vtanh.pop %v1672
        %v1675 = vrot.slane %v1630, 6
        %v1677 = vxor.u32 %v1675, 2147483648
        %v1678 = vmul.f32 %v1677, 1.442695
        %v1679 = vpow.pop %v1678
        %v1680 = vadd.f32 %v1679, 1.0
        %v1681 = vrcp.pop %v1680
        %v1682 = vmul.f32 %v1680, %v1681
        %v1683 = vsub.f32 1.0, %v1682
        %v1684 = vmul.f32 %v1681, %v1683
        %v1685 = vadd.f32 %v1681, %v1684
        %vm1686 = vweird.f32 %v1680
        %vm1687 = vweird.f32 %v1681
        %vm1688 = vmor %vm1686, %vm1687
        %v1689 = vsel %vm1688, %v1681, %v1685
        %v1690 = vand.u32 2147483647, %v1680
        %vm1691 = vcmp.eq.f32.partialorder %v1690, 8.507059e+37
        %v1692 = vand.u32 %v1680, 2147483648
        %v1693 = vor.u32 1.1754944e-38, %v1692
        %v1694 = vsel %vm1691, %v1693, %v1689
        %v1695 = vmul.f32 1.0, %v1694
        %v1696 = vld [vmem:[#allocation4] sm:$0x3]
        %v1697 = vmul.f32 %v1671, %v1696
        %v1698 = vmul.f32 %v1649, %v1674
        %v1699 = vadd.f32 %v1697, %v1698
        %v1700 = vtanh.pop %v1699
        %v1701 = vmul.f32 %v1695, %v1700
        %1702 = vst [vmem:[#allocation4] sm:$0x3] %v1699
        %1703 = vst [vmem:[#allocation3] sm:$0x3] %v1701
        %v1704 = vpack.c.bf16 %v1701, %v1701
        %s1705 = scalar_lea.vmem %s247, %s1368
        %1706 = vst [vmem:[%s1705] sm:$0x1] %v1704
        %s1707 = ssub.s32 4, %s17
        %s1708 = smul.u32 %s1707, 4
        %s1709 = scalar_lea.vmem %s206, %s1708 [#allocation6]
        %v1710 = vld [vmem:[%s1709] sm:$0xf]
        %v1711 = vunpack.c.l.bf16 %v1710
        %v1712 = vld [vmem:[#allocation3] sm:$0x3]
        %v1713 = vpack.c.bf16 %v1712, %v1712
        %v1714 = vld [vmem:[#allocation2] sm:$0xff]
        %v1715 = vld [vmem:[#allocation2 + $0x8] sm:$0xff]
        %v1716 = vld [vmem:[#allocation2 + $0x10] sm:$0xff]
        %v1717 = vld [vmem:[#allocation2 + $0x18] sm:$0xff]
        %v1718 = vld [vmem:[#allocation2 + $0x20] sm:$0xff]
        %v1719 = vld [vmem:[#allocation2 + $0x28] sm:$0xff]
        %v1720 = vld [vmem:[#allocation2 + $0x30] sm:$0xff]
        %v1721 = vld [vmem:[#allocation2 + $0x38] sm:$0xff]
        %v1722 = vld [vmem:[#allocation2 + $0x40] sm:$0xff]
        %v1723 = vld [vmem:[#allocation2 + $0x48] sm:$0xff]
        %v1724 = vld [vmem:[#allocation2 + $0x50] sm:$0xff]
        %v1725 = vld [vmem:[#allocation2 + $0x58] sm:$0xff]
        %v1726 = vld [vmem:[#allocation2 + $0x60] sm:$0xff]
        %v1727 = vld [vmem:[#allocation2 + $0x68] sm:$0xff]
        %v1728 = vld [vmem:[#allocation2 + $0x70] sm:$0xff]
        %v1729 = vld [vmem:[#allocation2 + $0x78] sm:$0xff]
        %v1730 = vld [vmem:[#allocation2 + $0x80] sm:$0xff]
        %v1731 = vld [vmem:[#allocation2 + $0x88] sm:$0xff]
        %v1732 = vld [vmem:[#allocation2 + $0x90] sm:$0xff]
        %v1733 = vld [vmem:[#allocation2 + $0x98] sm:$0xff]
        %v1734 = vld [vmem:[#allocation2 + $0xa0] sm:$0xff]
        %v1735 = vld [vmem:[#allocation2 + $0xa8] sm:$0xff]
        %v1736 = vld [vmem:[#allocation2 + $0xb0] sm:$0xff]
        %v1737 = vld [vmem:[#allocation2 + $0xb8] sm:$0xff]
        %v1738 = vld [vmem:[#allocation2 + $0xc0] sm:$0xff]
        %v1739 = vld [vmem:[#allocation2 + $0xc8] sm:$0xff]
        %v1740 = vld [vmem:[#allocation2 + $0xd0] sm:$0xff]
        %v1741 = vld [vmem:[#allocation2 + $0xd8] sm:$0xff]
        %v1742 = vld [vmem:[#allocation2 + $0xe0] sm:$0xff]
        %v1743 = vld [vmem:[#allocation2 + $0xe8] sm:$0xff]
        %v1744 = vld [vmem:[#allocation2 + $0xf0] sm:$0xff]
        %v1745 = vld [vmem:[#allocation2 + $0xf8] sm:$0xff]
        %v1778 = vunpack.c.l.b16 %v1714
        %v1779 = vunpack.c.h.b16 %v1714
        %v1780 = vunpack.c.l.b16 %v1715
        %v1781 = vunpack.c.h.b16 %v1715
        %v1782 = vunpack.c.l.b16 %v1716
        %v1783 = vunpack.c.h.b16 %v1716
        %v1784 = vunpack.c.l.b16 %v1717
        %v1785 = vunpack.c.h.b16 %v1717
        %v1786 = vunpack.c.l.b16 %v1718
        %v1787 = vunpack.c.h.b16 %v1718
        %v1788 = vunpack.c.l.b16 %v1719
        %v1789 = vunpack.c.h.b16 %v1719
        %v1790 = vunpack.c.l.b16 %v1720
        %v1791 = vunpack.c.h.b16 %v1720
        %v1792 = vunpack.c.l.b16 %v1721
        %v1793 = vunpack.c.h.b16 %v1721
        %v1794 = vunpack.c.l.b16 %v1722
        %v1795 = vunpack.c.h.b16 %v1722
        %v1796 = vunpack.c.l.b16 %v1723
        %v1797 = vunpack.c.h.b16 %v1723
        %v1798 = vunpack.c.l.b16 %v1724
        %v1799 = vunpack.c.h.b16 %v1724
        %v1800 = vunpack.c.l.b16 %v1725
        %v1801 = vunpack.c.h.b16 %v1725
        %v1802 = vunpack.c.l.b16 %v1726
        %v1803 = vunpack.c.h.b16 %v1726
        %v1804 = vunpack.c.l.b16 %v1727
        %v1805 = vunpack.c.h.b16 %v1727
        %v1806 = vunpack.c.l.b16 %v1728
        %v1807 = vunpack.c.h.b16 %v1728
        %v1808 = vunpack.c.l.b16 %v1729
        %v1809 = vunpack.c.h.b16 %v1729
        %v1810 = vunpack.c.l.b16 %v1730
        %v1811 = vunpack.c.h.b16 %v1730
        %v1812 = vunpack.c.l.b16 %v1731
        %v1813 = vunpack.c.h.b16 %v1731
        %v1814 = vunpack.c.l.b16 %v1732
        %v1815 = vunpack.c.h.b16 %v1732
        %v1816 = vunpack.c.l.b16 %v1733
        %v1817 = vunpack.c.h.b16 %v1733
        %v1818 = vunpack.c.l.b16 %v1734
        %v1819 = vunpack.c.h.b16 %v1734
        %v1820 = vunpack.c.l.b16 %v1735
        %v1821 = vunpack.c.h.b16 %v1735
        %v1822 = vunpack.c.l.b16 %v1736
        %v1823 = vunpack.c.h.b16 %v1736
        %v1824 = vunpack.c.l.b16 %v1737
        %v1825 = vunpack.c.h.b16 %v1737
        %v1826 = vunpack.c.l.b16 %v1738
        %v1827 = vunpack.c.h.b16 %v1738
        %v1828 = vunpack.c.l.b16 %v1739
        %v1829 = vunpack.c.h.b16 %v1739
        %v1830 = vunpack.c.l.b16 %v1740
        %v1831 = vunpack.c.h.b16 %v1740
        %v1832 = vunpack.c.l.b16 %v1741
        %v1833 = vunpack.c.h.b16 %v1741
        %v1834 = vunpack.c.l.b16 %v1742
        %v1835 = vunpack.c.h.b16 %v1742
        %v1836 = vunpack.c.l.b16 %v1743
        %v1837 = vunpack.c.h.b16 %v1743
        %v1838 = vunpack.c.l.b16 %v1744
        %v1839 = vunpack.c.h.b16 %v1744
        %v1840 = vunpack.c.l.b16 %v1745
        %v1841 = vunpack.c.h.b16 %v1745
        %v1842 = vpack.c.b16 %v1782, %v1778
        %v1843 = vpack.c.b16 %v1783, %v1779
        %v1844 = vpack.c.b16 %v1784, %v1780
        %v1845 = vpack.c.b16 %v1785, %v1781
        %v1846 = vpack.c.b16 %v1790, %v1786
        %v1847 = vpack.c.b16 %v1791, %v1787
        %v1848 = vpack.c.b16 %v1792, %v1788
        %v1849 = vpack.c.b16 %v1793, %v1789
        %v1850 = vpack.c.b16 %v1798, %v1794
        %v1851 = vpack.c.b16 %v1799, %v1795
        %v1852 = vpack.c.b16 %v1800, %v1796
        %v1853 = vpack.c.b16 %v1801, %v1797
        %v1854 = vpack.c.b16 %v1806, %v1802
        %v1855 = vpack.c.b16 %v1807, %v1803
        %v1856 = vpack.c.b16 %v1808, %v1804
        %v1857 = vpack.c.b16 %v1809, %v1805
        %v1858 = vpack.c.b16 %v1814, %v1810
        %v1859 = vpack.c.b16 %v1815, %v1811
        %v1860 = vpack.c.b16 %v1816, %v1812
        %v1861 = vpack.c.b16 %v1817, %v1813
        %v1862 = vpack.c.b16 %v1822, %v1818
        %v1863 = vpack.c.b16 %v1823, %v1819
        %v1864 = vpack.c.b16 %v1824, %v1820
        %v1865 = vpack.c.b16 %v1825, %v1821
        %v1866 = vpack.c.b16 %v1830, %v1826
        %v1867 = vpack.c.b16 %v1831, %v1827
        %v1868 = vpack.c.b16 %v1832, %v1828
        %v1869 = vpack.c.b16 %v1833, %v1829
        %v1870 = vpack.c.b16 %v1838, %v1834
        %v1871 = vpack.c.b16 %v1839, %v1835
        %v1872 = vpack.c.b16 %v1840, %v1836
        %v1873 = vpack.c.b16 %v1841, %v1837
        %1906 = vmatpush.bf16.msra.mxu0 %v1870
        %1907 = vmatpush.bf16.msra.mxu0 %v1866
        %1908 = vmatpush.bf16.msra.mxu0 %v1862
        %1909 = vmatpush.bf16.msra.mxu0 %v1858
        %1910 = vmatpush.bf16.msra.mxu0 %v1854
        %1911 = vmatpush.bf16.msra.mxu0 %v1850
        %1912 = vmatpush.bf16.msra.mxu0 %v1846
        %1913 = vmatpush.bf16.msra.mxu0 %v1842
        %1914 = vmatmul.bf16.gmra.mxu0 %v1713
        %v1915 = vpop.f32.mrf.mxu0
        %v1916 = vadd.f32 0.0, %v1915
        %v1917 = vpop.f32.mrf.mxu0
        %1918 = vdwg.mxu0
        %1919 = vmatpush.bf16.msra.mxu0 %v1871
        %1920 = vmatpush.bf16.msra.mxu0 %v1867
        %1921 = vmatpush.bf16.msra.mxu0 %v1863
        %1922 = vmatpush.bf16.msra.mxu0 %v1859
        %1923 = vmatpush.bf16.msra.mxu0 %v1855
        %1924 = vmatpush.bf16.msra.mxu0 %v1851
        %1925 = vmatpush.bf16.msra.mxu0 %v1847
        %1926 = vmatpush.bf16.msra.mxu0 %v1843
        %1927 = vmatmul.bf16.gmra.mxu0 %v1713
        %v1928 = vpop.f32.mrf.mxu0
        %v1929 = vadd.f32 0.0, %v1928
        %v1930 = vpop.f32.mrf.mxu0
        %1931 = vdwg.mxu0
        %1932 = vmatpush.bf16.msra.mxu0 %v1872
        %1933 = vmatpush.bf16.msra.mxu0 %v1868
        %1934 = vmatpush.bf16.msra.mxu0 %v1864
        %1935 = vmatpush.bf16.msra.mxu0 %v1860
        %1936 = vmatpush.bf16.msra.mxu0 %v1856
        %1937 = vmatpush.bf16.msra.mxu0 %v1852
        %1938 = vmatpush.bf16.msra.mxu0 %v1848
        %1939 = vmatpush.bf16.msra.mxu0 %v1844
        %1940 = vmatmul.bf16.gmra.mxu0 %v1713
        %v1941 = vpop.f32.mrf.mxu0
        %v1942 = vadd.f32 0.0, %v1941
        %v1943 = vpop.f32.mrf.mxu0
        %1944 = vdwg.mxu0
        %1945 = vmatpush.bf16.msra.mxu0 %v1873
        %1946 = vmatpush.bf16.msra.mxu0 %v1869
        %1947 = vmatpush.bf16.msra.mxu0 %v1865
        %1948 = vmatpush.bf16.msra.mxu0 %v1861
        %1949 = vmatpush.bf16.msra.mxu0 %v1857
        %1950 = vmatpush.bf16.msra.mxu0 %v1853
        %1951 = vmatpush.bf16.msra.mxu0 %v1849
        %1952 = vmatpush.bf16.msra.mxu0 %v1845
        %1953 = vmatmul.bf16.gmra.mxu0 %v1713
        %v1954 = vpop.f32.mrf.mxu0
        %v1955 = vadd.f32 0.0, %v1954
        %v1956 = vpop.f32.mrf.mxu0
        %1957 = vdwg.mxu0
        %v1962 = vrot.slane %v1929, 6
        %v1963 = vrot.slane %v1942, 4
        %v1964 = vrot.slane %v1955, 2
        %v1965 = vsel %vm604, %v1916, %v1962
        %v1966 = vsel %vm606, %v1963, %v1964
        %v1967 = vsel %vm608, %v1965, %v1966
        %v1969 = vadd.f32 %v1711, %v1967
        %v1970 = vxor.u32 %v1969, 2147483648
        %v1971 = vmul.f32 %v1970, 1.442695
        %v1972 = vpow.pop %v1971
        %v1973 = vadd.f32 %v1972, 1.0
        %v1974 = vrcp.pop %v1973
        %v1975 = vmul.f32 %v1973, %v1974
        %v1976 = vsub.f32 1.0, %v1975
        %v1977 = vmul.f32 %v1974, %v1976
        %v1978 = vadd.f32 %v1974, %v1977
        %vm1979 = vweird.f32 %v1973
        %vm1980 = vweird.f32 %v1974
        %vm1981 = vmor %vm1979, %vm1980
        %v1982 = vsel %vm1981, %v1974, %v1978
        %v1983 = vand.u32 2147483647, %v1973
        %vm1984 = vcmp.eq.f32.partialorder %v1983, 8.507059e+37
        %v1985 = vand.u32 %v1973, 2147483648
        %v1986 = vor.u32 1.1754944e-38, %v1985
        %v1987 = vsel %vm1984, %v1986, %v1982
        %v1988 = vmul.f32 1.0, %v1987
        %v1990 = vrot.slane %v1969, 2
        %v1992 = vxor.u32 %v1990, 2147483648
        %v1993 = vmul.f32 %v1992, 1.442695
        %v1994 = vpow.pop %v1993
        %v1995 = vadd.f32 %v1994, 1.0
        %v1996 = vrcp.pop %v1995
        %v1997 = vmul.f32 %v1995, %v1996
        %v1998 = vsub.f32 1.0, %v1997
        %v1999 = vmul.f32 %v1996, %v1998
        %v2000 = vadd.f32 %v1996, %v1999
        %vm2001 = vweird.f32 %v1995
        %vm2002 = vweird.f32 %v1996
        %vm2003 = vmor %vm2001, %vm2002
        %v2004 = vsel %vm2003, %v1996, %v2000
        %v2005 = vand.u32 2147483647, %v1995
        %vm2006 = vcmp.eq.f32.partialorder %v2005, 8.507059e+37
        %v2007 = vand.u32 %v1995, 2147483648
        %v2008 = vor.u32 1.1754944e-38, %v2007
        %v2009 = vsel %vm2006, %v2008, %v2004
        %v2010 = vmul.f32 1.0, %v2009
        %v2011 = vrot.slane %v1969, 4
        %v2013 = vtanh.pop %v2011
        %v2014 = vrot.slane %v1969, 6
        %v2016 = vxor.u32 %v2014, 2147483648
        %v2017 = vmul.f32 %v2016, 1.442695
        %v2018 = vpow.pop %v2017
        %v2019 = vadd.f32 %v2018, 1.0
        %v2020 = vrcp.pop %v2019
        %v2021 = vmul.f32 %v2019, %v2020
        %v2022 = vsub.f32 1.0, %v2021
        %v2023 = vmul.f32 %v2020, %v2022
        %v2024 = vadd.f32 %v2020, %v2023
        %vm2025 = vweird.f32 %v2019
        %vm2026 = vweird.f32 %v2020
        %vm2027 = vmor %vm2025, %vm2026
        %v2028 = vsel %vm2027, %v2020, %v2024
        %v2029 = vand.u32 2147483647, %v2019
        %vm2030 = vcmp.eq.f32.partialorder %v2029, 8.507059e+37
        %v2031 = vand.u32 %v2019, 2147483648
        %v2032 = vor.u32 1.1754944e-38, %v2031
        %v2033 = vsel %vm2030, %v2032, %v2028
        %v2034 = vmul.f32 1.0, %v2033
        %v2035 = vld [vmem:[#allocation4] sm:$0x3]
        %v2036 = vmul.f32 %v2010, %v2035
        %v2037 = vmul.f32 %v1988, %v2013
        %v2038 = vadd.f32 %v2036, %v2037
        %v2039 = vtanh.pop %v2038
        %v2040 = vmul.f32 %v2034, %v2039
        %2041 = vst [vmem:[#allocation4] sm:$0x3] %v2038
        %2042 = vst [vmem:[#allocation3] sm:$0x3] %v2040
        %v2043 = vpack.c.bf16 %v2040, %v2040
        %s2044 = scalar_lea.vmem %s247, %s1707
        %2045 = vst [vmem:[%s2044] sm:$0x1] %v2043
        %s2046 = smul.u32 %s17, 4294967293
        %s2047 = sadd.s32 %s2046, 5
        %s2048 = smul.u32 %s2047, 4
        %s2049 = scalar_lea.vmem %s206, %s2048 [#allocation6]
        %v2050 = vld [vmem:[%s2049] sm:$0xf]
        %v2051 = vunpack.c.l.bf16 %v2050
        %v2052 = vld [vmem:[#allocation3] sm:$0x3]
        %v2053 = vpack.c.bf16 %v2052, %v2052
        %v2054 = vld [vmem:[#allocation2] sm:$0xff]
        %v2055 = vld [vmem:[#allocation2 + $0x8] sm:$0xff]
        %v2056 = vld [vmem:[#allocation2 + $0x10] sm:$0xff]
        %v2057 = vld [vmem:[#allocation2 + $0x18] sm:$0xff]
        %v2058 = vld [vmem:[#allocation2 + $0x20] sm:$0xff]
        %v2059 = vld [vmem:[#allocation2 + $0x28] sm:$0xff]
        %v2060 = vld [vmem:[#allocation2 + $0x30] sm:$0xff]
        %v2061 = vld [vmem:[#allocation2 + $0x38] sm:$0xff]
        %v2062 = vld [vmem:[#allocation2 + $0x40] sm:$0xff]
        %v2063 = vld [vmem:[#allocation2 + $0x48] sm:$0xff]
        %v2064 = vld [vmem:[#allocation2 + $0x50] sm:$0xff]
        %v2065 = vld [vmem:[#allocation2 + $0x58] sm:$0xff]
        %v2066 = vld [vmem:[#allocation2 + $0x60] sm:$0xff]
        %v2067 = vld [vmem:[#allocation2 + $0x68] sm:$0xff]
        %v2068 = vld [vmem:[#allocation2 + $0x70] sm:$0xff]
        %v2069 = vld [vmem:[#allocation2 + $0x78] sm:$0xff]
        %v2070 = vld [vmem:[#allocation2 + $0x80] sm:$0xff]
        %v2071 = vld [vmem:[#allocation2 + $0x88] sm:$0xff]
        %v2072 = vld [vmem:[#allocation2 + $0x90] sm:$0xff]
        %v2073 = vld [vmem:[#allocation2 + $0x98] sm:$0xff]
        %v2074 = vld [vmem:[#allocation2 + $0xa0] sm:$0xff]
        %v2075 = vld [vmem:[#allocation2 + $0xa8] sm:$0xff]
        %v2076 = vld [vmem:[#allocation2 + $0xb0] sm:$0xff]
        %v2077 = vld [vmem:[#allocation2 + $0xb8] sm:$0xff]
        %v2078 = vld [vmem:[#allocation2 + $0xc0] sm:$0xff]
        %v2079 = vld [vmem:[#allocation2 + $0xc8] sm:$0xff]
        %v2080 = vld [vmem:[#allocation2 + $0xd0] sm:$0xff]
        %v2081 = vld [vmem:[#allocation2 + $0xd8] sm:$0xff]
        %v2082 = vld [vmem:[#allocation2 + $0xe0] sm:$0xff]
        %v2083 = vld [vmem:[#allocation2 + $0xe8] sm:$0xff]
        %v2084 = vld [vmem:[#allocation2 + $0xf0] sm:$0xff]
        %v2085 = vld [vmem:[#allocation2 + $0xf8] sm:$0xff]
        %v2118 = vunpack.c.l.b16 %v2054
        %v2119 = vunpack.c.h.b16 %v2054
        %v2120 = vunpack.c.l.b16 %v2055
        %v2121 = vunpack.c.h.b16 %v2055
        %v2122 = vunpack.c.l.b16 %v2056
        %v2123 = vunpack.c.h.b16 %v2056
        %v2124 = vunpack.c.l.b16 %v2057
        %v2125 = vunpack.c.h.b16 %v2057
        %v2126 = vunpack.c.l.b16 %v2058
        %v2127 = vunpack.c.h.b16 %v2058
        %v2128 = vunpack.c.l.b16 %v2059
        %v2129 = vunpack.c.h.b16 %v2059
        %v2130 = vunpack.c.l.b16 %v2060
        %v2131 = vunpack.c.h.b16 %v2060
        %v2132 = vunpack.c.l.b16 %v2061
        %v2133 = vunpack.c.h.b16 %v2061
        %v2134 = vunpack.c.l.b16 %v2062
        %v2135 = vunpack.c.h.b16 %v2062
        %v2136 = vunpack.c.l.b16 %v2063
        %v2137 = vunpack.c.h.b16 %v2063
        %v2138 = vunpack.c.l.b16 %v2064
        %v2139 = vunpack.c.h.b16 %v2064
        %v2140 = vunpack.c.l.b16 %v2065
        %v2141 = vunpack.c.h.b16 %v2065
        %v2142 = vunpack.c.l.b16 %v2066
        %v2143 = vunpack.c.h.b16 %v2066
        %v2144 = vunpack.c.l.b16 %v2067
        %v2145 = vunpack.c.h.b16 %v2067
        %v2146 = vunpack.c.l.b16 %v2068
        %v2147 = vunpack.c.h.b16 %v2068
        %v2148 = vunpack.c.l.b16 %v2069
        %v2149 = vunpack.c.h.b16 %v2069
        %v2150 = vunpack.c.l.b16 %v2070
        %v2151 = vunpack.c.h.b16 %v2070
        %v2152 = vunpack.c.l.b16 %v2071
        %v2153 = vunpack.c.h.b16 %v2071
        %v2154 = vunpack.c.l.b16 %v2072
        %v2155 = vunpack.c.h.b16 %v2072
        %v2156 = vunpack.c.l.b16 %v2073
        %v2157 = vunpack.c.h.b16 %v2073
        %v2158 = vunpack.c.l.b16 %v2074
        %v2159 = vunpack.c.h.b16 %v2074
        %v2160 = vunpack.c.l.b16 %v2075
        %v2161 = vunpack.c.h.b16 %v2075
        %v2162 = vunpack.c.l.b16 %v2076
        %v2163 = vunpack.c.h.b16 %v2076
        %v2164 = vunpack.c.l.b16 %v2077
        %v2165 = vunpack.c.h.b16 %v2077
        %v2166 = vunpack.c.l.b16 %v2078
        %v2167 = vunpack.c.h.b16 %v2078
        %v2168 = vunpack.c.l.b16 %v2079
        %v2169 = vunpack.c.h.b16 %v2079
        %v2170 = vunpack.c.l.b16 %v2080
        %v2171 = vunpack.c.h.b16 %v2080
        %v2172 = vunpack.c.l.b16 %v2081
        %v2173 = vunpack.c.h.b16 %v2081
        %v2174 = vunpack.c.l.b16 %v2082
        %v2175 = vunpack.c.h.b16 %v2082
        %v2176 = vunpack.c.l.b16 %v2083
        %v2177 = vunpack.c.h.b16 %v2083
        %v2178 = vunpack.c.l.b16 %v2084
        %v2179 = vunpack.c.h.b16 %v2084
        %v2180 = vunpack.c.l.b16 %v2085
        %v2181 = vunpack.c.h.b16 %v2085
        %v2182 = vpack.c.b16 %v2122, %v2118
        %v2183 = vpack.c.b16 %v2123, %v2119
        %v2184 = vpack.c.b16 %v2124, %v2120
        %v2185 = vpack.c.b16 %v2125, %v2121
        %v2186 = vpack.c.b16 %v2130, %v2126
        %v2187 = vpack.c.b16 %v2131, %v2127
        %v2188 = vpack.c.b16 %v2132, %v2128
        %v2189 = vpack.c.b16 %v2133, %v2129
        %v2190 = vpack.c.b16 %v2138, %v2134
        %v2191 = vpack.c.b16 %v2139, %v2135
        %v2192 = vpack.c.b16 %v2140, %v2136
        %v2193 = vpack.c.b16 %v2141, %v2137
        %v2194 = vpack.c.b16 %v2146, %v2142
        %v2195 = vpack.c.b16 %v2147, %v2143
        %v2196 = vpack.c.b16 %v2148, %v2144
        %v2197 = vpack.c.b16 %v2149, %v2145
        %v2198 = vpack.c.b16 %v2154, %v2150
        %v2199 = vpack.c.b16 %v2155, %v2151
        %v2200 = vpack.c.b16 %v2156, %v2152
        %v2201 = vpack.c.b16 %v2157, %v2153
        %v2202 = vpack.c.b16 %v2162, %v2158
        %v2203 = vpack.c.b16 %v2163, %v2159
        %v2204 = vpack.c.b16 %v2164, %v2160
        %v2205 = vpack.c.b16 %v2165, %v2161
        %v2206 = vpack.c.b16 %v2170, %v2166
        %v2207 = vpack.c.b16 %v2171, %v2167
        %v2208 = vpack.c.b16 %v2172, %v2168
        %v2209 = vpack.c.b16 %v2173, %v2169
        %v2210 = vpack.c.b16 %v2178, %v2174
        %v2211 = vpack.c.b16 %v2179, %v2175
        %v2212 = vpack.c.b16 %v2180, %v2176
        %v2213 = vpack.c.b16 %v2181, %v2177
        %2246 = vmatpush.bf16.msra.mxu0 %v2210
        %2247 = vmatpush.bf16.msra.mxu0 %v2206
        %2248 = vmatpush.bf16.msra.mxu0 %v2202
        %2249 = vmatpush.bf16.msra.mxu0 %v2198
        %2250 = vmatpush.bf16.msra.mxu0 %v2194
        %2251 = vmatpush.bf16.msra.mxu0 %v2190
        %2252 = vmatpush.bf16.msra.mxu0 %v2186
        %2253 = vmatpush.bf16.msra.mxu0 %v2182
        %2254 = vmatmul.bf16.gmra.mxu0 %v2053
        %v2255 = vpop.f32.mrf.mxu0
        %v2256 = vadd.f32 0.0, %v2255
        %v2257 = vpop.f32.mrf.mxu0
        %2258 = vdwg.mxu0
        %2259 = vmatpush.bf16.msra.mxu0 %v2211
        %2260 = vmatpush.bf16.msra.mxu0 %v2207
        %2261 = vmatpush.bf16.msra.mxu0 %v2203
        %2262 = vmatpush.bf16.msra.mxu0 %v2199
        %2263 = vmatpush.bf16.msra.mxu0 %v2195
        %2264 = vmatpush.bf16.msra.mxu0 %v2191
        %2265 = vmatpush.bf16.msra.mxu0 %v2187
        %2266 = vmatpush.bf16.msra.mxu0 %v2183
        %2267 = vmatmul.bf16.gmra.mxu0 %v2053
        %v2268 = vpop.f32.mrf.mxu0
        %v2269 = vadd.f32 0.0, %v2268
        %v2270 = vpop.f32.mrf.mxu0
        %2271 = vdwg.mxu0
        %2272 = vmatpush.bf16.msra.mxu0 %v2212
        %2273 = vmatpush.bf16.msra.mxu0 %v2208
        %2274 = vmatpush.bf16.msra.mxu0 %v2204
        %2275 = vmatpush.bf16.msra.mxu0 %v2200
        %2276 = vmatpush.bf16.msra.mxu0 %v2196
        %2277 = vmatpush.bf16.msra.mxu0 %v2192
        %2278 = vmatpush.bf16.msra.mxu0 %v2188
        %2279 = vmatpush.bf16.msra.mxu0 %v2184
        %2280 = vmatmul.bf16.gmra.mxu0 %v2053
        %v2281 = vpop.f32.mrf.mxu0
        %v2282 = vadd.f32 0.0, %v2281
        %v2283 = vpop.f32.mrf.mxu0
        %2284 = vdwg.mxu0
        %2285 = vmatpush.bf16.msra.mxu0 %v2213
        %2286 = vmatpush.bf16.msra.mxu0 %v2209
        %2287 = vmatpush.bf16.msra.mxu0 %v2205
        %2288 = vmatpush.bf16.msra.mxu0 %v2201
        %2289 = vmatpush.bf16.msra.mxu0 %v2197
        %2290 = vmatpush.bf16.msra.mxu0 %v2193
        %2291 = vmatpush.bf16.msra.mxu0 %v2189
        %2292 = vmatpush.bf16.msra.mxu0 %v2185
        %2293 = vmatmul.bf16.gmra.mxu0 %v2053
        %v2294 = vpop.f32.mrf.mxu0
        %v2295 = vadd.f32 0.0, %v2294
        %v2296 = vpop.f32.mrf.mxu0
        %2297 = vdwg.mxu0
        %v2302 = vrot.slane %v2269, 6
        %v2303 = vrot.slane %v2282, 4
        %v2304 = vrot.slane %v2295, 2
        %v2305 = vsel %vm604, %v2256, %v2302
        %v2306 = vsel %vm606, %v2303, %v2304
        %v2307 = vsel %vm608, %v2305, %v2306
        %v2309 = vadd.f32 %v2051, %v2307
        %v2310 = vxor.u32 %v2309, 2147483648
        %v2311 = vmul.f32 %v2310, 1.442695
        %v2312 = vpow.pop %v2311
        %v2313 = vadd.f32 %v2312, 1.0
        %v2314 = vrcp.pop %v2313
        %v2315 = vmul.f32 %v2313, %v2314
        %v2316 = vsub.f32 1.0, %v2315
        %v2317 = vmul.f32 %v2314, %v2316
        %v2318 = vadd.f32 %v2314, %v2317
        %vm2319 = vweird.f32 %v2313
        %vm2320 = vweird.f32 %v2314
        %vm2321 = vmor %vm2319, %vm2320
        %v2322 = vsel %vm2321, %v2314, %v2318
        %v2323 = vand.u32 2147483647, %v2313
        %vm2324 = vcmp.eq.f32.partialorder %v2323, 8.507059e+37
        %v2325 = vand.u32 %v2313, 2147483648
        %v2326 = vor.u32 1.1754944e-38, %v2325
        %v2327 = vsel %vm2324, %v2326, %v2322
        %v2328 = vmul.f32 1.0, %v2327
        %v2330 = vrot.slane %v2309, 2
        %v2332 = vxor.u32 %v2330, 2147483648
        %v2333 = vmul.f32 %v2332, 1.442695
        %v2334 = vpow.pop %v2333
        %v2335 = vadd.f32 %v2334, 1.0
        %v2336 = vrcp.pop %v2335
        %v2337 = vmul.f32 %v2335, %v2336
        %v2338 = vsub.f32 1.0, %v2337
        %v2339 = vmul.f32 %v2336, %v2338
        %v2340 = vadd.f32 %v2336, %v2339
        %vm2341 = vweird.f32 %v2335
        %vm2342 = vweird.f32 %v2336
        %vm2343 = vmor %vm2341, %vm2342
        %v2344 = vsel %vm2343, %v2336, %v2340
        %v2345 = vand.u32 2147483647, %v2335
        %vm2346 = vcmp.eq.f32.partialorder %v2345, 8.507059e+37
        %v2347 = vand.u32 %v2335, 2147483648
        %v2348 = vor.u32 1.1754944e-38, %v2347
        %v2349 = vsel %vm2346, %v2348, %v2344
        %v2350 = vmul.f32 1.0, %v2349
        %v2351 = vrot.slane %v2309, 4
        %v2353 = vtanh.pop %v2351
        %v2354 = vrot.slane %v2309, 6
        %v2356 = vxor.u32 %v2354, 2147483648
        %v2357 = vmul.f32 %v2356, 1.442695
        %v2358 = vpow.pop %v2357
        %v2359 = vadd.f32 %v2358, 1.0
        %v2360 = vrcp.pop %v2359
        %v2361 = vmul.f32 %v2359, %v2360
        %v2362 = vsub.f32 1.0, %v2361
        %v2363 = vmul.f32 %v2360, %v2362
        %v2364 = vadd.f32 %v2360, %v2363
        %vm2365 = vweird.f32 %v2359
        %vm2366 = vweird.f32 %v2360
        %vm2367 = vmor %vm2365, %vm2366
        %v2368 = vsel %vm2367, %v2360, %v2364
        %v2369 = vand.u32 2147483647, %v2359
        %vm2370 = vcmp.eq.f32.partialorder %v2369, 8.507059e+37
        %v2371 = vand.u32 %v2359, 2147483648
        %v2372 = vor.u32 1.1754944e-38, %v2371
        %v2373 = vsel %vm2370, %v2372, %v2368
        %v2374 = vmul.f32 1.0, %v2373
        %v2375 = vld [vmem:[#allocation4] sm:$0x3]
        %v2376 = vmul.f32 %v2350, %v2375
        %v2377 = vmul.f32 %v2328, %v2353
        %v2378 = vadd.f32 %v2376, %v2377
        %v2379 = vtanh.pop %v2378
        %v2380 = vmul.f32 %v2374, %v2379
        %2381 = vst [vmem:[#allocation4] sm:$0x3] %v2378
        %2382 = vst [vmem:[#allocation3] sm:$0x3] %v2380
        %v2383 = vpack.c.bf16 %v2380, %v2380
        %s2384 = scalar_lea.vmem %s247, %s2047
        %2385 = vst [vmem:[%s2384] sm:$0x1] %v2383
        %s2386 = smul.u32 %s17, 4294967291
        %s2387 = sadd.s32 %s2386, 6
        %s2388 = smul.u32 %s2387, 4
        %s2389 = scalar_lea.vmem %s206, %s2388 [#allocation6]
        %v2390 = vld [vmem:[%s2389] sm:$0xf]
        %v2391 = vunpack.c.l.bf16 %v2390
        %v2392 = vld [vmem:[#allocation3] sm:$0x3]
        %v2393 = vpack.c.bf16 %v2392, %v2392
        %v2394 = vld [vmem:[#allocation2] sm:$0xff]
        %v2395 = vld [vmem:[#allocation2 + $0x8] sm:$0xff]
        %v2396 = vld [vmem:[#allocation2 + $0x10] sm:$0xff]
        %v2397 = vld [vmem:[#allocation2 + $0x18] sm:$0xff]
        %v2398 = vld [vmem:[#allocation2 + $0x20] sm:$0xff]
        %v2399 = vld [vmem:[#allocation2 + $0x28] sm:$0xff]
        %v2400 = vld [vmem:[#allocation2 + $0x30] sm:$0xff]
        %v2401 = vld [vmem:[#allocation2 + $0x38] sm:$0xff]
        %v2402 = vld [vmem:[#allocation2 + $0x40] sm:$0xff]
        %v2403 = vld [vmem:[#allocation2 + $0x48] sm:$0xff]
        %v2404 = vld [vmem:[#allocation2 + $0x50] sm:$0xff]
        %v2405 = vld [vmem:[#allocation2 + $0x58] sm:$0xff]
        %v2406 = vld [vmem:[#allocation2 + $0x60] sm:$0xff]
        %v2407 = vld [vmem:[#allocation2 + $0x68] sm:$0xff]
        %v2408 = vld [vmem:[#allocation2 + $0x70] sm:$0xff]
        %v2409 = vld [vmem:[#allocation2 + $0x78] sm:$0xff]
        %v2410 = vld [vmem:[#allocation2 + $0x80] sm:$0xff]
        %v2411 = vld [vmem:[#allocation2 + $0x88] sm:$0xff]
        %v2412 = vld [vmem:[#allocation2 + $0x90] sm:$0xff]
        %v2413 = vld [vmem:[#allocation2 + $0x98] sm:$0xff]
        %v2414 = vld [vmem:[#allocation2 + $0xa0] sm:$0xff]
        %v2415 = vld [vmem:[#allocation2 + $0xa8] sm:$0xff]
        %v2416 = vld [vmem:[#allocation2 + $0xb0] sm:$0xff]
        %v2417 = vld [vmem:[#allocation2 + $0xb8] sm:$0xff]
        %v2418 = vld [vmem:[#allocation2 + $0xc0] sm:$0xff]
        %v2419 = vld [vmem:[#allocation2 + $0xc8] sm:$0xff]
        %v2420 = vld [vmem:[#allocation2 + $0xd0] sm:$0xff]
        %v2421 = vld [vmem:[#allocation2 + $0xd8] sm:$0xff]
        %v2422 = vld [vmem:[#allocation2 + $0xe0] sm:$0xff]
        %v2423 = vld [vmem:[#allocation2 + $0xe8] sm:$0xff]
        %v2424 = vld [vmem:[#allocation2 + $0xf0] sm:$0xff]
        %v2425 = vld [vmem:[#allocation2 + $0xf8] sm:$0xff]
        %v2458 = vunpack.c.l.b16 %v2394
        %v2459 = vunpack.c.h.b16 %v2394
        %v2460 = vunpack.c.l.b16 %v2395
        %v2461 = vunpack.c.h.b16 %v2395
        %v2462 = vunpack.c.l.b16 %v2396
        %v2463 = vunpack.c.h.b16 %v2396
        %v2464 = vunpack.c.l.b16 %v2397
        %v2465 = vunpack.c.h.b16 %v2397
        %v2466 = vunpack.c.l.b16 %v2398
        %v2467 = vunpack.c.h.b16 %v2398
        %v2468 = vunpack.c.l.b16 %v2399
        %v2469 = vunpack.c.h.b16 %v2399
        %v2470 = vunpack.c.l.b16 %v2400
        %v2471 = vunpack.c.h.b16 %v2400
        %v2472 = vunpack.c.l.b16 %v2401
        %v2473 = vunpack.c.h.b16 %v2401
        %v2474 = vunpack.c.l.b16 %v2402
        %v2475 = vunpack.c.h.b16 %v2402
        %v2476 = vunpack.c.l.b16 %v2403
        %v2477 = vunpack.c.h.b16 %v2403
        %v2478 = vunpack.c.l.b16 %v2404
        %v2479 = vunpack.c.h.b16 %v2404
        %v2480 = vunpack.c.l.b16 %v2405
        %v2481 = vunpack.c.h.b16 %v2405
        %v2482 = vunpack.c.l.b16 %v2406
        %v2483 = vunpack.c.h.b16 %v2406
        %v2484 = vunpack.c.l.b16 %v2407
        %v2485 = vunpack.c.h.b16 %v2407
        %v2486 = vunpack.c.l.b16 %v2408
        %v2487 = vunpack.c.h.b16 %v2408
        %v2488 = vunpack.c.l.b16 %v2409
        %v2489 = vunpack.c.h.b16 %v2409
        %v2490 = vunpack.c.l.b16 %v2410
        %v2491 = vunpack.c.h.b16 %v2410
        %v2492 = vunpack.c.l.b16 %v2411
        %v2493 = vunpack.c.h.b16 %v2411
        %v2494 = vunpack.c.l.b16 %v2412
        %v2495 = vunpack.c.h.b16 %v2412
        %v2496 = vunpack.c.l.b16 %v2413
        %v2497 = vunpack.c.h.b16 %v2413
        %v2498 = vunpack.c.l.b16 %v2414
        %v2499 = vunpack.c.h.b16 %v2414
        %v2500 = vunpack.c.l.b16 %v2415
        %v2501 = vunpack.c.h.b16 %v2415
        %v2502 = vunpack.c.l.b16 %v2416
        %v2503 = vunpack.c.h.b16 %v2416
        %v2504 = vunpack.c.l.b16 %v2417
        %v2505 = vunpack.c.h.b16 %v2417
        %v2506 = vunpack.c.l.b16 %v2418
        %v2507 = vunpack.c.h.b16 %v2418
        %v2508 = vunpack.c.l.b16 %v2419
        %v2509 = vunpack.c.h.b16 %v2419
        %v2510 = vunpack.c.l.b16 %v2420
        %v2511 = vunpack.c.h.b16 %v2420
        %v2512 = vunpack.c.l.b16 %v2421
        %v2513 = vunpack.c.h.b16 %v2421
        %v2514 = vunpack.c.l.b16 %v2422
        %v2515 = vunpack.c.h.b16 %v2422
        %v2516 = vunpack.c.l.b16 %v2423
        %v2517 = vunpack.c.h.b16 %v2423
        %v2518 = vunpack.c.l.b16 %v2424
        %v2519 = vunpack.c.h.b16 %v2424
        %v2520 = vunpack.c.l.b16 %v2425
        %v2521 = vunpack.c.h.b16 %v2425
        %v2522 = vpack.c.b16 %v2462, %v2458
        %v2523 = vpack.c.b16 %v2463, %v2459
        %v2524 = vpack.c.b16 %v2464, %v2460
        %v2525 = vpack.c.b16 %v2465, %v2461
        %v2526 = vpack.c.b16 %v2470, %v2466
        %v2527 = vpack.c.b16 %v2471, %v2467
        %v2528 = vpack.c.b16 %v2472, %v2468
        %v2529 = vpack.c.b16 %v2473, %v2469
        %v2530 = vpack.c.b16 %v2478, %v2474
        %v2531 = vpack.c.b16 %v2479, %v2475
        %v2532 = vpack.c.b16 %v2480, %v2476
        %v2533 = vpack.c.b16 %v2481, %v2477
        %v2534 = vpack.c.b16 %v2486, %v2482
        %v2535 = vpack.c.b16 %v2487, %v2483
        %v2536 = vpack.c.b16 %v2488, %v2484
        %v2537 = vpack.c.b16 %v2489, %v2485
        %v2538 = vpack.c.b16 %v2494, %v2490
        %v2539 = vpack.c.b16 %v2495, %v2491
        %v2540 = vpack.c.b16 %v2496, %v2492
        %v2541 = vpack.c.b16 %v2497, %v2493
        %v2542 = vpack.c.b16 %v2502, %v2498
        %v2543 = vpack.c.b16 %v2503, %v2499
        %v2544 = vpack.c.b16 %v2504, %v2500
        %v2545 = vpack.c.b16 %v2505, %v2501
        %v2546 = vpack.c.b16 %v2510, %v2506
        %v2547 = vpack.c.b16 %v2511, %v2507
        %v2548 = vpack.c.b16 %v2512, %v2508
        %v2549 = vpack.c.b16 %v2513, %v2509
        %v2550 = vpack.c.b16 %v2518, %v2514
        %v2551 = vpack.c.b16 %v2519, %v2515
        %v2552 = vpack.c.b16 %v2520, %v2516
        %v2553 = vpack.c.b16 %v2521, %v2517
        %2586 = vmatpush.bf16.msra.mxu0 %v2550
        %2587 = vmatpush.bf16.msra.mxu0 %v2546
        %2588 = vmatpush.bf16.msra.mxu0 %v2542
        %2589 = vmatpush.bf16.msra.mxu0 %v2538
        %2590 = vmatpush.bf16.msra.mxu0 %v2534
        %2591 = vmatpush.bf16.msra.mxu0 %v2530
        %2592 = vmatpush.bf16.msra.mxu0 %v2526
        %2593 = vmatpush.bf16.msra.mxu0 %v2522
        %2594 = vmatmul.bf16.gmra.mxu0 %v2393
        %v2595 = vpop.f32.mrf.mxu0
        %v2596 = vadd.f32 0.0, %v2595
        %v2597 = vpop.f32.mrf.mxu0
        %2598 = vdwg.mxu0
        %2599 = vmatpush.bf16.msra.mxu0 %v2551
        %2600 = vmatpush.bf16.msra.mxu0 %v2547
        %2601 = vmatpush.bf16.msra.mxu0 %v2543
        %2602 = vmatpush.bf16.msra.mxu0 %v2539
        %2603 = vmatpush.bf16.msra.mxu0 %v2535
        %2604 = vmatpush.bf16.msra.mxu0 %v2531
        %2605 = vmatpush.bf16.msra.mxu0 %v2527
        %2606 = vmatpush.bf16.msra.mxu0 %v2523
        %2607 = vmatmul.bf16.gmra.mxu0 %v2393
        %v2608 = vpop.f32.mrf.mxu0
        %v2609 = vadd.f32 0.0, %v2608
        %v2610 = vpop.f32.mrf.mxu0
        %2611 = vdwg.mxu0
        %2612 = vmatpush.bf16.msra.mxu0 %v2552
        %2613 = vmatpush.bf16.msra.mxu0 %v2548
        %2614 = vmatpush.bf16.msra.mxu0 %v2544
        %2615 = vmatpush.bf16.msra.mxu0 %v2540
        %2616 = vmatpush.bf16.msra.mxu0 %v2536
        %2617 = vmatpush.bf16.msra.mxu0 %v2532
        %2618 = vmatpush.bf16.msra.mxu0 %v2528
        %2619 = vmatpush.bf16.msra.mxu0 %v2524
        %2620 = vmatmul.bf16.gmra.mxu0 %v2393
        %v2621 = vpop.f32.mrf.mxu0
        %v2622 = vadd.f32 0.0, %v2621
        %v2623 = vpop.f32.mrf.mxu0
        %2624 = vdwg.mxu0
        %2625 = vmatpush.bf16.msra.mxu0 %v2553
        %2626 = vmatpush.bf16.msra.mxu0 %v2549
        %2627 = vmatpush.bf16.msra.mxu0 %v2545
        %2628 = vmatpush.bf16.msra.mxu0 %v2541
        %2629 = vmatpush.bf16.msra.mxu0 %v2537
        %2630 = vmatpush.bf16.msra.mxu0 %v2533
        %2631 = vmatpush.bf16.msra.mxu0 %v2529
        %2632 = vmatpush.bf16.msra.mxu0 %v2525
        %2633 = vmatmul.bf16.gmra.mxu0 %v2393
        %v2634 = vpop.f32.mrf.mxu0
        %v2635 = vadd.f32 0.0, %v2634
        %v2636 = vpop.f32.mrf.mxu0
        %2637 = vdwg.mxu0
        %v2642 = vrot.slane %v2609, 6
        %v2643 = vrot.slane %v2622, 4
        %v2644 = vrot.slane %v2635, 2
        %v2645 = vsel %vm604, %v2596, %v2642
        %v2646 = vsel %vm606, %v2643, %v2644
        %v2647 = vsel %vm608, %v2645, %v2646
        %v2649 = vadd.f32 %v2391, %v2647
        %v2650 = vxor.u32 %v2649, 2147483648
        %v2651 = vmul.f32 %v2650, 1.442695
        %v2652 = vpow.pop %v2651
        %v2653 = vadd.f32 %v2652, 1.0
        %v2654 = vrcp.pop %v2653
        %v2655 = vmul.f32 %v2653, %v2654
        %v2656 = vsub.f32 1.0, %v2655
        %v2657 = vmul.f32 %v2654, %v2656
        %v2658 = vadd.f32 %v2654, %v2657
        %vm2659 = vweird.f32 %v2653
        %vm2660 = vweird.f32 %v2654
        %vm2661 = vmor %vm2659, %vm2660
        %v2662 = vsel %vm2661, %v2654, %v2658
        %v2663 = vand.u32 2147483647, %v2653
        %vm2664 = vcmp.eq.f32.partialorder %v2663, 8.507059e+37
        %v2665 = vand.u32 %v2653, 2147483648
        %v2666 = vor.u32 1.1754944e-38, %v2665
        %v2667 = vsel %vm2664, %v2666, %v2662
        %v2668 = vmul.f32 1.0, %v2667
        %v2670 = vrot.slane %v2649, 2
        %v2672 = vxor.u32 %v2670, 2147483648
        %v2673 = vmul.f32 %v2672, 1.442695
        %v2674 = vpow.pop %v2673
        %v2675 = vadd.f32 %v2674, 1.0
        %v2676 = vrcp.pop %v2675
        %v2677 = vmul.f32 %v2675, %v2676
        %v2678 = vsub.f32 1.0, %v2677
        %v2679 = vmul.f32 %v2676, %v2678
        %v2680 = vadd.f32 %v2676, %v2679
        %vm2681 = vweird.f32 %v2675
        %vm2682 = vweird.f32 %v2676
        %vm2683 = vmor %vm2681, %vm2682
        %v2684 = vsel %vm2683, %v2676, %v2680
        %v2685 = vand.u32 2147483647, %v2675
        %vm2686 = vcmp.eq.f32.partialorder %v2685, 8.507059e+37
        %v2687 = vand.u32 %v2675, 2147483648
        %v2688 = vor.u32 1.1754944e-38, %v2687
        %v2689 = vsel %vm2686, %v2688, %v2684
        %v2690 = vmul.f32 1.0, %v2689
        %v2691 = vrot.slane %v2649, 4
        %v2693 = vtanh.pop %v2691
        %v2694 = vrot.slane %v2649, 6
        %v2696 = vxor.u32 %v2694, 2147483648
        %v2697 = vmul.f32 %v2696, 1.442695
        %v2698 = vpow.pop %v2697
        %v2699 = vadd.f32 %v2698, 1.0
        %v2700 = vrcp.pop %v2699
        %v2701 = vmul.f32 %v2699, %v2700
        %v2702 = vsub.f32 1.0, %v2701
        %v2703 = vmul.f32 %v2700, %v2702
        %v2704 = vadd.f32 %v2700, %v2703
        %vm2705 = vweird.f32 %v2699
        %vm2706 = vweird.f32 %v2700
        %vm2707 = vmor %vm2705, %vm2706
        %v2708 = vsel %vm2707, %v2700, %v2704
        %v2709 = vand.u32 2147483647, %v2699
        %vm2710 = vcmp.eq.f32.partialorder %v2709, 8.507059e+37
        %v2711 = vand.u32 %v2699, 2147483648
        %v2712 = vor.u32 1.1754944e-38, %v2711
        %v2713 = vsel %vm2710, %v2712, %v2708
        %v2714 = vmul.f32 1.0, %v2713
        %v2715 = vld [vmem:[#allocation4] sm:$0x3]
        %v2716 = vmul.f32 %v2690, %v2715
        %v2717 = vmul.f32 %v2668, %v2693
        %v2718 = vadd.f32 %v2716, %v2717
        %v2719 = vtanh.pop %v2718
        %v2720 = vmul.f32 %v2714, %v2719
        %2721 = vst [vmem:[#allocation4] sm:$0x3] %v2718
        %2722 = vst [vmem:[#allocation3] sm:$0x3] %v2720
        %v2723 = vpack.c.bf16 %v2720, %v2720
        %s2724 = scalar_lea.vmem %s247, %s2387
        %2725 = vst [vmem:[%s2724] sm:$0x1] %v2723
        %s2726 = smul.u32 %s17, 4294967289
        %s2727 = sadd.s32 %s2726, 7
        %s2728 = smul.u32 %s2727, 4
        %s2729 = scalar_lea.vmem %s206, %s2728 [#allocation6]
        %v2730 = vld [vmem:[%s2729] sm:$0xf]
        %v2731 = vunpack.c.l.bf16 %v2730
        %v2732 = vld [vmem:[#allocation3] sm:$0x3]
        %v2733 = vpack.c.bf16 %v2732, %v2732
        %v2734 = vld [vmem:[#allocation2] sm:$0xff]
        %v2735 = vld [vmem:[#allocation2 + $0x8] sm:$0xff]
        %v2736 = vld [vmem:[#allocation2 + $0x10] sm:$0xff]
        %v2737 = vld [vmem:[#allocation2 + $0x18] sm:$0xff]
        %v2738 = vld [vmem:[#allocation2 + $0x20] sm:$0xff]
        %v2739 = vld [vmem:[#allocation2 + $0x28] sm:$0xff]
        %v2740 = vld [vmem:[#allocation2 + $0x30] sm:$0xff]
        %v2741 = vld [vmem:[#allocation2 + $0x38] sm:$0xff]
        %v2742 = vld [vmem:[#allocation2 + $0x40] sm:$0xff]
        %v2743 = vld [vmem:[#allocation2 + $0x48] sm:$0xff]
        %v2744 = vld [vmem:[#allocation2 + $0x50] sm:$0xff]
        %v2745 = vld [vmem:[#allocation2 + $0x58] sm:$0xff]
        %v2746 = vld [vmem:[#allocation2 + $0x60] sm:$0xff]
        %v2747 = vld [vmem:[#allocation2 + $0x68] sm:$0xff]
        %v2748 = vld [vmem:[#allocation2 + $0x70] sm:$0xff]
        %v2749 = vld [vmem:[#allocation2 + $0x78] sm:$0xff]
        %v2750 = vld [vmem:[#allocation2 + $0x80] sm:$0xff]
        %v2751 = vld [vmem:[#allocation2 + $0x88] sm:$0xff]
        %v2752 = vld [vmem:[#allocation2 + $0x90] sm:$0xff]
        %v2753 = vld [vmem:[#allocation2 + $0x98] sm:$0xff]
        %v2754 = vld [vmem:[#allocation2 + $0xa0] sm:$0xff]
        %v2755 = vld [vmem:[#allocation2 + $0xa8] sm:$0xff]
        %v2756 = vld [vmem:[#allocation2 + $0xb0] sm:$0xff]
        %v2757 = vld [vmem:[#allocation2 + $0xb8] sm:$0xff]
        %v2758 = vld [vmem:[#allocation2 + $0xc0] sm:$0xff]
        %v2759 = vld [vmem:[#allocation2 + $0xc8] sm:$0xff]
        %v2760 = vld [vmem:[#allocation2 + $0xd0] sm:$0xff]
        %v2761 = vld [vmem:[#allocation2 + $0xd8] sm:$0xff]
        %v2762 = vld [vmem:[#allocation2 + $0xe0] sm:$0xff]
        %v2763 = vld [vmem:[#allocation2 + $0xe8] sm:$0xff]
        %v2764 = vld [vmem:[#allocation2 + $0xf0] sm:$0xff]
        %v2765 = vld [vmem:[#allocation2 + $0xf8] sm:$0xff]
        %v2798 = vunpack.c.l.b16 %v2734
        %v2799 = vunpack.c.h.b16 %v2734
        %v2800 = vunpack.c.l.b16 %v2735
        %v2801 = vunpack.c.h.b16 %v2735
        %v2802 = vunpack.c.l.b16 %v2736
        %v2803 = vunpack.c.h.b16 %v2736
        %v2804 = vunpack.c.l.b16 %v2737
        %v2805 = vunpack.c.h.b16 %v2737
        %v2806 = vunpack.c.l.b16 %v2738
        %v2807 = vunpack.c.h.b16 %v2738
        %v2808 = vunpack.c.l.b16 %v2739
        %v2809 = vunpack.c.h.b16 %v2739
        %v2810 = vunpack.c.l.b16 %v2740
        %v2811 = vunpack.c.h.b16 %v2740
        %v2812 = vunpack.c.l.b16 %v2741
        %v2813 = vunpack.c.h.b16 %v2741
        %v2814 = vunpack.c.l.b16 %v2742
        %v2815 = vunpack.c.h.b16 %v2742
        %v2816 = vunpack.c.l.b16 %v2743
        %v2817 = vunpack.c.h.b16 %v2743
        %v2818 = vunpack.c.l.b16 %v2744
        %v2819 = vunpack.c.h.b16 %v2744
        %v2820 = vunpack.c.l.b16 %v2745
        %v2821 = vunpack.c.h.b16 %v2745
        %v2822 = vunpack.c.l.b16 %v2746
        %v2823 = vunpack.c.h.b16 %v2746
        %v2824 = vunpack.c.l.b16 %v2747
        %v2825 = vunpack.c.h.b16 %v2747
        %v2826 = vunpack.c.l.b16 %v2748
        %v2827 = vunpack.c.h.b16 %v2748
        %v2828 = vunpack.c.l.b16 %v2749
        %v2829 = vunpack.c.h.b16 %v2749
        %v2830 = vunpack.c.l.b16 %v2750
        %v2831 = vunpack.c.h.b16 %v2750
        %v2832 = vunpack.c.l.b16 %v2751
        %v2833 = vunpack.c.h.b16 %v2751
        %v2834 = vunpack.c.l.b16 %v2752
        %v2835 = vunpack.c.h.b16 %v2752
        %v2836 = vunpack.c.l.b16 %v2753
        %v2837 = vunpack.c.h.b16 %v2753
        %v2838 = vunpack.c.l.b16 %v2754
        %v2839 = vunpack.c.h.b16 %v2754
        %v2840 = vunpack.c.l.b16 %v2755
        %v2841 = vunpack.c.h.b16 %v2755
        %v2842 = vunpack.c.l.b16 %v2756
        %v2843 = vunpack.c.h.b16 %v2756
        %v2844 = vunpack.c.l.b16 %v2757
        %v2845 = vunpack.c.h.b16 %v2757
        %v2846 = vunpack.c.l.b16 %v2758
        %v2847 = vunpack.c.h.b16 %v2758
        %v2848 = vunpack.c.l.b16 %v2759
        %v2849 = vunpack.c.h.b16 %v2759
        %v2850 = vunpack.c.l.b16 %v2760
        %v2851 = vunpack.c.h.b16 %v2760
        %v2852 = vunpack.c.l.b16 %v2761
        %v2853 = vunpack.c.h.b16 %v2761
        %v2854 = vunpack.c.l.b16 %v2762
        %v2855 = vunpack.c.h.b16 %v2762
        %v2856 = vunpack.c.l.b16 %v2763
        %v2857 = vunpack.c.h.b16 %v2763
        %v2858 = vunpack.c.l.b16 %v2764
        %v2859 = vunpack.c.h.b16 %v2764
        %v2860 = vunpack.c.l.b16 %v2765
        %v2861 = vunpack.c.h.b16 %v2765
        %v2862 = vpack.c.b16 %v2802, %v2798
        %v2863 = vpack.c.b16 %v2803, %v2799
        %v2864 = vpack.c.b16 %v2804, %v2800
        %v2865 = vpack.c.b16 %v2805, %v2801
        %v2866 = vpack.c.b16 %v2810, %v2806
        %v2867 = vpack.c.b16 %v2811, %v2807
        %v2868 = vpack.c.b16 %v2812, %v2808
        %v2869 = vpack.c.b16 %v2813, %v2809
        %v2870 = vpack.c.b16 %v2818, %v2814
        %v2871 = vpack.c.b16 %v2819, %v2815
        %v2872 = vpack.c.b16 %v2820, %v2816
        %v2873 = vpack.c.b16 %v2821, %v2817
        %v2874 = vpack.c.b16 %v2826, %v2822
        %v2875 = vpack.c.b16 %v2827, %v2823
        %v2876 = vpack.c.b16 %v2828, %v2824
        %v2877 = vpack.c.b16 %v2829, %v2825
        %v2878 = vpack.c.b16 %v2834, %v2830
        %v2879 = vpack.c.b16 %v2835, %v2831
        %v2880 = vpack.c.b16 %v2836, %v2832
        %v2881 = vpack.c.b16 %v2837, %v2833
        %v2882 = vpack.c.b16 %v2842, %v2838
        %v2883 = vpack.c.b16 %v2843, %v2839
        %v2884 = vpack.c.b16 %v2844, %v2840
        %v2885 = vpack.c.b16 %v2845, %v2841
        %v2886 = vpack.c.b16 %v2850, %v2846
        %v2887 = vpack.c.b16 %v2851, %v2847
        %v2888 = vpack.c.b16 %v2852, %v2848
        %v2889 = vpack.c.b16 %v2853, %v2849
        %v2890 = vpack.c.b16 %v2858, %v2854
        %v2891 = vpack.c.b16 %v2859, %v2855
        %v2892 = vpack.c.b16 %v2860, %v2856
        %v2893 = vpack.c.b16 %v2861, %v2857
        %2926 = vmatpush.bf16.msra.mxu0 %v2890
        %2927 = vmatpush.bf16.msra.mxu0 %v2886
        %2928 = vmatpush.bf16.msra.mxu0 %v2882
        %2929 = vmatpush.bf16.msra.mxu0 %v2878
        %2930 = vmatpush.bf16.msra.mxu0 %v2874
        %2931 = vmatpush.bf16.msra.mxu0 %v2870
        %2932 = vmatpush.bf16.msra.mxu0 %v2866
        %2933 = vmatpush.bf16.msra.mxu0 %v2862
        %2934 = vmatmul.bf16.gmra.mxu0 %v2733
        %v2935 = vpop.f32.mrf.mxu0
        %v2936 = vadd.f32 0.0, %v2935
        %v2937 = vpop.f32.mrf.mxu0
        %2938 = vdwg.mxu0
        %2939 = vmatpush.bf16.msra.mxu0 %v2891
        %2940 = vmatpush.bf16.msra.mxu0 %v2887
        %2941 = vmatpush.bf16.msra.mxu0 %v2883
        %2942 = vmatpush.bf16.msra.mxu0 %v2879
        %2943 = vmatpush.bf16.msra.mxu0 %v2875
        %2944 = vmatpush.bf16.msra.mxu0 %v2871
        %2945 = vmatpush.bf16.msra.mxu0 %v2867
        %2946 = vmatpush.bf16.msra.mxu0 %v2863
        %2947 = vmatmul.bf16.gmra.mxu0 %v2733
        %v2948 = vpop.f32.mrf.mxu0
        %v2949 = vadd.f32 0.0, %v2948
        %v2950 = vpop.f32.mrf.mxu0
        %2951 = vdwg.mxu0
        %2952 = vmatpush.bf16.msra.mxu0 %v2892
        %2953 = vmatpush.bf16.msra.mxu0 %v2888
        %2954 = vmatpush.bf16.msra.mxu0 %v2884
        %2955 = vmatpush.bf16.msra.mxu0 %v2880
        %2956 = vmatpush.bf16.msra.mxu0 %v2876
        %2957 = vmatpush.bf16.msra.mxu0 %v2872
        %2958 = vmatpush.bf16.msra.mxu0 %v2868
        %2959 = vmatpush.bf16.msra.mxu0 %v2864
        %2960 = vmatmul.bf16.gmra.mxu0 %v2733
        %v2961 = vpop.f32.mrf.mxu0
        %v2962 = vadd.f32 0.0, %v2961
        %v2963 = vpop.f32.mrf.mxu0
        %2964 = vdwg.mxu0
        %2965 = vmatpush.bf16.msra.mxu0 %v2893
        %2966 = vmatpush.bf16.msra.mxu0 %v2889
        %2967 = vmatpush.bf16.msra.mxu0 %v2885
        %2968 = vmatpush.bf16.msra.mxu0 %v2881
        %2969 = vmatpush.bf16.msra.mxu0 %v2877
        %2970 = vmatpush.bf16.msra.mxu0 %v2873
        %2971 = vmatpush.bf16.msra.mxu0 %v2869
        %2972 = vmatpush.bf16.msra.mxu0 %v2865
        %2973 = vmatmul.bf16.gmra.mxu0 %v2733
        %v2974 = vpop.f32.mrf.mxu0
        %v2975 = vadd.f32 0.0, %v2974
        %v2976 = vpop.f32.mrf.mxu0
        %2977 = vdwg.mxu0
        %v2982 = vrot.slane %v2949, 6
        %v2983 = vrot.slane %v2962, 4
        %v2984 = vrot.slane %v2975, 2
        %v2985 = vsel %vm604, %v2936, %v2982
        %v2986 = vsel %vm606, %v2983, %v2984
        %v2987 = vsel %vm608, %v2985, %v2986
        %v2989 = vadd.f32 %v2731, %v2987
        %v2990 = vxor.u32 %v2989, 2147483648
        %v2991 = vmul.f32 %v2990, 1.442695
        %v2992 = vpow.pop %v2991
        %v2993 = vadd.f32 %v2992, 1.0
        %v2994 = vrcp.pop %v2993
        %v2995 = vmul.f32 %v2993, %v2994
        %v2996 = vsub.f32 1.0, %v2995
        %v2997 = vmul.f32 %v2994, %v2996
        %v2998 = vadd.f32 %v2994, %v2997
        %vm2999 = vweird.f32 %v2993
        %vm3000 = vweird.f32 %v2994
        %vm3001 = vmor %vm2999, %vm3000
        %v3002 = vsel %vm3001, %v2994, %v2998
        %v3003 = vand.u32 2147483647, %v2993
        %vm3004 = vcmp.eq.f32.partialorder %v3003, 8.507059e+37
        %v3005 = vand.u32 %v2993, 2147483648
        %v3006 = vor.u32 1.1754944e-38, %v3005
        %v3007 = vsel %vm3004, %v3006, %v3002
        %v3008 = vmul.f32 1.0, %v3007
        %v3010 = vrot.slane %v2989, 2
        %v3012 = vxor.u32 %v3010, 2147483648
        %v3013 = vmul.f32 %v3012, 1.442695
        %v3014 = vpow.pop %v3013
        %v3015 = vadd.f32 %v3014, 1.0
        %v3016 = vrcp.pop %v3015
        %v3017 = vmul.f32 %v3015, %v3016
        %v3018 = vsub.f32 1.0, %v3017
        %v3019 = vmul.f32 %v3016, %v3018
        %v3020 = vadd.f32 %v3016, %v3019
        %vm3021 = vweird.f32 %v3015
        %vm3022 = vweird.f32 %v3016
        %vm3023 = vmor %vm3021, %vm3022
        %v3024 = vsel %vm3023, %v3016, %v3020
        %v3025 = vand.u32 2147483647, %v3015
        %vm3026 = vcmp.eq.f32.partialorder %v3025, 8.507059e+37
        %v3027 = vand.u32 %v3015, 2147483648
        %v3028 = vor.u32 1.1754944e-38, %v3027
        %v3029 = vsel %vm3026, %v3028, %v3024
        %v3030 = vmul.f32 1.0, %v3029
        %v3031 = vrot.slane %v2989, 4
        %v3033 = vtanh.pop %v3031
        %v3034 = vrot.slane %v2989, 6
        %v3036 = vxor.u32 %v3034, 2147483648
        %v3037 = vmul.f32 %v3036, 1.442695
        %v3038 = vpow.pop %v3037
        %v3039 = vadd.f32 %v3038, 1.0
        %v3040 = vrcp.pop %v3039
        %v3041 = vmul.f32 %v3039, %v3040
        %v3042 = vsub.f32 1.0, %v3041
        %v3043 = vmul.f32 %v3040, %v3042
        %v3044 = vadd.f32 %v3040, %v3043
        %vm3045 = vweird.f32 %v3039
        %vm3046 = vweird.f32 %v3040
        %vm3047 = vmor %vm3045, %vm3046
        %v3048 = vsel %vm3047, %v3040, %v3044
        %v3049 = vand.u32 2147483647, %v3039
        %vm3050 = vcmp.eq.f32.partialorder %v3049, 8.507059e+37
        %v3051 = vand.u32 %v3039, 2147483648
        %v3052 = vor.u32 1.1754944e-38, %v3051
        %v3053 = vsel %vm3050, %v3052, %v3048
        %v3054 = vmul.f32 1.0, %v3053
        %v3055 = vld [vmem:[#allocation4] sm:$0x3]
        %v3056 = vmul.f32 %v3030, %v3055
        %v3057 = vmul.f32 %v3008, %v3033
        %v3058 = vadd.f32 %v3056, %v3057
        %v3059 = vtanh.pop %v3058
        %v3060 = vmul.f32 %v3054, %v3059
        %3061 = vst [vmem:[#allocation4] sm:$0x3] %v3058
        %3062 = vst [vmem:[#allocation3] sm:$0x3] %v3060
        %v3063 = vpack.c.bf16 %v3060, %v3060
        %s3064 = scalar_lea.vmem %s247, %s2727
        %3065 = vst [vmem:[%s3064] sm:$0x1] %v3063
        %s3066 = smul.u32 %s18, 2
        %s3067 = ssub.s32 0, %s3066
        %s3068 = smul.u32 %s17, %s3067
        %s3069 = sadd.s32 %s18, %s3068
        %s3070 = smul.u32 8, %s3069
        %p3071 = scmp.lt.s32.totalorder %s17, 1
        %s3072 = scalar_select %p3071, %s17, 1
        %p3073 = scmp.lt.s32.totalorder %s3070, 7
        %s3074 = scalar_select %p3073, %s3070, 7
        %s3075 = smul.addr %s3072, 8
        %s3076 = sadd.s32 %s3074, %s3075
        %s3077 = scalar_lea.vmem %s2, %s3076
        // Predicated region
        $region89: #{deepspeech2_forward.10} parent=60 // pred_check
          %p3078 = pneg %p89
        $region90: #{deepspeech2_forward.10} parent=60 // pred_check_branch
          %3080 = sbr.rel (%p3078) target = $region92
        $region91: #{deepspeech2_forward.10} parent=60 // pred_region
          %s3081 = smul.u32 %s18, 2
          %s3082 = ssub.s32 0, %s3081
          %s3083 = smul.u32 %s17, %s3082
          %s3084 = sadd.s32 %s18, %s3083
          %s3085 = smul.u32 8, %s3084
        $region92: #{deepspeech2_forward.10} parent=60 // pred_fallthru
          _
      $region61: #{deepspeech2_forward.10} parent=5 // pred_fallthru
        _
      %p3086 = scmp.le.s32.totalorder 2, %s8
      // Predicated region
      $region93: #{deepspeech2_forward.10} parent=5 // pred_check
        %p3087 = pneg %p3086
      $region94: #{deepspeech2_forward.10} parent=5 // pred_check_branch
        %3089 = sbr.rel (%p3087) target = $region96
      $region95: #{deepspeech2_forward.10} parent=5 // pred_region
        %s3090 = ssub.s32 %s8, 2
        // Predicated region
        $region97: #{deepspeech2_forward.10} parent=95 // pred_check
          %p3091 = pneg %p95
        $region98: #{deepspeech2_forward.10} parent=95 // pred_check_branch
          %3093 = sbr.rel (%p3091) target = $region100
        $region99: #{deepspeech2_forward.10} parent=95 // pred_region
          %s3094 = smul.u32 %s20, 2
          %s3095 = ssub.s32 0, %s3094
          %s3096 = smul.u32 %s19, %s3095
          %s3097 = sadd.s32 %s20, %s3096
          %s3098 = smul.u32 8, %s3097
          %p3099 = scmp.lt.s32.totalorder %s19, 1
          %s3100 = scalar_select %p3099, %s19, 1
          %p3101 = scmp.lt.s32.totalorder %s3098, 7
          %s3102 = scalar_select %p3101, %s3098, 7
          %s3103 = smul.addr %s3100, 8
          %s3104 = sadd.s32 %s3102, %s3103
          %s3105 = scalar_lea.vmem %s2, %s3104
        $region100: #{deepspeech2_forward.10} parent=95 // pred_fallthru
          _
      $region96: #{deepspeech2_forward.10} parent=5 // pred_fallthru
        _
    $region6: #{deepspeech2_forward.10} parent=1 // loop_footer
      %s12 = sadd.s32 1, %s8
    $region7: #{deepspeech2_forward.10} parent=1 // loop_footer_branch
      %7 = sbr.rel target = $region3
    $region8: #{deepspeech2_forward.10} parent=1 // loop_exit
      _
  %3106 = vsyncmov [#allocation5]
  %s3107 = vpop.sfrf %3106
  %p3108 = scmp.eq.s32.totalorder %s3107, 0
  %p3109 = pneg %p3108
  %3111 = shalt.err (%p3109)

</llo_original>
